<compile_context>
chip_gen: v7x
topology: tpu7x:2x2x1
jax: 0.10.0
libtpu: 0.0.40
codegen_flags: <defaults>
</compile_context>

<pallas_src>
import math
from functools import partial

import jax
import jax.numpy as jnp
from jax import lax
from jax.experimental import pallas as pl
from jax.experimental.pallas import tpu as pltpu

# ----------------------------- configuration -------------------------------
IN_CHANNELS = 4
OUT_CHANNELS = 10
NO_HIDDEN = 16          # no_hidden
NO_BLOCKS = 2           # no_blocks, block_width_factors=[0.0] -> all widths = 1
DATA_DIM = 1            # sequences
SEQ_LEN = 32            # kernel_size='same' -> continuous kernel length == SEQ_LEN
KERNEL_NO_HIDDEN = 32   # MAGNet hidden
KERNEL_NO_LAYERS = 3
KERNEL_OMEGA_0 = 976.0
MASK_THRESHOLD = 0.1
KERNEL_INIT_SPATIAL_VALUE = 0.125025
BN_EPS = 1e-5
# downsampling=[], dropout=0.0, dropout_in=0.0, nonlinearity='ReLU',
# norm='BatchNorm', block_type='default', block_prenorm=False, conv_causal=True


# --------------------------- fused Pallas kernel ----------------------------

def _fused_resnet_kernel(x_ref, w1_ref, wc_ref, gam_ref, bet_ref,
                         e_ref, et_ref, wo_ref, bo_ref, out_ref, *, inv_n):
    """Whole ResNetBase forward on VMEM-resident data.

    x_ref:   (B, Cin*L)        input, flat lane-dense layout
    w1_ref:  (Cin*L, H*L)      folded stem SeparableFlexConv
    wc_ref:  (4, H*L, H*L)     folded block convs [b1.c1, b1.c2, b2.c1, b2.c2]
    gam_ref: (5, 1, H)         BatchNorm gammas (stem, b1.n1, b1.n2, b2.n1, b2.n2)
    bet_ref: (5, 1, H)         BatchNorm betas
    e_ref:   (H, H*L)          channel -> lane-block broadcast matrix
    et_ref:  (H*L, H)          lane-block -> channel reduction matrix
    wo_ref:  (H*L, Cout*L)     folded final Linear1d
    bo_ref:  (1, Cout*L)
    out_ref: (B, Cout*L)
    """
    e = e_ref[...]
    et = et_ref[...]

    def conv(h, w):
        # Folded depthwise-causal + pointwise conv: one MXU matmul.  The conv
        # bias (constant per channel over the BN reduce dims (N, L)) cancels
        # exactly in the training-mode BatchNorm that always follows -> omitted.
        return jnp.dot(h, w, preferred_element_type=jnp.float32)

    def bn_relu(h, gamma, beta, res=None):
        # BatchNorm1d (training-mode batch stats over (N, L), biased variance)
        # + residual + ReLU on the lane-dense (B, C*L) layout.  Per-channel
        # reduce / broadcast is expressed as tiny matmuls against E / E^T ->
        # no in-kernel reshapes or transposes.
        s = jnp.sum(h, axis=0, keepdims=True)             # (1, C*L)
        ss = jnp.sum(h * h, axis=0, keepdims=True)        # (1, C*L)
        mean = jnp.dot(s, et, preferred_element_type=jnp.float32) * inv_n   # (1, C)
        ex2 = jnp.dot(ss, et, preferred_element_type=jnp.float32) * inv_n   # (1, C)
        var = ex2 - mean * mean                           # biased (train-mode)
        inv = lax.rsqrt(var + BN_EPS)
        scale = gamma * inv                               # (1, C)
        shift = beta - mean * scale                       # (1, C)
        y = (h * jnp.dot(scale, e, preferred_element_type=jnp.float32)
             + jnp.dot(shift, e, preferred_element_type=jnp.float32))
        if res is not None:
            y = y + res
        return jnp.maximum(y, 0.0)

    x = x_ref[...]                                        # (B, Cin*L)
    # stem: conv1 -> norm1 -> ReLU (no residual; no zero tensor materialized)
    h = bn_relu(conv(x, w1_ref[...]), gam_ref[0], bet_ref[0])
    # ResNet block 1 (default / post-norm, identity shortcut, dropout p=0)
    r = h
    h = bn_relu(conv(h, wc_ref[0]), gam_ref[1], bet_ref[1])
    h = bn_relu(conv(h, wc_ref[1]), gam_ref[2], bet_ref[2], res=r)
    # ResNet block 2
    r = h
    h = bn_relu(conv(h, wc_ref[2]), gam_ref[3], bet_ref[3])
    h = bn_relu(conv(h, wc_ref[3]), gam_ref[4], bet_ref[4], res=r)
    # out_norm = Identity; out_layer = Linear1d (pointwise), folded via kron.
    out_ref[...] = (jnp.dot(h, wo_ref[...], preferred_element_type=jnp.float32)
                    + bo_ref[...])


# --------------------- glue: MAGNet kernel / mask / folding -----------------

def _magnet_generate(magnet, K):
    """MFN with Gabor filters evaluated on rel-pos grid linspace(-1, 1, K).

    The last tap (rel_pos = +1) corresponds to the current time step (causal).
    Returns (cin, K) depthwise kernel values.
    """
    x = jnp.linspace(-1.0, 1.0, K)[:, None]               # (K, 1)

    def gabor(f):
        env = jnp.exp(-0.5 * (f["gamma"][None, :] * (x - f["mu"][None, :])) ** 2)
        return env * jnp.sin(f["omega"][None, :] * x + f["phi"][None, :])

    h = gabor(magnet["filters"][0])
    for i in range(1, len(magnet["filters"])):
        lin = magnet["linears"][i - 1]
        h = gabor(magnet["filters"][i]) * (h @ lin["w"] + lin["b"])
    k = h @ magnet["w_out"] + magnet["b_out"]              # (K, cin)
    return k.T                                             # (cin, K)


def _gaussian_mask(K):
    pos = jnp.linspace(-1.0, 1.0, K)
    # sigma chosen so the mask decays to mask_threshold at a distance of
    # kernel_init_spatial_value * 2 from the fixed causal mean at rel_pos=+1.
    dist = KERNEL_INIT_SPATIAL_VALUE * 2.0
    sigma = dist / math.sqrt(-2.0 * math.log(MASK_THRESHOLD))
    return jnp.exp(-0.5 * ((pos - 1.0) / sigma) ** 2)


def _fold_sepflexconv(p, cin, cout, L):
    """Fold one SeparableFlexConv into W acting on flat (B, cin*L) input:

        out_flat = h_flat @ W        with W: (cin*L, cout*L)

    so that out[b, o, t] = sum_c w_pw[o,c] * sum_{s<=t} x[b,c,s]*wk[c,K-1+s-t].
    The depthwise/pointwise biases are dropped here because every conv in this
    network is immediately followed by training-mode BatchNorm, in which a
    per-channel constant shift cancels exactly.
    """
    K = L  # kernel_size='same'
    # TODO(synk): conv_use_fft=True and mask_dynamic_cropping are perf-only in
    # flexconv; implemented here as an explicit folded spatial causal conv.
    wk = _magnet_generate(p["magnet"], K) * _gaussian_mask(K)[None, :]   # (cin, K)
    s_idx = jnp.arange(L)[:, None]
    t_idx = jnp.arange(L)[None, :]
    kk = (K - 1) + s_idx - t_idx                          # tap index
    valid = (kk >= 0) & (kk < K)                          # causal: s <= t
    T = jnp.where(valid[None, :, :],
                  jnp.take(wk, jnp.clip(kk, 0, K - 1), axis=1),
                  0.0)                                    # (cin, L, L)
    W = jnp.einsum('oc,cst->csot', p["w_pw"], T).reshape(cin * L, cout * L)
    return W.astype(jnp.float32)


# ------------------------------ network forward -----------------------------

def resnet_base_forward(x, params):
    B, Cin, L = x.shape
    H = NO_HIDDEN
    # dropout_in: p = 0 -> identity

    # Fold every conv / linear into lane-dense matmul operands (parameter-only
    # work, runs in plain JAX under jit).
    w1 = _fold_sepflexconv(params["conv1"], Cin, H, L)
    wcs = []
    gs, bs = [params["norm1_g"]], [params["norm1_b"]]
    for bp in params["blocks"]:
        wcs.append(_fold_sepflexconv(bp["conv1"], H, H, L))
        wcs.append(_fold_sepflexconv(bp["conv2"], H, H, L))
        gs += [bp["norm1_g"], bp["norm2_g"]]
        bs += [bp["norm1_b"], bp["norm2_b"]]
    wc = jnp.stack(wcs)                                    # (4, H*L, H*L)
    gam = jnp.stack([g.reshape(1, H) for g in gs])         # (5, 1, H)
    bet = jnp.stack([b.reshape(1, H) for b in bs])         # (5, 1, H)

    e = jnp.kron(jnp.eye(H, dtype=jnp.float32), jnp.ones((1, L), jnp.float32))
    et = e.T                                               # (H*L, H)
    wo = jnp.kron(params["out_w"].T, jnp.eye(L, dtype=jnp.float32))  # (H*L, Cout*L)
    bo = jnp.kron(params["out_b"].reshape(1, OUT_CHANNELS),
                  jnp.ones((1, L), jnp.float32))           # (1, Cout*L)

    x_flat = x.reshape(B, Cin * L)

    # One fused pallas_call for the whole network; everything (~5 MiB of folded
    # weights + tiny activations) lives in VMEM for the single invocation.
    # TODO(synk): on v7x a second TensorCore stays idle; BatchNorm couples the
    # batch so there is no clean parallel grid axis at B=2.
    out_flat = pl.pallas_call(
        partial(_fused_resnet_kernel, inv_n=1.0 / float(B * L)),
        out_shape=jax.ShapeDtypeStruct((B, OUT_CHANNELS * L), jnp.float32),
        compiler_params=pltpu.CompilerParams(vmem_limit_bytes=32 * 1024 * 1024),
    )(x_flat, w1, wc, gam, bet, e, et, wo, bo)

    return out_flat.reshape(B, OUT_CHANNELS, L)


# ------------------------------ parameter init ------------------------------

def _init_sepflexconv(key, cin, cout):
    keys = jax.random.split(key, 4 * KERNEL_NO_LAYERS + 8)
    it = iter(keys)
    filters = []
    for _ in range(KERNEL_NO_LAYERS):
        filters.append(dict(
            omega=KERNEL_OMEGA_0 * jax.random.normal(next(it), (KERNEL_NO_HIDDEN,))
                  / math.sqrt(KERNEL_NO_LAYERS),
            phi=jax.random.uniform(next(it), (KERNEL_NO_HIDDEN,),
                                   minval=-math.pi, maxval=math.pi),
            gamma=jnp.abs(jax.random.normal(next(it), (KERNEL_NO_HIDDEN,))),
            mu=jax.random.uniform(next(it), (KERNEL_NO_HIDDEN,),
                                  minval=-1.0, maxval=1.0),
        ))
    linears = []
    for _ in range(KERNEL_NO_LAYERS - 1):
        linears.append(dict(
            w=jax.random.normal(next(it), (KERNEL_NO_HIDDEN, KERNEL_NO_HIDDEN))
              / math.sqrt(KERNEL_NO_HIDDEN),
            b=jnp.zeros((KERNEL_NO_HIDDEN,)),
        ))
    # TODO(synk): kernel_chang_initialize gain approximated by 1/sqrt(hidden)
    # scaling of the MAGNet output layer.
    w_out = (jax.random.normal(next(it), (KERNEL_NO_HIDDEN, cin))
             / math.sqrt(KERNEL_NO_HIDDEN))
    b_out = jnp.zeros((cin,))
    b_dw = 0.01 * jax.random.normal(next(it), (cin,))          # depthwise bias
    w_pw = jax.random.normal(next(it), (cout, cin)) / math.sqrt(cin)
    b_pw = jnp.zeros((cout,))
    return dict(magnet=dict(filters=filters, linears=linears,
                            w_out=w_out, b_out=b_out),
                b_dw=b_dw, w_pw=w_pw, b_pw=b_pw)


def init_params(key):
    keys = jax.random.split(key, 2 + 2 * NO_BLOCKS)
    params = dict(
        conv1=_init_sepflexconv(keys[0], IN_CHANNELS, NO_HIDDEN),
        norm1_g=jnp.ones((NO_HIDDEN,)),
        norm1_b=jnp.zeros((NO_HIDDEN,)),
        blocks=[],
    )
    for i in range(NO_BLOCKS):
        params["blocks"].append(dict(
            conv1=_init_sepflexconv(keys[1 + 2 * i], NO_HIDDEN, NO_HIDDEN),
            conv2=_init_sepflexconv(keys[2 + 2 * i], NO_HIDDEN, NO_HIDDEN),
            norm1_g=jnp.ones((NO_HIDDEN,)), norm1_b=jnp.zeros((NO_HIDDEN,)),
            norm2_g=jnp.ones((NO_HIDDEN,)), norm2_b=jnp.zeros((NO_HIDDEN,)),
        ))
    # out_layer: Linear1d(final_no_hidden -> out_channels),
    # kaiming_normal_ weight (fan_in = NO_HIDDEN), zero bias.
    params["out_w"] = (jax.random.normal(keys[-1], (OUT_CHANNELS, NO_HIDDEN))
                       * math.sqrt(2.0 / NO_HIDDEN))
    params["out_b"] = jnp.zeros((OUT_CHANNELS,))
    return params


# ----------------------------------- main -----------------------------------

if __name__ == "__main__":
    root = jax.random.PRNGKey(0)
    k_x, k_p = jax.random.split(root)
    x = jax.random.normal(k_x, (2, IN_CHANNELS, SEQ_LEN), jnp.float32)
    params = init_params(k_p)

    fwd = jax.jit(resnet_base_forward)
    out = fwd(x, params)
    jax.block_until_ready(out)

    assert out.shape == (2, OUT_CHANNELS, SEQ_LEN), out.shape
    assert bool(jnp.all(jnp.isfinite(out)))
    print("KERNEL_OK")
</pallas_src>

<mosaic_0001>
module attributes {stable_mosaic.version = 11 : i64} {
  func.func @_fused_resnet_kernel(%arg0: memref<2x128xf32, #tpu.memory_space<vmem>>, %arg1: memref<128x512xf32, #tpu.memory_space<vmem>>, %arg2: memref<4x512x512xf32, #tpu.memory_space<vmem>>, %arg3: memref<5x1x16xf32, #tpu.memory_space<vmem>>, %arg4: memref<5x1x16xf32, #tpu.memory_space<vmem>>, %arg5: memref<16x512xf32, #tpu.memory_space<vmem>>, %arg6: memref<512x16xf32, #tpu.memory_space<vmem>>, %arg7: memref<512x320xf32, #tpu.memory_space<vmem>>, %arg8: memref<1x320xf32, #tpu.memory_space<vmem>>, %arg9: memref<2x320xf32, #tpu.memory_space<vmem>>) attributes {dimension_semantics = [], scalar_prefetch = 0 : i64, scratch_operands = 0 : i64, tpu.core_type = #tpu.core_type<tc>} {
    %c0 = arith.constant 0 : index
    %c0_0 = arith.constant 0 : index
    %0 = vector.load %arg5[%c0, %c0_0] : memref<16x512xf32, #tpu.memory_space<vmem>>, vector<16x512xf32>
    %c0_1 = arith.constant 0 : index
    %c0_2 = arith.constant 0 : index
    %1 = vector.load %arg6[%c0_1, %c0_2] : memref<512x16xf32, #tpu.memory_space<vmem>>, vector<512x16xf32>
    %c0_3 = arith.constant 0 : index
    %c0_4 = arith.constant 0 : index
    %2 = vector.load %arg0[%c0_3, %c0_4] : memref<2x128xf32, #tpu.memory_space<vmem>>, vector<2x128xf32>
    %c0_5 = arith.constant 0 : index
    %c0_6 = arith.constant 0 : index
    %3 = vector.load %arg1[%c0_5, %c0_6] : memref<128x512xf32, #tpu.memory_space<vmem>>, vector<128x512xf32>
    %cst = arith.constant dense<0.000000e+00> : vector<2x512xf32>
    %4 = tpu.matmul %2, %3, %cst {dimension_numbers = #tpu.dot_dimension_numbers<[1], [0], [0], [1], [0, 0, 1, 1], [], []>} : vector<2x128xf32>, vector<128x512xf32>, vector<2x512xf32> -> vector<2x512xf32>
    %c0_7 = arith.constant 0 : index
    %c0_8 = arith.constant 0 : index
    %c0_9 = arith.constant 0 : index
    %5 = vector.load %arg3[%c0_7, %c0_8, %c0_9] : memref<5x1x16xf32, #tpu.memory_space<vmem>>, vector<1x1x16xf32>
    %6 = vector.shape_cast %5 : vector<1x1x16xf32> to vector<1x16xf32>
    %c0_10 = arith.constant 0 : index
    %c0_11 = arith.constant 0 : index
    %c0_12 = arith.constant 0 : index
    %7 = vector.load %arg4[%c0_10, %c0_11, %c0_12] : memref<5x1x16xf32, #tpu.memory_space<vmem>>, vector<1x1x16xf32>
    %8 = vector.shape_cast %7 : vector<1x1x16xf32> to vector<1x16xf32>
    %cst_13 = arith.constant dense<0.000000e+00> : vector<512xf32>
    %9 = vector.multi_reduction <add>, %4, %cst_13 [0] : vector<2x512xf32> to vector<512xf32>
    %10 = vector.shape_cast %9 : vector<512xf32> to vector<1x512xf32>
    %11 = arith.mulf %4, %4 : vector<2x512xf32>
    %cst_14 = arith.constant dense<0.000000e+00> : vector<512xf32>
    %12 = vector.multi_reduction <add>, %11, %cst_14 [0] : vector<2x512xf32> to vector<512xf32>
    %13 = vector.shape_cast %12 : vector<512xf32> to vector<1x512xf32>
    %cst_15 = arith.constant dense<0.000000e+00> : vector<1x16xf32>
    %14 = tpu.matmul %10, %1, %cst_15 {dimension_numbers = #tpu.dot_dimension_numbers<[1], [0], [0], [1], [0, 0, 1, 1], [], []>} : vector<1x512xf32>, vector<512x16xf32>, vector<1x16xf32> -> vector<1x16xf32>
    %cst_16 = arith.constant 1.562500e-02 : f32
    %15 = vector.broadcast %cst_16 : f32 to vector<1x16xf32>
    %16 = arith.mulf %14, %15 : vector<1x16xf32>
    %cst_17 = arith.constant dense<0.000000e+00> : vector<1x16xf32>
    %17 = tpu.matmul %13, %1, %cst_17 {dimension_numbers = #tpu.dot_dimension_numbers<[1], [0], [0], [1], [0, 0, 1, 1], [], []>} : vector<1x512xf32>, vector<512x16xf32>, vector<1x16xf32> -> vector<1x16xf32>
    %cst_18 = arith.constant 1.562500e-02 : f32
    %18 = vector.broadcast %cst_18 : f32 to vector<1x16xf32>
    %19 = arith.mulf %17, %18 : vector<1x16xf32>
    %20 = arith.mulf %16, %16 : vector<1x16xf32>
    %21 = arith.subf %19, %20 : vector<1x16xf32>
    %cst_19 = arith.constant 9.99999974E-6 : f32
    %22 = vector.broadcast %cst_19 : f32 to vector<1x16xf32>
    %23 = arith.addf %21, %22 : vector<1x16xf32>
    %24 = math.rsqrt %23 : vector<1x16xf32>
    %25 = arith.mulf %6, %24 : vector<1x16xf32>
    %26 = arith.mulf %16, %25 : vector<1x16xf32>
    %27 = arith.subf %8, %26 : vector<1x16xf32>
    %cst_20 = arith.constant dense<0.000000e+00> : vector<1x512xf32>
    %28 = tpu.matmul %25, %0, %cst_20 {dimension_numbers = #tpu.dot_dimension_numbers<[1], [0], [0], [1], [0, 0, 1, 1], [], []>} : vector<1x16xf32>, vector<16x512xf32>, vector<1x512xf32> -> vector<1x512xf32>
    %29 = vector.broadcast %28 : vector<1x512xf32> to vector<2x512xf32>
    %30 = arith.mulf %4, %29 : vector<2x512xf32>
    %cst_21 = arith.constant dense<0.000000e+00> : vector<1x512xf32>
    %31 = tpu.matmul %27, %0, %cst_21 {dimension_numbers = #tpu.dot_dimension_numbers<[1], [0], [0], [1], [0, 0, 1, 1], [], []>} : vector<1x16xf32>, vector<16x512xf32>, vector<1x512xf32> -> vector<1x512xf32>
    %32 = vector.broadcast %31 : vector<1x512xf32> to vector<2x512xf32>
    %33 = arith.addf %30, %32 : vector<2x512xf32>
    %cst_22 = arith.constant 0.000000e+00 : f32
    %34 = vector.broadcast %cst_22 : f32 to vector<2x512xf32>
    %35 = arith.maximumf %33, %34 : vector<2x512xf32>
    %c0_23 = arith.constant 0 : index
    %c0_24 = arith.constant 0 : index
    %c0_25 = arith.constant 0 : index
    %36 = vector.load %arg2[%c0_23, %c0_24, %c0_25] : memref<4x512x512xf32, #tpu.memory_space<vmem>>, vector<1x512x512xf32>
    %37 = vector.shape_cast %36 : vector<1x512x512xf32> to vector<512x512xf32>
    %cst_26 = arith.constant dense<0.000000e+00> : vector<2x512xf32>
    %38 = tpu.matmul %35, %37, %cst_26 {dimension_numbers = #tpu.dot_dimension_numbers<[1], [0], [0], [1], [0, 0, 1, 1], [], []>} : vector<2x512xf32>, vector<512x512xf32>, vector<2x512xf32> -> vector<2x512xf32>
    %c1 = arith.constant 1 : index
    %c0_27 = arith.constant 0 : index
    %c0_28 = arith.constant 0 : index
    %39 = vector.load %arg3[%c1, %c0_27, %c0_28] : memref<5x1x16xf32, #tpu.memory_space<vmem>>, vector<1x1x16xf32>
    %40 = vector.shape_cast %39 : vector<1x1x16xf32> to vector<1x16xf32>
    %c1_29 = arith.constant 1 : index
    %c0_30 = arith.constant 0 : index
    %c0_31 = arith.constant 0 : index
    %41 = vector.load %arg4[%c1_29, %c0_30, %c0_31] : memref<5x1x16xf32, #tpu.memory_space<vmem>>, vector<1x1x16xf32>
    %42 = vector.shape_cast %41 : vector<1x1x16xf32> to vector<1x16xf32>
    %cst_32 = arith.constant dense<0.000000e+00> : vector<512xf32>
    %43 = vector.multi_reduction <add>, %38, %cst_32 [0] : vector<2x512xf32> to vector<512xf32>
    %44 = vector.shape_cast %43 : vector<512xf32> to vector<1x512xf32>
    %45 = arith.mulf %38, %38 : vector<2x512xf32>
    %cst_33 = arith.constant dense<0.000000e+00> : vector<512xf32>
    %46 = vector.multi_reduction <add>, %45, %cst_33 [0] : vector<2x512xf32> to vector<512xf32>
    %47 = vector.shape_cast %46 : vector<512xf32> to vector<1x512xf32>
    %cst_34 = arith.constant dense<0.000000e+00> : vector<1x16xf32>
    %48 = tpu.matmul %44, %1, %cst_34 {dimension_numbers = #tpu.dot_dimension_numbers<[1], [0], [0], [1], [0, 0, 1, 1], [], []>} : vector<1x512xf32>, vector<512x16xf32>, vector<1x16xf32> -> vector<1x16xf32>
    %cst_35 = arith.constant 1.562500e-02 : f32
    %49 = vector.broadcast %cst_35 : f32 to vector<1x16xf32>
    %50 = arith.mulf %48, %49 : vector<1x16xf32>
    %cst_36 = arith.constant dense<0.000000e+00> : vector<1x16xf32>
    %51 = tpu.matmul %47, %1, %cst_36 {dimension_numbers = #tpu.dot_dimension_numbers<[1], [0], [0], [1], [0, 0, 1, 1], [], []>} : vector<1x512xf32>, vector<512x16xf32>, vector<1x16xf32> -> vector<1x16xf32>
    %cst_37 = arith.constant 1.562500e-02 : f32
    %52 = vector.broadcast %cst_37 : f32 to vector<1x16xf32>
    %53 = arith.mulf %51, %52 : vector<1x16xf32>
    %54 = arith.mulf %50, %50 : vector<1x16xf32>
    %55 = arith.subf %53, %54 : vector<1x16xf32>
    %cst_38 = arith.constant 9.99999974E-6 : f32
    %56 = vector.broadcast %cst_38 : f32 to vector<1x16xf32>
    %57 = arith.addf %55, %56 : vector<1x16xf32>
    %58 = math.rsqrt %57 : vector<1x16xf32>
    %59 = arith.mulf %40, %58 : vector<1x16xf32>
    %60 = arith.mulf %50, %59 : vector<1x16xf32>
    %61 = arith.subf %42, %60 : vector<1x16xf32>
    %cst_39 = arith.constant dense<0.000000e+00> : vector<1x512xf32>
    %62 = tpu.matmul %59, %0, %cst_39 {dimension_numbers = #tpu.dot_dimension_numbers<[1], [0], [0], [1], [0, 0, 1, 1], [], []>} : vector<1x16xf32>, vector<16x512xf32>, vector<1x512xf32> -> vector<1x512xf32>
    %63 = vector.broadcast %62 : vector<1x512xf32> to vector<2x512xf32>
    %64 = arith.mulf %38, %63 : vector<2x512xf32>
    %cst_40 = arith.constant dense<0.000000e+00> : vector<1x512xf32>
    %65 = tpu.matmul %61, %0, %cst_40 {dimension_numbers = #tpu.dot_dimension_numbers<[1], [0], [0], [1], [0, 0, 1, 1], [], []>} : vector<1x16xf32>, vector<16x512xf32>, vector<1x512xf32> -> vector<1x512xf32>
    %66 = vector.broadcast %65 : vector<1x512xf32> to vector<2x512xf32>
    %67 = arith.addf %64, %66 : vector<2x512xf32>
    %cst_41 = arith.constant 0.000000e+00 : f32
    %68 = vector.broadcast %cst_41 : f32 to vector<2x512xf32>
    %69 = arith.maximumf %67, %68 : vector<2x512xf32>
    %c1_42 = arith.constant 1 : index
    %c0_43 = arith.constant 0 : index
    %c0_44 = arith.constant 0 : index
    %70 = vector.load %arg2[%c1_42, %c0_43, %c0_44] : memref<4x512x512xf32, #tpu.memory_space<vmem>>, vector<1x512x512xf32>
    %71 = vector.shape_cast %70 : vector<1x512x512xf32> to vector<512x512xf32>
    %cst_45 = arith.constant dense<0.000000e+00> : vector<2x512xf32>
    %72 = tpu.matmul %69, %71, %cst_45 {dimension_numbers = #tpu.dot_dimension_numbers<[1], [0], [0], [1], [0, 0, 1, 1], [], []>} : vector<2x512xf32>, vector<512x512xf32>, vector<2x512xf32> -> vector<2x512xf32>
    %c2 = arith.constant 2 : index
    %c0_46 = arith.constant 0 : index
    %c0_47 = arith.constant 0 : index
    %73 = vector.load %arg3[%c2, %c0_46, %c0_47] : memref<5x1x16xf32, #tpu.memory_space<vmem>>, vector<1x1x16xf32>
    %74 = vector.shape_cast %73 : vector<1x1x16xf32> to vector<1x16xf32>
    %c2_48 = arith.constant 2 : index
    %c0_49 = arith.constant 0 : index
    %c0_50 = arith.constant 0 : index
    %75 = vector.load %arg4[%c2_48, %c0_49, %c0_50] : memref<5x1x16xf32, #tpu.memory_space<vmem>>, vector<1x1x16xf32>
    %76 = vector.shape_cast %75 : vector<1x1x16xf32> to vector<1x16xf32>
    %cst_51 = arith.constant dense<0.000000e+00> : vector<512xf32>
    %77 = vector.multi_reduction <add>, %72, %cst_51 [0] : vector<2x512xf32> to vector<512xf32>
    %78 = vector.shape_cast %77 : vector<512xf32> to vector<1x512xf32>
    %79 = arith.mulf %72, %72 : vector<2x512xf32>
    %cst_52 = arith.constant dense<0.000000e+00> : vector<512xf32>
    %80 = vector.multi_reduction <add>, %79, %cst_52 [0] : vector<2x512xf32> to vector<512xf32>
    %81 = vector.shape_cast %80 : vector<512xf32> to vector<1x512xf32>
    %cst_53 = arith.constant dense<0.000000e+00> : vector<1x16xf32>
    %82 = tpu.matmul %78, %1, %cst_53 {dimension_numbers = #tpu.dot_dimension_numbers<[1], [0], [0], [1], [0, 0, 1, 1], [], []>} : vector<1x512xf32>, vector<512x16xf32>, vector<1x16xf32> -> vector<1x16xf32>
    %cst_54 = arith.constant 1.562500e-02 : f32
    %83 = vector.broadcast %cst_54 : f32 to vector<1x16xf32>
    %84 = arith.mulf %82, %83 : vector<1x16xf32>
    %cst_55 = arith.constant dense<0.000000e+00> : vector<1x16xf32>
    %85 = tpu.matmul %81, %1, %cst_55 {dimension_numbers = #tpu.dot_dimension_numbers<[1], [0], [0], [1], [0, 0, 1, 1], [], []>} : vector<1x512xf32>, vector<512x16xf32>, vector<1x16xf32> -> vector<1x16xf32>
    %cst_56 = arith.constant 1.562500e-02 : f32
    %86 = vector.broadcast %cst_56 : f32 to vector<1x16xf32>
    %87 = arith.mulf %85, %86 : vector<1x16xf32>
    %88 = arith.mulf %84, %84 : vector<1x16xf32>
    %89 = arith.subf %87, %88 : vector<1x16xf32>
    %cst_57 = arith.constant 9.99999974E-6 : f32
    %90 = vector.broadcast %cst_57 : f32 to vector<1x16xf32>
    %91 = arith.addf %89, %90 : vector<1x16xf32>
    %92 = math.rsqrt %91 : vector<1x16xf32>
    %93 = arith.mulf %74, %92 : vector<1x16xf32>
    %94 = arith.mulf %84, %93 : vector<1x16xf32>
    %95 = arith.subf %76, %94 : vector<1x16xf32>
    %cst_58 = arith.constant dense<0.000000e+00> : vector<1x512xf32>
    %96 = tpu.matmul %93, %0, %cst_58 {dimension_numbers = #tpu.dot_dimension_numbers<[1], [0], [0], [1], [0, 0, 1, 1], [], []>} : vector<1x16xf32>, vector<16x512xf32>, vector<1x512xf32> -> vector<1x512xf32>
    %97 = vector.broadcast %96 : vector<1x512xf32> to vector<2x512xf32>
    %98 = arith.mulf %72, %97 : vector<2x512xf32>
    %cst_59 = arith.constant dense<0.000000e+00> : vector<1x512xf32>
    %99 = tpu.matmul %95, %0, %cst_59 {dimension_numbers = #tpu.dot_dimension_numbers<[1], [0], [0], [1], [0, 0, 1, 1], [], []>} : vector<1x16xf32>, vector<16x512xf32>, vector<1x512xf32> -> vector<1x512xf32>
    %100 = vector.broadcast %99 : vector<1x512xf32> to vector<2x512xf32>
    %101 = arith.addf %98, %100 : vector<2x512xf32>
    %102 = arith.addf %101, %35 : vector<2x512xf32>
    %cst_60 = arith.constant 0.000000e+00 : f32
    %103 = vector.broadcast %cst_60 : f32 to vector<2x512xf32>
    %104 = arith.maximumf %102, %103 : vector<2x512xf32>
    %c2_61 = arith.constant 2 : index
    %c0_62 = arith.constant 0 : index
    %c0_63 = arith.constant 0 : index
    %105 = vector.load %arg2[%c2_61, %c0_62, %c0_63] : memref<4x512x512xf32, #tpu.memory_space<vmem>>, vector<1x512x512xf32>
    %106 = vector.shape_cast %105 : vector<1x512x512xf32> to vector<512x512xf32>
    %cst_64 = arith.constant dense<0.000000e+00> : vector<2x512xf32>
    %107 = tpu.matmul %104, %106, %cst_64 {dimension_numbers = #tpu.dot_dimension_numbers<[1], [0], [0], [1], [0, 0, 1, 1], [], []>} : vector<2x512xf32>, vector<512x512xf32>, vector<2x512xf32> -> vector<2x512xf32>
    %c3 = arith.constant 3 : index
    %c0_65 = arith.constant 0 : index
    %c0_66 = arith.constant 0 : index
    %108 = vector.load %arg3[%c3, %c0_65, %c0_66] : memref<5x1x16xf32, #tpu.memory_space<vmem>>, vector<1x1x16xf32>
    %109 = vector.shape_cast %108 : vector<1x1x16xf32> to vector<1x16xf32>
    %c3_67 = arith.constant 3 : index
    %c0_68 = arith.constant 0 : index
    %c0_69 = arith.constant 0 : index
    %110 = vector.load %arg4[%c3_67, %c0_68, %c0_69] : memref<5x1x16xf32, #tpu.memory_space<vmem>>, vector<1x1x16xf32>
    %111 = vector.shape_cast %110 : vector<1x1x16xf32> to vector<1x16xf32>
    %cst_70 = arith.constant dense<0.000000e+00> : vector<512xf32>
    %112 = vector.multi_reduction <add>, %107, %cst_70 [0] : vector<2x512xf32> to vector<512xf32>
    %113 = vector.shape_cast %112 : vector<512xf32> to vector<1x512xf32>
    %114 = arith.mulf %107, %107 : vector<2x512xf32>
    %cst_71 = arith.constant dense<0.000000e+00> : vector<512xf32>
    %115 = vector.multi_reduction <add>, %114, %cst_71 [0] : vector<2x512xf32> to vector<512xf32>
    %116 = vector.shape_cast %115 : vector<512xf32> to vector<1x512xf32>
    %cst_72 = arith.constant dense<0.000000e+00> : vector<1x16xf32>
    %117 = tpu.matmul %113, %1, %cst_72 {dimension_numbers = #tpu.dot_dimension_numbers<[1], [0], [0], [1], [0, 0, 1, 1], [], []>} : vector<1x512xf32>, vector<512x16xf32>, vector<1x16xf32> -> vector<1x16xf32>
    %cst_73 = arith.constant 1.562500e-02 : f32
    %118 = vector.broadcast %cst_73 : f32 to vector<1x16xf32>
    %119 = arith.mulf %117, %118 : vector<1x16xf32>
    %cst_74 = arith.constant dense<0.000000e+00> : vector<1x16xf32>
    %120 = tpu.matmul %116, %1, %cst_74 {dimension_numbers = #tpu.dot_dimension_numbers<[1], [0], [0], [1], [0, 0, 1, 1], [], []>} : vector<1x512xf32>, vector<512x16xf32>, vector<1x16xf32> -> vector<1x16xf32>
    %cst_75 = arith.constant 1.562500e-02 : f32
    %121 = vector.broadcast %cst_75 : f32 to vector<1x16xf32>
    %122 = arith.mulf %120, %121 : vector<1x16xf32>
    %123 = arith.mulf %119, %119 : vector<1x16xf32>
    %124 = arith.subf %122, %123 : vector<1x16xf32>
    %cst_76 = arith.constant 9.99999974E-6 : f32
    %125 = vector.broadcast %cst_76 : f32 to vector<1x16xf32>
    %126 = arith.addf %124, %125 : vector<1x16xf32>
    %127 = math.rsqrt %126 : vector<1x16xf32>
    %128 = arith.mulf %109, %127 : vector<1x16xf32>
    %129 = arith.mulf %119, %128 : vector<1x16xf32>
    %130 = arith.subf %111, %129 : vector<1x16xf32>
    %cst_77 = arith.constant dense<0.000000e+00> : vector<1x512xf32>
    %131 = tpu.matmul %128, %0, %cst_77 {dimension_numbers = #tpu.dot_dimension_numbers<[1], [0], [0], [1], [0, 0, 1, 1], [], []>} : vector<1x16xf32>, vector<16x512xf32>, vector<1x512xf32> -> vector<1x512xf32>
    %132 = vector.broadcast %131 : vector<1x512xf32> to vector<2x512xf32>
    %133 = arith.mulf %107, %132 : vector<2x512xf32>
    %cst_78 = arith.constant dense<0.000000e+00> : vector<1x512xf32>
    %134 = tpu.matmul %130, %0, %cst_78 {dimension_numbers = #tpu.dot_dimension_numbers<[1], [0], [0], [1], [0, 0, 1, 1], [], []>} : vector<1x16xf32>, vector<16x512xf32>, vector<1x512xf32> -> vector<1x512xf32>
    %135 = vector.broadcast %134 : vector<1x512xf32> to vector<2x512xf32>
    %136 = arith.addf %133, %135 : vector<2x512xf32>
    %cst_79 = arith.constant 0.000000e+00 : f32
    %137 = vector.broadcast %cst_79 : f32 to vector<2x512xf32>
    %138 = arith.maximumf %136, %137 : vector<2x512xf32>
    %c3_80 = arith.constant 3 : index
    %c0_81 = arith.constant 0 : index
    %c0_82 = arith.constant 0 : index
    %139 = vector.load %arg2[%c3_80, %c0_81, %c0_82] : memref<4x512x512xf32, #tpu.memory_space<vmem>>, vector<1x512x512xf32>
    %140 = vector.shape_cast %139 : vector<1x512x512xf32> to vector<512x512xf32>
    %cst_83 = arith.constant dense<0.000000e+00> : vector<2x512xf32>
    %141 = tpu.matmul %138, %140, %cst_83 {dimension_numbers = #tpu.dot_dimension_numbers<[1], [0], [0], [1], [0, 0, 1, 1], [], []>} : vector<2x512xf32>, vector<512x512xf32>, vector<2x512xf32> -> vector<2x512xf32>
    %c4 = arith.constant 4 : index
    %c0_84 = arith.constant 0 : index
    %c0_85 = arith.constant 0 : index
    %142 = vector.load %arg3[%c4, %c0_84, %c0_85] : memref<5x1x16xf32, #tpu.memory_space<vmem>>, vector<1x1x16xf32>
    %143 = vector.shape_cast %142 : vector<1x1x16xf32> to vector<1x16xf32>
    %c4_86 = arith.constant 4 : index
    %c0_87 = arith.constant 0 : index
    %c0_88 = arith.constant 0 : index
    %144 = vector.load %arg4[%c4_86, %c0_87, %c0_88] : memref<5x1x16xf32, #tpu.memory_space<vmem>>, vector<1x1x16xf32>
    %145 = vector.shape_cast %144 : vector<1x1x16xf32> to vector<1x16xf32>
    %cst_89 = arith.constant dense<0.000000e+00> : vector<512xf32>
    %146 = vector.multi_reduction <add>, %141, %cst_89 [0] : vector<2x512xf32> to vector<512xf32>
    %147 = vector.shape_cast %146 : vector<512xf32> to vector<1x512xf32>
    %148 = arith.mulf %141, %141 : vector<2x512xf32>
    %cst_90 = arith.constant dense<0.000000e+00> : vector<512xf32>
    %149 = vector.multi_reduction <add>, %148, %cst_90 [0] : vector<2x512xf32> to vector<512xf32>
    %150 = vector.shape_cast %149 : vector<512xf32> to vector<1x512xf32>
    %cst_91 = arith.constant dense<0.000000e+00> : vector<1x16xf32>
    %151 = tpu.matmul %147, %1, %cst_91 {dimension_numbers = #tpu.dot_dimension_numbers<[1], [0], [0], [1], [0, 0, 1, 1], [], []>} : vector<1x512xf32>, vector<512x16xf32>, vector<1x16xf32> -> vector<1x16xf32>
    %cst_92 = arith.constant 1.562500e-02 : f32
    %152 = vector.broadcast %cst_92 : f32 to vector<1x16xf32>
    %153 = arith.mulf %151, %152 : vector<1x16xf32>
    %cst_93 = arith.constant dense<0.000000e+00> : vector<1x16xf32>
    %154 = tpu.matmul %150, %1, %cst_93 {dimension_numbers = #tpu.dot_dimension_numbers<[1], [0], [0], [1], [0, 0, 1, 1], [], []>} : vector<1x512xf32>, vector<512x16xf32>, vector<1x16xf32> -> vector<1x16xf32>
    %cst_94 = arith.constant 1.562500e-02 : f32
    %155 = vector.broadcast %cst_94 : f32 to vector<1x16xf32>
    %156 = arith.mulf %154, %155 : vector<1x16xf32>
    %157 = arith.mulf %153, %153 : vector<1x16xf32>
    %158 = arith.subf %156, %157 : vector<1x16xf32>
    %cst_95 = arith.constant 9.99999974E-6 : f32
    %159 = vector.broadcast %cst_95 : f32 to vector<1x16xf32>
    %160 = arith.addf %158, %159 : vector<1x16xf32>
    %161 = math.rsqrt %160 : vector<1x16xf32>
    %162 = arith.mulf %143, %161 : vector<1x16xf32>
    %163 = arith.mulf %153, %162 : vector<1x16xf32>
    %164 = arith.subf %145, %163 : vector<1x16xf32>
    %cst_96 = arith.constant dense<0.000000e+00> : vector<1x512xf32>
    %165 = tpu.matmul %162, %0, %cst_96 {dimension_numbers = #tpu.dot_dimension_numbers<[1], [0], [0], [1], [0, 0, 1, 1], [], []>} : vector<1x16xf32>, vector<16x512xf32>, vector<1x512xf32> -> vector<1x512xf32>
    %166 = vector.broadcast %165 : vector<1x512xf32> to vector<2x512xf32>
    %167 = arith.mulf %141, %166 : vector<2x512xf32>
    %cst_97 = arith.constant dense<0.000000e+00> : vector<1x512xf32>
    %168 = tpu.matmul %164, %0, %cst_97 {dimension_numbers = #tpu.dot_dimension_numbers<[1], [0], [0], [1], [0, 0, 1, 1], [], []>} : vector<1x16xf32>, vector<16x512xf32>, vector<1x512xf32> -> vector<1x512xf32>
    %169 = vector.broadcast %168 : vector<1x512xf32> to vector<2x512xf32>
    %170 = arith.addf %167, %169 : vector<2x512xf32>
    %171 = arith.addf %170, %104 : vector<2x512xf32>
    %cst_98 = arith.constant 0.000000e+00 : f32
    %172 = vector.broadcast %cst_98 : f32 to vector<2x512xf32>
    %173 = arith.maximumf %171, %172 : vector<2x512xf32>
    %c0_99 = arith.constant 0 : index
    %c0_100 = arith.constant 0 : index
    %174 = vector.load %arg7[%c0_99, %c0_100] : memref<512x320xf32, #tpu.memory_space<vmem>>, vector<512x320xf32>
    %cst_101 = arith.constant dense<0.000000e+00> : vector<2x320xf32>
    %175 = tpu.matmul %173, %174, %cst_101 {dimension_numbers = #tpu.dot_dimension_numbers<[1], [0], [0], [1], [0, 0, 1, 1], [], []>} : vector<2x512xf32>, vector<512x320xf32>, vector<2x320xf32> -> vector<2x320xf32>
    %c0_102 = arith.constant 0 : index
    %c0_103 = arith.constant 0 : index
    %176 = vector.load %arg8[%c0_102, %c0_103] : memref<1x320xf32, #tpu.memory_space<vmem>>, vector<1x320xf32>
    %177 = vector.broadcast %176 : vector<1x320xf32> to vector<2x320xf32>
    %178 = arith.addf %175, %177 : vector<2x320xf32>
    %c0_104 = arith.constant 0 : index
    %c0_105 = arith.constant 0 : index
    %179 = vector.load %arg9[%c0_104, %c0_105] : memref<2x320xf32, #tpu.memory_space<vmem>>, vector<2x320xf32>
    tpu.vector_store %arg9[%c0_104, %c0_105], %178 {strides = array<i32>} : memref<2x320xf32, #tpu.memory_space<vmem>>, vector<2x320xf32>,
    return
  }
}

</mosaic_0001>

<llo_original>
// kernel: resnet_base_forward.1
$region0: #{resnet_base_forward.1}
  #allocation0 [shape = 'u32[]', space=smem, size = 0x4, offset = 0x4, fixed_abs, tag = 'smem constant byte address 0x4 - core index']
  #allocation1 [shape = 'u32[144,128]{1,0:T(1,128)}', space=vmem, size = 0x12000, scoped, tag = 'internal scratch']
  %s0 = inlined_call_operand.vmem [shape: f32[2,128], index: 0, kind: input, shape index: {}]
  %s1 = inlined_call_operand.vmem [shape: f32[128,512], index: 1, kind: input, shape index: {}]
  %s2 = inlined_call_operand.vmem [shape: f32[4,512,512], index: 2, kind: input, shape index: {}]
  %s3 = inlined_call_operand.vmem [shape: f32[5,1,16], index: 3, kind: input, shape index: {}]
  %s4 = inlined_call_operand.vmem [shape: f32[5,1,16], index: 4, kind: input, shape index: {}]
  %s5 = inlined_call_operand.vmem [shape: f32[16,512], index: 5, kind: input, shape index: {}]
  %s6 = inlined_call_operand.vmem [shape: f32[512,16], index: 6, kind: input, shape index: {}]
  %s7 = inlined_call_operand.vmem [shape: f32[512,320], index: 7, kind: input, shape index: {}]
  %s8 = inlined_call_operand.vmem [shape: f32[1,320], index: 8, kind: input, shape index: {}]
  %s9 = inlined_call_operand.vmem [shape: f32[2,320], index: 9, kind: output, shape index: {}]
  %s10 = sld [smem:[#allocation0]]
  $region46: #{resnet_base_forward.1} parent=0
    _
  %s12 = ssub.s32 1, %s10
  %s13 = scalar_select 0, %s12, %s10
  // Predicated region
  $region2: #{resnet_base_forward.1} parent=0 // pred_check
    _
  $region3: #{resnet_base_forward.1} parent=0 // pred_check_branch
    %15 = sbr.rel (0) target = $region5
  $region4: #{resnet_base_forward.1} parent=0 // pred_region
    _
  $region5: #{resnet_base_forward.1} parent=0 // pred_fallthru
    _
  // Predicated region
  $region6: #{resnet_base_forward.1} parent=0 // pred_check
    _
  $region7: #{resnet_base_forward.1} parent=0 // pred_check_branch
    %17 = sbr.rel (0) target = $region9
  $region8: #{resnet_base_forward.1} parent=0 // pred_region
    _
  $region9: #{resnet_base_forward.1} parent=0 // pred_fallthru
    _
  // Predicated region
  $region10: #{resnet_base_forward.1} parent=0 // pred_check
    _
  $region11: #{resnet_base_forward.1} parent=0 // pred_check_branch
    %19 = sbr.rel (0) target = $region13
  $region12: #{resnet_base_forward.1} parent=0 // pred_region
    _
  $region13: #{resnet_base_forward.1} parent=0 // pred_fallthru
    _
  // Predicated region
  $region14: #{resnet_base_forward.1} parent=0 // pred_check
    _
  $region15: #{resnet_base_forward.1} parent=0 // pred_check_branch
    %21 = sbr.rel (0) target = $region17
  $region16: #{resnet_base_forward.1} parent=0 // pred_region
    _
  $region17: #{resnet_base_forward.1} parent=0 // pred_fallthru
    _
  // Predicated region
  $region18: #{resnet_base_forward.1} parent=0 // pred_check
    _
  $region19: #{resnet_base_forward.1} parent=0 // pred_check_branch
    %23 = sbr.rel (0) target = $region21
  $region20: #{resnet_base_forward.1} parent=0 // pred_region
    _
  $region21: #{resnet_base_forward.1} parent=0 // pred_fallthru
    _
  // Predicated region
  $region22: #{resnet_base_forward.1} parent=0 // pred_check
    _
  $region23: #{resnet_base_forward.1} parent=0 // pred_check_branch
    %25 = sbr.rel (0) target = $region25
  $region24: #{resnet_base_forward.1} parent=0 // pred_region
    _
  $region25: #{resnet_base_forward.1} parent=0 // pred_fallthru
    _
  // Predicated region
  $region26: #{resnet_base_forward.1} parent=0 // pred_check
    _
  $region27: #{resnet_base_forward.1} parent=0 // pred_check_branch
    %27 = sbr.rel (0) target = $region29
  $region28: #{resnet_base_forward.1} parent=0 // pred_region
    _
  $region29: #{resnet_base_forward.1} parent=0 // pred_fallthru
    _
  // Predicated region
  $region30: #{resnet_base_forward.1} parent=0 // pred_check
    _
  $region31: #{resnet_base_forward.1} parent=0 // pred_check_branch
    %29 = sbr.rel (0) target = $region33
  $region32: #{resnet_base_forward.1} parent=0 // pred_region
    _
  $region33: #{resnet_base_forward.1} parent=0 // pred_fallthru
    _
  // Predicated region
  $region34: #{resnet_base_forward.1} parent=0 // pred_check
    _
  $region35: #{resnet_base_forward.1} parent=0 // pred_check_branch
    %31 = sbr.rel (0) target = $region37
  $region36: #{resnet_base_forward.1} parent=0 // pred_region
    _
  $region37: #{resnet_base_forward.1} parent=0 // pred_fallthru
    _
  %v32 = vld [vmem:[%s5] sm:$0xff]
  %v33 = vld [vmem:[%s5 + $0x8] sm:$0xff]
  %v34 = vld [vmem:[%s5 + $0x10] sm:$0xff]
  %v35 = vld [vmem:[%s5 + $0x18] sm:$0xff]
  %v36 = vld [vmem:[%s5 + $0x20] sm:$0xff]
  %v37 = vld [vmem:[%s5 + $0x28] sm:$0xff]
  %v38 = vld [vmem:[%s5 + $0x30] sm:$0xff]
  %v39 = vld [vmem:[%s5 + $0x38] sm:$0xff]
  %v40 = vld [vmem:[%s6] sm:$0xff]
  %v41 = vld [vmem:[%s6 + $0x8] sm:$0xff]
  %v42 = vld [vmem:[%s6 + $0x10] sm:$0xff]
  %v43 = vld [vmem:[%s6 + $0x18] sm:$0xff]
  %v44 = vld [vmem:[%s6 + $0x20] sm:$0xff]
  %v45 = vld [vmem:[%s6 + $0x28] sm:$0xff]
  %v46 = vld [vmem:[%s6 + $0x30] sm:$0xff]
  %v47 = vld [vmem:[%s6 + $0x38] sm:$0xff]
  %v48 = vld [vmem:[%s6 + $0x40] sm:$0xff]
  %v49 = vld [vmem:[%s6 + $0x48] sm:$0xff]
  %v50 = vld [vmem:[%s6 + $0x50] sm:$0xff]
  %v51 = vld [vmem:[%s6 + $0x58] sm:$0xff]
  %v52 = vld [vmem:[%s6 + $0x60] sm:$0xff]
  %v53 = vld [vmem:[%s6 + $0x68] sm:$0xff]
  %v54 = vld [vmem:[%s6 + $0x70] sm:$0xff]
  %v55 = vld [vmem:[%s6 + $0x78] sm:$0xff]
  %v56 = vld [vmem:[%s6 + $0x80] sm:$0xff]
  %v57 = vld [vmem:[%s6 + $0x88] sm:$0xff]
  %v58 = vld [vmem:[%s6 + $0x90] sm:$0xff]
  %v59 = vld [vmem:[%s6 + $0x98] sm:$0xff]
  %v60 = vld [vmem:[%s6 + $0xa0] sm:$0xff]
  %v61 = vld [vmem:[%s6 + $0xa8] sm:$0xff]
  %v62 = vld [vmem:[%s6 + $0xb0] sm:$0xff]
  %v63 = vld [vmem:[%s6 + $0xb8] sm:$0xff]
  %v64 = vld [vmem:[%s6 + $0xc0] sm:$0xff]
  %v65 = vld [vmem:[%s6 + $0xc8] sm:$0xff]
  %v66 = vld [vmem:[%s6 + $0xd0] sm:$0xff]
  %v67 = vld [vmem:[%s6 + $0xd8] sm:$0xff]
  %v68 = vld [vmem:[%s6 + $0xe0] sm:$0xff]
  %v69 = vld [vmem:[%s6 + $0xe8] sm:$0xff]
  %v70 = vld [vmem:[%s6 + $0xf0] sm:$0xff]
  %v71 = vld [vmem:[%s6 + $0xf8] sm:$0xff]
  %v72 = vld [vmem:[%s6 + $0x100] sm:$0xff]
  %v73 = vld [vmem:[%s6 + $0x108] sm:$0xff]
  %v74 = vld [vmem:[%s6 + $0x110] sm:$0xff]
  %v75 = vld [vmem:[%s6 + $0x118] sm:$0xff]
  %v76 = vld [vmem:[%s6 + $0x120] sm:$0xff]
  %v77 = vld [vmem:[%s6 + $0x128] sm:$0xff]
  %v78 = vld [vmem:[%s6 + $0x130] sm:$0xff]
  %v79 = vld [vmem:[%s6 + $0x138] sm:$0xff]
  %v80 = vld [vmem:[%s6 + $0x140] sm:$0xff]
  %v81 = vld [vmem:[%s6 + $0x148] sm:$0xff]
  %v82 = vld [vmem:[%s6 + $0x150] sm:$0xff]
  %v83 = vld [vmem:[%s6 + $0x158] sm:$0xff]
  %v84 = vld [vmem:[%s6 + $0x160] sm:$0xff]
  %v85 = vld [vmem:[%s6 + $0x168] sm:$0xff]
  %v86 = vld [vmem:[%s6 + $0x170] sm:$0xff]
  %v87 = vld [vmem:[%s6 + $0x178] sm:$0xff]
  %v88 = vld [vmem:[%s6 + $0x180] sm:$0xff]
  %v89 = vld [vmem:[%s6 + $0x188] sm:$0xff]
  %v90 = vld [vmem:[%s6 + $0x190] sm:$0xff]
  %v91 = vld [vmem:[%s6 + $0x198] sm:$0xff]
  %v92 = vld [vmem:[%s6 + $0x1a0] sm:$0xff]
  %v93 = vld [vmem:[%s6 + $0x1a8] sm:$0xff]
  %v94 = vld [vmem:[%s6 + $0x1b0] sm:$0xff]
  %v95 = vld [vmem:[%s6 + $0x1b8] sm:$0xff]
  %v96 = vld [vmem:[%s6 + $0x1c0] sm:$0xff]
  %v97 = vld [vmem:[%s6 + $0x1c8] sm:$0xff]
  %v98 = vld [vmem:[%s6 + $0x1d0] sm:$0xff]
  %v99 = vld [vmem:[%s6 + $0x1d8] sm:$0xff]
  %v100 = vld [vmem:[%s6 + $0x1e0] sm:$0xff]
  %v101 = vld [vmem:[%s6 + $0x1e8] sm:$0xff]
  %v102 = vld [vmem:[%s6 + $0x1f0] sm:$0xff]
  %v103 = vld [vmem:[%s6 + $0x1f8] sm:$0xff]
  %v104 = vld [vmem:[%s0] sm:$0x3]
  %v105 = vld [vmem:[%s1] sm:$0xff]
  %v106 = vld [vmem:[%s1 + $0x8] sm:$0xff]
  %v107 = vld [vmem:[%s1 + $0x10] sm:$0xff]
  %v108 = vld [vmem:[%s1 + $0x18] sm:$0xff]
  %v109 = vld [vmem:[%s1 + $0x20] sm:$0xff]
  %v110 = vld [vmem:[%s1 + $0x28] sm:$0xff]
  %v111 = vld [vmem:[%s1 + $0x30] sm:$0xff]
  %v112 = vld [vmem:[%s1 + $0x38] sm:$0xff]
  %v113 = vld [vmem:[%s1 + $0x40] sm:$0xff]
  %v114 = vld [vmem:[%s1 + $0x48] sm:$0xff]
  %v115 = vld [vmem:[%s1 + $0x50] sm:$0xff]
  %v116 = vld [vmem:[%s1 + $0x58] sm:$0xff]
  %v117 = vld [vmem:[%s1 + $0x60] sm:$0xff]
  %v118 = vld [vmem:[%s1 + $0x68] sm:$0xff]
  %v119 = vld [vmem:[%s1 + $0x70] sm:$0xff]
  %v120 = vld [vmem:[%s1 + $0x78] sm:$0xff]
  %v121 = vld [vmem:[%s1 + $0x80] sm:$0xff]
  %v122 = vld [vmem:[%s1 + $0x88] sm:$0xff]
  %v123 = vld [vmem:[%s1 + $0x90] sm:$0xff]
  %v124 = vld [vmem:[%s1 + $0x98] sm:$0xff]
  %v125 = vld [vmem:[%s1 + $0xa0] sm:$0xff]
  %v126 = vld [vmem:[%s1 + $0xa8] sm:$0xff]
  %v127 = vld [vmem:[%s1 + $0xb0] sm:$0xff]
  %v128 = vld [vmem:[%s1 + $0xb8] sm:$0xff]
  %v129 = vld [vmem:[%s1 + $0xc0] sm:$0xff]
  %v130 = vld [vmem:[%s1 + $0xc8] sm:$0xff]
  %v131 = vld [vmem:[%s1 + $0xd0] sm:$0xff]
  %v132 = vld [vmem:[%s1 + $0xd8] sm:$0xff]
  %v133 = vld [vmem:[%s1 + $0xe0] sm:$0xff]
  %v134 = vld [vmem:[%s1 + $0xe8] sm:$0xff]
  %v135 = vld [vmem:[%s1 + $0xf0] sm:$0xff]
  %v136 = vld [vmem:[%s1 + $0xf8] sm:$0xff]
  %v137 = vld [vmem:[%s1 + $0x100] sm:$0xff]
  %v138 = vld [vmem:[%s1 + $0x108] sm:$0xff]
  %v139 = vld [vmem:[%s1 + $0x110] sm:$0xff]
  %v140 = vld [vmem:[%s1 + $0x118] sm:$0xff]
  %v141 = vld [vmem:[%s1 + $0x120] sm:$0xff]
  %v142 = vld [vmem:[%s1 + $0x128] sm:$0xff]
  %v143 = vld [vmem:[%s1 + $0x130] sm:$0xff]
  %v144 = vld [vmem:[%s1 + $0x138] sm:$0xff]
  %v145 = vld [vmem:[%s1 + $0x140] sm:$0xff]
  %v146 = vld [vmem:[%s1 + $0x148] sm:$0xff]
  %v147 = vld [vmem:[%s1 + $0x150] sm:$0xff]
  %v148 = vld [vmem:[%s1 + $0x158] sm:$0xff]
  %v149 = vld [vmem:[%s1 + $0x160] sm:$0xff]
  %v150 = vld [vmem:[%s1 + $0x168] sm:$0xff]
  %v151 = vld [vmem:[%s1 + $0x170] sm:$0xff]
  %v152 = vld [vmem:[%s1 + $0x178] sm:$0xff]
  %v153 = vld [vmem:[%s1 + $0x180] sm:$0xff]
  %v154 = vld [vmem:[%s1 + $0x188] sm:$0xff]
  %v155 = vld [vmem:[%s1 + $0x190] sm:$0xff]
  %v156 = vld [vmem:[%s1 + $0x198] sm:$0xff]
  %v157 = vld [vmem:[%s1 + $0x1a0] sm:$0xff]
  %v158 = vld [vmem:[%s1 + $0x1a8] sm:$0xff]
  %v159 = vld [vmem:[%s1 + $0x1b0] sm:$0xff]
  %v160 = vld [vmem:[%s1 + $0x1b8] sm:$0xff]
  %v161 = vld [vmem:[%s1 + $0x1c0] sm:$0xff]
  %v162 = vld [vmem:[%s1 + $0x1c8] sm:$0xff]
  %v163 = vld [vmem:[%s1 + $0x1d0] sm:$0xff]
  %v164 = vld [vmem:[%s1 + $0x1d8] sm:$0xff]
  %v165 = vld [vmem:[%s1 + $0x1e0] sm:$0xff]
  %v166 = vld [vmem:[%s1 + $0x1e8] sm:$0xff]
  %v167 = vld [vmem:[%s1 + $0x1f0] sm:$0xff]
  %v168 = vld [vmem:[%s1 + $0x1f8] sm:$0xff]
  %169 = vmatprep.subr.mxu0 %v106
  %170 = vmatpush1.msra.mxu0 %v105
  %171 = vmatprep.subr.mxu0 %v110
  %172 = vmatpush1.msra.mxu0 %v109
  %173 = vmatprep.subr.mxu0 %v114
  %174 = vmatpush1.msra.mxu0 %v113
  %175 = vmatprep.subr.mxu0 %v118
  %176 = vmatpush1.msra.mxu0 %v117
  %177 = vmatprep.subr.mxu0 %v122
  %178 = vmatpush1.msra.mxu0 %v121
  %179 = vmatprep.subr.mxu0 %v126
  %180 = vmatpush1.msra.mxu0 %v125
  %181 = vmatprep.subr.mxu0 %v130
  %182 = vmatpush1.msra.mxu0 %v129
  %183 = vmatprep.subr.mxu0 %v134
  %184 = vmatpush1.msra.mxu0 %v133
  %185 = vmatprep.subr.mxu0 %v138
  %186 = vmatpush1.msra.mxu0 %v137
  %187 = vmatprep.subr.mxu0 %v142
  %188 = vmatpush1.msra.mxu0 %v141
  %189 = vmatprep.subr.mxu0 %v146
  %190 = vmatpush1.msra.mxu0 %v145
  %191 = vmatprep.subr.mxu0 %v150
  %192 = vmatpush1.msra.mxu0 %v149
  %193 = vmatprep.subr.mxu0 %v154
  %194 = vmatpush1.msra.mxu0 %v153
  %195 = vmatprep.subr.mxu0 %v158
  %196 = vmatpush1.msra.mxu0 %v157
  %197 = vmatprep.subr.mxu0 %v162
  %198 = vmatpush1.msra.mxu0 %v161
  %199 = vmatprep.subr.mxu0 %v166
  %200 = vmatpush1.msra.mxu0 %v165
  %201 = vmatprep.subr.mxu0 0.0
  %202 = vmatpush1.msra.mxu0 0.0
  %203 = vmatprep.subr.mxu0 0.0
  %204 = vmatpush1.msra.mxu0 0.0
  %205 = vmatprep.subr.mxu0 0.0
  %206 = vmatpush1.msra.mxu0 0.0
  %207 = vmatprep.subr.mxu0 0.0
  %208 = vmatpush1.msra.mxu0 0.0
  %209 = vmatprep.subr.mxu0 0.0
  %210 = vmatpush1.msra.mxu0 0.0
  %211 = vmatprep.subr.mxu0 0.0
  %212 = vmatpush1.msra.mxu0 0.0
  %213 = vmatprep.subr.mxu0 0.0
  %214 = vmatpush1.msra.mxu0 0.0
  %215 = vmatprep.subr.mxu0 0.0
  %216 = vmatpush1.msra.mxu0 0.0
  %217 = vmatprep.subr.mxu0 0.0
  %218 = vmatpush1.msra.mxu0 0.0
  %219 = vmatprep.subr.mxu0 0.0
  %220 = vmatpush1.msra.mxu0 0.0
  %221 = vmatprep.subr.mxu0 0.0
  %222 = vmatpush1.msra.mxu0 0.0
  %223 = vmatprep.subr.mxu0 0.0
  %224 = vmatpush1.msra.mxu0 0.0
  %225 = vmatprep.subr.mxu0 0.0
  %226 = vmatpush1.msra.mxu0 0.0
  %227 = vmatprep.subr.mxu0 0.0
  %228 = vmatpush1.msra.mxu0 0.0
  %229 = vmatprep.subr.mxu0 0.0
  %230 = vmatpush1.msra.mxu0 0.0
  %231 = vmatprep.subr.mxu0 0.0
  %232 = vmatpush1.msra.mxu0 0.0
  %233 = vmatprep.mubr.f32.mxu0 0.0
  %234 = vmatmul.mubr.f32.gmra.mrb[0].mxu0 %v104
  %v235 = vpop.f32.mrb[0].mxu0
  %v236 = vadd.f32 0.0, %v235
  %v237 = vpop.f32.mrb[0].mxu0
  %v238 = vadd.f32 0.0, %v237
  %239 = vdwg.mxu0
  %240 = vmatprep.subr.mxu0 %v108
  %241 = vmatpush1.msra.mxu0 %v107
  %242 = vmatprep.subr.mxu0 %v112
  %243 = vmatpush1.msra.mxu0 %v111
  %244 = vmatprep.subr.mxu0 %v116
  %245 = vmatpush1.msra.mxu0 %v115
  %246 = vmatprep.subr.mxu0 %v120
  %247 = vmatpush1.msra.mxu0 %v119
  %248 = vmatprep.subr.mxu0 %v124
  %249 = vmatpush1.msra.mxu0 %v123
  %250 = vmatprep.subr.mxu0 %v128
  %251 = vmatpush1.msra.mxu0 %v127
  %252 = vmatprep.subr.mxu0 %v132
  %253 = vmatpush1.msra.mxu0 %v131
  %254 = vmatprep.subr.mxu0 %v136
  %255 = vmatpush1.msra.mxu0 %v135
  %256 = vmatprep.subr.mxu0 %v140
  %257 = vmatpush1.msra.mxu0 %v139
  %258 = vmatprep.subr.mxu0 %v144
  %259 = vmatpush1.msra.mxu0 %v143
  %260 = vmatprep.subr.mxu0 %v148
  %261 = vmatpush1.msra.mxu0 %v147
  %262 = vmatprep.subr.mxu0 %v152
  %263 = vmatpush1.msra.mxu0 %v151
  %264 = vmatprep.subr.mxu0 %v156
  %265 = vmatpush1.msra.mxu0 %v155
  %266 = vmatprep.subr.mxu0 %v160
  %267 = vmatpush1.msra.mxu0 %v159
  %268 = vmatprep.subr.mxu0 %v164
  %269 = vmatpush1.msra.mxu0 %v163
  %270 = vmatprep.subr.mxu0 %v168
  %271 = vmatpush1.msra.mxu0 %v167
  %272 = vmatprep.subr.mxu0 0.0
  %273 = vmatpush1.msra.mxu0 0.0
  %274 = vmatprep.subr.mxu0 0.0
  %275 = vmatpush1.msra.mxu0 0.0
  %276 = vmatprep.subr.mxu0 0.0
  %277 = vmatpush1.msra.mxu0 0.0
  %278 = vmatprep.subr.mxu0 0.0
  %279 = vmatpush1.msra.mxu0 0.0
  %280 = vmatprep.subr.mxu0 0.0
  %281 = vmatpush1.msra.mxu0 0.0
  %282 = vmatprep.subr.mxu0 0.0
  %283 = vmatpush1.msra.mxu0 0.0
  %284 = vmatprep.subr.mxu0 0.0
  %285 = vmatpush1.msra.mxu0 0.0
  %286 = vmatprep.subr.mxu0 0.0
  %287 = vmatpush1.msra.mxu0 0.0
  %288 = vmatprep.subr.mxu0 0.0
  %289 = vmatpush1.msra.mxu0 0.0
  %290 = vmatprep.subr.mxu0 0.0
  %291 = vmatpush1.msra.mxu0 0.0
  %292 = vmatprep.subr.mxu0 0.0
  %293 = vmatpush1.msra.mxu0 0.0
  %294 = vmatprep.subr.mxu0 0.0
  %295 = vmatpush1.msra.mxu0 0.0
  %296 = vmatprep.subr.mxu0 0.0
  %297 = vmatpush1.msra.mxu0 0.0
  %298 = vmatprep.subr.mxu0 0.0
  %299 = vmatpush1.msra.mxu0 0.0
  %300 = vmatprep.subr.mxu0 0.0
  %301 = vmatpush1.msra.mxu0 0.0
  %302 = vmatprep.subr.mxu0 0.0
  %303 = vmatpush1.msra.mxu0 0.0
  %304 = vmatprep.mubr.f32.mxu0 0.0
  %305 = vmatmul.mubr.f32.gmra.mrb[0].mxu0 %v104
  %v306 = vpop.f32.mrb[0].mxu0
  %v307 = vadd.f32 0.0, %v306
  %v308 = vpop.f32.mrb[0].mxu0
  %v309 = vadd.f32 0.0, %v308
  %310 = vdwg.mxu0
  %v311 = vld [vmem:[%s3] sm:$0x1]
  %v312 = vld [vmem:[%s4] sm:$0x1]
  %vm313 = vcmask 1041408
  %v314 = vsel %vm313, %v236, 0.0
  %v315 = vrot.slane %v314, 4
  %v316 = vadd.f32 %v314, %v315
  %v317 = vrot.slane %v316, 2
  %v318 = vadd.f32 %v316, %v317
  %v319 = vrot.slane %v318, 1
  %v320 = vadd.f32 %v318, %v319
  %v321 = vsel %vm313, %v238, 0.0
  %v322 = vrot.slane %v321, 4
  %v323 = vadd.f32 %v321, %v322
  %v324 = vrot.slane %v323, 2
  %v325 = vadd.f32 %v323, %v324
  %v326 = vrot.slane %v325, 1
  %v327 = vadd.f32 %v325, %v326
  %v328 = vsel %vm313, %v307, 0.0
  %v329 = vrot.slane %v328, 4
  %v330 = vadd.f32 %v328, %v329
  %v331 = vrot.slane %v330, 2
  %v332 = vadd.f32 %v330, %v331
  %v333 = vrot.slane %v332, 1
  %v334 = vadd.f32 %v332, %v333
  %v335 = vsel %vm313, %v309, 0.0
  %v336 = vrot.slane %v335, 4
  %v337 = vadd.f32 %v335, %v336
  %v338 = vrot.slane %v337, 2
  %v339 = vadd.f32 %v337, %v338
  %v340 = vrot.slane %v339, 1
  %v341 = vadd.f32 %v339, %v340
  %v342 = vmul.f32 %v236, %v236
  %v343 = vmul.f32 %v238, %v238
  %v344 = vmul.f32 %v307, %v307
  %v345 = vmul.f32 %v309, %v309
  %v346 = vsel %vm313, %v342, 0.0
  %v347 = vrot.slane %v346, 4
  %v348 = vadd.f32 %v346, %v347
  %v349 = vrot.slane %v348, 2
  %v350 = vadd.f32 %v348, %v349
  %v351 = vrot.slane %v350, 1
  %v352 = vadd.f32 %v350, %v351
  %v353 = vsel %vm313, %v343, 0.0
  %v354 = vrot.slane %v353, 4
  %v355 = vadd.f32 %v353, %v354
  %v356 = vrot.slane %v355, 2
  %v357 = vadd.f32 %v355, %v356
  %v358 = vrot.slane %v357, 1
  %v359 = vadd.f32 %v357, %v358
  %v360 = vsel %vm313, %v344, 0.0
  %v361 = vrot.slane %v360, 4
  %v362 = vadd.f32 %v360, %v361
  %v363 = vrot.slane %v362, 2
  %v364 = vadd.f32 %v362, %v363
  %v365 = vrot.slane %v364, 1
  %v366 = vadd.f32 %v364, %v365
  %v367 = vsel %vm313, %v345, 0.0
  %v368 = vrot.slane %v367, 4
  %v369 = vadd.f32 %v367, %v368
  %v370 = vrot.slane %v369, 2
  %v371 = vadd.f32 %v369, %v370
  %v372 = vrot.slane %v371, 1
  %v373 = vadd.f32 %v371, %v372
  %374 = vmatprep.subr.mxu0 0.0
  %375 = vmatpush1.msra.mxu0 %v40
  %376 = vmatprep.subr.mxu0 0.0
  %377 = vmatpush1.msra.mxu0 %v41
  %378 = vmatprep.subr.mxu0 0.0
  %379 = vmatpush1.msra.mxu0 %v42
  %380 = vmatprep.subr.mxu0 0.0
  %381 = vmatpush1.msra.mxu0 %v43
  %382 = vmatprep.subr.mxu0 0.0
  %383 = vmatpush1.msra.mxu0 %v44
  %384 = vmatprep.subr.mxu0 0.0
  %385 = vmatpush1.msra.mxu0 %v45
  %386 = vmatprep.subr.mxu0 0.0
  %387 = vmatpush1.msra.mxu0 %v46
  %388 = vmatprep.subr.mxu0 0.0
  %389 = vmatpush1.msra.mxu0 %v47
  %390 = vmatprep.subr.mxu0 0.0
  %391 = vmatpush1.msra.mxu0 %v48
  %392 = vmatprep.subr.mxu0 0.0
  %393 = vmatpush1.msra.mxu0 %v49
  %394 = vmatprep.subr.mxu0 0.0
  %395 = vmatpush1.msra.mxu0 %v50
  %396 = vmatprep.subr.mxu0 0.0
  %397 = vmatpush1.msra.mxu0 %v51
  %398 = vmatprep.subr.mxu0 0.0
  %399 = vmatpush1.msra.mxu0 %v52
  %400 = vmatprep.subr.mxu0 0.0
  %401 = vmatpush1.msra.mxu0 %v53
  %402 = vmatprep.subr.mxu0 0.0
  %403 = vmatpush1.msra.mxu0 %v54
  %404 = vmatprep.subr.mxu0 0.0
  %405 = vmatpush1.msra.mxu0 %v55
  %406 = vmatprep.subr.mxu0 0.0
  %407 = vmatpush1.msra.mxu0 %v56
  %408 = vmatprep.subr.mxu0 0.0
  %409 = vmatpush1.msra.mxu0 %v57
  %410 = vmatprep.subr.mxu0 0.0
  %411 = vmatpush1.msra.mxu0 %v58
  %412 = vmatprep.subr.mxu0 0.0
  %413 = vmatpush1.msra.mxu0 %v59
  %414 = vmatprep.subr.mxu0 0.0
  %415 = vmatpush1.msra.mxu0 %v60
  %416 = vmatprep.subr.mxu0 0.0
  %417 = vmatpush1.msra.mxu0 %v61
  %418 = vmatprep.subr.mxu0 0.0
  %419 = vmatpush1.msra.mxu0 %v62
  %420 = vmatprep.subr.mxu0 0.0
  %421 = vmatpush1.msra.mxu0 %v63
  %422 = vmatprep.subr.mxu0 0.0
  %423 = vmatpush1.msra.mxu0 %v64
  %424 = vmatprep.subr.mxu0 0.0
  %425 = vmatpush1.msra.mxu0 %v65
  %426 = vmatprep.subr.mxu0 0.0
  %427 = vmatpush1.msra.mxu0 %v66
  %428 = vmatprep.subr.mxu0 0.0
  %429 = vmatpush1.msra.mxu0 %v67
  %430 = vmatprep.subr.mxu0 0.0
  %431 = vmatpush1.msra.mxu0 %v68
  %432 = vmatprep.subr.mxu0 0.0
  %433 = vmatpush1.msra.mxu0 %v69
  %434 = vmatprep.subr.mxu0 0.0
  %435 = vmatpush1.msra.mxu0 %v70
  %436 = vmatprep.subr.mxu0 0.0
  %437 = vmatpush1.msra.mxu0 %v71
  %438 = vmatprep.mubr.f32.mxu0 %v327
  %439 = vmatmul.mubr.f32.gmra.mrb[0].mxu0 %v320
  %v440 = vpop.f32.mrb[0].mxu0
  %v441 = vadd.f32 0.0, %v440
  %v442 = vpop.f32.mrb[0].mxu0
  %443 = vdwg.mxu0
  %444 = vmatprep.subr.mxu0 0.0
  %445 = vmatpush1.msra.mxu0 %v72
  %446 = vmatprep.subr.mxu0 0.0
  %447 = vmatpush1.msra.mxu0 %v73
  %448 = vmatprep.subr.mxu0 0.0
  %449 = vmatpush1.msra.mxu0 %v74
  %450 = vmatprep.subr.mxu0 0.0
  %451 = vmatpush1.msra.mxu0 %v75
  %452 = vmatprep.subr.mxu0 0.0
  %453 = vmatpush1.msra.mxu0 %v76
  %454 = vmatprep.subr.mxu0 0.0
  %455 = vmatpush1.msra.mxu0 %v77
  %456 = vmatprep.subr.mxu0 0.0
  %457 = vmatpush1.msra.mxu0 %v78
  %458 = vmatprep.subr.mxu0 0.0
  %459 = vmatpush1.msra.mxu0 %v79
  %460 = vmatprep.subr.mxu0 0.0
  %461 = vmatpush1.msra.mxu0 %v80
  %462 = vmatprep.subr.mxu0 0.0
  %463 = vmatpush1.msra.mxu0 %v81
  %464 = vmatprep.subr.mxu0 0.0
  %465 = vmatpush1.msra.mxu0 %v82
  %466 = vmatprep.subr.mxu0 0.0
  %467 = vmatpush1.msra.mxu0 %v83
  %468 = vmatprep.subr.mxu0 0.0
  %469 = vmatpush1.msra.mxu0 %v84
  %470 = vmatprep.subr.mxu0 0.0
  %471 = vmatpush1.msra.mxu0 %v85
  %472 = vmatprep.subr.mxu0 0.0
  %473 = vmatpush1.msra.mxu0 %v86
  %474 = vmatprep.subr.mxu0 0.0
  %475 = vmatpush1.msra.mxu0 %v87
  %476 = vmatprep.subr.mxu0 0.0
  %477 = vmatpush1.msra.mxu0 %v88
  %478 = vmatprep.subr.mxu0 0.0
  %479 = vmatpush1.msra.mxu0 %v89
  %480 = vmatprep.subr.mxu0 0.0
  %481 = vmatpush1.msra.mxu0 %v90
  %482 = vmatprep.subr.mxu0 0.0
  %483 = vmatpush1.msra.mxu0 %v91
  %484 = vmatprep.subr.mxu0 0.0
  %485 = vmatpush1.msra.mxu0 %v92
  %486 = vmatprep.subr.mxu0 0.0
  %487 = vmatpush1.msra.mxu0 %v93
  %488 = vmatprep.subr.mxu0 0.0
  %489 = vmatpush1.msra.mxu0 %v94
  %490 = vmatprep.subr.mxu0 0.0
  %491 = vmatpush1.msra.mxu0 %v95
  %492 = vmatprep.subr.mxu0 0.0
  %493 = vmatpush1.msra.mxu0 %v96
  %494 = vmatprep.subr.mxu0 0.0
  %495 = vmatpush1.msra.mxu0 %v97
  %496 = vmatprep.subr.mxu0 0.0
  %497 = vmatpush1.msra.mxu0 %v98
  %498 = vmatprep.subr.mxu0 0.0
  %499 = vmatpush1.msra.mxu0 %v99
  %500 = vmatprep.subr.mxu0 0.0
  %501 = vmatpush1.msra.mxu0 %v100
  %502 = vmatprep.subr.mxu0 0.0
  %503 = vmatpush1.msra.mxu0 %v101
  %504 = vmatprep.subr.mxu0 0.0
  %505 = vmatpush1.msra.mxu0 %v102
  %506 = vmatprep.subr.mxu0 0.0
  %507 = vmatpush1.msra.mxu0 %v103
  %508 = vmatprep.mubr.f32.mxu0 %v341
  %509 = vmatmul.mubr.f32.gmra.mrb[0].mxu0 %v334
  %v510 = vpop.f32.mrb[0].mxu0
  %v511 = vadd.f32 %v441, %v510
  %v512 = vpop.f32.mrb[0].mxu0
  %513 = vdwg.mxu0
  %v514 = vmul.f32 %v511, 0.015625
  %515 = vmatprep.subr.mxu0 0.0
  %516 = vmatpush1.msra.mxu0 %v40
  %517 = vmatprep.subr.mxu0 0.0
  %518 = vmatpush1.msra.mxu0 %v41
  %519 = vmatprep.subr.mxu0 0.0
  %520 = vmatpush1.msra.mxu0 %v42
  %521 = vmatprep.subr.mxu0 0.0
  %522 = vmatpush1.msra.mxu0 %v43
  %523 = vmatprep.subr.mxu0 0.0
  %524 = vmatpush1.msra.mxu0 %v44
  %525 = vmatprep.subr.mxu0 0.0
  %526 = vmatpush1.msra.mxu0 %v45
  %527 = vmatprep.subr.mxu0 0.0
  %528 = vmatpush1.msra.mxu0 %v46
  %529 = vmatprep.subr.mxu0 0.0
  %530 = vmatpush1.msra.mxu0 %v47
  %531 = vmatprep.subr.mxu0 0.0
  %532 = vmatpush1.msra.mxu0 %v48
  %533 = vmatprep.subr.mxu0 0.0
  %534 = vmatpush1.msra.mxu0 %v49
  %535 = vmatprep.subr.mxu0 0.0
  %536 = vmatpush1.msra.mxu0 %v50
  %537 = vmatprep.subr.mxu0 0.0
  %538 = vmatpush1.msra.mxu0 %v51
  %539 = vmatprep.subr.mxu0 0.0
  %540 = vmatpush1.msra.mxu0 %v52
  %541 = vmatprep.subr.mxu0 0.0
  %542 = vmatpush1.msra.mxu0 %v53
  %543 = vmatprep.subr.mxu0 0.0
  %544 = vmatpush1.msra.mxu0 %v54
  %545 = vmatprep.subr.mxu0 0.0
  %546 = vmatpush1.msra.mxu0 %v55
  %547 = vmatprep.subr.mxu0 0.0
  %548 = vmatpush1.msra.mxu0 %v56
  %549 = vmatprep.subr.mxu0 0.0
  %550 = vmatpush1.msra.mxu0 %v57
  %551 = vmatprep.subr.mxu0 0.0
  %552 = vmatpush1.msra.mxu0 %v58
  %553 = vmatprep.subr.mxu0 0.0
  %554 = vmatpush1.msra.mxu0 %v59
  %555 = vmatprep.subr.mxu0 0.0
  %556 = vmatpush1.msra.mxu0 %v60
  %557 = vmatprep.subr.mxu0 0.0
  %558 = vmatpush1.msra.mxu0 %v61
  %559 = vmatprep.subr.mxu0 0.0
  %560 = vmatpush1.msra.mxu0 %v62
  %561 = vmatprep.subr.mxu0 0.0
  %562 = vmatpush1.msra.mxu0 %v63
  %563 = vmatprep.subr.mxu0 0.0
  %564 = vmatpush1.msra.mxu0 %v64
  %565 = vmatprep.subr.mxu0 0.0
  %566 = vmatpush1.msra.mxu0 %v65
  %567 = vmatprep.subr.mxu0 0.0
  %568 = vmatpush1.msra.mxu0 %v66
  %569 = vmatprep.subr.mxu0 0.0
  %570 = vmatpush1.msra.mxu0 %v67
  %571 = vmatprep.subr.mxu0 0.0
  %572 = vmatpush1.msra.mxu0 %v68
  %573 = vmatprep.subr.mxu0 0.0
  %574 = vmatpush1.msra.mxu0 %v69
  %575 = vmatprep.subr.mxu0 0.0
  %576 = vmatpush1.msra.mxu0 %v70
  %577 = vmatprep.subr.mxu0 0.0
  %578 = vmatpush1.msra.mxu0 %v71
  %579 = vmatprep.mubr.f32.mxu0 %v359
  %580 = vmatmul.mubr.f32.gmra.mrb[0].mxu0 %v352
  %v581 = vpop.f32.mrb[0].mxu0
  %v582 = vadd.f32 0.0, %v581
  %v583 = vpop.f32.mrb[0].mxu0
  %584 = vdwg.mxu0
  %585 = vmatprep.subr.mxu0 0.0
  %586 = vmatpush1.msra.mxu0 %v72
  %587 = vmatprep.subr.mxu0 0.0
  %588 = vmatpush1.msra.mxu0 %v73
  %589 = vmatprep.subr.mxu0 0.0
  %590 = vmatpush1.msra.mxu0 %v74
  %591 = vmatprep.subr.mxu0 0.0
  %592 = vmatpush1.msra.mxu0 %v75
  %593 = vmatprep.subr.mxu0 0.0
  %594 = vmatpush1.msra.mxu0 %v76
  %595 = vmatprep.subr.mxu0 0.0
  %596 = vmatpush1.msra.mxu0 %v77
  %597 = vmatprep.subr.mxu0 0.0
  %598 = vmatpush1.msra.mxu0 %v78
  %599 = vmatprep.subr.mxu0 0.0
  %600 = vmatpush1.msra.mxu0 %v79
  %601 = vmatprep.subr.mxu0 0.0
  %602 = vmatpush1.msra.mxu0 %v80
  %603 = vmatprep.subr.mxu0 0.0
  %604 = vmatpush1.msra.mxu0 %v81
  %605 = vmatprep.subr.mxu0 0.0
  %606 = vmatpush1.msra.mxu0 %v82
  %607 = vmatprep.subr.mxu0 0.0
  %608 = vmatpush1.msra.mxu0 %v83
  %609 = vmatprep.subr.mxu0 0.0
  %610 = vmatpush1.msra.mxu0 %v84
  %611 = vmatprep.subr.mxu0 0.0
  %612 = vmatpush1.msra.mxu0 %v85
  %613 = vmatprep.subr.mxu0 0.0
  %614 = vmatpush1.msra.mxu0 %v86
  %615 = vmatprep.subr.mxu0 0.0
  %616 = vmatpush1.msra.mxu0 %v87
  %617 = vmatprep.subr.mxu0 0.0
  %618 = vmatpush1.msra.mxu0 %v88
  %619 = vmatprep.subr.mxu0 0.0
  %620 = vmatpush1.msra.mxu0 %v89
  %621 = vmatprep.subr.mxu0 0.0
  %622 = vmatpush1.msra.mxu0 %v90
  %623 = vmatprep.subr.mxu0 0.0
  %624 = vmatpush1.msra.mxu0 %v91
  %625 = vmatprep.subr.mxu0 0.0
  %626 = vmatpush1.msra.mxu0 %v92
  %627 = vmatprep.subr.mxu0 0.0
  %628 = vmatpush1.msra.mxu0 %v93
  %629 = vmatprep.subr.mxu0 0.0
  %630 = vmatpush1.msra.mxu0 %v94
  %631 = vmatprep.subr.mxu0 0.0
  %632 = vmatpush1.msra.mxu0 %v95
  %633 = vmatprep.subr.mxu0 0.0
  %634 = vmatpush1.msra.mxu0 %v96
  %635 = vmatprep.subr.mxu0 0.0
  %636 = vmatpush1.msra.mxu0 %v97
  %637 = vmatprep.subr.mxu0 0.0
  %638 = vmatpush1.msra.mxu0 %v98
  %639 = vmatprep.subr.mxu0 0.0
  %640 = vmatpush1.msra.mxu0 %v99
  %641 = vmatprep.subr.mxu0 0.0
  %642 = vmatpush1.msra.mxu0 %v100
  %643 = vmatprep.subr.mxu0 0.0
  %644 = vmatpush1.msra.mxu0 %v101
  %645 = vmatprep.subr.mxu0 0.0
  %646 = vmatpush1.msra.mxu0 %v102
  %647 = vmatprep.subr.mxu0 0.0
  %648 = vmatpush1.msra.mxu0 %v103
  %649 = vmatprep.mubr.f32.mxu0 %v373
  %650 = vmatmul.mubr.f32.gmra.mrb[0].mxu0 %v366
  %v651 = vpop.f32.mrb[0].mxu0
  %v652 = vadd.f32 %v582, %v651
  %v653 = vpop.f32.mrb[0].mxu0
  %654 = vdwg.mxu0
  %v655 = vmul.f32 %v652, 0.015625
  %v656 = vmul.f32 %v514, %v514
  %v657 = vsub.f32 %v655, %v656
  %v658 = vadd.f32 %v657, 1e-05
  %v659 = vrsqrt.pop %v658
  %v660 = vmul.f32 %v311, %v659
  %v661 = vmul.f32 %v514, %v660
  %v662 = vsub.f32 %v312, %v661
  %vm663 = vcmask 130048
  %v665 = vsel %vm663, %v660, 0
  %667 = vmatprep.subr.mxu0 %v33
  %668 = vmatpush1.msra.mxu0 %v32
  %669 = vmatprep.subr.mxu0 %v37
  %670 = vmatpush1.msra.mxu0 %v36
  %671 = vmatprep.subr.mxu0 0.0
  %672 = vmatpush1.msra.mxu0 0.0
  %673 = vmatprep.subr.mxu0 0.0
  %674 = vmatpush1.msra.mxu0 0.0
  %675 = vmatprep.subr.mxu0 0.0
  %676 = vmatpush1.msra.mxu0 0.0
  %677 = vmatprep.subr.mxu0 0.0
  %678 = vmatpush1.msra.mxu0 0.0
  %679 = vmatprep.subr.mxu0 0.0
  %680 = vmatpush1.msra.mxu0 0.0
  %681 = vmatprep.subr.mxu0 0.0
  %682 = vmatpush1.msra.mxu0 0.0
  %683 = vmatprep.subr.mxu0 0.0
  %684 = vmatpush1.msra.mxu0 0.0
  %685 = vmatprep.subr.mxu0 0.0
  %686 = vmatpush1.msra.mxu0 0.0
  %687 = vmatprep.subr.mxu0 0.0
  %688 = vmatpush1.msra.mxu0 0.0
  %689 = vmatprep.subr.mxu0 0.0
  %690 = vmatpush1.msra.mxu0 0.0
  %691 = vmatprep.subr.mxu0 0.0
  %692 = vmatpush1.msra.mxu0 0.0
  %693 = vmatprep.subr.mxu0 0.0
  %694 = vmatpush1.msra.mxu0 0.0
  %695 = vmatprep.subr.mxu0 0.0
  %696 = vmatpush1.msra.mxu0 0.0
  %697 = vmatprep.subr.mxu0 0.0
  %698 = vmatpush1.msra.mxu0 0.0
  %699 = vmatprep.subr.mxu0 0.0
  %700 = vmatpush1.msra.mxu0 0.0
  %701 = vmatprep.subr.mxu0 0.0
  %702 = vmatpush1.msra.mxu0 0.0
  %703 = vmatprep.subr.mxu0 0.0
  %704 = vmatpush1.msra.mxu0 0.0
  %705 = vmatprep.subr.mxu0 0.0
  %706 = vmatpush1.msra.mxu0 0.0
  %707 = vmatprep.subr.mxu0 0.0
  %708 = vmatpush1.msra.mxu0 0.0
  %709 = vmatprep.subr.mxu0 0.0
  %710 = vmatpush1.msra.mxu0 0.0
  %711 = vmatprep.subr.mxu0 0.0
  %712 = vmatpush1.msra.mxu0 0.0
  %713 = vmatprep.subr.mxu0 0.0
  %714 = vmatpush1.msra.mxu0 0.0
  %715 = vmatprep.subr.mxu0 0.0
  %716 = vmatpush1.msra.mxu0 0.0
  %717 = vmatprep.subr.mxu0 0.0
  %718 = vmatpush1.msra.mxu0 0.0
  %719 = vmatprep.subr.mxu0 0.0
  %720 = vmatpush1.msra.mxu0 0.0
  %721 = vmatprep.subr.mxu0 0.0
  %722 = vmatpush1.msra.mxu0 0.0
  %723 = vmatprep.subr.mxu0 0.0
  %724 = vmatpush1.msra.mxu0 0.0
  %725 = vmatprep.subr.mxu0 0.0
  %726 = vmatpush1.msra.mxu0 0.0
  %727 = vmatprep.subr.mxu0 0.0
  %728 = vmatpush1.msra.mxu0 0.0
  %729 = vmatprep.subr.mxu0 0.0
  %730 = vmatpush1.msra.mxu0 0.0
  %731 = vmatprep.mubr.f32.mxu0 0.0
  %732 = vmatmul.mubr.f32.gmra.mrb[0].mxu0 %v665
  %v733 = vpop.f32.mrb[0].mxu0
  %v734 = vadd.f32 0.0, %v733
  %v735 = vpop.f32.mrb[0].mxu0
  %v736 = vadd.f32 0.0, %v735
  %737 = vdwg.mxu0
  %738 = vmatprep.subr.mxu0 %v35
  %739 = vmatpush1.msra.mxu0 %v34
  %740 = vmatprep.subr.mxu0 %v39
  %741 = vmatpush1.msra.mxu0 %v38
  %742 = vmatprep.subr.mxu0 0.0
  %743 = vmatpush1.msra.mxu0 0.0
  %744 = vmatprep.subr.mxu0 0.0
  %745 = vmatpush1.msra.mxu0 0.0
  %746 = vmatprep.subr.mxu0 0.0
  %747 = vmatpush1.msra.mxu0 0.0
  %748 = vmatprep.subr.mxu0 0.0
  %749 = vmatpush1.msra.mxu0 0.0
  %750 = vmatprep.subr.mxu0 0.0
  %751 = vmatpush1.msra.mxu0 0.0
  %752 = vmatprep.subr.mxu0 0.0
  %753 = vmatpush1.msra.mxu0 0.0
  %754 = vmatprep.subr.mxu0 0.0
  %755 = vmatpush1.msra.mxu0 0.0
  %756 = vmatprep.subr.mxu0 0.0
  %757 = vmatpush1.msra.mxu0 0.0
  %758 = vmatprep.subr.mxu0 0.0
  %759 = vmatpush1.msra.mxu0 0.0
  %760 = vmatprep.subr.mxu0 0.0
  %761 = vmatpush1.msra.mxu0 0.0
  %762 = vmatprep.subr.mxu0 0.0
  %763 = vmatpush1.msra.mxu0 0.0
  %764 = vmatprep.subr.mxu0 0.0
  %765 = vmatpush1.msra.mxu0 0.0
  %766 = vmatprep.subr.mxu0 0.0
  %767 = vmatpush1.msra.mxu0 0.0
  %768 = vmatprep.subr.mxu0 0.0
  %769 = vmatpush1.msra.mxu0 0.0
  %770 = vmatprep.subr.mxu0 0.0
  %771 = vmatpush1.msra.mxu0 0.0
  %772 = vmatprep.subr.mxu0 0.0
  %773 = vmatpush1.msra.mxu0 0.0
  %774 = vmatprep.subr.mxu0 0.0
  %775 = vmatpush1.msra.mxu0 0.0
  %776 = vmatprep.subr.mxu0 0.0
  %777 = vmatpush1.msra.mxu0 0.0
  %778 = vmatprep.subr.mxu0 0.0
  %779 = vmatpush1.msra.mxu0 0.0
  %780 = vmatprep.subr.mxu0 0.0
  %781 = vmatpush1.msra.mxu0 0.0
  %782 = vmatprep.subr.mxu0 0.0
  %783 = vmatpush1.msra.mxu0 0.0
  %784 = vmatprep.subr.mxu0 0.0
  %785 = vmatpush1.msra.mxu0 0.0
  %786 = vmatprep.subr.mxu0 0.0
  %787 = vmatpush1.msra.mxu0 0.0
  %788 = vmatprep.subr.mxu0 0.0
  %789 = vmatpush1.msra.mxu0 0.0
  %790 = vmatprep.subr.mxu0 0.0
  %791 = vmatpush1.msra.mxu0 0.0
  %792 = vmatprep.subr.mxu0 0.0
  %793 = vmatpush1.msra.mxu0 0.0
  %794 = vmatprep.subr.mxu0 0.0
  %795 = vmatpush1.msra.mxu0 0.0
  %796 = vmatprep.subr.mxu0 0.0
  %797 = vmatpush1.msra.mxu0 0.0
  %798 = vmatprep.subr.mxu0 0.0
  %799 = vmatpush1.msra.mxu0 0.0
  %800 = vmatprep.subr.mxu0 0.0
  %801 = vmatpush1.msra.mxu0 0.0
  %802 = vmatprep.mubr.f32.mxu0 0.0
  %803 = vmatmul.mubr.f32.gmra.mrb[0].mxu0 %v665
  %v804 = vpop.f32.mrb[0].mxu0
  %v805 = vadd.f32 0.0, %v804
  %v806 = vpop.f32.mrb[0].mxu0
  %v807 = vadd.f32 0.0, %v806
  %808 = vdwg.mxu0
  %v809 = vlaneseq
  %v810 = vshrl.u32 %v809, 7
  %v811 = vsub.s32 0, %v810
  %v812 = vrot.slane %v734, %v811
  %v813 = vlaneseq
  %v814 = vshrl.u32 %v813, 7
  %v815 = vsub.s32 0, %v814
  %v816 = vrot.slane %v736, %v815
  %v817 = vlaneseq
  %v818 = vshrl.u32 %v817, 7
  %v819 = vsub.s32 0, %v818
  %v820 = vrot.slane %v805, %v819
  %v821 = vlaneseq
  %v822 = vshrl.u32 %v821, 7
  %v823 = vsub.s32 0, %v822
  %v824 = vrot.slane %v807, %v823
  %v825 = vmul.f32 %v236, %v812
  %v826 = vmul.f32 %v238, %v816
  %v827 = vmul.f32 %v307, %v820
  %v828 = vmul.f32 %v309, %v824
  %v830 = vsel %vm663, %v662, 0
  %832 = vmatprep.subr.mxu0 %v33
  %833 = vmatpush1.msra.mxu0 %v32
  %834 = vmatprep.subr.mxu0 %v37
  %835 = vmatpush1.msra.mxu0 %v36
  %836 = vmatprep.subr.mxu0 0.0
  %837 = vmatpush1.msra.mxu0 0.0
  %838 = vmatprep.subr.mxu0 0.0
  %839 = vmatpush1.msra.mxu0 0.0
  %840 = vmatprep.subr.mxu0 0.0
  %841 = vmatpush1.msra.mxu0 0.0
  %842 = vmatprep.subr.mxu0 0.0
  %843 = vmatpush1.msra.mxu0 0.0
  %844 = vmatprep.subr.mxu0 0.0
  %845 = vmatpush1.msra.mxu0 0.0
  %846 = vmatprep.subr.mxu0 0.0
  %847 = vmatpush1.msra.mxu0 0.0
  %848 = vmatprep.subr.mxu0 0.0
  %849 = vmatpush1.msra.mxu0 0.0
  %850 = vmatprep.subr.mxu0 0.0
  %851 = vmatpush1.msra.mxu0 0.0
  %852 = vmatprep.subr.mxu0 0.0
  %853 = vmatpush1.msra.mxu0 0.0
  %854 = vmatprep.subr.mxu0 0.0
  %855 = vmatpush1.msra.mxu0 0.0
  %856 = vmatprep.subr.mxu0 0.0
  %857 = vmatpush1.msra.mxu0 0.0
  %858 = vmatprep.subr.mxu0 0.0
  %859 = vmatpush1.msra.mxu0 0.0
  %860 = vmatprep.subr.mxu0 0.0
  %861 = vmatpush1.msra.mxu0 0.0
  %862 = vmatprep.subr.mxu0 0.0
  %863 = vmatpush1.msra.mxu0 0.0
  %864 = vmatprep.subr.mxu0 0.0
  %865 = vmatpush1.msra.mxu0 0.0
  %866 = vmatprep.subr.mxu0 0.0
  %867 = vmatpush1.msra.mxu0 0.0
  %868 = vmatprep.subr.mxu0 0.0
  %869 = vmatpush1.msra.mxu0 0.0
  %870 = vmatprep.subr.mxu0 0.0
  %871 = vmatpush1.msra.mxu0 0.0
  %872 = vmatprep.subr.mxu0 0.0
  %873 = vmatpush1.msra.mxu0 0.0
  %874 = vmatprep.subr.mxu0 0.0
  %875 = vmatpush1.msra.mxu0 0.0
  %876 = vmatprep.subr.mxu0 0.0
  %877 = vmatpush1.msra.mxu0 0.0
  %878 = vmatprep.subr.mxu0 0.0
  %879 = vmatpush1.msra.mxu0 0.0
  %880 = vmatprep.subr.mxu0 0.0
  %881 = vmatpush1.msra.mxu0 0.0
  %882 = vmatprep.subr.mxu0 0.0
  %883 = vmatpush1.msra.mxu0 0.0
  %884 = vmatprep.subr.mxu0 0.0
  %885 = vmatpush1.msra.mxu0 0.0
  %886 = vmatprep.subr.mxu0 0.0
  %887 = vmatpush1.msra.mxu0 0.0
  %888 = vmatprep.subr.mxu0 0.0
  %889 = vmatpush1.msra.mxu0 0.0
  %890 = vmatprep.subr.mxu0 0.0
  %891 = vmatpush1.msra.mxu0 0.0
  %892 = vmatprep.subr.mxu0 0.0
  %893 = vmatpush1.msra.mxu0 0.0
  %894 = vmatprep.subr.mxu0 0.0
  %895 = vmatpush1.msra.mxu0 0.0
  %896 = vmatprep.mubr.f32.mxu0 0.0
  %897 = vmatmul.mubr.f32.gmra.mrb[0].mxu0 %v830
  %v898 = vpop.f32.mrb[0].mxu0
  %v899 = vadd.f32 0.0, %v898
  %v900 = vpop.f32.mrb[0].mxu0
  %v901 = vadd.f32 0.0, %v900
  %902 = vdwg.mxu0
  %903 = vmatprep.subr.mxu0 %v35
  %904 = vmatpush1.msra.mxu0 %v34
  %905 = vmatprep.subr.mxu0 %v39
  %906 = vmatpush1.msra.mxu0 %v38
  %907 = vmatprep.subr.mxu0 0.0
  %908 = vmatpush1.msra.mxu0 0.0
  %909 = vmatprep.subr.mxu0 0.0
  %910 = vmatpush1.msra.mxu0 0.0
  %911 = vmatprep.subr.mxu0 0.0
  %912 = vmatpush1.msra.mxu0 0.0
  %913 = vmatprep.subr.mxu0 0.0
  %914 = vmatpush1.msra.mxu0 0.0
  %915 = vmatprep.subr.mxu0 0.0
  %916 = vmatpush1.msra.mxu0 0.0
  %917 = vmatprep.subr.mxu0 0.0
  %918 = vmatpush1.msra.mxu0 0.0
  %919 = vmatprep.subr.mxu0 0.0
  %920 = vmatpush1.msra.mxu0 0.0
  %921 = vmatprep.subr.mxu0 0.0
  %922 = vmatpush1.msra.mxu0 0.0
  %923 = vmatprep.subr.mxu0 0.0
  %924 = vmatpush1.msra.mxu0 0.0
  %925 = vmatprep.subr.mxu0 0.0
  %926 = vmatpush1.msra.mxu0 0.0
  %927 = vmatprep.subr.mxu0 0.0
  %928 = vmatpush1.msra.mxu0 0.0
  %929 = vmatprep.subr.mxu0 0.0
  %930 = vmatpush1.msra.mxu0 0.0
  %931 = vmatprep.subr.mxu0 0.0
  %932 = vmatpush1.msra.mxu0 0.0
  %933 = vmatprep.subr.mxu0 0.0
  %934 = vmatpush1.msra.mxu0 0.0
  %935 = vmatprep.subr.mxu0 0.0
  %936 = vmatpush1.msra.mxu0 0.0
  %937 = vmatprep.subr.mxu0 0.0
  %938 = vmatpush1.msra.mxu0 0.0
  %939 = vmatprep.subr.mxu0 0.0
  %940 = vmatpush1.msra.mxu0 0.0
  %941 = vmatprep.subr.mxu0 0.0
  %942 = vmatpush1.msra.mxu0 0.0
  %943 = vmatprep.subr.mxu0 0.0
  %944 = vmatpush1.msra.mxu0 0.0
  %945 = vmatprep.subr.mxu0 0.0
  %946 = vmatpush1.msra.mxu0 0.0
  %947 = vmatprep.subr.mxu0 0.0
  %948 = vmatpush1.msra.mxu0 0.0
  %949 = vmatprep.subr.mxu0 0.0
  %950 = vmatpush1.msra.mxu0 0.0
  %951 = vmatprep.subr.mxu0 0.0
  %952 = vmatpush1.msra.mxu0 0.0
  %953 = vmatprep.subr.mxu0 0.0
  %954 = vmatpush1.msra.mxu0 0.0
  %955 = vmatprep.subr.mxu0 0.0
  %956 = vmatpush1.msra.mxu0 0.0
  %957 = vmatprep.subr.mxu0 0.0
  %958 = vmatpush1.msra.mxu0 0.0
  %959 = vmatprep.subr.mxu0 0.0
  %960 = vmatpush1.msra.mxu0 0.0
  %961 = vmatprep.subr.mxu0 0.0
  %962 = vmatpush1.msra.mxu0 0.0
  %963 = vmatprep.subr.mxu0 0.0
  %964 = vmatpush1.msra.mxu0 0.0
  %965 = vmatprep.subr.mxu0 0.0
  %966 = vmatpush1.msra.mxu0 0.0
  %967 = vmatprep.mubr.f32.mxu0 0.0
  %968 = vmatmul.mubr.f32.gmra.mrb[0].mxu0 %v830
  %v969 = vpop.f32.mrb[0].mxu0
  %v970 = vadd.f32 0.0, %v969
  %v971 = vpop.f32.mrb[0].mxu0
  %v972 = vadd.f32 0.0, %v971
  %973 = vdwg.mxu0
  %v974 = vlaneseq
  %v975 = vshrl.u32 %v974, 7
  %v976 = vsub.s32 0, %v975
  %v977 = vrot.slane %v899, %v976
  %v978 = vlaneseq
  %v979 = vshrl.u32 %v978, 7
  %v980 = vsub.s32 0, %v979
  %v981 = vrot.slane %v901, %v980
  %v982 = vlaneseq
  %v983 = vshrl.u32 %v982, 7
  %v984 = vsub.s32 0, %v983
  %v985 = vrot.slane %v970, %v984
  %v986 = vlaneseq
  %v987 = vshrl.u32 %v986, 7
  %v988 = vsub.s32 0, %v987
  %v989 = vrot.slane %v972, %v988
  %v990 = vadd.f32 %v825, %v977
  %v991 = vadd.f32 %v826, %v981
  %v992 = vadd.f32 %v827, %v985
  %v993 = vadd.f32 %v828, %v989
  %v994 = vmax.f32 %v990, 0.0
  %v995 = vmax.f32 %v991, 0.0
  %v996 = vmax.f32 %v992, 0.0
  %v997 = vmax.f32 %v993, 0.0
  %v998 = vld [vmem:[%s2] sm:$0xff]
  %v999 = vld [vmem:[%s2 + $0x8] sm:$0xff]
  %v1000 = vld [vmem:[%s2 + $0x10] sm:$0xff]
  %v1001 = vld [vmem:[%s2 + $0x18] sm:$0xff]
  %v1002 = vld [vmem:[%s2 + $0x20] sm:$0xff]
  %v1003 = vld [vmem:[%s2 + $0x28] sm:$0xff]
  %v1004 = vld [vmem:[%s2 + $0x30] sm:$0xff]
  %v1005 = vld [vmem:[%s2 + $0x38] sm:$0xff]
  %v1006 = vld [vmem:[%s2 + $0x40] sm:$0xff]
  %v1007 = vld [vmem:[%s2 + $0x48] sm:$0xff]
  %v1008 = vld [vmem:[%s2 + $0x50] sm:$0xff]
  %v1009 = vld [vmem:[%s2 + $0x58] sm:$0xff]
  %v1010 = vld [vmem:[%s2 + $0x60] sm:$0xff]
  %v1011 = vld [vmem:[%s2 + $0x68] sm:$0xff]
  %v1012 = vld [vmem:[%s2 + $0x70] sm:$0xff]
  %v1013 = vld [vmem:[%s2 + $0x78] sm:$0xff]
  %v1014 = vld [vmem:[%s2 + $0x80] sm:$0xff]
  %v1015 = vld [vmem:[%s2 + $0x88] sm:$0xff]
  %v1016 = vld [vmem:[%s2 + $0x90] sm:$0xff]
  %v1017 = vld [vmem:[%s2 + $0x98] sm:$0xff]
  %v1018 = vld [vmem:[%s2 + $0xa0] sm:$0xff]
  %v1019 = vld [vmem:[%s2 + $0xa8] sm:$0xff]
  %v1020 = vld [vmem:[%s2 + $0xb0] sm:$0xff]
  %v1021 = vld [vmem:[%s2 + $0xb8] sm:$0xff]
  %v1022 = vld [vmem:[%s2 + $0xc0] sm:$0xff]
  %v1023 = vld [vmem:[%s2 + $0xc8] sm:$0xff]
  %v1024 = vld [vmem:[%s2 + $0xd0] sm:$0xff]
  %v1025 = vld [vmem:[%s2 + $0xd8] sm:$0xff]
  %v1026 = vld [vmem:[%s2 + $0xe0] sm:$0xff]
  %v1027 = vld [vmem:[%s2 + $0xe8] sm:$0xff]
  %v1028 = vld [vmem:[%s2 + $0xf0] sm:$0xff]
  %v1029 = vld [vmem:[%s2 + $0xf8] sm:$0xff]
  %v1030 = vld [vmem:[%s2 + $0x100] sm:$0xff]
  %v1031 = vld [vmem:[%s2 + $0x108] sm:$0xff]
  %v1032 = vld [vmem:[%s2 + $0x110] sm:$0xff]
  %v1033 = vld [vmem:[%s2 + $0x118] sm:$0xff]
  %v1034 = vld [vmem:[%s2 + $0x120] sm:$0xff]
  %v1035 = vld [vmem:[%s2 + $0x128] sm:$0xff]
  %v1036 = vld [vmem:[%s2 + $0x130] sm:$0xff]
  %v1037 = vld [vmem:[%s2 + $0x138] sm:$0xff]
  %v1038 = vld [vmem:[%s2 + $0x140] sm:$0xff]
  %v1039 = vld [vmem:[%s2 + $0x148] sm:$0xff]
  %v1040 = vld [vmem:[%s2 + $0x150] sm:$0xff]
  %v1041 = vld [vmem:[%s2 + $0x158] sm:$0xff]
  %v1042 = vld [vmem:[%s2 + $0x160] sm:$0xff]
  %v1043 = vld [vmem:[%s2 + $0x168] sm:$0xff]
  %v1044 = vld [vmem:[%s2 + $0x170] sm:$0xff]
  %v1045 = vld [vmem:[%s2 + $0x178] sm:$0xff]
  %v1046 = vld [vmem:[%s2 + $0x180] sm:$0xff]
  %v1047 = vld [vmem:[%s2 + $0x188] sm:$0xff]
  %v1048 = vld [vmem:[%s2 + $0x190] sm:$0xff]
  %v1049 = vld [vmem:[%s2 + $0x198] sm:$0xff]
  %v1050 = vld [vmem:[%s2 + $0x1a0] sm:$0xff]
  %v1051 = vld [vmem:[%s2 + $0x1a8] sm:$0xff]
  %v1052 = vld [vmem:[%s2 + $0x1b0] sm:$0xff]
  %v1053 = vld [vmem:[%s2 + $0x1b8] sm:$0xff]
  %v1054 = vld [vmem:[%s2 + $0x1c0] sm:$0xff]
  %v1055 = vld [vmem:[%s2 + $0x1c8] sm:$0xff]
  %v1056 = vld [vmem:[%s2 + $0x1d0] sm:$0xff]
  %v1057 = vld [vmem:[%s2 + $0x1d8] sm:$0xff]
  %v1058 = vld [vmem:[%s2 + $0x1e0] sm:$0xff]
  %v1059 = vld [vmem:[%s2 + $0x1e8] sm:$0xff]
  %v1060 = vld [vmem:[%s2 + $0x1f0] sm:$0xff]
  %v1061 = vld [vmem:[%s2 + $0x1f8] sm:$0xff]
  %v1062 = vld [vmem:[%s2 + $0x200] sm:$0xff]
  %v1063 = vld [vmem:[%s2 + $0x208] sm:$0xff]
  %v1064 = vld [vmem:[%s2 + $0x210] sm:$0xff]
  %v1065 = vld [vmem:[%s2 + $0x218] sm:$0xff]
  %v1066 = vld [vmem:[%s2 + $0x220] sm:$0xff]
  %v1067 = vld [vmem:[%s2 + $0x228] sm:$0xff]
  %v1068 = vld [vmem:[%s2 + $0x230] sm:$0xff]
  %v1069 = vld [vmem:[%s2 + $0x238] sm:$0xff]
  %v1070 = vld [vmem:[%s2 + $0x240] sm:$0xff]
  %v1071 = vld [vmem:[%s2 + $0x248] sm:$0xff]
  %v1072 = vld [vmem:[%s2 + $0x250] sm:$0xff]
  %v1073 = vld [vmem:[%s2 + $0x258] sm:$0xff]
  %v1074 = vld [vmem:[%s2 + $0x260] sm:$0xff]
  %v1075 = vld [vmem:[%s2 + $0x268] sm:$0xff]
  %v1076 = vld [vmem:[%s2 + $0x270] sm:$0xff]
  %v1077 = vld [vmem:[%s2 + $0x278] sm:$0xff]
  %v1078 = vld [vmem:[%s2 + $0x280] sm:$0xff]
  %v1079 = vld [vmem:[%s2 + $0x288] sm:$0xff]
  %v1080 = vld [vmem:[%s2 + $0x290] sm:$0xff]
  %v1081 = vld [vmem:[%s2 + $0x298] sm:$0xff]
  %v1082 = vld [vmem:[%s2 + $0x2a0] sm:$0xff]
  %v1083 = vld [vmem:[%s2 + $0x2a8] sm:$0xff]
  %v1084 = vld [vmem:[%s2 + $0x2b0] sm:$0xff]
  %v1085 = vld [vmem:[%s2 + $0x2b8] sm:$0xff]
  %v1086 = vld [vmem:[%s2 + $0x2c0] sm:$0xff]
  %v1087 = vld [vmem:[%s2 + $0x2c8] sm:$0xff]
  %v1088 = vld [vmem:[%s2 + $0x2d0] sm:$0xff]
  %v1089 = vld [vmem:[%s2 + $0x2d8] sm:$0xff]
  %v1090 = vld [vmem:[%s2 + $0x2e0] sm:$0xff]
  %v1091 = vld [vmem:[%s2 + $0x2e8] sm:$0xff]
  %v1092 = vld [vmem:[%s2 + $0x2f0] sm:$0xff]
  %v1093 = vld [vmem:[%s2 + $0x2f8] sm:$0xff]
  %v1094 = vld [vmem:[%s2 + $0x300] sm:$0xff]
  %v1095 = vld [vmem:[%s2 + $0x308] sm:$0xff]
  %v1096 = vld [vmem:[%s2 + $0x310] sm:$0xff]
  %v1097 = vld [vmem:[%s2 + $0x318] sm:$0xff]
  %v1098 = vld [vmem:[%s2 + $0x320] sm:$0xff]
  %v1099 = vld [vmem:[%s2 + $0x328] sm:$0xff]
  %v1100 = vld [vmem:[%s2 + $0x330] sm:$0xff]
  %v1101 = vld [vmem:[%s2 + $0x338] sm:$0xff]
  %v1102 = vld [vmem:[%s2 + $0x340] sm:$0xff]
  %v1103 = vld [vmem:[%s2 + $0x348] sm:$0xff]
  %v1104 = vld [vmem:[%s2 + $0x350] sm:$0xff]
  %v1105 = vld [vmem:[%s2 + $0x358] sm:$0xff]
  %v1106 = vld [vmem:[%s2 + $0x360] sm:$0xff]
  %v1107 = vld [vmem:[%s2 + $0x368] sm:$0xff]
  %v1108 = vld [vmem:[%s2 + $0x370] sm:$0xff]
  %v1109 = vld [vmem:[%s2 + $0x378] sm:$0xff]
  %v1110 = vld [vmem:[%s2 + $0x380] sm:$0xff]
  %v1111 = vld [vmem:[%s2 + $0x388] sm:$0xff]
  %v1112 = vld [vmem:[%s2 + $0x390] sm:$0xff]
  %v1113 = vld [vmem:[%s2 + $0x398] sm:$0xff]
  %v1114 = vld [vmem:[%s2 + $0x3a0] sm:$0xff]
  %v1115 = vld [vmem:[%s2 + $0x3a8] sm:$0xff]
  %v1116 = vld [vmem:[%s2 + $0x3b0] sm:$0xff]
  %v1117 = vld [vmem:[%s2 + $0x3b8] sm:$0xff]
  %v1118 = vld [vmem:[%s2 + $0x3c0] sm:$0xff]
  %v1119 = vld [vmem:[%s2 + $0x3c8] sm:$0xff]
  %v1120 = vld [vmem:[%s2 + $0x3d0] sm:$0xff]
  %v1121 = vld [vmem:[%s2 + $0x3d8] sm:$0xff]
  %v1122 = vld [vmem:[%s2 + $0x3e0] sm:$0xff]
  %v1123 = vld [vmem:[%s2 + $0x3e8] sm:$0xff]
  %v1124 = vld [vmem:[%s2 + $0x3f0] sm:$0xff]
  %v1125 = vld [vmem:[%s2 + $0x3f8] sm:$0xff]
  %v1126 = vld [vmem:[%s2 + $0x400] sm:$0xff]
  %v1127 = vld [vmem:[%s2 + $0x408] sm:$0xff]
  %v1128 = vld [vmem:[%s2 + $0x410] sm:$0xff]
  %v1129 = vld [vmem:[%s2 + $0x418] sm:$0xff]
  %v1130 = vld [vmem:[%s2 + $0x420] sm:$0xff]
  %v1131 = vld [vmem:[%s2 + $0x428] sm:$0xff]
  %v1132 = vld [vmem:[%s2 + $0x430] sm:$0xff]
  %v1133 = vld [vmem:[%s2 + $0x438] sm:$0xff]
  %v1134 = vld [vmem:[%s2 + $0x440] sm:$0xff]
  %v1135 = vld [vmem:[%s2 + $0x448] sm:$0xff]
  %v1136 = vld [vmem:[%s2 + $0x450] sm:$0xff]
  %v1137 = vld [vmem:[%s2 + $0x458] sm:$0xff]
  %v1138 = vld [vmem:[%s2 + $0x460] sm:$0xff]
  %v1139 = vld [vmem:[%s2 + $0x468] sm:$0xff]
  %v1140 = vld [vmem:[%s2 + $0x470] sm:$0xff]
  %v1141 = vld [vmem:[%s2 + $0x478] sm:$0xff]
  %v1142 = vld [vmem:[%s2 + $0x480] sm:$0xff]
  %v1143 = vld [vmem:[%s2 + $0x488] sm:$0xff]
  %v1144 = vld [vmem:[%s2 + $0x490] sm:$0xff]
  %v1145 = vld [vmem:[%s2 + $0x498] sm:$0xff]
  %v1146 = vld [vmem:[%s2 + $0x4a0] sm:$0xff]
  %v1147 = vld [vmem:[%s2 + $0x4a8] sm:$0xff]
  %v1148 = vld [vmem:[%s2 + $0x4b0] sm:$0xff]
  %v1149 = vld [vmem:[%s2 + $0x4b8] sm:$0xff]
  %v1150 = vld [vmem:[%s2 + $0x4c0] sm:$0xff]
  %v1151 = vld [vmem:[%s2 + $0x4c8] sm:$0xff]
  %v1152 = vld [vmem:[%s2 + $0x4d0] sm:$0xff]
  %v1153 = vld [vmem:[%s2 + $0x4d8] sm:$0xff]
  %v1154 = vld [vmem:[%s2 + $0x4e0] sm:$0xff]
  %v1155 = vld [vmem:[%s2 + $0x4e8] sm:$0xff]
  %v1156 = vld [vmem:[%s2 + $0x4f0] sm:$0xff]
  %v1157 = vld [vmem:[%s2 + $0x4f8] sm:$0xff]
  %v1158 = vld [vmem:[%s2 + $0x500] sm:$0xff]
  %v1159 = vld [vmem:[%s2 + $0x508] sm:$0xff]
  %v1160 = vld [vmem:[%s2 + $0x510] sm:$0xff]
  %v1161 = vld [vmem:[%s2 + $0x518] sm:$0xff]
  %v1162 = vld [vmem:[%s2 + $0x520] sm:$0xff]
  %v1163 = vld [vmem:[%s2 + $0x528] sm:$0xff]
  %v1164 = vld [vmem:[%s2 + $0x530] sm:$0xff]
  %v1165 = vld [vmem:[%s2 + $0x538] sm:$0xff]
  %v1166 = vld [vmem:[%s2 + $0x540] sm:$0xff]
  %v1167 = vld [vmem:[%s2 + $0x548] sm:$0xff]
  %v1168 = vld [vmem:[%s2 + $0x550] sm:$0xff]
  %v1169 = vld [vmem:[%s2 + $0x558] sm:$0xff]
  %v1170 = vld [vmem:[%s2 + $0x560] sm:$0xff]
  %v1171 = vld [vmem:[%s2 + $0x568] sm:$0xff]
  %v1172 = vld [vmem:[%s2 + $0x570] sm:$0xff]
  %v1173 = vld [vmem:[%s2 + $0x578] sm:$0xff]
  %v1174 = vld [vmem:[%s2 + $0x580] sm:$0xff]
  %v1175 = vld [vmem:[%s2 + $0x588] sm:$0xff]
  %v1176 = vld [vmem:[%s2 + $0x590] sm:$0xff]
  %v1177 = vld [vmem:[%s2 + $0x598] sm:$0xff]
  %v1178 = vld [vmem:[%s2 + $0x5a0] sm:$0xff]
  %v1179 = vld [vmem:[%s2 + $0x5a8] sm:$0xff]
  %v1180 = vld [vmem:[%s2 + $0x5b0] sm:$0xff]
  %v1181 = vld [vmem:[%s2 + $0x5b8] sm:$0xff]
  %v1182 = vld [vmem:[%s2 + $0x5c0] sm:$0xff]
  %v1183 = vld [vmem:[%s2 + $0x5c8] sm:$0xff]
  %v1184 = vld [vmem:[%s2 + $0x5d0] sm:$0xff]
  %v1185 = vld [vmem:[%s2 + $0x5d8] sm:$0xff]
  %v1186 = vld [vmem:[%s2 + $0x5e0] sm:$0xff]
  %v1187 = vld [vmem:[%s2 + $0x5e8] sm:$0xff]
  %v1188 = vld [vmem:[%s2 + $0x5f0] sm:$0xff]
  %v1189 = vld [vmem:[%s2 + $0x5f8] sm:$0xff]
  %v1190 = vld [vmem:[%s2 + $0x600] sm:$0xff]
  %v1191 = vld [vmem:[%s2 + $0x608] sm:$0xff]
  %v1192 = vld [vmem:[%s2 + $0x610] sm:$0xff]
  %v1193 = vld [vmem:[%s2 + $0x618] sm:$0xff]
  %v1194 = vld [vmem:[%s2 + $0x620] sm:$0xff]
  %v1195 = vld [vmem:[%s2 + $0x628] sm:$0xff]
  %v1196 = vld [vmem:[%s2 + $0x630] sm:$0xff]
  %v1197 = vld [vmem:[%s2 + $0x638] sm:$0xff]
  %v1198 = vld [vmem:[%s2 + $0x640] sm:$0xff]
  %v1199 = vld [vmem:[%s2 + $0x648] sm:$0xff]
  %v1200 = vld [vmem:[%s2 + $0x650] sm:$0xff]
  %v1201 = vld [vmem:[%s2 + $0x658] sm:$0xff]
  %v1202 = vld [vmem:[%s2 + $0x660] sm:$0xff]
  %v1203 = vld [vmem:[%s2 + $0x668] sm:$0xff]
  %v1204 = vld [vmem:[%s2 + $0x670] sm:$0xff]
  %v1205 = vld [vmem:[%s2 + $0x678] sm:$0xff]
  %v1206 = vld [vmem:[%s2 + $0x680] sm:$0xff]
  %v1207 = vld [vmem:[%s2 + $0x688] sm:$0xff]
  %v1208 = vld [vmem:[%s2 + $0x690] sm:$0xff]
  %v1209 = vld [vmem:[%s2 + $0x698] sm:$0xff]
  %v1210 = vld [vmem:[%s2 + $0x6a0] sm:$0xff]
  %v1211 = vld [vmem:[%s2 + $0x6a8] sm:$0xff]
  %v1212 = vld [vmem:[%s2 + $0x6b0] sm:$0xff]
  %v1213 = vld [vmem:[%s2 + $0x6b8] sm:$0xff]
  %v1214 = vld [vmem:[%s2 + $0x6c0] sm:$0xff]
  %v1215 = vld [vmem:[%s2 + $0x6c8] sm:$0xff]
  %v1216 = vld [vmem:[%s2 + $0x6d0] sm:$0xff]
  %v1217 = vld [vmem:[%s2 + $0x6d8] sm:$0xff]
  %v1218 = vld [vmem:[%s2 + $0x6e0] sm:$0xff]
  %v1219 = vld [vmem:[%s2 + $0x6e8] sm:$0xff]
  %v1220 = vld [vmem:[%s2 + $0x6f0] sm:$0xff]
  %v1221 = vld [vmem:[%s2 + $0x6f8] sm:$0xff]
  %v1222 = vld [vmem:[%s2 + $0x700] sm:$0xff]
  %v1223 = vld [vmem:[%s2 + $0x708] sm:$0xff]
  %v1224 = vld [vmem:[%s2 + $0x710] sm:$0xff]
  %v1225 = vld [vmem:[%s2 + $0x718] sm:$0xff]
  %v1226 = vld [vmem:[%s2 + $0x720] sm:$0xff]
  %v1227 = vld [vmem:[%s2 + $0x728] sm:$0xff]
  %v1228 = vld [vmem:[%s2 + $0x730] sm:$0xff]
  %v1229 = vld [vmem:[%s2 + $0x738] sm:$0xff]
  %v1230 = vld [vmem:[%s2 + $0x740] sm:$0xff]
  %v1231 = vld [vmem:[%s2 + $0x748] sm:$0xff]
  %v1232 = vld [vmem:[%s2 + $0x750] sm:$0xff]
  %v1233 = vld [vmem:[%s2 + $0x758] sm:$0xff]
  %v1234 = vld [vmem:[%s2 + $0x760] sm:$0xff]
  %v1235 = vld [vmem:[%s2 + $0x768] sm:$0xff]
  %v1236 = vld [vmem:[%s2 + $0x770] sm:$0xff]
  %v1237 = vld [vmem:[%s2 + $0x778] sm:$0xff]
  %v1238 = vld [vmem:[%s2 + $0x780] sm:$0xff]
  %v1239 = vld [vmem:[%s2 + $0x788] sm:$0xff]
  %v1240 = vld [vmem:[%s2 + $0x790] sm:$0xff]
  %v1241 = vld [vmem:[%s2 + $0x798] sm:$0xff]
  %v1242 = vld [vmem:[%s2 + $0x7a0] sm:$0xff]
  %v1243 = vld [vmem:[%s2 + $0x7a8] sm:$0xff]
  %v1244 = vld [vmem:[%s2 + $0x7b0] sm:$0xff]
  %v1245 = vld [vmem:[%s2 + $0x7b8] sm:$0xff]
  %v1246 = vld [vmem:[%s2 + $0x7c0] sm:$0xff]
  %v1247 = vld [vmem:[%s2 + $0x7c8] sm:$0xff]
  %v1248 = vld [vmem:[%s2 + $0x7d0] sm:$0xff]
  %v1249 = vld [vmem:[%s2 + $0x7d8] sm:$0xff]
  %v1250 = vld [vmem:[%s2 + $0x7e0] sm:$0xff]
  %v1251 = vld [vmem:[%s2 + $0x7e8] sm:$0xff]
  %v1252 = vld [vmem:[%s2 + $0x7f0] sm:$0xff]
  %v1253 = vld [vmem:[%s2 + $0x7f8] sm:$0xff]
  %1254 = vmatprep.subr.mxu0 %v999
  %1255 = vmatpush1.msra.mxu0 %v998
  %1256 = vmatprep.subr.mxu0 %v1003
  %1257 = vmatpush1.msra.mxu0 %v1002
  %1258 = vmatprep.subr.mxu0 %v1007
  %1259 = vmatpush1.msra.mxu0 %v1006
  %1260 = vmatprep.subr.mxu0 %v1011
  %1261 = vmatpush1.msra.mxu0 %v1010
  %1262 = vmatprep.subr.mxu0 %v1015
  %1263 = vmatpush1.msra.mxu0 %v1014
  %1264 = vmatprep.subr.mxu0 %v1019
  %1265 = vmatpush1.msra.mxu0 %v1018
  %1266 = vmatprep.subr.mxu0 %v1023
  %1267 = vmatpush1.msra.mxu0 %v1022
  %1268 = vmatprep.subr.mxu0 %v1027
  %1269 = vmatpush1.msra.mxu0 %v1026
  %1270 = vmatprep.subr.mxu0 %v1031
  %1271 = vmatpush1.msra.mxu0 %v1030
  %1272 = vmatprep.subr.mxu0 %v1035
  %1273 = vmatpush1.msra.mxu0 %v1034
  %1274 = vmatprep.subr.mxu0 %v1039
  %1275 = vmatpush1.msra.mxu0 %v1038
  %1276 = vmatprep.subr.mxu0 %v1043
  %1277 = vmatpush1.msra.mxu0 %v1042
  %1278 = vmatprep.subr.mxu0 %v1047
  %1279 = vmatpush1.msra.mxu0 %v1046
  %1280 = vmatprep.subr.mxu0 %v1051
  %1281 = vmatpush1.msra.mxu0 %v1050
  %1282 = vmatprep.subr.mxu0 %v1055
  %1283 = vmatpush1.msra.mxu0 %v1054
  %1284 = vmatprep.subr.mxu0 %v1059
  %1285 = vmatpush1.msra.mxu0 %v1058
  %1286 = vmatprep.subr.mxu0 %v1063
  %1287 = vmatpush1.msra.mxu0 %v1062
  %1288 = vmatprep.subr.mxu0 %v1067
  %1289 = vmatpush1.msra.mxu0 %v1066
  %1290 = vmatprep.subr.mxu0 %v1071
  %1291 = vmatpush1.msra.mxu0 %v1070
  %1292 = vmatprep.subr.mxu0 %v1075
  %1293 = vmatpush1.msra.mxu0 %v1074
  %1294 = vmatprep.subr.mxu0 %v1079
  %1295 = vmatpush1.msra.mxu0 %v1078
  %1296 = vmatprep.subr.mxu0 %v1083
  %1297 = vmatpush1.msra.mxu0 %v1082
  %1298 = vmatprep.subr.mxu0 %v1087
  %1299 = vmatpush1.msra.mxu0 %v1086
  %1300 = vmatprep.subr.mxu0 %v1091
  %1301 = vmatpush1.msra.mxu0 %v1090
  %1302 = vmatprep.subr.mxu0 %v1095
  %1303 = vmatpush1.msra.mxu0 %v1094
  %1304 = vmatprep.subr.mxu0 %v1099
  %1305 = vmatpush1.msra.mxu0 %v1098
  %1306 = vmatprep.subr.mxu0 %v1103
  %1307 = vmatpush1.msra.mxu0 %v1102
  %1308 = vmatprep.subr.mxu0 %v1107
  %1309 = vmatpush1.msra.mxu0 %v1106
  %1310 = vmatprep.subr.mxu0 %v1111
  %1311 = vmatpush1.msra.mxu0 %v1110
  %1312 = vmatprep.subr.mxu0 %v1115
  %1313 = vmatpush1.msra.mxu0 %v1114
  %1314 = vmatprep.subr.mxu0 %v1119
  %1315 = vmatpush1.msra.mxu0 %v1118
  %1316 = vmatprep.subr.mxu0 %v1123
  %1317 = vmatpush1.msra.mxu0 %v1122
  %1318 = vmatprep.mubr.f32.mxu0 %v995
  %1319 = vmatmul.mubr.f32.gmra.mrb[0].mxu0 %v994
  %v1320 = vpop.f32.mrb[0].mxu0
  %v1321 = vadd.f32 0.0, %v1320
  %v1322 = vpop.f32.mrb[0].mxu0
  %v1323 = vadd.f32 0.0, %v1322
  %1324 = vdwg.mxu0
  %1325 = vmatprep.subr.mxu0 %v1127
  %1326 = vmatpush1.msra.mxu0 %v1126
  %1327 = vmatprep.subr.mxu0 %v1131
  %1328 = vmatpush1.msra.mxu0 %v1130
  %1329 = vmatprep.subr.mxu0 %v1135
  %1330 = vmatpush1.msra.mxu0 %v1134
  %1331 = vmatprep.subr.mxu0 %v1139
  %1332 = vmatpush1.msra.mxu0 %v1138
  %1333 = vmatprep.subr.mxu0 %v1143
  %1334 = vmatpush1.msra.mxu0 %v1142
  %1335 = vmatprep.subr.mxu0 %v1147
  %1336 = vmatpush1.msra.mxu0 %v1146
  %1337 = vmatprep.subr.mxu0 %v1151
  %1338 = vmatpush1.msra.mxu0 %v1150
  %1339 = vmatprep.subr.mxu0 %v1155
  %1340 = vmatpush1.msra.mxu0 %v1154
  %1341 = vmatprep.subr.mxu0 %v1159
  %1342 = vmatpush1.msra.mxu0 %v1158
  %1343 = vmatprep.subr.mxu0 %v1163
  %1344 = vmatpush1.msra.mxu0 %v1162
  %1345 = vmatprep.subr.mxu0 %v1167
  %1346 = vmatpush1.msra.mxu0 %v1166
  %1347 = vmatprep.subr.mxu0 %v1171
  %1348 = vmatpush1.msra.mxu0 %v1170
  %1349 = vmatprep.subr.mxu0 %v1175
  %1350 = vmatpush1.msra.mxu0 %v1174
  %1351 = vmatprep.subr.mxu0 %v1179
  %1352 = vmatpush1.msra.mxu0 %v1178
  %1353 = vmatprep.subr.mxu0 %v1183
  %1354 = vmatpush1.msra.mxu0 %v1182
  %1355 = vmatprep.subr.mxu0 %v1187
  %1356 = vmatpush1.msra.mxu0 %v1186
  %1357 = vmatprep.subr.mxu0 %v1191
  %1358 = vmatpush1.msra.mxu0 %v1190
  %1359 = vmatprep.subr.mxu0 %v1195
  %1360 = vmatpush1.msra.mxu0 %v1194
  %1361 = vmatprep.subr.mxu0 %v1199
  %1362 = vmatpush1.msra.mxu0 %v1198
  %1363 = vmatprep.subr.mxu0 %v1203
  %1364 = vmatpush1.msra.mxu0 %v1202
  %1365 = vmatprep.subr.mxu0 %v1207
  %1366 = vmatpush1.msra.mxu0 %v1206
  %1367 = vmatprep.subr.mxu0 %v1211
  %1368 = vmatpush1.msra.mxu0 %v1210
  %1369 = vmatprep.subr.mxu0 %v1215
  %1370 = vmatpush1.msra.mxu0 %v1214
  %1371 = vmatprep.subr.mxu0 %v1219
  %1372 = vmatpush1.msra.mxu0 %v1218
  %1373 = vmatprep.subr.mxu0 %v1223
  %1374 = vmatpush1.msra.mxu0 %v1222
  %1375 = vmatprep.subr.mxu0 %v1227
  %1376 = vmatpush1.msra.mxu0 %v1226
  %1377 = vmatprep.subr.mxu0 %v1231
  %1378 = vmatpush1.msra.mxu0 %v1230
  %1379 = vmatprep.subr.mxu0 %v1235
  %1380 = vmatpush1.msra.mxu0 %v1234
  %1381 = vmatprep.subr.mxu0 %v1239
  %1382 = vmatpush1.msra.mxu0 %v1238
  %1383 = vmatprep.subr.mxu0 %v1243
  %1384 = vmatpush1.msra.mxu0 %v1242
  %1385 = vmatprep.subr.mxu0 %v1247
  %1386 = vmatpush1.msra.mxu0 %v1246
  %1387 = vmatprep.subr.mxu0 %v1251
  %1388 = vmatpush1.msra.mxu0 %v1250
  %1389 = vmatprep.mubr.f32.mxu0 %v997
  %1390 = vmatmul.mubr.f32.gmra.mrb[0].mxu0 %v996
  %v1391 = vpop.f32.mrb[0].mxu0
  %v1392 = vadd.f32 %v1321, %v1391
  %v1393 = vpop.f32.mrb[0].mxu0
  %v1394 = vadd.f32 %v1323, %v1393
  %1395 = vdwg.mxu0
  %1396 = vmatprep.subr.mxu0 %v1001
  %1397 = vmatpush1.msra.mxu0 %v1000
  %1398 = vmatprep.subr.mxu0 %v1005
  %1399 = vmatpush1.msra.mxu0 %v1004
  %1400 = vmatprep.subr.mxu0 %v1009
  %1401 = vmatpush1.msra.mxu0 %v1008
  %1402 = vmatprep.subr.mxu0 %v1013
  %1403 = vmatpush1.msra.mxu0 %v1012
  %1404 = vmatprep.subr.mxu0 %v1017
  %1405 = vmatpush1.msra.mxu0 %v1016
  %1406 = vmatprep.subr.mxu0 %v1021
  %1407 = vmatpush1.msra.mxu0 %v1020
  %1408 = vmatprep.subr.mxu0 %v1025
  %1409 = vmatpush1.msra.mxu0 %v1024
  %1410 = vmatprep.subr.mxu0 %v1029
  %1411 = vmatpush1.msra.mxu0 %v1028
  %1412 = vmatprep.subr.mxu0 %v1033
  %1413 = vmatpush1.msra.mxu0 %v1032
  %1414 = vmatprep.subr.mxu0 %v1037
  %1415 = vmatpush1.msra.mxu0 %v1036
  %1416 = vmatprep.subr.mxu0 %v1041
  %1417 = vmatpush1.msra.mxu0 %v1040
  %1418 = vmatprep.subr.mxu0 %v1045
  %1419 = vmatpush1.msra.mxu0 %v1044
  %1420 = vmatprep.subr.mxu0 %v1049
  %1421 = vmatpush1.msra.mxu0 %v1048
  %1422 = vmatprep.subr.mxu0 %v1053
  %1423 = vmatpush1.msra.mxu0 %v1052
  %1424 = vmatprep.subr.mxu0 %v1057
  %1425 = vmatpush1.msra.mxu0 %v1056
  %1426 = vmatprep.subr.mxu0 %v1061
  %1427 = vmatpush1.msra.mxu0 %v1060
  %1428 = vmatprep.subr.mxu0 %v1065
  %1429 = vmatpush1.msra.mxu0 %v1064
  %1430 = vmatprep.subr.mxu0 %v1069
  %1431 = vmatpush1.msra.mxu0 %v1068
  %1432 = vmatprep.subr.mxu0 %v1073
  %1433 = vmatpush1.msra.mxu0 %v1072
  %1434 = vmatprep.subr.mxu0 %v1077
  %1435 = vmatpush1.msra.mxu0 %v1076
  %1436 = vmatprep.subr.mxu0 %v1081
  %1437 = vmatpush1.msra.mxu0 %v1080
  %1438 = vmatprep.subr.mxu0 %v1085
  %1439 = vmatpush1.msra.mxu0 %v1084
  %1440 = vmatprep.subr.mxu0 %v1089
  %1441 = vmatpush1.msra.mxu0 %v1088
  %1442 = vmatprep.subr.mxu0 %v1093
  %1443 = vmatpush1.msra.mxu0 %v1092
  %1444 = vmatprep.subr.mxu0 %v1097
  %1445 = vmatpush1.msra.mxu0 %v1096
  %1446 = vmatprep.subr.mxu0 %v1101
  %1447 = vmatpush1.msra.mxu0 %v1100
  %1448 = vmatprep.subr.mxu0 %v1105
  %1449 = vmatpush1.msra.mxu0 %v1104
  %1450 = vmatprep.subr.mxu0 %v1109
  %1451 = vmatpush1.msra.mxu0 %v1108
  %1452 = vmatprep.subr.mxu0 %v1113
  %1453 = vmatpush1.msra.mxu0 %v1112
  %1454 = vmatprep.subr.mxu0 %v1117
  %1455 = vmatpush1.msra.mxu0 %v1116
  %1456 = vmatprep.subr.mxu0 %v1121
  %1457 = vmatpush1.msra.mxu0 %v1120
  %1458 = vmatprep.subr.mxu0 %v1125
  %1459 = vmatpush1.msra.mxu0 %v1124
  %1460 = vmatprep.mubr.f32.mxu0 %v995
  %1461 = vmatmul.mubr.f32.gmra.mrb[0].mxu0 %v994
  %v1462 = vpop.f32.mrb[0].mxu0
  %v1463 = vadd.f32 0.0, %v1462
  %v1464 = vpop.f32.mrb[0].mxu0
  %v1465 = vadd.f32 0.0, %v1464
  %1466 = vdwg.mxu0
  %1467 = vmatprep.subr.mxu0 %v1129
  %1468 = vmatpush1.msra.mxu0 %v1128
  %1469 = vmatprep.subr.mxu0 %v1133
  %1470 = vmatpush1.msra.mxu0 %v1132
  %1471 = vmatprep.subr.mxu0 %v1137
  %1472 = vmatpush1.msra.mxu0 %v1136
  %1473 = vmatprep.subr.mxu0 %v1141
  %1474 = vmatpush1.msra.mxu0 %v1140
  %1475 = vmatprep.subr.mxu0 %v1145
  %1476 = vmatpush1.msra.mxu0 %v1144
  %1477 = vmatprep.subr.mxu0 %v1149
  %1478 = vmatpush1.msra.mxu0 %v1148
  %1479 = vmatprep.subr.mxu0 %v1153
  %1480 = vmatpush1.msra.mxu0 %v1152
  %1481 = vmatprep.subr.mxu0 %v1157
  %1482 = vmatpush1.msra.mxu0 %v1156
  %1483 = vmatprep.subr.mxu0 %v1161
  %1484 = vmatpush1.msra.mxu0 %v1160
  %1485 = vmatprep.subr.mxu0 %v1165
  %1486 = vmatpush1.msra.mxu0 %v1164
  %1487 = vmatprep.subr.mxu0 %v1169
  %1488 = vmatpush1.msra.mxu0 %v1168
  %1489 = vmatprep.subr.mxu0 %v1173
  %1490 = vmatpush1.msra.mxu0 %v1172
  %1491 = vmatprep.subr.mxu0 %v1177
  %1492 = vmatpush1.msra.mxu0 %v1176
  %1493 = vmatprep.subr.mxu0 %v1181
  %1494 = vmatpush1.msra.mxu0 %v1180
  %1495 = vmatprep.subr.mxu0 %v1185
  %1496 = vmatpush1.msra.mxu0 %v1184
  %1497 = vmatprep.subr.mxu0 %v1189
  %1498 = vmatpush1.msra.mxu0 %v1188
  %1499 = vmatprep.subr.mxu0 %v1193
  %1500 = vmatpush1.msra.mxu0 %v1192
  %1501 = vmatprep.subr.mxu0 %v1197
  %1502 = vmatpush1.msra.mxu0 %v1196
  %1503 = vmatprep.subr.mxu0 %v1201
  %1504 = vmatpush1.msra.mxu0 %v1200
  %1505 = vmatprep.subr.mxu0 %v1205
  %1506 = vmatpush1.msra.mxu0 %v1204
  %1507 = vmatprep.subr.mxu0 %v1209
  %1508 = vmatpush1.msra.mxu0 %v1208
  %1509 = vmatprep.subr.mxu0 %v1213
  %1510 = vmatpush1.msra.mxu0 %v1212
  %1511 = vmatprep.subr.mxu0 %v1217
  %1512 = vmatpush1.msra.mxu0 %v1216
  %1513 = vmatprep.subr.mxu0 %v1221
  %1514 = vmatpush1.msra.mxu0 %v1220
  %1515 = vmatprep.subr.mxu0 %v1225
  %1516 = vmatpush1.msra.mxu0 %v1224
  %1517 = vmatprep.subr.mxu0 %v1229
  %1518 = vmatpush1.msra.mxu0 %v1228
  %1519 = vmatprep.subr.mxu0 %v1233
  %1520 = vmatpush1.msra.mxu0 %v1232
  %1521 = vmatprep.subr.mxu0 %v1237
  %1522 = vmatpush1.msra.mxu0 %v1236
  %1523 = vmatprep.subr.mxu0 %v1241
  %1524 = vmatpush1.msra.mxu0 %v1240
  %1525 = vmatprep.subr.mxu0 %v1245
  %1526 = vmatpush1.msra.mxu0 %v1244
  %1527 = vmatprep.subr.mxu0 %v1249
  %1528 = vmatpush1.msra.mxu0 %v1248
  %1529 = vmatprep.subr.mxu0 %v1253
  %1530 = vmatpush1.msra.mxu0 %v1252
  %1531 = vmatprep.mubr.f32.mxu0 %v997
  %1532 = vmatmul.mubr.f32.gmra.mrb[0].mxu0 %v996
  %v1533 = vpop.f32.mrb[0].mxu0
  %v1534 = vadd.f32 %v1463, %v1533
  %v1535 = vpop.f32.mrb[0].mxu0
  %v1536 = vadd.f32 %v1465, %v1535
  %1537 = vdwg.mxu0
  %s1538 = scalar_lea.vmem %s3, 1
  %v1539 = vld [vmem:[%s1538] sm:$0x1]
  %s1540 = scalar_lea.vmem %s4, 1
  %v1541 = vld [vmem:[%s1540] sm:$0x1]
  %v1542 = vsel %vm313, %v1392, 0.0
  %v1543 = vrot.slane %v1542, 4
  %v1544 = vadd.f32 %v1542, %v1543
  %v1545 = vrot.slane %v1544, 2
  %v1546 = vadd.f32 %v1544, %v1545
  %v1547 = vrot.slane %v1546, 1
  %v1548 = vadd.f32 %v1546, %v1547
  %v1549 = vsel %vm313, %v1394, 0.0
  %v1550 = vrot.slane %v1549, 4
  %v1551 = vadd.f32 %v1549, %v1550
  %v1552 = vrot.slane %v1551, 2
  %v1553 = vadd.f32 %v1551, %v1552
  %v1554 = vrot.slane %v1553, 1
  %v1555 = vadd.f32 %v1553, %v1554
  %v1556 = vsel %vm313, %v1534, 0.0
  %v1557 = vrot.slane %v1556, 4
  %v1558 = vadd.f32 %v1556, %v1557
  %v1559 = vrot.slane %v1558, 2
  %v1560 = vadd.f32 %v1558, %v1559
  %v1561 = vrot.slane %v1560, 1
  %v1562 = vadd.f32 %v1560, %v1561
  %v1563 = vsel %vm313, %v1536, 0.0
  %v1564 = vrot.slane %v1563, 4
  %v1565 = vadd.f32 %v1563, %v1564
  %v1566 = vrot.slane %v1565, 2
  %v1567 = vadd.f32 %v1565, %v1566
  %v1568 = vrot.slane %v1567, 1
  %v1569 = vadd.f32 %v1567, %v1568
  %v1570 = vmul.f32 %v1392, %v1392
  %v1571 = vmul.f32 %v1394, %v1394
  %v1572 = vmul.f32 %v1534, %v1534
  %v1573 = vmul.f32 %v1536, %v1536
  %v1574 = vsel %vm313, %v1570, 0.0
  %v1575 = vrot.slane %v1574, 4
  %v1576 = vadd.f32 %v1574, %v1575
  %v1577 = vrot.slane %v1576, 2
  %v1578 = vadd.f32 %v1576, %v1577
  %v1579 = vrot.slane %v1578, 1
  %v1580 = vadd.f32 %v1578, %v1579
  %v1581 = vsel %vm313, %v1571, 0.0
  %v1582 = vrot.slane %v1581, 4
  %v1583 = vadd.f32 %v1581, %v1582
  %v1584 = vrot.slane %v1583, 2
  %v1585 = vadd.f32 %v1583, %v1584
  %v1586 = vrot.slane %v1585, 1
  %v1587 = vadd.f32 %v1585, %v1586
  %v1588 = vsel %vm313, %v1572, 0.0
  %v1589 = vrot.slane %v1588, 4
  %v1590 = vadd.f32 %v1588, %v1589
  %v1591 = vrot.slane %v1590, 2
  %v1592 = vadd.f32 %v1590, %v1591
  %v1593 = vrot.slane %v1592, 1
  %v1594 = vadd.f32 %v1592, %v1593
  %v1595 = vsel %vm313, %v1573, 0.0
  %v1596 = vrot.slane %v1595, 4
  %v1597 = vadd.f32 %v1595, %v1596
  %v1598 = vrot.slane %v1597, 2
  %v1599 = vadd.f32 %v1597, %v1598
  %v1600 = vrot.slane %v1599, 1
  %v1601 = vadd.f32 %v1599, %v1600
  %1602 = vmatprep.subr.mxu0 0.0
  %1603 = vmatpush1.msra.mxu0 %v40
  %1604 = vmatprep.subr.mxu0 0.0
  %1605 = vmatpush1.msra.mxu0 %v41
  %1606 = vmatprep.subr.mxu0 0.0
  %1607 = vmatpush1.msra.mxu0 %v42
  %1608 = vmatprep.subr.mxu0 0.0
  %1609 = vmatpush1.msra.mxu0 %v43
  %1610 = vmatprep.subr.mxu0 0.0
  %1611 = vmatpush1.msra.mxu0 %v44
  %1612 = vmatprep.subr.mxu0 0.0
  %1613 = vmatpush1.msra.mxu0 %v45
  %1614 = vmatprep.subr.mxu0 0.0
  %1615 = vmatpush1.msra.mxu0 %v46
  %1616 = vmatprep.subr.mxu0 0.0
  %1617 = vmatpush1.msra.mxu0 %v47
  %1618 = vmatprep.subr.mxu0 0.0
  %1619 = vmatpush1.msra.mxu0 %v48
  %1620 = vmatprep.subr.mxu0 0.0
  %1621 = vmatpush1.msra.mxu0 %v49
  %1622 = vmatprep.subr.mxu0 0.0
  %1623 = vmatpush1.msra.mxu0 %v50
  %1624 = vmatprep.subr.mxu0 0.0
  %1625 = vmatpush1.msra.mxu0 %v51
  %1626 = vmatprep.subr.mxu0 0.0
  %1627 = vmatpush1.msra.mxu0 %v52
  %1628 = vmatprep.subr.mxu0 0.0
  %1629 = vmatpush1.msra.mxu0 %v53
  %1630 = vmatprep.subr.mxu0 0.0
  %1631 = vmatpush1.msra.mxu0 %v54
  %1632 = vmatprep.subr.mxu0 0.0
  %1633 = vmatpush1.msra.mxu0 %v55
  %1634 = vmatprep.subr.mxu0 0.0
  %1635 = vmatpush1.msra.mxu0 %v56
  %1636 = vmatprep.subr.mxu0 0.0
  %1637 = vmatpush1.msra.mxu0 %v57
  %1638 = vmatprep.subr.mxu0 0.0
  %1639 = vmatpush1.msra.mxu0 %v58
  %1640 = vmatprep.subr.mxu0 0.0
  %1641 = vmatpush1.msra.mxu0 %v59
  %1642 = vmatprep.subr.mxu0 0.0
  %1643 = vmatpush1.msra.mxu0 %v60
  %1644 = vmatprep.subr.mxu0 0.0
  %1645 = vmatpush1.msra.mxu0 %v61
  %1646 = vmatprep.subr.mxu0 0.0
  %1647 = vmatpush1.msra.mxu0 %v62
  %1648 = vmatprep.subr.mxu0 0.0
  %1649 = vmatpush1.msra.mxu0 %v63
  %1650 = vmatprep.subr.mxu0 0.0
  %1651 = vmatpush1.msra.mxu0 %v64
  %1652 = vmatprep.subr.mxu0 0.0
  %1653 = vmatpush1.msra.mxu0 %v65
  %1654 = vmatprep.subr.mxu0 0.0
  %1655 = vmatpush1.msra.mxu0 %v66
  %1656 = vmatprep.subr.mxu0 0.0
  %1657 = vmatpush1.msra.mxu0 %v67
  %1658 = vmatprep.subr.mxu0 0.0
  %1659 = vmatpush1.msra.mxu0 %v68
  %1660 = vmatprep.subr.mxu0 0.0
  %1661 = vmatpush1.msra.mxu0 %v69
  %1662 = vmatprep.subr.mxu0 0.0
  %1663 = vmatpush1.msra.mxu0 %v70
  %1664 = vmatprep.subr.mxu0 0.0
  %1665 = vmatpush1.msra.mxu0 %v71
  %1666 = vmatprep.mubr.f32.mxu0 %v1555
  %1667 = vmatmul.mubr.f32.gmra.mrb[0].mxu0 %v1548
  %v1668 = vpop.f32.mrb[0].mxu0
  %v1669 = vadd.f32 0.0, %v1668
  %v1670 = vpop.f32.mrb[0].mxu0
  %1671 = vdwg.mxu0
  %1672 = vmatprep.subr.mxu0 0.0
  %1673 = vmatpush1.msra.mxu0 %v72
  %1674 = vmatprep.subr.mxu0 0.0
  %1675 = vmatpush1.msra.mxu0 %v73
  %1676 = vmatprep.subr.mxu0 0.0
  %1677 = vmatpush1.msra.mxu0 %v74
  %1678 = vmatprep.subr.mxu0 0.0
  %1679 = vmatpush1.msra.mxu0 %v75
  %1680 = vmatprep.subr.mxu0 0.0
  %1681 = vmatpush1.msra.mxu0 %v76
  %1682 = vmatprep.subr.mxu0 0.0
  %1683 = vmatpush1.msra.mxu0 %v77
  %1684 = vmatprep.subr.mxu0 0.0
  %1685 = vmatpush1.msra.mxu0 %v78
  %1686 = vmatprep.subr.mxu0 0.0
  %1687 = vmatpush1.msra.mxu0 %v79
  %1688 = vmatprep.subr.mxu0 0.0
  %1689 = vmatpush1.msra.mxu0 %v80
  %1690 = vmatprep.subr.mxu0 0.0
  %1691 = vmatpush1.msra.mxu0 %v81
  %1692 = vmatprep.subr.mxu0 0.0
  %1693 = vmatpush1.msra.mxu0 %v82
  %1694 = vmatprep.subr.mxu0 0.0
  %1695 = vmatpush1.msra.mxu0 %v83
  %1696 = vmatprep.subr.mxu0 0.0
  %1697 = vmatpush1.msra.mxu0 %v84
  %1698 = vmatprep.subr.mxu0 0.0
  %1699 = vmatpush1.msra.mxu0 %v85
  %1700 = vmatprep.subr.mxu0 0.0
  %1701 = vmatpush1.msra.mxu0 %v86
  %1702 = vmatprep.subr.mxu0 0.0
  %1703 = vmatpush1.msra.mxu0 %v87
  %1704 = vmatprep.subr.mxu0 0.0
  %1705 = vmatpush1.msra.mxu0 %v88
  %1706 = vmatprep.subr.mxu0 0.0
  %1707 = vmatpush1.msra.mxu0 %v89
  %1708 = vmatprep.subr.mxu0 0.0
  %1709 = vmatpush1.msra.mxu0 %v90
  %1710 = vmatprep.subr.mxu0 0.0
  %1711 = vmatpush1.msra.mxu0 %v91
  %1712 = vmatprep.subr.mxu0 0.0
  %1713 = vmatpush1.msra.mxu0 %v92
  %1714 = vmatprep.subr.mxu0 0.0
  %1715 = vmatpush1.msra.mxu0 %v93
  %1716 = vmatprep.subr.mxu0 0.0
  %1717 = vmatpush1.msra.mxu0 %v94
  %1718 = vmatprep.subr.mxu0 0.0
  %1719 = vmatpush1.msra.mxu0 %v95
  %1720 = vmatprep.subr.mxu0 0.0
  %1721 = vmatpush1.msra.mxu0 %v96
  %1722 = vmatprep.subr.mxu0 0.0
  %1723 = vmatpush1.msra.mxu0 %v97
  %1724 = vmatprep.subr.mxu0 0.0
  %1725 = vmatpush1.msra.mxu0 %v98
  %1726 = vmatprep.subr.mxu0 0.0
  %1727 = vmatpush1.msra.mxu0 %v99
  %1728 = vmatprep.subr.mxu0 0.0
  %1729 = vmatpush1.msra.mxu0 %v100
  %1730 = vmatprep.subr.mxu0 0.0
  %1731 = vmatpush1.msra.mxu0 %v101
  %1732 = vmatprep.subr.mxu0 0.0
  %1733 = vmatpush1.msra.mxu0 %v102
  %1734 = vmatprep.subr.mxu0 0.0
  %1735 = vmatpush1.msra.mxu0 %v103
  %1736 = vmatprep.mubr.f32.mxu0 %v1569
  %1737 = vmatmul.mubr.f32.gmra.mrb[0].mxu0 %v1562
  %v1738 = vpop.f32.mrb[0].mxu0
  %v1739 = vadd.f32 %v1669, %v1738
  %v1740 = vpop.f32.mrb[0].mxu0
  %1741 = vdwg.mxu0
  %v1742 = vmul.f32 %v1739, 0.015625
  %1743 = vmatprep.subr.mxu0 0.0
  %1744 = vmatpush1.msra.mxu0 %v40
  %1745 = vmatprep.subr.mxu0 0.0
  %1746 = vmatpush1.msra.mxu0 %v41
  %1747 = vmatprep.subr.mxu0 0.0
  %1748 = vmatpush1.msra.mxu0 %v42
  %1749 = vmatprep.subr.mxu0 0.0
  %1750 = vmatpush1.msra.mxu0 %v43
  %1751 = vmatprep.subr.mxu0 0.0
  %1752 = vmatpush1.msra.mxu0 %v44
  %1753 = vmatprep.subr.mxu0 0.0
  %1754 = vmatpush1.msra.mxu0 %v45
  %1755 = vmatprep.subr.mxu0 0.0
  %1756 = vmatpush1.msra.mxu0 %v46
  %1757 = vmatprep.subr.mxu0 0.0
  %1758 = vmatpush1.msra.mxu0 %v47
  %1759 = vmatprep.subr.mxu0 0.0
  %1760 = vmatpush1.msra.mxu0 %v48
  %1761 = vmatprep.subr.mxu0 0.0
  %1762 = vmatpush1.msra.mxu0 %v49
  %1763 = vmatprep.subr.mxu0 0.0
  %1764 = vmatpush1.msra.mxu0 %v50
  %1765 = vmatprep.subr.mxu0 0.0
  %1766 = vmatpush1.msra.mxu0 %v51
  %1767 = vmatprep.subr.mxu0 0.0
  %1768 = vmatpush1.msra.mxu0 %v52
  %1769 = vmatprep.subr.mxu0 0.0
  %1770 = vmatpush1.msra.mxu0 %v53
  %1771 = vmatprep.subr.mxu0 0.0
  %1772 = vmatpush1.msra.mxu0 %v54
  %1773 = vmatprep.subr.mxu0 0.0
  %1774 = vmatpush1.msra.mxu0 %v55
  %1775 = vmatprep.subr.mxu0 0.0
  %1776 = vmatpush1.msra.mxu0 %v56
  %1777 = vmatprep.subr.mxu0 0.0
  %1778 = vmatpush1.msra.mxu0 %v57
  %1779 = vmatprep.subr.mxu0 0.0
  %1780 = vmatpush1.msra.mxu0 %v58
  %1781 = vmatprep.subr.mxu0 0.0
  %1782 = vmatpush1.msra.mxu0 %v59
  %1783 = vmatprep.subr.mxu0 0.0
  %1784 = vmatpush1.msra.mxu0 %v60
  %1785 = vmatprep.subr.mxu0 0.0
  %1786 = vmatpush1.msra.mxu0 %v61
  %1787 = vmatprep.subr.mxu0 0.0
  %1788 = vmatpush1.msra.mxu0 %v62
  %1789 = vmatprep.subr.mxu0 0.0
  %1790 = vmatpush1.msra.mxu0 %v63
  %1791 = vmatprep.subr.mxu0 0.0
  %1792 = vmatpush1.msra.mxu0 %v64
  %1793 = vmatprep.subr.mxu0 0.0
  %1794 = vmatpush1.msra.mxu0 %v65
  %1795 = vmatprep.subr.mxu0 0.0
  %1796 = vmatpush1.msra.mxu0 %v66
  %1797 = vmatprep.subr.mxu0 0.0
  %1798 = vmatpush1.msra.mxu0 %v67
  %1799 = vmatprep.subr.mxu0 0.0
  %1800 = vmatpush1.msra.mxu0 %v68
  %1801 = vmatprep.subr.mxu0 0.0
  %1802 = vmatpush1.msra.mxu0 %v69
  %1803 = vmatprep.subr.mxu0 0.0
  %1804 = vmatpush1.msra.mxu0 %v70
  %1805 = vmatprep.subr.mxu0 0.0
  %1806 = vmatpush1.msra.mxu0 %v71
  %1807 = vmatprep.mubr.f32.mxu0 %v1587
  %1808 = vmatmul.mubr.f32.gmra.mrb[0].mxu0 %v1580
  %v1809 = vpop.f32.mrb[0].mxu0
  %v1810 = vadd.f32 0.0, %v1809
  %v1811 = vpop.f32.mrb[0].mxu0
  %1812 = vdwg.mxu0
  %1813 = vmatprep.subr.mxu0 0.0
  %1814 = vmatpush1.msra.mxu0 %v72
  %1815 = vmatprep.subr.mxu0 0.0
  %1816 = vmatpush1.msra.mxu0 %v73
  %1817 = vmatprep.subr.mxu0 0.0
  %1818 = vmatpush1.msra.mxu0 %v74
  %1819 = vmatprep.subr.mxu0 0.0
  %1820 = vmatpush1.msra.mxu0 %v75
  %1821 = vmatprep.subr.mxu0 0.0
  %1822 = vmatpush1.msra.mxu0 %v76
  %1823 = vmatprep.subr.mxu0 0.0
  %1824 = vmatpush1.msra.mxu0 %v77
  %1825 = vmatprep.subr.mxu0 0.0
  %1826 = vmatpush1.msra.mxu0 %v78
  %1827 = vmatprep.subr.mxu0 0.0
  %1828 = vmatpush1.msra.mxu0 %v79
  %1829 = vmatprep.subr.mxu0 0.0
  %1830 = vmatpush1.msra.mxu0 %v80
  %1831 = vmatprep.subr.mxu0 0.0
  %1832 = vmatpush1.msra.mxu0 %v81
  %1833 = vmatprep.subr.mxu0 0.0
  %1834 = vmatpush1.msra.mxu0 %v82
  %1835 = vmatprep.subr.mxu0 0.0
  %1836 = vmatpush1.msra.mxu0 %v83
  %1837 = vmatprep.subr.mxu0 0.0
  %1838 = vmatpush1.msra.mxu0 %v84
  %1839 = vmatprep.subr.mxu0 0.0
  %1840 = vmatpush1.msra.mxu0 %v85
  %1841 = vmatprep.subr.mxu0 0.0
  %1842 = vmatpush1.msra.mxu0 %v86
  %1843 = vmatprep.subr.mxu0 0.0
  %1844 = vmatpush1.msra.mxu0 %v87
  %1845 = vmatprep.subr.mxu0 0.0
  %1846 = vmatpush1.msra.mxu0 %v88
  %1847 = vmatprep.subr.mxu0 0.0
  %1848 = vmatpush1.msra.mxu0 %v89
  %1849 = vmatprep.subr.mxu0 0.0
  %1850 = vmatpush1.msra.mxu0 %v90
  %1851 = vmatprep.subr.mxu0 0.0
  %1852 = vmatpush1.msra.mxu0 %v91
  %1853 = vmatprep.subr.mxu0 0.0
  %1854 = vmatpush1.msra.mxu0 %v92
  %1855 = vmatprep.subr.mxu0 0.0
  %1856 = vmatpush1.msra.mxu0 %v93
  %1857 = vmatprep.subr.mxu0 0.0
  %1858 = vmatpush1.msra.mxu0 %v94
  %1859 = vmatprep.subr.mxu0 0.0
  %1860 = vmatpush1.msra.mxu0 %v95
  %1861 = vmatprep.subr.mxu0 0.0
  %1862 = vmatpush1.msra.mxu0 %v96
  %1863 = vmatprep.subr.mxu0 0.0
  %1864 = vmatpush1.msra.mxu0 %v97
  %1865 = vmatprep.subr.mxu0 0.0
  %1866 = vmatpush1.msra.mxu0 %v98
  %1867 = vmatprep.subr.mxu0 0.0
  %1868 = vmatpush1.msra.mxu0 %v99
  %1869 = vmatprep.subr.mxu0 0.0
  %1870 = vmatpush1.msra.mxu0 %v100
  %1871 = vmatprep.subr.mxu0 0.0
  %1872 = vmatpush1.msra.mxu0 %v101
  %1873 = vmatprep.subr.mxu0 0.0
  %1874 = vmatpush1.msra.mxu0 %v102
  %1875 = vmatprep.subr.mxu0 0.0
  %1876 = vmatpush1.msra.mxu0 %v103
  %1877 = vmatprep.mubr.f32.mxu0 %v1601
  %1878 = vmatmul.mubr.f32.gmra.mrb[0].mxu0 %v1594
  %v1879 = vpop.f32.mrb[0].mxu0
  %v1880 = vadd.f32 %v1810, %v1879
  %v1881 = vpop.f32.mrb[0].mxu0
  %1882 = vdwg.mxu0
  %v1883 = vmul.f32 %v1880, 0.015625
  %v1884 = vmul.f32 %v1742, %v1742
  %v1885 = vsub.f32 %v1883, %v1884
  %v1886 = vadd.f32 %v1885, 1e-05
  %v1887 = vrsqrt.pop %v1886
  %v1888 = vmul.f32 %v1539, %v1887
  %v1889 = vmul.f32 %v1742, %v1888
  %v1890 = vsub.f32 %v1541, %v1889
  %v1892 = vsel %vm663, %v1888, 0
  %1894 = vmatprep.subr.mxu0 %v33
  %1895 = vmatpush1.msra.mxu0 %v32
  %1896 = vmatprep.subr.mxu0 %v37
  %1897 = vmatpush1.msra.mxu0 %v36
  %1898 = vmatprep.subr.mxu0 0.0
  %1899 = vmatpush1.msra.mxu0 0.0
  %1900 = vmatprep.subr.mxu0 0.0
  %1901 = vmatpush1.msra.mxu0 0.0
  %1902 = vmatprep.subr.mxu0 0.0
  %1903 = vmatpush1.msra.mxu0 0.0
  %1904 = vmatprep.subr.mxu0 0.0
  %1905 = vmatpush1.msra.mxu0 0.0
  %1906 = vmatprep.subr.mxu0 0.0
  %1907 = vmatpush1.msra.mxu0 0.0
  %1908 = vmatprep.subr.mxu0 0.0
  %1909 = vmatpush1.msra.mxu0 0.0
  %1910 = vmatprep.subr.mxu0 0.0
  %1911 = vmatpush1.msra.mxu0 0.0
  %1912 = vmatprep.subr.mxu0 0.0
  %1913 = vmatpush1.msra.mxu0 0.0
  %1914 = vmatprep.subr.mxu0 0.0
  %1915 = vmatpush1.msra.mxu0 0.0
  %1916 = vmatprep.subr.mxu0 0.0
  %1917 = vmatpush1.msra.mxu0 0.0
  %1918 = vmatprep.subr.mxu0 0.0
  %1919 = vmatpush1.msra.mxu0 0.0
  %1920 = vmatprep.subr.mxu0 0.0
  %1921 = vmatpush1.msra.mxu0 0.0
  %1922 = vmatprep.subr.mxu0 0.0
  %1923 = vmatpush1.msra.mxu0 0.0
  %1924 = vmatprep.subr.mxu0 0.0
  %1925 = vmatpush1.msra.mxu0 0.0
  %1926 = vmatprep.subr.mxu0 0.0
  %1927 = vmatpush1.msra.mxu0 0.0
  %1928 = vmatprep.subr.mxu0 0.0
  %1929 = vmatpush1.msra.mxu0 0.0
  %1930 = vmatprep.subr.mxu0 0.0
  %1931 = vmatpush1.msra.mxu0 0.0
  %1932 = vmatprep.subr.mxu0 0.0
  %1933 = vmatpush1.msra.mxu0 0.0
  %1934 = vmatprep.subr.mxu0 0.0
  %1935 = vmatpush1.msra.mxu0 0.0
  %1936 = vmatprep.subr.mxu0 0.0
  %1937 = vmatpush1.msra.mxu0 0.0
  %1938 = vmatprep.subr.mxu0 0.0
  %1939 = vmatpush1.msra.mxu0 0.0
  %1940 = vmatprep.subr.mxu0 0.0
  %1941 = vmatpush1.msra.mxu0 0.0
  %1942 = vmatprep.subr.mxu0 0.0
  %1943 = vmatpush1.msra.mxu0 0.0
  %1944 = vmatprep.subr.mxu0 0.0
  %1945 = vmatpush1.msra.mxu0 0.0
  %1946 = vmatprep.subr.mxu0 0.0
  %1947 = vmatpush1.msra.mxu0 0.0
  %1948 = vmatprep.subr.mxu0 0.0
  %1949 = vmatpush1.msra.mxu0 0.0
  %1950 = vmatprep.subr.mxu0 0.0
  %1951 = vmatpush1.msra.mxu0 0.0
  %1952 = vmatprep.subr.mxu0 0.0
  %1953 = vmatpush1.msra.mxu0 0.0
  %1954 = vmatprep.subr.mxu0 0.0
  %1955 = vmatpush1.msra.mxu0 0.0
  %1956 = vmatprep.subr.mxu0 0.0
  %1957 = vmatpush1.msra.mxu0 0.0
  %1958 = vmatprep.mubr.f32.mxu0 0.0
  %1959 = vmatmul.mubr.f32.gmra.mrb[0].mxu0 %v1892
  %v1960 = vpop.f32.mrb[0].mxu0
  %v1961 = vadd.f32 0.0, %v1960
  %v1962 = vpop.f32.mrb[0].mxu0
  %v1963 = vadd.f32 0.0, %v1962
  %1964 = vdwg.mxu0
  %1965 = vmatprep.subr.mxu0 %v35
  %1966 = vmatpush1.msra.mxu0 %v34
  %1967 = vmatprep.subr.mxu0 %v39
  %1968 = vmatpush1.msra.mxu0 %v38
  %1969 = vmatprep.subr.mxu0 0.0
  %1970 = vmatpush1.msra.mxu0 0.0
  %1971 = vmatprep.subr.mxu0 0.0
  %1972 = vmatpush1.msra.mxu0 0.0
  %1973 = vmatprep.subr.mxu0 0.0
  %1974 = vmatpush1.msra.mxu0 0.0
  %1975 = vmatprep.subr.mxu0 0.0
  %1976 = vmatpush1.msra.mxu0 0.0
  %1977 = vmatprep.subr.mxu0 0.0
  %1978 = vmatpush1.msra.mxu0 0.0
  %1979 = vmatprep.subr.mxu0 0.0
  %1980 = vmatpush1.msra.mxu0 0.0
  %1981 = vmatprep.subr.mxu0 0.0
  %1982 = vmatpush1.msra.mxu0 0.0
  %1983 = vmatprep.subr.mxu0 0.0
  %1984 = vmatpush1.msra.mxu0 0.0
  %1985 = vmatprep.subr.mxu0 0.0
  %1986 = vmatpush1.msra.mxu0 0.0
  %1987 = vmatprep.subr.mxu0 0.0
  %1988 = vmatpush1.msra.mxu0 0.0
  %1989 = vmatprep.subr.mxu0 0.0
  %1990 = vmatpush1.msra.mxu0 0.0
  %1991 = vmatprep.subr.mxu0 0.0
  %1992 = vmatpush1.msra.mxu0 0.0
  %1993 = vmatprep.subr.mxu0 0.0
  %1994 = vmatpush1.msra.mxu0 0.0
  %1995 = vmatprep.subr.mxu0 0.0
  %1996 = vmatpush1.msra.mxu0 0.0
  %1997 = vmatprep.subr.mxu0 0.0
  %1998 = vmatpush1.msra.mxu0 0.0
  %1999 = vmatprep.subr.mxu0 0.0
  %2000 = vmatpush1.msra.mxu0 0.0
  %2001 = vmatprep.subr.mxu0 0.0
  %2002 = vmatpush1.msra.mxu0 0.0
  %2003 = vmatprep.subr.mxu0 0.0
  %2004 = vmatpush1.msra.mxu0 0.0
  %2005 = vmatprep.subr.mxu0 0.0
  %2006 = vmatpush1.msra.mxu0 0.0
  %2007 = vmatprep.subr.mxu0 0.0
  %2008 = vmatpush1.msra.mxu0 0.0
  %2009 = vmatprep.subr.mxu0 0.0
  %2010 = vmatpush1.msra.mxu0 0.0
  %2011 = vmatprep.subr.mxu0 0.0
  %2012 = vmatpush1.msra.mxu0 0.0
  %2013 = vmatprep.subr.mxu0 0.0
  %2014 = vmatpush1.msra.mxu0 0.0
  %2015 = vmatprep.subr.mxu0 0.0
  %2016 = vmatpush1.msra.mxu0 0.0
  %2017 = vmatprep.subr.mxu0 0.0
  %2018 = vmatpush1.msra.mxu0 0.0
  %2019 = vmatprep.subr.mxu0 0.0
  %2020 = vmatpush1.msra.mxu0 0.0
  %2021 = vmatprep.subr.mxu0 0.0
  %2022 = vmatpush1.msra.mxu0 0.0
  %2023 = vmatprep.subr.mxu0 0.0
  %2024 = vmatpush1.msra.mxu0 0.0
  %2025 = vmatprep.subr.mxu0 0.0
  %2026 = vmatpush1.msra.mxu0 0.0
  %2027 = vmatprep.subr.mxu0 0.0
  %2028 = vmatpush1.msra.mxu0 0.0
  %2029 = vmatprep.mubr.f32.mxu0 0.0
  %2030 = vmatmul.mubr.f32.gmra.mrb[0].mxu0 %v1892
  %v2031 = vpop.f32.mrb[0].mxu0
  %v2032 = vadd.f32 0.0, %v2031
  %v2033 = vpop.f32.mrb[0].mxu0
  %v2034 = vadd.f32 0.0, %v2033
  %2035 = vdwg.mxu0
  %v2036 = vlaneseq
  %v2037 = vshrl.u32 %v2036, 7
  %v2038 = vsub.s32 0, %v2037
  %v2039 = vrot.slane %v1961, %v2038
  %v2040 = vlaneseq
  %v2041 = vshrl.u32 %v2040, 7
  %v2042 = vsub.s32 0, %v2041
  %v2043 = vrot.slane %v1963, %v2042
  %v2044 = vlaneseq
  %v2045 = vshrl.u32 %v2044, 7
  %v2046 = vsub.s32 0, %v2045
  %v2047 = vrot.slane %v2032, %v2046
  %v2048 = vlaneseq
  %v2049 = vshrl.u32 %v2048, 7
  %v2050 = vsub.s32 0, %v2049
  %v2051 = vrot.slane %v2034, %v2050
  %v2052 = vmul.f32 %v1392, %v2039
  %v2053 = vmul.f32 %v1394, %v2043
  %v2054 = vmul.f32 %v1534, %v2047
  %v2055 = vmul.f32 %v1536, %v2051
  %v2057 = vsel %vm663, %v1890, 0
  %2059 = vmatprep.subr.mxu0 %v33
  %2060 = vmatpush1.msra.mxu0 %v32
  %2061 = vmatprep.subr.mxu0 %v37
  %2062 = vmatpush1.msra.mxu0 %v36
  %2063 = vmatprep.subr.mxu0 0.0
  %2064 = vmatpush1.msra.mxu0 0.0
  %2065 = vmatprep.subr.mxu0 0.0
  %2066 = vmatpush1.msra.mxu0 0.0
  %2067 = vmatprep.subr.mxu0 0.0
  %2068 = vmatpush1.msra.mxu0 0.0
  %2069 = vmatprep.subr.mxu0 0.0
  %2070 = vmatpush1.msra.mxu0 0.0
  %2071 = vmatprep.subr.mxu0 0.0
  %2072 = vmatpush1.msra.mxu0 0.0
  %2073 = vmatprep.subr.mxu0 0.0
  %2074 = vmatpush1.msra.mxu0 0.0
  %2075 = vmatprep.subr.mxu0 0.0
  %2076 = vmatpush1.msra.mxu0 0.0
  %2077 = vmatprep.subr.mxu0 0.0
  %2078 = vmatpush1.msra.mxu0 0.0
  %2079 = vmatprep.subr.mxu0 0.0
  %2080 = vmatpush1.msra.mxu0 0.0
  %2081 = vmatprep.subr.mxu0 0.0
  %2082 = vmatpush1.msra.mxu0 0.0
  %2083 = vmatprep.subr.mxu0 0.0
  %2084 = vmatpush1.msra.mxu0 0.0
  %2085 = vmatprep.subr.mxu0 0.0
  %2086 = vmatpush1.msra.mxu0 0.0
  %2087 = vmatprep.subr.mxu0 0.0
  %2088 = vmatpush1.msra.mxu0 0.0
  %2089 = vmatprep.subr.mxu0 0.0
  %2090 = vmatpush1.msra.mxu0 0.0
  %2091 = vmatprep.subr.mxu0 0.0
  %2092 = vmatpush1.msra.mxu0 0.0
  %2093 = vmatprep.subr.mxu0 0.0
  %2094 = vmatpush1.msra.mxu0 0.0
  %2095 = vmatprep.subr.mxu0 0.0
  %2096 = vmatpush1.msra.mxu0 0.0
  %2097 = vmatprep.subr.mxu0 0.0
  %2098 = vmatpush1.msra.mxu0 0.0
  %2099 = vmatprep.subr.mxu0 0.0
  %2100 = vmatpush1.msra.mxu0 0.0
  %2101 = vmatprep.subr.mxu0 0.0
  %2102 = vmatpush1.msra.mxu0 0.0
  %2103 = vmatprep.subr.mxu0 0.0
  %2104 = vmatpush1.msra.mxu0 0.0
  %2105 = vmatprep.subr.mxu0 0.0
  %2106 = vmatpush1.msra.mxu0 0.0
  %2107 = vmatprep.subr.mxu0 0.0
  %2108 = vmatpush1.msra.mxu0 0.0
  %2109 = vmatprep.subr.mxu0 0.0
  %2110 = vmatpush1.msra.mxu0 0.0
  %2111 = vmatprep.subr.mxu0 0.0
  %2112 = vmatpush1.msra.mxu0 0.0
  %2113 = vmatprep.subr.mxu0 0.0
  %2114 = vmatpush1.msra.mxu0 0.0
  %2115 = vmatprep.subr.mxu0 0.0
  %2116 = vmatpush1.msra.mxu0 0.0
  %2117 = vmatprep.subr.mxu0 0.0
  %2118 = vmatpush1.msra.mxu0 0.0
  %2119 = vmatprep.subr.mxu0 0.0
  %2120 = vmatpush1.msra.mxu0 0.0
  %2121 = vmatprep.subr.mxu0 0.0
  %2122 = vmatpush1.msra.mxu0 0.0
  %2123 = vmatprep.mubr.f32.mxu0 0.0
  %2124 = vmatmul.mubr.f32.gmra.mrb[0].mxu0 %v2057
  %v2125 = vpop.f32.mrb[0].mxu0
  %v2126 = vadd.f32 0.0, %v2125
  %v2127 = vpop.f32.mrb[0].mxu0
  %v2128 = vadd.f32 0.0, %v2127
  %2129 = vdwg.mxu0
  %2130 = vmatprep.subr.mxu0 %v35
  %2131 = vmatpush1.msra.mxu0 %v34
  %2132 = vmatprep.subr.mxu0 %v39
  %2133 = vmatpush1.msra.mxu0 %v38
  %2134 = vmatprep.subr.mxu0 0.0
  %2135 = vmatpush1.msra.mxu0 0.0
  %2136 = vmatprep.subr.mxu0 0.0
  %2137 = vmatpush1.msra.mxu0 0.0
  %2138 = vmatprep.subr.mxu0 0.0
  %2139 = vmatpush1.msra.mxu0 0.0
  %2140 = vmatprep.subr.mxu0 0.0
  %2141 = vmatpush1.msra.mxu0 0.0
  %2142 = vmatprep.subr.mxu0 0.0
  %2143 = vmatpush1.msra.mxu0 0.0
  %2144 = vmatprep.subr.mxu0 0.0
  %2145 = vmatpush1.msra.mxu0 0.0
  %2146 = vmatprep.subr.mxu0 0.0
  %2147 = vmatpush1.msra.mxu0 0.0
  %2148 = vmatprep.subr.mxu0 0.0
  %2149 = vmatpush1.msra.mxu0 0.0
  %2150 = vmatprep.subr.mxu0 0.0
  %2151 = vmatpush1.msra.mxu0 0.0
  %2152 = vmatprep.subr.mxu0 0.0
  %2153 = vmatpush1.msra.mxu0 0.0
  %2154 = vmatprep.subr.mxu0 0.0
  %2155 = vmatpush1.msra.mxu0 0.0
  %2156 = vmatprep.subr.mxu0 0.0
  %2157 = vmatpush1.msra.mxu0 0.0
  %2158 = vmatprep.subr.mxu0 0.0
  %2159 = vmatpush1.msra.mxu0 0.0
  %2160 = vmatprep.subr.mxu0 0.0
  %2161 = vmatpush1.msra.mxu0 0.0
  %2162 = vmatprep.subr.mxu0 0.0
  %2163 = vmatpush1.msra.mxu0 0.0
  %2164 = vmatprep.subr.mxu0 0.0
  %2165 = vmatpush1.msra.mxu0 0.0
  %2166 = vmatprep.subr.mxu0 0.0
  %2167 = vmatpush1.msra.mxu0 0.0
  %2168 = vmatprep.subr.mxu0 0.0
  %2169 = vmatpush1.msra.mxu0 0.0
  %2170 = vmatprep.subr.mxu0 0.0
  %2171 = vmatpush1.msra.mxu0 0.0
  %2172 = vmatprep.subr.mxu0 0.0
  %2173 = vmatpush1.msra.mxu0 0.0
  %2174 = vmatprep.subr.mxu0 0.0
  %2175 = vmatpush1.msra.mxu0 0.0
  %2176 = vmatprep.subr.mxu0 0.0
  %2177 = vmatpush1.msra.mxu0 0.0
  %2178 = vmatprep.subr.mxu0 0.0
  %2179 = vmatpush1.msra.mxu0 0.0
  %2180 = vmatprep.subr.mxu0 0.0
  %2181 = vmatpush1.msra.mxu0 0.0
  %2182 = vmatprep.subr.mxu0 0.0
  %2183 = vmatpush1.msra.mxu0 0.0
  %2184 = vmatprep.subr.mxu0 0.0
  %2185 = vmatpush1.msra.mxu0 0.0
  %2186 = vmatprep.subr.mxu0 0.0
  %2187 = vmatpush1.msra.mxu0 0.0
  %2188 = vmatprep.subr.mxu0 0.0
  %2189 = vmatpush1.msra.mxu0 0.0
  %2190 = vmatprep.subr.mxu0 0.0
  %2191 = vmatpush1.msra.mxu0 0.0
  %2192 = vmatprep.subr.mxu0 0.0
  %2193 = vmatpush1.msra.mxu0 0.0
  %2194 = vmatprep.mubr.f32.mxu0 0.0
  %2195 = vmatmul.mubr.f32.gmra.mrb[0].mxu0 %v2057
  %v2196 = vpop.f32.mrb[0].mxu0
  %v2197 = vadd.f32 0.0, %v2196
  %v2198 = vpop.f32.mrb[0].mxu0
  %v2199 = vadd.f32 0.0, %v2198
  %2200 = vdwg.mxu0
  %v2201 = vlaneseq
  %v2202 = vshrl.u32 %v2201, 7
  %v2203 = vsub.s32 0, %v2202
  %v2204 = vrot.slane %v2126, %v2203
  %v2205 = vlaneseq
  %v2206 = vshrl.u32 %v2205, 7
  %v2207 = vsub.s32 0, %v2206
  %v2208 = vrot.slane %v2128, %v2207
  %v2209 = vlaneseq
  %v2210 = vshrl.u32 %v2209, 7
  %v2211 = vsub.s32 0, %v2210
  %v2212 = vrot.slane %v2197, %v2211
  %v2213 = vlaneseq
  %v2214 = vshrl.u32 %v2213, 7
  %v2215 = vsub.s32 0, %v2214
  %v2216 = vrot.slane %v2199, %v2215
  %v2217 = vadd.f32 %v2052, %v2204
  %v2218 = vadd.f32 %v2053, %v2208
  %v2219 = vadd.f32 %v2054, %v2212
  %v2220 = vadd.f32 %v2055, %v2216
  %v2221 = vmax.f32 %v2217, 0.0
  %v2222 = vmax.f32 %v2218, 0.0
  %v2223 = vmax.f32 %v2219, 0.0
  %v2224 = vmax.f32 %v2220, 0.0
  %s2225 = scalar_lea.vmem %s2, 2048
  %v2226 = vld [vmem:[%s2225] sm:$0xff]
  %v2227 = vld [vmem:[%s2225 + $0x8] sm:$0xff]
  %v2228 = vld [vmem:[%s2225 + $0x10] sm:$0xff]
  %v2229 = vld [vmem:[%s2225 + $0x18] sm:$0xff]
  %v2230 = vld [vmem:[%s2225 + $0x20] sm:$0xff]
  %v2231 = vld [vmem:[%s2225 + $0x28] sm:$0xff]
  %v2232 = vld [vmem:[%s2225 + $0x30] sm:$0xff]
  %v2233 = vld [vmem:[%s2225 + $0x38] sm:$0xff]
  %v2234 = vld [vmem:[%s2225 + $0x40] sm:$0xff]
  %v2235 = vld [vmem:[%s2225 + $0x48] sm:$0xff]
  %v2236 = vld [vmem:[%s2225 + $0x50] sm:$0xff]
  %v2237 = vld [vmem:[%s2225 + $0x58] sm:$0xff]
  %v2238 = vld [vmem:[%s2225 + $0x60] sm:$0xff]
  %v2239 = vld [vmem:[%s2225 + $0x68] sm:$0xff]
  %v2240 = vld [vmem:[%s2225 + $0x70] sm:$0xff]
  %v2241 = vld [vmem:[%s2225 + $0x78] sm:$0xff]
  %v2242 = vld [vmem:[%s2225 + $0x80] sm:$0xff]
  %v2243 = vld [vmem:[%s2225 + $0x88] sm:$0xff]
  %v2244 = vld [vmem:[%s2225 + $0x90] sm:$0xff]
  %v2245 = vld [vmem:[%s2225 + $0x98] sm:$0xff]
  %v2246 = vld [vmem:[%s2225 + $0xa0] sm:$0xff]
  %v2247 = vld [vmem:[%s2225 + $0xa8] sm:$0xff]
  %v2248 = vld [vmem:[%s2225 + $0xb0] sm:$0xff]
  %v2249 = vld [vmem:[%s2225 + $0xb8] sm:$0xff]
  %v2250 = vld [vmem:[%s2225 + $0xc0] sm:$0xff]
  %v2251 = vld [vmem:[%s2225 + $0xc8] sm:$0xff]
  %v2252 = vld [vmem:[%s2225 + $0xd0] sm:$0xff]
  %v2253 = vld [vmem:[%s2225 + $0xd8] sm:$0xff]
  %v2254 = vld [vmem:[%s2225 + $0xe0] sm:$0xff]
  %v2255 = vld [vmem:[%s2225 + $0xe8] sm:$0xff]
  %v2256 = vld [vmem:[%s2225 + $0xf0] sm:$0xff]
  %v2257 = vld [vmem:[%s2225 + $0xf8] sm:$0xff]
  %v2258 = vld [vmem:[%s2225 + $0x100] sm:$0xff]
  %v2259 = vld [vmem:[%s2225 + $0x108] sm:$0xff]
  %v2260 = vld [vmem:[%s2225 + $0x110] sm:$0xff]
  %v2261 = vld [vmem:[%s2225 + $0x118] sm:$0xff]
  %v2262 = vld [vmem:[%s2225 + $0x120] sm:$0xff]
  %v2263 = vld [vmem:[%s2225 + $0x128] sm:$0xff]
  %v2264 = vld [vmem:[%s2225 + $0x130] sm:$0xff]
  %v2265 = vld [vmem:[%s2225 + $0x138] sm:$0xff]
  %v2266 = vld [vmem:[%s2225 + $0x140] sm:$0xff]
  %v2267 = vld [vmem:[%s2225 + $0x148] sm:$0xff]
  %v2268 = vld [vmem:[%s2225 + $0x150] sm:$0xff]
  %v2269 = vld [vmem:[%s2225 + $0x158] sm:$0xff]
  %v2270 = vld [vmem:[%s2225 + $0x160] sm:$0xff]
  %v2271 = vld [vmem:[%s2225 + $0x168] sm:$0xff]
  %v2272 = vld [vmem:[%s2225 + $0x170] sm:$0xff]
  %v2273 = vld [vmem:[%s2225 + $0x178] sm:$0xff]
  %v2274 = vld [vmem:[%s2225 + $0x180] sm:$0xff]
  %v2275 = vld [vmem:[%s2225 + $0x188] sm:$0xff]
  %v2276 = vld [vmem:[%s2225 + $0x190] sm:$0xff]
  %v2277 = vld [vmem:[%s2225 + $0x198] sm:$0xff]
  %v2278 = vld [vmem:[%s2225 + $0x1a0] sm:$0xff]
  %v2279 = vld [vmem:[%s2225 + $0x1a8] sm:$0xff]
  %v2280 = vld [vmem:[%s2225 + $0x1b0] sm:$0xff]
  %v2281 = vld [vmem:[%s2225 + $0x1b8] sm:$0xff]
  %v2282 = vld [vmem:[%s2225 + $0x1c0] sm:$0xff]
  %v2283 = vld [vmem:[%s2225 + $0x1c8] sm:$0xff]
  %v2284 = vld [vmem:[%s2225 + $0x1d0] sm:$0xff]
  %v2285 = vld [vmem:[%s2225 + $0x1d8] sm:$0xff]
  %v2286 = vld [vmem:[%s2225 + $0x1e0] sm:$0xff]
  %v2287 = vld [vmem:[%s2225 + $0x1e8] sm:$0xff]
  %v2288 = vld [vmem:[%s2225 + $0x1f0] sm:$0xff]
  %v2289 = vld [vmem:[%s2225 + $0x1f8] sm:$0xff]
  %v2290 = vld [vmem:[%s2225 + $0x200] sm:$0xff]
  %v2291 = vld [vmem:[%s2225 + $0x208] sm:$0xff]
  %v2292 = vld [vmem:[%s2225 + $0x210] sm:$0xff]
  %v2293 = vld [vmem:[%s2225 + $0x218] sm:$0xff]
  %v2294 = vld [vmem:[%s2225 + $0x220] sm:$0xff]
  %v2295 = vld [vmem:[%s2225 + $0x228] sm:$0xff]
  %v2296 = vld [vmem:[%s2225 + $0x230] sm:$0xff]
  %v2297 = vld [vmem:[%s2225 + $0x238] sm:$0xff]
  %v2298 = vld [vmem:[%s2225 + $0x240] sm:$0xff]
  %v2299 = vld [vmem:[%s2225 + $0x248] sm:$0xff]
  %v2300 = vld [vmem:[%s2225 + $0x250] sm:$0xff]
  %v2301 = vld [vmem:[%s2225 + $0x258] sm:$0xff]
  %v2302 = vld [vmem:[%s2225 + $0x260] sm:$0xff]
  %v2303 = vld [vmem:[%s2225 + $0x268] sm:$0xff]
  %v2304 = vld [vmem:[%s2225 + $0x270] sm:$0xff]
  %v2305 = vld [vmem:[%s2225 + $0x278] sm:$0xff]
  %v2306 = vld [vmem:[%s2225 + $0x280] sm:$0xff]
  %v2307 = vld [vmem:[%s2225 + $0x288] sm:$0xff]
  %v2308 = vld [vmem:[%s2225 + $0x290] sm:$0xff]
  %v2309 = vld [vmem:[%s2225 + $0x298] sm:$0xff]
  %v2310 = vld [vmem:[%s2225 + $0x2a0] sm:$0xff]
  %v2311 = vld [vmem:[%s2225 + $0x2a8] sm:$0xff]
  %v2312 = vld [vmem:[%s2225 + $0x2b0] sm:$0xff]
  %v2313 = vld [vmem:[%s2225 + $0x2b8] sm:$0xff]
  %v2314 = vld [vmem:[%s2225 + $0x2c0] sm:$0xff]
  %v2315 = vld [vmem:[%s2225 + $0x2c8] sm:$0xff]
  %v2316 = vld [vmem:[%s2225 + $0x2d0] sm:$0xff]
  %v2317 = vld [vmem:[%s2225 + $0x2d8] sm:$0xff]
  %v2318 = vld [vmem:[%s2225 + $0x2e0] sm:$0xff]
  %v2319 = vld [vmem:[%s2225 + $0x2e8] sm:$0xff]
  %v2320 = vld [vmem:[%s2225 + $0x2f0] sm:$0xff]
  %v2321 = vld [vmem:[%s2225 + $0x2f8] sm:$0xff]
  %v2322 = vld [vmem:[%s2225 + $0x300] sm:$0xff]
  %v2323 = vld [vmem:[%s2225 + $0x308] sm:$0xff]
  %v2324 = vld [vmem:[%s2225 + $0x310] sm:$0xff]
  %v2325 = vld [vmem:[%s2225 + $0x318] sm:$0xff]
  %v2326 = vld [vmem:[%s2225 + $0x320] sm:$0xff]
  %v2327 = vld [vmem:[%s2225 + $0x328] sm:$0xff]
  %v2328 = vld [vmem:[%s2225 + $0x330] sm:$0xff]
  %v2329 = vld [vmem:[%s2225 + $0x338] sm:$0xff]
  %v2330 = vld [vmem:[%s2225 + $0x340] sm:$0xff]
  %v2331 = vld [vmem:[%s2225 + $0x348] sm:$0xff]
  %v2332 = vld [vmem:[%s2225 + $0x350] sm:$0xff]
  %v2333 = vld [vmem:[%s2225 + $0x358] sm:$0xff]
  %v2334 = vld [vmem:[%s2225 + $0x360] sm:$0xff]
  %v2335 = vld [vmem:[%s2225 + $0x368] sm:$0xff]
  %v2336 = vld [vmem:[%s2225 + $0x370] sm:$0xff]
  %v2337 = vld [vmem:[%s2225 + $0x378] sm:$0xff]
  %v2338 = vld [vmem:[%s2225 + $0x380] sm:$0xff]
  %v2339 = vld [vmem:[%s2225 + $0x388] sm:$0xff]
  %v2340 = vld [vmem:[%s2225 + $0x390] sm:$0xff]
  %v2341 = vld [vmem:[%s2225 + $0x398] sm:$0xff]
  %v2342 = vld [vmem:[%s2225 + $0x3a0] sm:$0xff]
  %v2343 = vld [vmem:[%s2225 + $0x3a8] sm:$0xff]
  %v2344 = vld [vmem:[%s2225 + $0x3b0] sm:$0xff]
  %v2345 = vld [vmem:[%s2225 + $0x3b8] sm:$0xff]
  %v2346 = vld [vmem:[%s2225 + $0x3c0] sm:$0xff]
  %v2347 = vld [vmem:[%s2225 + $0x3c8] sm:$0xff]
  %v2348 = vld [vmem:[%s2225 + $0x3d0] sm:$0xff]
  %v2349 = vld [vmem:[%s2225 + $0x3d8] sm:$0xff]
  %v2350 = vld [vmem:[%s2225 + $0x3e0] sm:$0xff]
  %v2351 = vld [vmem:[%s2225 + $0x3e8] sm:$0xff]
  %v2352 = vld [vmem:[%s2225 + $0x3f0] sm:$0xff]
  %v2353 = vld [vmem:[%s2225 + $0x3f8] sm:$0xff]
  %v2354 = vld [vmem:[%s2225 + $0x400] sm:$0xff]
  %v2355 = vld [vmem:[%s2225 + $0x408] sm:$0xff]
  %v2356 = vld [vmem:[%s2225 + $0x410] sm:$0xff]
  %v2357 = vld [vmem:[%s2225 + $0x418] sm:$0xff]
  %v2358 = vld [vmem:[%s2225 + $0x420] sm:$0xff]
  %v2359 = vld [vmem:[%s2225 + $0x428] sm:$0xff]
  %v2360 = vld [vmem:[%s2225 + $0x430] sm:$0xff]
  %v2361 = vld [vmem:[%s2225 + $0x438] sm:$0xff]
  %v2362 = vld [vmem:[%s2225 + $0x440] sm:$0xff]
  %v2363 = vld [vmem:[%s2225 + $0x448] sm:$0xff]
  %v2364 = vld [vmem:[%s2225 + $0x450] sm:$0xff]
  %v2365 = vld [vmem:[%s2225 + $0x458] sm:$0xff]
  %v2366 = vld [vmem:[%s2225 + $0x460] sm:$0xff]
  %v2367 = vld [vmem:[%s2225 + $0x468] sm:$0xff]
  %v2368 = vld [vmem:[%s2225 + $0x470] sm:$0xff]
  %v2369 = vld [vmem:[%s2225 + $0x478] sm:$0xff]
  %v2370 = vld [vmem:[%s2225 + $0x480] sm:$0xff]
  %v2371 = vld [vmem:[%s2225 + $0x488] sm:$0xff]
  %v2372 = vld [vmem:[%s2225 + $0x490] sm:$0xff]
  %v2373 = vld [vmem:[%s2225 + $0x498] sm:$0xff]
  %v2374 = vld [vmem:[%s2225 + $0x4a0] sm:$0xff]
  %v2375 = vld [vmem:[%s2225 + $0x4a8] sm:$0xff]
  %v2376 = vld [vmem:[%s2225 + $0x4b0] sm:$0xff]
  %v2377 = vld [vmem:[%s2225 + $0x4b8] sm:$0xff]
  %v2378 = vld [vmem:[%s2225 + $0x4c0] sm:$0xff]
  %v2379 = vld [vmem:[%s2225 + $0x4c8] sm:$0xff]
  %v2380 = vld [vmem:[%s2225 + $0x4d0] sm:$0xff]
  %v2381 = vld [vmem:[%s2225 + $0x4d8] sm:$0xff]
  %v2382 = vld [vmem:[%s2225 + $0x4e0] sm:$0xff]
  %v2383 = vld [vmem:[%s2225 + $0x4e8] sm:$0xff]
  %v2384 = vld [vmem:[%s2225 + $0x4f0] sm:$0xff]
  %v2385 = vld [vmem:[%s2225 + $0x4f8] sm:$0xff]
  %v2386 = vld [vmem:[%s2225 + $0x500] sm:$0xff]
  %v2387 = vld [vmem:[%s2225 + $0x508] sm:$0xff]
  %v2388 = vld [vmem:[%s2225 + $0x510] sm:$0xff]
  %v2389 = vld [vmem:[%s2225 + $0x518] sm:$0xff]
  %v2390 = vld [vmem:[%s2225 + $0x520] sm:$0xff]
  %v2391 = vld [vmem:[%s2225 + $0x528] sm:$0xff]
  %v2392 = vld [vmem:[%s2225 + $0x530] sm:$0xff]
  %v2393 = vld [vmem:[%s2225 + $0x538] sm:$0xff]
  %v2394 = vld [vmem:[%s2225 + $0x540] sm:$0xff]
  %v2395 = vld [vmem:[%s2225 + $0x548] sm:$0xff]
  %v2396 = vld [vmem:[%s2225 + $0x550] sm:$0xff]
  %v2397 = vld [vmem:[%s2225 + $0x558] sm:$0xff]
  %v2398 = vld [vmem:[%s2225 + $0x560] sm:$0xff]
  %v2399 = vld [vmem:[%s2225 + $0x568] sm:$0xff]
  %v2400 = vld [vmem:[%s2225 + $0x570] sm:$0xff]
  %v2401 = vld [vmem:[%s2225 + $0x578] sm:$0xff]
  %v2402 = vld [vmem:[%s2225 + $0x580] sm:$0xff]
  %v2403 = vld [vmem:[%s2225 + $0x588] sm:$0xff]
  %v2404 = vld [vmem:[%s2225 + $0x590] sm:$0xff]
  %v2405 = vld [vmem:[%s2225 + $0x598] sm:$0xff]
  %v2406 = vld [vmem:[%s2225 + $0x5a0] sm:$0xff]
  %v2407 = vld [vmem:[%s2225 + $0x5a8] sm:$0xff]
  %v2408 = vld [vmem:[%s2225 + $0x5b0] sm:$0xff]
  %v2409 = vld [vmem:[%s2225 + $0x5b8] sm:$0xff]
  %v2410 = vld [vmem:[%s2225 + $0x5c0] sm:$0xff]
  %v2411 = vld [vmem:[%s2225 + $0x5c8] sm:$0xff]
  %v2412 = vld [vmem:[%s2225 + $0x5d0] sm:$0xff]
  %v2413 = vld [vmem:[%s2225 + $0x5d8] sm:$0xff]
  %v2414 = vld [vmem:[%s2225 + $0x5e0] sm:$0xff]
  %v2415 = vld [vmem:[%s2225 + $0x5e8] sm:$0xff]
  %v2416 = vld [vmem:[%s2225 + $0x5f0] sm:$0xff]
  %v2417 = vld [vmem:[%s2225 + $0x5f8] sm:$0xff]
  %v2418 = vld [vmem:[%s2225 + $0x600] sm:$0xff]
  %v2419 = vld [vmem:[%s2225 + $0x608] sm:$0xff]
  %v2420 = vld [vmem:[%s2225 + $0x610] sm:$0xff]
  %v2421 = vld [vmem:[%s2225 + $0x618] sm:$0xff]
  %v2422 = vld [vmem:[%s2225 + $0x620] sm:$0xff]
  %v2423 = vld [vmem:[%s2225 + $0x628] sm:$0xff]
  %v2424 = vld [vmem:[%s2225 + $0x630] sm:$0xff]
  %v2425 = vld [vmem:[%s2225 + $0x638] sm:$0xff]
  %v2426 = vld [vmem:[%s2225 + $0x640] sm:$0xff]
  %v2427 = vld [vmem:[%s2225 + $0x648] sm:$0xff]
  %v2428 = vld [vmem:[%s2225 + $0x650] sm:$0xff]
  %v2429 = vld [vmem:[%s2225 + $0x658] sm:$0xff]
  %v2430 = vld [vmem:[%s2225 + $0x660] sm:$0xff]
  %v2431 = vld [vmem:[%s2225 + $0x668] sm:$0xff]
  %v2432 = vld [vmem:[%s2225 + $0x670] sm:$0xff]
  %v2433 = vld [vmem:[%s2225 + $0x678] sm:$0xff]
  %v2434 = vld [vmem:[%s2225 + $0x680] sm:$0xff]
  %v2435 = vld [vmem:[%s2225 + $0x688] sm:$0xff]
  %v2436 = vld [vmem:[%s2225 + $0x690] sm:$0xff]
  %v2437 = vld [vmem:[%s2225 + $0x698] sm:$0xff]
  %v2438 = vld [vmem:[%s2225 + $0x6a0] sm:$0xff]
  %v2439 = vld [vmem:[%s2225 + $0x6a8] sm:$0xff]
  %v2440 = vld [vmem:[%s2225 + $0x6b0] sm:$0xff]
  %v2441 = vld [vmem:[%s2225 + $0x6b8] sm:$0xff]
  %v2442 = vld [vmem:[%s2225 + $0x6c0] sm:$0xff]
  %v2443 = vld [vmem:[%s2225 + $0x6c8] sm:$0xff]
  %v2444 = vld [vmem:[%s2225 + $0x6d0] sm:$0xff]
  %v2445 = vld [vmem:[%s2225 + $0x6d8] sm:$0xff]
  %v2446 = vld [vmem:[%s2225 + $0x6e0] sm:$0xff]
  %v2447 = vld [vmem:[%s2225 + $0x6e8] sm:$0xff]
  %v2448 = vld [vmem:[%s2225 + $0x6f0] sm:$0xff]
  %v2449 = vld [vmem:[%s2225 + $0x6f8] sm:$0xff]
  %v2450 = vld [vmem:[%s2225 + $0x700] sm:$0xff]
  %v2451 = vld [vmem:[%s2225 + $0x708] sm:$0xff]
  %v2452 = vld [vmem:[%s2225 + $0x710] sm:$0xff]
  %v2453 = vld [vmem:[%s2225 + $0x718] sm:$0xff]
  %v2454 = vld [vmem:[%s2225 + $0x720] sm:$0xff]
  %v2455 = vld [vmem:[%s2225 + $0x728] sm:$0xff]
  %v2456 = vld [vmem:[%s2225 + $0x730] sm:$0xff]
  %v2457 = vld [vmem:[%s2225 + $0x738] sm:$0xff]
  %v2458 = vld [vmem:[%s2225 + $0x740] sm:$0xff]
  %v2459 = vld [vmem:[%s2225 + $0x748] sm:$0xff]
  %v2460 = vld [vmem:[%s2225 + $0x750] sm:$0xff]
  %v2461 = vld [vmem:[%s2225 + $0x758] sm:$0xff]
  %v2462 = vld [vmem:[%s2225 + $0x760] sm:$0xff]
  %v2463 = vld [vmem:[%s2225 + $0x768] sm:$0xff]
  %v2464 = vld [vmem:[%s2225 + $0x770] sm:$0xff]
  %v2465 = vld [vmem:[%s2225 + $0x778] sm:$0xff]
  %v2466 = vld [vmem:[%s2225 + $0x780] sm:$0xff]
  %v2467 = vld [vmem:[%s2225 + $0x788] sm:$0xff]
  %v2468 = vld [vmem:[%s2225 + $0x790] sm:$0xff]
  %v2469 = vld [vmem:[%s2225 + $0x798] sm:$0xff]
  %v2470 = vld [vmem:[%s2225 + $0x7a0] sm:$0xff]
  %v2471 = vld [vmem:[%s2225 + $0x7a8] sm:$0xff]
  %v2472 = vld [vmem:[%s2225 + $0x7b0] sm:$0xff]
  %v2473 = vld [vmem:[%s2225 + $0x7b8] sm:$0xff]
  %v2474 = vld [vmem:[%s2225 + $0x7c0] sm:$0xff]
  %v2475 = vld [vmem:[%s2225 + $0x7c8] sm:$0xff]
  %v2476 = vld [vmem:[%s2225 + $0x7d0] sm:$0xff]
  %v2477 = vld [vmem:[%s2225 + $0x7d8] sm:$0xff]
  %v2478 = vld [vmem:[%s2225 + $0x7e0] sm:$0xff]
  %v2479 = vld [vmem:[%s2225 + $0x7e8] sm:$0xff]
  %v2480 = vld [vmem:[%s2225 + $0x7f0] sm:$0xff]
  %v2481 = vld [vmem:[%s2225 + $0x7f8] sm:$0xff]
  %2482 = vmatprep.subr.mxu0 %v2227
  %2483 = vmatpush1.msra.mxu0 %v2226
  %2484 = vmatprep.subr.mxu0 %v2231
  %2485 = vmatpush1.msra.mxu0 %v2230
  %2486 = vmatprep.subr.mxu0 %v2235
  %2487 = vmatpush1.msra.mxu0 %v2234
  %2488 = vmatprep.subr.mxu0 %v2239
  %2489 = vmatpush1.msra.mxu0 %v2238
  %2490 = vmatprep.subr.mxu0 %v2243
  %2491 = vmatpush1.msra.mxu0 %v2242
  %2492 = vmatprep.subr.mxu0 %v2247
  %2493 = vmatpush1.msra.mxu0 %v2246
  %2494 = vmatprep.subr.mxu0 %v2251
  %2495 = vmatpush1.msra.mxu0 %v2250
  %2496 = vmatprep.subr.mxu0 %v2255
  %2497 = vmatpush1.msra.mxu0 %v2254
  %2498 = vmatprep.subr.mxu0 %v2259
  %2499 = vmatpush1.msra.mxu0 %v2258
  %2500 = vmatprep.subr.mxu0 %v2263
  %2501 = vmatpush1.msra.mxu0 %v2262
  %2502 = vmatprep.subr.mxu0 %v2267
  %2503 = vmatpush1.msra.mxu0 %v2266
  %2504 = vmatprep.subr.mxu0 %v2271
  %2505 = vmatpush1.msra.mxu0 %v2270
  %2506 = vmatprep.subr.mxu0 %v2275
  %2507 = vmatpush1.msra.mxu0 %v2274
  %2508 = vmatprep.subr.mxu0 %v2279
  %2509 = vmatpush1.msra.mxu0 %v2278
  %2510 = vmatprep.subr.mxu0 %v2283
  %2511 = vmatpush1.msra.mxu0 %v2282
  %2512 = vmatprep.subr.mxu0 %v2287
  %2513 = vmatpush1.msra.mxu0 %v2286
  %2514 = vmatprep.subr.mxu0 %v2291
  %2515 = vmatpush1.msra.mxu0 %v2290
  %2516 = vmatprep.subr.mxu0 %v2295
  %2517 = vmatpush1.msra.mxu0 %v2294
  %2518 = vmatprep.subr.mxu0 %v2299
  %2519 = vmatpush1.msra.mxu0 %v2298
  %2520 = vmatprep.subr.mxu0 %v2303
  %2521 = vmatpush1.msra.mxu0 %v2302
  %2522 = vmatprep.subr.mxu0 %v2307
  %2523 = vmatpush1.msra.mxu0 %v2306
  %2524 = vmatprep.subr.mxu0 %v2311
  %2525 = vmatpush1.msra.mxu0 %v2310
  %2526 = vmatprep.subr.mxu0 %v2315
  %2527 = vmatpush1.msra.mxu0 %v2314
  %2528 = vmatprep.subr.mxu0 %v2319
  %2529 = vmatpush1.msra.mxu0 %v2318
  %2530 = vmatprep.subr.mxu0 %v2323
  %2531 = vmatpush1.msra.mxu0 %v2322
  %2532 = vmatprep.subr.mxu0 %v2327
  %2533 = vmatpush1.msra.mxu0 %v2326
  %2534 = vmatprep.subr.mxu0 %v2331
  %2535 = vmatpush1.msra.mxu0 %v2330
  %2536 = vmatprep.subr.mxu0 %v2335
  %2537 = vmatpush1.msra.mxu0 %v2334
  %2538 = vmatprep.subr.mxu0 %v2339
  %2539 = vmatpush1.msra.mxu0 %v2338
  %2540 = vmatprep.subr.mxu0 %v2343
  %2541 = vmatpush1.msra.mxu0 %v2342
  %2542 = vmatprep.subr.mxu0 %v2347
  %2543 = vmatpush1.msra.mxu0 %v2346
  %2544 = vmatprep.subr.mxu0 %v2351
  %2545 = vmatpush1.msra.mxu0 %v2350
  %2546 = vmatprep.mubr.f32.mxu0 %v2222
  %2547 = vmatmul.mubr.f32.gmra.mrb[0].mxu0 %v2221
  %v2548 = vpop.f32.mrb[0].mxu0
  %v2549 = vadd.f32 0.0, %v2548
  %v2550 = vpop.f32.mrb[0].mxu0
  %v2551 = vadd.f32 0.0, %v2550
  %2552 = vdwg.mxu0
  %2553 = vmatprep.subr.mxu0 %v2355
  %2554 = vmatpush1.msra.mxu0 %v2354
  %2555 = vmatprep.subr.mxu0 %v2359
  %2556 = vmatpush1.msra.mxu0 %v2358
  %2557 = vmatprep.subr.mxu0 %v2363
  %2558 = vmatpush1.msra.mxu0 %v2362
  %2559 = vmatprep.subr.mxu0 %v2367
  %2560 = vmatpush1.msra.mxu0 %v2366
  %2561 = vmatprep.subr.mxu0 %v2371
  %2562 = vmatpush1.msra.mxu0 %v2370
  %2563 = vmatprep.subr.mxu0 %v2375
  %2564 = vmatpush1.msra.mxu0 %v2374
  %2565 = vmatprep.subr.mxu0 %v2379
  %2566 = vmatpush1.msra.mxu0 %v2378
  %2567 = vmatprep.subr.mxu0 %v2383
  %2568 = vmatpush1.msra.mxu0 %v2382
  %2569 = vmatprep.subr.mxu0 %v2387
  %2570 = vmatpush1.msra.mxu0 %v2386
  %2571 = vmatprep.subr.mxu0 %v2391
  %2572 = vmatpush1.msra.mxu0 %v2390
  %2573 = vmatprep.subr.mxu0 %v2395
  %2574 = vmatpush1.msra.mxu0 %v2394
  %2575 = vmatprep.subr.mxu0 %v2399
  %2576 = vmatpush1.msra.mxu0 %v2398
  %2577 = vmatprep.subr.mxu0 %v2403
  %2578 = vmatpush1.msra.mxu0 %v2402
  %2579 = vmatprep.subr.mxu0 %v2407
  %2580 = vmatpush1.msra.mxu0 %v2406
  %2581 = vmatprep.subr.mxu0 %v2411
  %2582 = vmatpush1.msra.mxu0 %v2410
  %2583 = vmatprep.subr.mxu0 %v2415
  %2584 = vmatpush1.msra.mxu0 %v2414
  %2585 = vmatprep.subr.mxu0 %v2419
  %2586 = vmatpush1.msra.mxu0 %v2418
  %2587 = vmatprep.subr.mxu0 %v2423
  %2588 = vmatpush1.msra.mxu0 %v2422
  %2589 = vmatprep.subr.mxu0 %v2427
  %2590 = vmatpush1.msra.mxu0 %v2426
  %2591 = vmatprep.subr.mxu0 %v2431
  %2592 = vmatpush1.msra.mxu0 %v2430
  %2593 = vmatprep.subr.mxu0 %v2435
  %2594 = vmatpush1.msra.mxu0 %v2434
  %2595 = vmatprep.subr.mxu0 %v2439
  %2596 = vmatpush1.msra.mxu0 %v2438
  %2597 = vmatprep.subr.mxu0 %v2443
  %2598 = vmatpush1.msra.mxu0 %v2442
  %2599 = vmatprep.subr.mxu0 %v2447
  %2600 = vmatpush1.msra.mxu0 %v2446
  %2601 = vmatprep.subr.mxu0 %v2451
  %2602 = vmatpush1.msra.mxu0 %v2450
  %2603 = vmatprep.subr.mxu0 %v2455
  %2604 = vmatpush1.msra.mxu0 %v2454
  %2605 = vmatprep.subr.mxu0 %v2459
  %2606 = vmatpush1.msra.mxu0 %v2458
  %2607 = vmatprep.subr.mxu0 %v2463
  %2608 = vmatpush1.msra.mxu0 %v2462
  %2609 = vmatprep.subr.mxu0 %v2467
  %2610 = vmatpush1.msra.mxu0 %v2466
  %2611 = vmatprep.subr.mxu0 %v2471
  %2612 = vmatpush1.msra.mxu0 %v2470
  %2613 = vmatprep.subr.mxu0 %v2475
  %2614 = vmatpush1.msra.mxu0 %v2474
  %2615 = vmatprep.subr.mxu0 %v2479
  %2616 = vmatpush1.msra.mxu0 %v2478
  %2617 = vmatprep.mubr.f32.mxu0 %v2224
  %2618 = vmatmul.mubr.f32.gmra.mrb[0].mxu0 %v2223
  %v2619 = vpop.f32.mrb[0].mxu0
  %v2620 = vadd.f32 %v2549, %v2619
  %v2621 = vpop.f32.mrb[0].mxu0
  %v2622 = vadd.f32 %v2551, %v2621
  %2623 = vdwg.mxu0
  %2624 = vmatprep.subr.mxu0 %v2229
  %2625 = vmatpush1.msra.mxu0 %v2228
  %2626 = vmatprep.subr.mxu0 %v2233
  %2627 = vmatpush1.msra.mxu0 %v2232
  %2628 = vmatprep.subr.mxu0 %v2237
  %2629 = vmatpush1.msra.mxu0 %v2236
  %2630 = vmatprep.subr.mxu0 %v2241
  %2631 = vmatpush1.msra.mxu0 %v2240
  %2632 = vmatprep.subr.mxu0 %v2245
  %2633 = vmatpush1.msra.mxu0 %v2244
  %2634 = vmatprep.subr.mxu0 %v2249
  %2635 = vmatpush1.msra.mxu0 %v2248
  %2636 = vmatprep.subr.mxu0 %v2253
  %2637 = vmatpush1.msra.mxu0 %v2252
  %2638 = vmatprep.subr.mxu0 %v2257
  %2639 = vmatpush1.msra.mxu0 %v2256
  %2640 = vmatprep.subr.mxu0 %v2261
  %2641 = vmatpush1.msra.mxu0 %v2260
  %2642 = vmatprep.subr.mxu0 %v2265
  %2643 = vmatpush1.msra.mxu0 %v2264
  %2644 = vmatprep.subr.mxu0 %v2269
  %2645 = vmatpush1.msra.mxu0 %v2268
  %2646 = vmatprep.subr.mxu0 %v2273
  %2647 = vmatpush1.msra.mxu0 %v2272
  %2648 = vmatprep.subr.mxu0 %v2277
  %2649 = vmatpush1.msra.mxu0 %v2276
  %2650 = vmatprep.subr.mxu0 %v2281
  %2651 = vmatpush1.msra.mxu0 %v2280
  %2652 = vmatprep.subr.mxu0 %v2285
  %2653 = vmatpush1.msra.mxu0 %v2284
  %2654 = vmatprep.subr.mxu0 %v2289
  %2655 = vmatpush1.msra.mxu0 %v2288
  %2656 = vmatprep.subr.mxu0 %v2293
  %2657 = vmatpush1.msra.mxu0 %v2292
  %2658 = vmatprep.subr.mxu0 %v2297
  %2659 = vmatpush1.msra.mxu0 %v2296
  %2660 = vmatprep.subr.mxu0 %v2301
  %2661 = vmatpush1.msra.mxu0 %v2300
  %2662 = vmatprep.subr.mxu0 %v2305
  %2663 = vmatpush1.msra.mxu0 %v2304
  %2664 = vmatprep.subr.mxu0 %v2309
  %2665 = vmatpush1.msra.mxu0 %v2308
  %2666 = vmatprep.subr.mxu0 %v2313
  %2667 = vmatpush1.msra.mxu0 %v2312
  %2668 = vmatprep.subr.mxu0 %v2317
  %2669 = vmatpush1.msra.mxu0 %v2316
  %2670 = vmatprep.subr.mxu0 %v2321
  %2671 = vmatpush1.msra.mxu0 %v2320
  %2672 = vmatprep.subr.mxu0 %v2325
  %2673 = vmatpush1.msra.mxu0 %v2324
  %2674 = vmatprep.subr.mxu0 %v2329
  %2675 = vmatpush1.msra.mxu0 %v2328
  %2676 = vmatprep.subr.mxu0 %v2333
  %2677 = vmatpush1.msra.mxu0 %v2332
  %2678 = vmatprep.subr.mxu0 %v2337
  %2679 = vmatpush1.msra.mxu0 %v2336
  %2680 = vmatprep.subr.mxu0 %v2341
  %2681 = vmatpush1.msra.mxu0 %v2340
  %2682 = vmatprep.subr.mxu0 %v2345
  %2683 = vmatpush1.msra.mxu0 %v2344
  %2684 = vmatprep.subr.mxu0 %v2349
  %2685 = vmatpush1.msra.mxu0 %v2348
  %2686 = vmatprep.subr.mxu0 %v2353
  %2687 = vmatpush1.msra.mxu0 %v2352
  %2688 = vmatprep.mubr.f32.mxu0 %v2222
  %2689 = vmatmul.mubr.f32.gmra.mrb[0].mxu0 %v2221
  %v2690 = vpop.f32.mrb[0].mxu0
  %v2691 = vadd.f32 0.0, %v2690
  %v2692 = vpop.f32.mrb[0].mxu0
  %v2693 = vadd.f32 0.0, %v2692
  %2694 = vdwg.mxu0
  %2695 = vmatprep.subr.mxu0 %v2357
  %2696 = vmatpush1.msra.mxu0 %v2356
  %2697 = vmatprep.subr.mxu0 %v2361
  %2698 = vmatpush1.msra.mxu0 %v2360
  %2699 = vmatprep.subr.mxu0 %v2365
  %2700 = vmatpush1.msra.mxu0 %v2364
  %2701 = vmatprep.subr.mxu0 %v2369
  %2702 = vmatpush1.msra.mxu0 %v2368
  %2703 = vmatprep.subr.mxu0 %v2373
  %2704 = vmatpush1.msra.mxu0 %v2372
  %2705 = vmatprep.subr.mxu0 %v2377
  %2706 = vmatpush1.msra.mxu0 %v2376
  %2707 = vmatprep.subr.mxu0 %v2381
  %2708 = vmatpush1.msra.mxu0 %v2380
  %2709 = vmatprep.subr.mxu0 %v2385
  %2710 = vmatpush1.msra.mxu0 %v2384
  %2711 = vmatprep.subr.mxu0 %v2389
  %2712 = vmatpush1.msra.mxu0 %v2388
  %2713 = vmatprep.subr.mxu0 %v2393
  %2714 = vmatpush1.msra.mxu0 %v2392
  %2715 = vmatprep.subr.mxu0 %v2397
  %2716 = vmatpush1.msra.mxu0 %v2396
  %2717 = vmatprep.subr.mxu0 %v2401
  %2718 = vmatpush1.msra.mxu0 %v2400
  %2719 = vmatprep.subr.mxu0 %v2405
  %2720 = vmatpush1.msra.mxu0 %v2404
  %2721 = vmatprep.subr.mxu0 %v2409
  %2722 = vmatpush1.msra.mxu0 %v2408
  %2723 = vmatprep.subr.mxu0 %v2413
  %2724 = vmatpush1.msra.mxu0 %v2412
  %2725 = vmatprep.subr.mxu0 %v2417
  %2726 = vmatpush1.msra.mxu0 %v2416
  %2727 = vmatprep.subr.mxu0 %v2421
  %2728 = vmatpush1.msra.mxu0 %v2420
  %2729 = vmatprep.subr.mxu0 %v2425
  %2730 = vmatpush1.msra.mxu0 %v2424
  %2731 = vmatprep.subr.mxu0 %v2429
  %2732 = vmatpush1.msra.mxu0 %v2428
  %2733 = vmatprep.subr.mxu0 %v2433
  %2734 = vmatpush1.msra.mxu0 %v2432
  %2735 = vmatprep.subr.mxu0 %v2437
  %2736 = vmatpush1.msra.mxu0 %v2436
  %2737 = vmatprep.subr.mxu0 %v2441
  %2738 = vmatpush1.msra.mxu0 %v2440
  %2739 = vmatprep.subr.mxu0 %v2445
  %2740 = vmatpush1.msra.mxu0 %v2444
  %2741 = vmatprep.subr.mxu0 %v2449
  %2742 = vmatpush1.msra.mxu0 %v2448
  %2743 = vmatprep.subr.mxu0 %v2453
  %2744 = vmatpush1.msra.mxu0 %v2452
  %2745 = vmatprep.subr.mxu0 %v2457
  %2746 = vmatpush1.msra.mxu0 %v2456
  %2747 = vmatprep.subr.mxu0 %v2461
  %2748 = vmatpush1.msra.mxu0 %v2460
  %2749 = vmatprep.subr.mxu0 %v2465
  %2750 = vmatpush1.msra.mxu0 %v2464
  %2751 = vmatprep.subr.mxu0 %v2469
  %2752 = vmatpush1.msra.mxu0 %v2468
  %2753 = vmatprep.subr.mxu0 %v2473
  %2754 = vmatpush1.msra.mxu0 %v2472
  %2755 = vmatprep.subr.mxu0 %v2477
  %2756 = vmatpush1.msra.mxu0 %v2476
  %2757 = vmatprep.subr.mxu0 %v2481
  %2758 = vmatpush1.msra.mxu0 %v2480
  %2759 = vmatprep.mubr.f32.mxu0 %v2224
  %2760 = vmatmul.mubr.f32.gmra.mrb[0].mxu0 %v2223
  %v2761 = vpop.f32.mrb[0].mxu0
  %v2762 = vadd.f32 %v2691, %v2761
  %v2763 = vpop.f32.mrb[0].mxu0
  %v2764 = vadd.f32 %v2693, %v2763
  %2765 = vdwg.mxu0
  %s2766 = scalar_lea.vmem %s3, 2
  %v2767 = vld [vmem:[%s2766] sm:$0x1]
  %s2768 = scalar_lea.vmem %s4, 2
  %v2769 = vld [vmem:[%s2768] sm:$0x1]
  %v2770 = vsel %vm313, %v2620, 0.0
  %v2771 = vrot.slane %v2770, 4
  %v2772 = vadd.f32 %v2770, %v2771
  %v2773 = vrot.slane %v2772, 2
  %v2774 = vadd.f32 %v2772, %v2773
  %v2775 = vrot.slane %v2774, 1
  %v2776 = vadd.f32 %v2774, %v2775
  %v2777 = vsel %vm313, %v2622, 0.0
  %v2778 = vrot.slane %v2777, 4
  %v2779 = vadd.f32 %v2777, %v2778
  %v2780 = vrot.slane %v2779, 2
  %v2781 = vadd.f32 %v2779, %v2780
  %v2782 = vrot.slane %v2781, 1
  %v2783 = vadd.f32 %v2781, %v2782
  %v2784 = vsel %vm313, %v2762, 0.0
  %v2785 = vrot.slane %v2784, 4
  %v2786 = vadd.f32 %v2784, %v2785
  %v2787 = vrot.slane %v2786, 2
  %v2788 = vadd.f32 %v2786, %v2787
  %v2789 = vrot.slane %v2788, 1
  %v2790 = vadd.f32 %v2788, %v2789
  %v2791 = vsel %vm313, %v2764, 0.0
  %v2792 = vrot.slane %v2791, 4
  %v2793 = vadd.f32 %v2791, %v2792
  %v2794 = vrot.slane %v2793, 2
  %v2795 = vadd.f32 %v2793, %v2794
  %v2796 = vrot.slane %v2795, 1
  %v2797 = vadd.f32 %v2795, %v2796
  %v2798 = vmul.f32 %v2620, %v2620
  %v2799 = vmul.f32 %v2622, %v2622
  %v2800 = vmul.f32 %v2762, %v2762
  %v2801 = vmul.f32 %v2764, %v2764
  %v2802 = vsel %vm313, %v2798, 0.0
  %v2803 = vrot.slane %v2802, 4
  %v2804 = vadd.f32 %v2802, %v2803
  %v2805 = vrot.slane %v2804, 2
  %v2806 = vadd.f32 %v2804, %v2805
  %v2807 = vrot.slane %v2806, 1
  %v2808 = vadd.f32 %v2806, %v2807
  %v2809 = vsel %vm313, %v2799, 0.0
  %v2810 = vrot.slane %v2809, 4
  %v2811 = vadd.f32 %v2809, %v2810
  %v2812 = vrot.slane %v2811, 2
  %v2813 = vadd.f32 %v2811, %v2812
  %v2814 = vrot.slane %v2813, 1
  %v2815 = vadd.f32 %v2813, %v2814
  %v2816 = vsel %vm313, %v2800, 0.0
  %v2817 = vrot.slane %v2816, 4
  %v2818 = vadd.f32 %v2816, %v2817
  %v2819 = vrot.slane %v2818, 2
  %v2820 = vadd.f32 %v2818, %v2819
  %v2821 = vrot.slane %v2820, 1
  %v2822 = vadd.f32 %v2820, %v2821
  %v2823 = vsel %vm313, %v2801, 0.0
  %v2824 = vrot.slane %v2823, 4
  %v2825 = vadd.f32 %v2823, %v2824
  %v2826 = vrot.slane %v2825, 2
  %v2827 = vadd.f32 %v2825, %v2826
  %v2828 = vrot.slane %v2827, 1
  %v2829 = vadd.f32 %v2827, %v2828
  %2830 = vmatprep.subr.mxu0 0.0
  %2831 = vmatpush1.msra.mxu0 %v40
  %2832 = vmatprep.subr.mxu0 0.0
  %2833 = vmatpush1.msra.mxu0 %v41
  %2834 = vmatprep.subr.mxu0 0.0
  %2835 = vmatpush1.msra.mxu0 %v42
  %2836 = vmatprep.subr.mxu0 0.0
  %2837 = vmatpush1.msra.mxu0 %v43
  %2838 = vmatprep.subr.mxu0 0.0
  %2839 = vmatpush1.msra.mxu0 %v44
  %2840 = vmatprep.subr.mxu0 0.0
  %2841 = vmatpush1.msra.mxu0 %v45
  %2842 = vmatprep.subr.mxu0 0.0
  %2843 = vmatpush1.msra.mxu0 %v46
  %2844 = vmatprep.subr.mxu0 0.0
  %2845 = vmatpush1.msra.mxu0 %v47
  %2846 = vmatprep.subr.mxu0 0.0
  %2847 = vmatpush1.msra.mxu0 %v48
  %2848 = vmatprep.subr.mxu0 0.0
  %2849 = vmatpush1.msra.mxu0 %v49
  %2850 = vmatprep.subr.mxu0 0.0
  %2851 = vmatpush1.msra.mxu0 %v50
  %2852 = vmatprep.subr.mxu0 0.0
  %2853 = vmatpush1.msra.mxu0 %v51
  %2854 = vmatprep.subr.mxu0 0.0
  %2855 = vmatpush1.msra.mxu0 %v52
  %2856 = vmatprep.subr.mxu0 0.0
  %2857 = vmatpush1.msra.mxu0 %v53
  %2858 = vmatprep.subr.mxu0 0.0
  %2859 = vmatpush1.msra.mxu0 %v54
  %2860 = vmatprep.subr.mxu0 0.0
  %2861 = vmatpush1.msra.mxu0 %v55
  %2862 = vmatprep.subr.mxu0 0.0
  %2863 = vmatpush1.msra.mxu0 %v56
  %2864 = vmatprep.subr.mxu0 0.0
  %2865 = vmatpush1.msra.mxu0 %v57
  %2866 = vmatprep.subr.mxu0 0.0
  %2867 = vmatpush1.msra.mxu0 %v58
  %2868 = vmatprep.subr.mxu0 0.0
  %2869 = vmatpush1.msra.mxu0 %v59
  %2870 = vmatprep.subr.mxu0 0.0
  %2871 = vmatpush1.msra.mxu0 %v60
  %2872 = vmatprep.subr.mxu0 0.0
  %2873 = vmatpush1.msra.mxu0 %v61
  %2874 = vmatprep.subr.mxu0 0.0
  %2875 = vmatpush1.msra.mxu0 %v62
  %2876 = vmatprep.subr.mxu0 0.0
  %2877 = vmatpush1.msra.mxu0 %v63
  %2878 = vmatprep.subr.mxu0 0.0
  %2879 = vmatpush1.msra.mxu0 %v64
  %2880 = vmatprep.subr.mxu0 0.0
  %2881 = vmatpush1.msra.mxu0 %v65
  %2882 = vmatprep.subr.mxu0 0.0
  %2883 = vmatpush1.msra.mxu0 %v66
  %2884 = vmatprep.subr.mxu0 0.0
  %2885 = vmatpush1.msra.mxu0 %v67
  %2886 = vmatprep.subr.mxu0 0.0
  %2887 = vmatpush1.msra.mxu0 %v68
  %2888 = vmatprep.subr.mxu0 0.0
  %2889 = vmatpush1.msra.mxu0 %v69
  %2890 = vmatprep.subr.mxu0 0.0
  %2891 = vmatpush1.msra.mxu0 %v70
  %2892 = vmatprep.subr.mxu0 0.0
  %2893 = vmatpush1.msra.mxu0 %v71
  %2894 = vmatprep.mubr.f32.mxu0 %v2783
  %2895 = vmatmul.mubr.f32.gmra.mrb[0].mxu0 %v2776
  %v2896 = vpop.f32.mrb[0].mxu0
  %v2897 = vadd.f32 0.0, %v2896
  %v2898 = vpop.f32.mrb[0].mxu0
  %2899 = vdwg.mxu0
  %2900 = vmatprep.subr.mxu0 0.0
  %2901 = vmatpush1.msra.mxu0 %v72
  %2902 = vmatprep.subr.mxu0 0.0
  %2903 = vmatpush1.msra.mxu0 %v73
  %2904 = vmatprep.subr.mxu0 0.0
  %2905 = vmatpush1.msra.mxu0 %v74
  %2906 = vmatprep.subr.mxu0 0.0
  %2907 = vmatpush1.msra.mxu0 %v75
  %2908 = vmatprep.subr.mxu0 0.0
  %2909 = vmatpush1.msra.mxu0 %v76
  %2910 = vmatprep.subr.mxu0 0.0
  %2911 = vmatpush1.msra.mxu0 %v77
  %2912 = vmatprep.subr.mxu0 0.0
  %2913 = vmatpush1.msra.mxu0 %v78
  %2914 = vmatprep.subr.mxu0 0.0
  %2915 = vmatpush1.msra.mxu0 %v79
  %2916 = vmatprep.subr.mxu0 0.0
  %2917 = vmatpush1.msra.mxu0 %v80
  %2918 = vmatprep.subr.mxu0 0.0
  %2919 = vmatpush1.msra.mxu0 %v81
  %2920 = vmatprep.subr.mxu0 0.0
  %2921 = vmatpush1.msra.mxu0 %v82
  %2922 = vmatprep.subr.mxu0 0.0
  %2923 = vmatpush1.msra.mxu0 %v83
  %2924 = vmatprep.subr.mxu0 0.0
  %2925 = vmatpush1.msra.mxu0 %v84
  %2926 = vmatprep.subr.mxu0 0.0
  %2927 = vmatpush1.msra.mxu0 %v85
  %2928 = vmatprep.subr.mxu0 0.0
  %2929 = vmatpush1.msra.mxu0 %v86
  %2930 = vmatprep.subr.mxu0 0.0
  %2931 = vmatpush1.msra.mxu0 %v87
  %2932 = vmatprep.subr.mxu0 0.0
  %2933 = vmatpush1.msra.mxu0 %v88
  %2934 = vmatprep.subr.mxu0 0.0
  %2935 = vmatpush1.msra.mxu0 %v89
  %2936 = vmatprep.subr.mxu0 0.0
  %2937 = vmatpush1.msra.mxu0 %v90
  %2938 = vmatprep.subr.mxu0 0.0
  %2939 = vmatpush1.msra.mxu0 %v91
  %2940 = vmatprep.subr.mxu0 0.0
  %2941 = vmatpush1.msra.mxu0 %v92
  %2942 = vmatprep.subr.mxu0 0.0
  %2943 = vmatpush1.msra.mxu0 %v93
  %2944 = vmatprep.subr.mxu0 0.0
  %2945 = vmatpush1.msra.mxu0 %v94
  %2946 = vmatprep.subr.mxu0 0.0
  %2947 = vmatpush1.msra.mxu0 %v95
  %2948 = vmatprep.subr.mxu0 0.0
  %2949 = vmatpush1.msra.mxu0 %v96
  %2950 = vmatprep.subr.mxu0 0.0
  %2951 = vmatpush1.msra.mxu0 %v97
  %2952 = vmatprep.subr.mxu0 0.0
  %2953 = vmatpush1.msra.mxu0 %v98
  %2954 = vmatprep.subr.mxu0 0.0
  %2955 = vmatpush1.msra.mxu0 %v99
  %2956 = vmatprep.subr.mxu0 0.0
  %2957 = vmatpush1.msra.mxu0 %v100
  %2958 = vmatprep.subr.mxu0 0.0
  %2959 = vmatpush1.msra.mxu0 %v101
  %2960 = vmatprep.subr.mxu0 0.0
  %2961 = vmatpush1.msra.mxu0 %v102
  %2962 = vmatprep.subr.mxu0 0.0
  %2963 = vmatpush1.msra.mxu0 %v103
  %2964 = vmatprep.mubr.f32.mxu0 %v2797
  %2965 = vmatmul.mubr.f32.gmra.mrb[0].mxu0 %v2790
  %v2966 = vpop.f32.mrb[0].mxu0
  %v2967 = vadd.f32 %v2897, %v2966
  %v2968 = vpop.f32.mrb[0].mxu0
  %2969 = vdwg.mxu0
  %v2970 = vmul.f32 %v2967, 0.015625
  %2971 = vmatprep.subr.mxu0 0.0
  %2972 = vmatpush1.msra.mxu0 %v40
  %2973 = vmatprep.subr.mxu0 0.0
  %2974 = vmatpush1.msra.mxu0 %v41
  %2975 = vmatprep.subr.mxu0 0.0
  %2976 = vmatpush1.msra.mxu0 %v42
  %2977 = vmatprep.subr.mxu0 0.0
  %2978 = vmatpush1.msra.mxu0 %v43
  %2979 = vmatprep.subr.mxu0 0.0
  %2980 = vmatpush1.msra.mxu0 %v44
  %2981 = vmatprep.subr.mxu0 0.0
  %2982 = vmatpush1.msra.mxu0 %v45
  %2983 = vmatprep.subr.mxu0 0.0
  %2984 = vmatpush1.msra.mxu0 %v46
  %2985 = vmatprep.subr.mxu0 0.0
  %2986 = vmatpush1.msra.mxu0 %v47
  %2987 = vmatprep.subr.mxu0 0.0
  %2988 = vmatpush1.msra.mxu0 %v48
  %2989 = vmatprep.subr.mxu0 0.0
  %2990 = vmatpush1.msra.mxu0 %v49
  %2991 = vmatprep.subr.mxu0 0.0
  %2992 = vmatpush1.msra.mxu0 %v50
  %2993 = vmatprep.subr.mxu0 0.0
  %2994 = vmatpush1.msra.mxu0 %v51
  %2995 = vmatprep.subr.mxu0 0.0
  %2996 = vmatpush1.msra.mxu0 %v52
  %2997 = vmatprep.subr.mxu0 0.0
  %2998 = vmatpush1.msra.mxu0 %v53
  %2999 = vmatprep.subr.mxu0 0.0
  %3000 = vmatpush1.msra.mxu0 %v54
  %3001 = vmatprep.subr.mxu0 0.0
  %3002 = vmatpush1.msra.mxu0 %v55
  %3003 = vmatprep.subr.mxu0 0.0
  %3004 = vmatpush1.msra.mxu0 %v56
  %3005 = vmatprep.subr.mxu0 0.0
  %3006 = vmatpush1.msra.mxu0 %v57
  %3007 = vmatprep.subr.mxu0 0.0
  %3008 = vmatpush1.msra.mxu0 %v58
  %3009 = vmatprep.subr.mxu0 0.0
  %3010 = vmatpush1.msra.mxu0 %v59
  %3011 = vmatprep.subr.mxu0 0.0
  %3012 = vmatpush1.msra.mxu0 %v60
  %3013 = vmatprep.subr.mxu0 0.0
  %3014 = vmatpush1.msra.mxu0 %v61
  %3015 = vmatprep.subr.mxu0 0.0
  %3016 = vmatpush1.msra.mxu0 %v62
  %3017 = vmatprep.subr.mxu0 0.0
  %3018 = vmatpush1.msra.mxu0 %v63
  %3019 = vmatprep.subr.mxu0 0.0
  %3020 = vmatpush1.msra.mxu0 %v64
  %3021 = vmatprep.subr.mxu0 0.0
  %3022 = vmatpush1.msra.mxu0 %v65
  %3023 = vmatprep.subr.mxu0 0.0
  %3024 = vmatpush1.msra.mxu0 %v66
  %3025 = vmatprep.subr.mxu0 0.0
  %3026 = vmatpush1.msra.mxu0 %v67
  %3027 = vmatprep.subr.mxu0 0.0
  %3028 = vmatpush1.msra.mxu0 %v68
  %3029 = vmatprep.subr.mxu0 0.0
  %3030 = vmatpush1.msra.mxu0 %v69
  %3031 = vmatprep.subr.mxu0 0.0
  %3032 = vmatpush1.msra.mxu0 %v70
  %3033 = vmatprep.subr.mxu0 0.0
  %3034 = vmatpush1.msra.mxu0 %v71
  %3035 = vmatprep.mubr.f32.mxu0 %v2815
  %3036 = vmatmul.mubr.f32.gmra.mrb[0].mxu0 %v2808
  %v3037 = vpop.f32.mrb[0].mxu0
  %v3038 = vadd.f32 0.0, %v3037
  %v3039 = vpop.f32.mrb[0].mxu0
  %3040 = vdwg.mxu0
  %3041 = vmatprep.subr.mxu0 0.0
  %3042 = vmatpush1.msra.mxu0 %v72
  %3043 = vmatprep.subr.mxu0 0.0
  %3044 = vmatpush1.msra.mxu0 %v73
  %3045 = vmatprep.subr.mxu0 0.0
  %3046 = vmatpush1.msra.mxu0 %v74
  %3047 = vmatprep.subr.mxu0 0.0
  %3048 = vmatpush1.msra.mxu0 %v75
  %3049 = vmatprep.subr.mxu0 0.0
  %3050 = vmatpush1.msra.mxu0 %v76
  %3051 = vmatprep.subr.mxu0 0.0
  %3052 = vmatpush1.msra.mxu0 %v77
  %3053 = vmatprep.subr.mxu0 0.0
  %3054 = vmatpush1.msra.mxu0 %v78
  %3055 = vmatprep.subr.mxu0 0.0
  %3056 = vmatpush1.msra.mxu0 %v79
  %3057 = vmatprep.subr.mxu0 0.0
  %3058 = vmatpush1.msra.mxu0 %v80
  %3059 = vmatprep.subr.mxu0 0.0
  %3060 = vmatpush1.msra.mxu0 %v81
  %3061 = vmatprep.subr.mxu0 0.0
  %3062 = vmatpush1.msra.mxu0 %v82
  %3063 = vmatprep.subr.mxu0 0.0
  %3064 = vmatpush1.msra.mxu0 %v83
  %3065 = vmatprep.subr.mxu0 0.0
  %3066 = vmatpush1.msra.mxu0 %v84
  %3067 = vmatprep.subr.mxu0 0.0
  %3068 = vmatpush1.msra.mxu0 %v85
  %3069 = vmatprep.subr.mxu0 0.0
  %3070 = vmatpush1.msra.mxu0 %v86
  %3071 = vmatprep.subr.mxu0 0.0
  %3072 = vmatpush1.msra.mxu0 %v87
  %3073 = vmatprep.subr.mxu0 0.0
  %3074 = vmatpush1.msra.mxu0 %v88
  %3075 = vmatprep.subr.mxu0 0.0
  %3076 = vmatpush1.msra.mxu0 %v89
  %3077 = vmatprep.subr.mxu0 0.0
  %3078 = vmatpush1.msra.mxu0 %v90
  %3079 = vmatprep.subr.mxu0 0.0
  %3080 = vmatpush1.msra.mxu0 %v91
  %3081 = vmatprep.subr.mxu0 0.0
  %3082 = vmatpush1.msra.mxu0 %v92
  %3083 = vmatprep.subr.mxu0 0.0
  %3084 = vmatpush1.msra.mxu0 %v93
  %3085 = vmatprep.subr.mxu0 0.0
  %3086 = vmatpush1.msra.mxu0 %v94
  %3087 = vmatprep.subr.mxu0 0.0
  %3088 = vmatpush1.msra.mxu0 %v95
  %3089 = vmatprep.subr.mxu0 0.0
  %3090 = vmatpush1.msra.mxu0 %v96
  %3091 = vmatprep.subr.mxu0 0.0
  %3092 = vmatpush1.msra.mxu0 %v97
  %3093 = vmatprep.subr.mxu0 0.0
  %3094 = vmatpush1.msra.mxu0 %v98
  %3095 = vmatprep.subr.mxu0 0.0
  %3096 = vmatpush1.msra.mxu0 %v99
  %3097 = vmatprep.subr.mxu0 0.0
  %3098 = vmatpush1.msra.mxu0 %v100
  %3099 = vmatprep.subr.mxu0 0.0
  %3100 = vmatpush1.msra.mxu0 %v101
  %3101 = vmatprep.subr.mxu0 0.0
  %3102 = vmatpush1.msra.mxu0 %v102
  %3103 = vmatprep.subr.mxu0 0.0
  %3104 = vmatpush1.msra.mxu0 %v103
  %3105 = vmatprep.mubr.f32.mxu0 %v2829
  %3106 = vmatmul.mubr.f32.gmra.mrb[0].mxu0 %v2822
  %v3107 = vpop.f32.mrb[0].mxu0
  %v3108 = vadd.f32 %v3038, %v3107
  %v3109 = vpop.f32.mrb[0].mxu0
  %3110 = vdwg.mxu0
  %v3111 = vmul.f32 %v3108, 0.015625
  %v3112 = vmul.f32 %v2970, %v2970
  %v3113 = vsub.f32 %v3111, %v3112
  %v3114 = vadd.f32 %v3113, 1e-05
  %v3115 = vrsqrt.pop %v3114
  %v3116 = vmul.f32 %v2767, %v3115
  %v3117 = vmul.f32 %v2970, %v3116
  %v3118 = vsub.f32 %v2769, %v3117
  %v3120 = vsel %vm663, %v3116, 0
  %3122 = vmatprep.subr.mxu0 %v33
  %3123 = vmatpush1.msra.mxu0 %v32
  %3124 = vmatprep.subr.mxu0 %v37
  %3125 = vmatpush1.msra.mxu0 %v36
  %3126 = vmatprep.subr.mxu0 0.0
  %3127 = vmatpush1.msra.mxu0 0.0
  %3128 = vmatprep.subr.mxu0 0.0
  %3129 = vmatpush1.msra.mxu0 0.0
  %3130 = vmatprep.subr.mxu0 0.0
  %3131 = vmatpush1.msra.mxu0 0.0
  %3132 = vmatprep.subr.mxu0 0.0
  %3133 = vmatpush1.msra.mxu0 0.0
  %3134 = vmatprep.subr.mxu0 0.0
  %3135 = vmatpush1.msra.mxu0 0.0
  %3136 = vmatprep.subr.mxu0 0.0
  %3137 = vmatpush1.msra.mxu0 0.0
  %3138 = vmatprep.subr.mxu0 0.0
  %3139 = vmatpush1.msra.mxu0 0.0
  %3140 = vmatprep.subr.mxu0 0.0
  %3141 = vmatpush1.msra.mxu0 0.0
  %3142 = vmatprep.subr.mxu0 0.0
  %3143 = vmatpush1.msra.mxu0 0.0
  %3144 = vmatprep.subr.mxu0 0.0
  %3145 = vmatpush1.msra.mxu0 0.0
  %3146 = vmatprep.subr.mxu0 0.0
  %3147 = vmatpush1.msra.mxu0 0.0
  %3148 = vmatprep.subr.mxu0 0.0
  %3149 = vmatpush1.msra.mxu0 0.0
  %3150 = vmatprep.subr.mxu0 0.0
  %3151 = vmatpush1.msra.mxu0 0.0
  %3152 = vmatprep.subr.mxu0 0.0
  %3153 = vmatpush1.msra.mxu0 0.0
  %3154 = vmatprep.subr.mxu0 0.0
  %3155 = vmatpush1.msra.mxu0 0.0
  %3156 = vmatprep.subr.mxu0 0.0
  %3157 = vmatpush1.msra.mxu0 0.0
  %3158 = vmatprep.subr.mxu0 0.0
  %3159 = vmatpush1.msra.mxu0 0.0
  %3160 = vmatprep.subr.mxu0 0.0
  %3161 = vmatpush1.msra.mxu0 0.0
  %3162 = vmatprep.subr.mxu0 0.0
  %3163 = vmatpush1.msra.mxu0 0.0
  %3164 = vmatprep.subr.mxu0 0.0
  %3165 = vmatpush1.msra.mxu0 0.0
  %3166 = vmatprep.subr.mxu0 0.0
  %3167 = vmatpush1.msra.mxu0 0.0
  %3168 = vmatprep.subr.mxu0 0.0
  %3169 = vmatpush1.msra.mxu0 0.0
  %3170 = vmatprep.subr.mxu0 0.0
  %3171 = vmatpush1.msra.mxu0 0.0
  %3172 = vmatprep.subr.mxu0 0.0
  %3173 = vmatpush1.msra.mxu0 0.0
  %3174 = vmatprep.subr.mxu0 0.0
  %3175 = vmatpush1.msra.mxu0 0.0
  %3176 = vmatprep.subr.mxu0 0.0
  %3177 = vmatpush1.msra.mxu0 0.0
  %3178 = vmatprep.subr.mxu0 0.0
  %3179 = vmatpush1.msra.mxu0 0.0
  %3180 = vmatprep.subr.mxu0 0.0
  %3181 = vmatpush1.msra.mxu0 0.0
  %3182 = vmatprep.subr.mxu0 0.0
  %3183 = vmatpush1.msra.mxu0 0.0
  %3184 = vmatprep.subr.mxu0 0.0
  %3185 = vmatpush1.msra.mxu0 0.0
  %3186 = vmatprep.mubr.f32.mxu0 0.0
  %3187 = vmatmul.mubr.f32.gmra.mrb[0].mxu0 %v3120
  %v3188 = vpop.f32.mrb[0].mxu0
  %v3189 = vadd.f32 0.0, %v3188
  %v3190 = vpop.f32.mrb[0].mxu0
  %v3191 = vadd.f32 0.0, %v3190
  %3192 = vdwg.mxu0
  %3193 = vmatprep.subr.mxu0 %v35
  %3194 = vmatpush1.msra.mxu0 %v34
  %3195 = vmatprep.subr.mxu0 %v39
  %3196 = vmatpush1.msra.mxu0 %v38
  %3197 = vmatprep.subr.mxu0 0.0
  %3198 = vmatpush1.msra.mxu0 0.0
  %3199 = vmatprep.subr.mxu0 0.0
  %3200 = vmatpush1.msra.mxu0 0.0
  %3201 = vmatprep.subr.mxu0 0.0
  %3202 = vmatpush1.msra.mxu0 0.0
  %3203 = vmatprep.subr.mxu0 0.0
  %3204 = vmatpush1.msra.mxu0 0.0
  %3205 = vmatprep.subr.mxu0 0.0
  %3206 = vmatpush1.msra.mxu0 0.0
  %3207 = vmatprep.subr.mxu0 0.0
  %3208 = vmatpush1.msra.mxu0 0.0
  %3209 = vmatprep.subr.mxu0 0.0
  %3210 = vmatpush1.msra.mxu0 0.0
  %3211 = vmatprep.subr.mxu0 0.0
  %3212 = vmatpush1.msra.mxu0 0.0
  %3213 = vmatprep.subr.mxu0 0.0
  %3214 = vmatpush1.msra.mxu0 0.0
  %3215 = vmatprep.subr.mxu0 0.0
  %3216 = vmatpush1.msra.mxu0 0.0
  %3217 = vmatprep.subr.mxu0 0.0
  %3218 = vmatpush1.msra.mxu0 0.0
  %3219 = vmatprep.subr.mxu0 0.0
  %3220 = vmatpush1.msra.mxu0 0.0
  %3221 = vmatprep.subr.mxu0 0.0
  %3222 = vmatpush1.msra.mxu0 0.0
  %3223 = vmatprep.subr.mxu0 0.0
  %3224 = vmatpush1.msra.mxu0 0.0
  %3225 = vmatprep.subr.mxu0 0.0
  %3226 = vmatpush1.msra.mxu0 0.0
  %3227 = vmatprep.subr.mxu0 0.0
  %3228 = vmatpush1.msra.mxu0 0.0
  %3229 = vmatprep.subr.mxu0 0.0
  %3230 = vmatpush1.msra.mxu0 0.0
  %3231 = vmatprep.subr.mxu0 0.0
  %3232 = vmatpush1.msra.mxu0 0.0
  %3233 = vmatprep.subr.mxu0 0.0
  %3234 = vmatpush1.msra.mxu0 0.0
  %3235 = vmatprep.subr.mxu0 0.0
  %3236 = vmatpush1.msra.mxu0 0.0
  %3237 = vmatprep.subr.mxu0 0.0
  %3238 = vmatpush1.msra.mxu0 0.0
  %3239 = vmatprep.subr.mxu0 0.0
  %3240 = vmatpush1.msra.mxu0 0.0
  %3241 = vmatprep.subr.mxu0 0.0
  %3242 = vmatpush1.msra.mxu0 0.0
  %3243 = vmatprep.subr.mxu0 0.0
  %3244 = vmatpush1.msra.mxu0 0.0
  %3245 = vmatprep.subr.mxu0 0.0
  %3246 = vmatpush1.msra.mxu0 0.0
  %3247 = vmatprep.subr.mxu0 0.0
  %3248 = vmatpush1.msra.mxu0 0.0
  %3249 = vmatprep.subr.mxu0 0.0
  %3250 = vmatpush1.msra.mxu0 0.0
  %3251 = vmatprep.subr.mxu0 0.0
  %3252 = vmatpush1.msra.mxu0 0.0
  %3253 = vmatprep.subr.mxu0 0.0
  %3254 = vmatpush1.msra.mxu0 0.0
  %3255 = vmatprep.subr.mxu0 0.0
  %3256 = vmatpush1.msra.mxu0 0.0
  %3257 = vmatprep.mubr.f32.mxu0 0.0
  %3258 = vmatmul.mubr.f32.gmra.mrb[0].mxu0 %v3120
  %v3259 = vpop.f32.mrb[0].mxu0
  %v3260 = vadd.f32 0.0, %v3259
  %v3261 = vpop.f32.mrb[0].mxu0
  %v3262 = vadd.f32 0.0, %v3261
  %3263 = vdwg.mxu0
  %v3264 = vlaneseq
  %v3265 = vshrl.u32 %v3264, 7
  %v3266 = vsub.s32 0, %v3265
  %v3267 = vrot.slane %v3189, %v3266
  %v3268 = vlaneseq
  %v3269 = vshrl.u32 %v3268, 7
  %v3270 = vsub.s32 0, %v3269
  %v3271 = vrot.slane %v3191, %v3270
  %v3272 = vlaneseq
  %v3273 = vshrl.u32 %v3272, 7
  %v3274 = vsub.s32 0, %v3273
  %v3275 = vrot.slane %v3260, %v3274
  %v3276 = vlaneseq
  %v3277 = vshrl.u32 %v3276, 7
  %v3278 = vsub.s32 0, %v3277
  %v3279 = vrot.slane %v3262, %v3278
  %v3280 = vmul.f32 %v2620, %v3267
  %v3281 = vmul.f32 %v2622, %v3271
  %v3282 = vmul.f32 %v2762, %v3275
  %v3283 = vmul.f32 %v2764, %v3279
  %v3285 = vsel %vm663, %v3118, 0
  %3287 = vmatprep.subr.mxu0 %v33
  %3288 = vmatpush1.msra.mxu0 %v32
  %3289 = vmatprep.subr.mxu0 %v37
  %3290 = vmatpush1.msra.mxu0 %v36
  %3291 = vmatprep.subr.mxu0 0.0
  %3292 = vmatpush1.msra.mxu0 0.0
  %3293 = vmatprep.subr.mxu0 0.0
  %3294 = vmatpush1.msra.mxu0 0.0
  %3295 = vmatprep.subr.mxu0 0.0
  %3296 = vmatpush1.msra.mxu0 0.0
  %3297 = vmatprep.subr.mxu0 0.0
  %3298 = vmatpush1.msra.mxu0 0.0
  %3299 = vmatprep.subr.mxu0 0.0
  %3300 = vmatpush1.msra.mxu0 0.0
  %3301 = vmatprep.subr.mxu0 0.0
  %3302 = vmatpush1.msra.mxu0 0.0
  %3303 = vmatprep.subr.mxu0 0.0
  %3304 = vmatpush1.msra.mxu0 0.0
  %3305 = vmatprep.subr.mxu0 0.0
  %3306 = vmatpush1.msra.mxu0 0.0
  %3307 = vmatprep.subr.mxu0 0.0
  %3308 = vmatpush1.msra.mxu0 0.0
  %3309 = vmatprep.subr.mxu0 0.0
  %3310 = vmatpush1.msra.mxu0 0.0
  %3311 = vmatprep.subr.mxu0 0.0
  %3312 = vmatpush1.msra.mxu0 0.0
  %3313 = vmatprep.subr.mxu0 0.0
  %3314 = vmatpush1.msra.mxu0 0.0
  %3315 = vmatprep.subr.mxu0 0.0
  %3316 = vmatpush1.msra.mxu0 0.0
  %3317 = vmatprep.subr.mxu0 0.0
  %3318 = vmatpush1.msra.mxu0 0.0
  %3319 = vmatprep.subr.mxu0 0.0
  %3320 = vmatpush1.msra.mxu0 0.0
  %3321 = vmatprep.subr.mxu0 0.0
  %3322 = vmatpush1.msra.mxu0 0.0
  %3323 = vmatprep.subr.mxu0 0.0
  %3324 = vmatpush1.msra.mxu0 0.0
  %3325 = vmatprep.subr.mxu0 0.0
  %3326 = vmatpush1.msra.mxu0 0.0
  %3327 = vmatprep.subr.mxu0 0.0
  %3328 = vmatpush1.msra.mxu0 0.0
  %3329 = vmatprep.subr.mxu0 0.0
  %3330 = vmatpush1.msra.mxu0 0.0
  %3331 = vmatprep.subr.mxu0 0.0
  %3332 = vmatpush1.msra.mxu0 0.0
  %3333 = vmatprep.subr.mxu0 0.0
  %3334 = vmatpush1.msra.mxu0 0.0
  %3335 = vmatprep.subr.mxu0 0.0
  %3336 = vmatpush1.msra.mxu0 0.0
  %3337 = vmatprep.subr.mxu0 0.0
  %3338 = vmatpush1.msra.mxu0 0.0
  %3339 = vmatprep.subr.mxu0 0.0
  %3340 = vmatpush1.msra.mxu0 0.0
  %3341 = vmatprep.subr.mxu0 0.0
  %3342 = vmatpush1.msra.mxu0 0.0
  %3343 = vmatprep.subr.mxu0 0.0
  %3344 = vmatpush1.msra.mxu0 0.0
  %3345 = vmatprep.subr.mxu0 0.0
  %3346 = vmatpush1.msra.mxu0 0.0
  %3347 = vmatprep.subr.mxu0 0.0
  %3348 = vmatpush1.msra.mxu0 0.0
  %3349 = vmatprep.subr.mxu0 0.0
  %3350 = vmatpush1.msra.mxu0 0.0
  %3351 = vmatprep.mubr.f32.mxu0 0.0
  %3352 = vmatmul.mubr.f32.gmra.mrb[0].mxu0 %v3285
  %v3353 = vpop.f32.mrb[0].mxu0
  %v3354 = vadd.f32 0.0, %v3353
  %v3355 = vpop.f32.mrb[0].mxu0
  %v3356 = vadd.f32 0.0, %v3355
  %3357 = vdwg.mxu0
  %3358 = vmatprep.subr.mxu0 %v35
  %3359 = vmatpush1.msra.mxu0 %v34
  %3360 = vmatprep.subr.mxu0 %v39
  %3361 = vmatpush1.msra.mxu0 %v38
  %3362 = vmatprep.subr.mxu0 0.0
  %3363 = vmatpush1.msra.mxu0 0.0
  %3364 = vmatprep.subr.mxu0 0.0
  %3365 = vmatpush1.msra.mxu0 0.0
  %3366 = vmatprep.subr.mxu0 0.0
  %3367 = vmatpush1.msra.mxu0 0.0
  %3368 = vmatprep.subr.mxu0 0.0
  %3369 = vmatpush1.msra.mxu0 0.0
  %3370 = vmatprep.subr.mxu0 0.0
  %3371 = vmatpush1.msra.mxu0 0.0
  %3372 = vmatprep.subr.mxu0 0.0
  %3373 = vmatpush1.msra.mxu0 0.0
  %3374 = vmatprep.subr.mxu0 0.0
  %3375 = vmatpush1.msra.mxu0 0.0
  %3376 = vmatprep.subr.mxu0 0.0
  %3377 = vmatpush1.msra.mxu0 0.0
  %3378 = vmatprep.subr.mxu0 0.0
  %3379 = vmatpush1.msra.mxu0 0.0
  %3380 = vmatprep.subr.mxu0 0.0
  %3381 = vmatpush1.msra.mxu0 0.0
  %3382 = vmatprep.subr.mxu0 0.0
  %3383 = vmatpush1.msra.mxu0 0.0
  %3384 = vmatprep.subr.mxu0 0.0
  %3385 = vmatpush1.msra.mxu0 0.0
  %3386 = vmatprep.subr.mxu0 0.0
  %3387 = vmatpush1.msra.mxu0 0.0
  %3388 = vmatprep.subr.mxu0 0.0
  %3389 = vmatpush1.msra.mxu0 0.0
  %3390 = vmatprep.subr.mxu0 0.0
  %3391 = vmatpush1.msra.mxu0 0.0
  %3392 = vmatprep.subr.mxu0 0.0
  %3393 = vmatpush1.msra.mxu0 0.0
  %3394 = vmatprep.subr.mxu0 0.0
  %3395 = vmatpush1.msra.mxu0 0.0
  %3396 = vmatprep.subr.mxu0 0.0
  %3397 = vmatpush1.msra.mxu0 0.0
  %3398 = vmatprep.subr.mxu0 0.0
  %3399 = vmatpush1.msra.mxu0 0.0
  %3400 = vmatprep.subr.mxu0 0.0
  %3401 = vmatpush1.msra.mxu0 0.0
  %3402 = vmatprep.subr.mxu0 0.0
  %3403 = vmatpush1.msra.mxu0 0.0
  %3404 = vmatprep.subr.mxu0 0.0
  %3405 = vmatpush1.msra.mxu0 0.0
  %3406 = vmatprep.subr.mxu0 0.0
  %3407 = vmatpush1.msra.mxu0 0.0
  %3408 = vmatprep.subr.mxu0 0.0
  %3409 = vmatpush1.msra.mxu0 0.0
  %3410 = vmatprep.subr.mxu0 0.0
  %3411 = vmatpush1.msra.mxu0 0.0
  %3412 = vmatprep.subr.mxu0 0.0
  %3413 = vmatpush1.msra.mxu0 0.0
  %3414 = vmatprep.subr.mxu0 0.0
  %3415 = vmatpush1.msra.mxu0 0.0
  %3416 = vmatprep.subr.mxu0 0.0
  %3417 = vmatpush1.msra.mxu0 0.0
  %3418 = vmatprep.subr.mxu0 0.0
  %3419 = vmatpush1.msra.mxu0 0.0
  %3420 = vmatprep.subr.mxu0 0.0
  %3421 = vmatpush1.msra.mxu0 0.0
  %3422 = vmatprep.mubr.f32.mxu0 0.0
  %3423 = vmatmul.mubr.f32.gmra.mrb[0].mxu0 %v3285
  %v3424 = vpop.f32.mrb[0].mxu0
  %v3425 = vadd.f32 0.0, %v3424
  %v3426 = vpop.f32.mrb[0].mxu0
  %v3427 = vadd.f32 0.0, %v3426
  %3428 = vdwg.mxu0
  %v3429 = vlaneseq
  %v3430 = vshrl.u32 %v3429, 7
  %v3431 = vsub.s32 0, %v3430
  %v3432 = vrot.slane %v3354, %v3431
  %v3433 = vlaneseq
  %v3434 = vshrl.u32 %v3433, 7
  %v3435 = vsub.s32 0, %v3434
  %v3436 = vrot.slane %v3356, %v3435
  %v3437 = vlaneseq
  %v3438 = vshrl.u32 %v3437, 7
  %v3439 = vsub.s32 0, %v3438
  %v3440 = vrot.slane %v3425, %v3439
  %v3441 = vlaneseq
  %v3442 = vshrl.u32 %v3441, 7
  %v3443 = vsub.s32 0, %v3442
  %v3444 = vrot.slane %v3427, %v3443
  %v3445 = vadd.f32 %v3280, %v3432
  %v3446 = vadd.f32 %v3281, %v3436
  %v3447 = vadd.f32 %v3282, %v3440
  %v3448 = vadd.f32 %v3283, %v3444
  %v3449 = vadd.f32 %v3445, %v994
  %v3450 = vadd.f32 %v3446, %v995
  %v3451 = vadd.f32 %v3447, %v996
  %v3452 = vadd.f32 %v3448, %v997
  %v3453 = vmax.f32 %v3449, 0.0
  %v3454 = vmax.f32 %v3450, 0.0
  %v3455 = vmax.f32 %v3451, 0.0
  %v3456 = vmax.f32 %v3452, 0.0
  %s3457 = scalar_lea.vmem %s2, 4096
  %v3458 = vld [vmem:[%s3457] sm:$0xff]
  %v3459 = vld [vmem:[%s3457 + $0x8] sm:$0xff]
  %v3460 = vld [vmem:[%s3457 + $0x10] sm:$0xff]
  %v3461 = vld [vmem:[%s3457 + $0x18] sm:$0xff]
  %v3462 = vld [vmem:[%s3457 + $0x20] sm:$0xff]
  %v3463 = vld [vmem:[%s3457 + $0x28] sm:$0xff]
  %v3464 = vld [vmem:[%s3457 + $0x30] sm:$0xff]
  %v3465 = vld [vmem:[%s3457 + $0x38] sm:$0xff]
  %v3466 = vld [vmem:[%s3457 + $0x40] sm:$0xff]
  %v3467 = vld [vmem:[%s3457 + $0x48] sm:$0xff]
  %v3468 = vld [vmem:[%s3457 + $0x50] sm:$0xff]
  %v3469 = vld [vmem:[%s3457 + $0x58] sm:$0xff]
  %v3470 = vld [vmem:[%s3457 + $0x60] sm:$0xff]
  %v3471 = vld [vmem:[%s3457 + $0x68] sm:$0xff]
  %v3472 = vld [vmem:[%s3457 + $0x70] sm:$0xff]
  %v3473 = vld [vmem:[%s3457 + $0x78] sm:$0xff]
  %v3474 = vld [vmem:[%s3457 + $0x80] sm:$0xff]
  %v3475 = vld [vmem:[%s3457 + $0x88] sm:$0xff]
  %v3476 = vld [vmem:[%s3457 + $0x90] sm:$0xff]
  %v3477 = vld [vmem:[%s3457 + $0x98] sm:$0xff]
  %v3478 = vld [vmem:[%s3457 + $0xa0] sm:$0xff]
  %v3479 = vld [vmem:[%s3457 + $0xa8] sm:$0xff]
  %v3480 = vld [vmem:[%s3457 + $0xb0] sm:$0xff]
  %v3481 = vld [vmem:[%s3457 + $0xb8] sm:$0xff]
  %v3482 = vld [vmem:[%s3457 + $0xc0] sm:$0xff]
  %v3483 = vld [vmem:[%s3457 + $0xc8] sm:$0xff]
  %v3484 = vld [vmem:[%s3457 + $0xd0] sm:$0xff]
  %v3485 = vld [vmem:[%s3457 + $0xd8] sm:$0xff]
  %v3486 = vld [vmem:[%s3457 + $0xe0] sm:$0xff]
  %v3487 = vld [vmem:[%s3457 + $0xe8] sm:$0xff]
  %v3488 = vld [vmem:[%s3457 + $0xf0] sm:$0xff]
  %v3489 = vld [vmem:[%s3457 + $0xf8] sm:$0xff]
  %v3490 = vld [vmem:[%s3457 + $0x100] sm:$0xff]
  %v3491 = vld [vmem:[%s3457 + $0x108] sm:$0xff]
  %v3492 = vld [vmem:[%s3457 + $0x110] sm:$0xff]
  %v3493 = vld [vmem:[%s3457 + $0x118] sm:$0xff]
  %v3494 = vld [vmem:[%s3457 + $0x120] sm:$0xff]
  %v3495 = vld [vmem:[%s3457 + $0x128] sm:$0xff]
  %v3496 = vld [vmem:[%s3457 + $0x130] sm:$0xff]
  %v3497 = vld [vmem:[%s3457 + $0x138] sm:$0xff]
  %v3498 = vld [vmem:[%s3457 + $0x140] sm:$0xff]
  %v3499 = vld [vmem:[%s3457 + $0x148] sm:$0xff]
  %v3500 = vld [vmem:[%s3457 + $0x150] sm:$0xff]
  %v3501 = vld [vmem:[%s3457 + $0x158] sm:$0xff]
  %v3502 = vld [vmem:[%s3457 + $0x160] sm:$0xff]
  %v3503 = vld [vmem:[%s3457 + $0x168] sm:$0xff]
  %v3504 = vld [vmem:[%s3457 + $0x170] sm:$0xff]
  %v3505 = vld [vmem:[%s3457 + $0x178] sm:$0xff]
  %v3506 = vld [vmem:[%s3457 + $0x180] sm:$0xff]
  %v3507 = vld [vmem:[%s3457 + $0x188] sm:$0xff]
  %v3508 = vld [vmem:[%s3457 + $0x190] sm:$0xff]
  %v3509 = vld [vmem:[%s3457 + $0x198] sm:$0xff]
  %v3510 = vld [vmem:[%s3457 + $0x1a0] sm:$0xff]
  %v3511 = vld [vmem:[%s3457 + $0x1a8] sm:$0xff]
  %v3512 = vld [vmem:[%s3457 + $0x1b0] sm:$0xff]
  %v3513 = vld [vmem:[%s3457 + $0x1b8] sm:$0xff]
  %v3514 = vld [vmem:[%s3457 + $0x1c0] sm:$0xff]
  %v3515 = vld [vmem:[%s3457 + $0x1c8] sm:$0xff]
  %v3516 = vld [vmem:[%s3457 + $0x1d0] sm:$0xff]
  %v3517 = vld [vmem:[%s3457 + $0x1d8] sm:$0xff]
  %v3518 = vld [vmem:[%s3457 + $0x1e0] sm:$0xff]
  %v3519 = vld [vmem:[%s3457 + $0x1e8] sm:$0xff]
  %v3520 = vld [vmem:[%s3457 + $0x1f0] sm:$0xff]
  %v3521 = vld [vmem:[%s3457 + $0x1f8] sm:$0xff]
  %v3522 = vld [vmem:[%s3457 + $0x200] sm:$0xff]
  %v3523 = vld [vmem:[%s3457 + $0x208] sm:$0xff]
  %v3524 = vld [vmem:[%s3457 + $0x210] sm:$0xff]
  %v3525 = vld [vmem:[%s3457 + $0x218] sm:$0xff]
  %v3526 = vld [vmem:[%s3457 + $0x220] sm:$0xff]
  %v3527 = vld [vmem:[%s3457 + $0x228] sm:$0xff]
  %v3528 = vld [vmem:[%s3457 + $0x230] sm:$0xff]
  %v3529 = vld [vmem:[%s3457 + $0x238] sm:$0xff]
  %v3530 = vld [vmem:[%s3457 + $0x240] sm:$0xff]
  %v3531 = vld [vmem:[%s3457 + $0x248] sm:$0xff]
  %v3532 = vld [vmem:[%s3457 + $0x250] sm:$0xff]
  %v3533 = vld [vmem:[%s3457 + $0x258] sm:$0xff]
  %v3534 = vld [vmem:[%s3457 + $0x260] sm:$0xff]
  %v3535 = vld [vmem:[%s3457 + $0x268] sm:$0xff]
  %v3536 = vld [vmem:[%s3457 + $0x270] sm:$0xff]
  %v3537 = vld [vmem:[%s3457 + $0x278] sm:$0xff]
  %v3538 = vld [vmem:[%s3457 + $0x280] sm:$0xff]
  %v3539 = vld [vmem:[%s3457 + $0x288] sm:$0xff]
  %v3540 = vld [vmem:[%s3457 + $0x290] sm:$0xff]
  %v3541 = vld [vmem:[%s3457 + $0x298] sm:$0xff]
  %v3542 = vld [vmem:[%s3457 + $0x2a0] sm:$0xff]
  %v3543 = vld [vmem:[%s3457 + $0x2a8] sm:$0xff]
  %v3544 = vld [vmem:[%s3457 + $0x2b0] sm:$0xff]
  %v3545 = vld [vmem:[%s3457 + $0x2b8] sm:$0xff]
  %v3546 = vld [vmem:[%s3457 + $0x2c0] sm:$0xff]
  %v3547 = vld [vmem:[%s3457 + $0x2c8] sm:$0xff]
  %v3548 = vld [vmem:[%s3457 + $0x2d0] sm:$0xff]
  %v3549 = vld [vmem:[%s3457 + $0x2d8] sm:$0xff]
  %v3550 = vld [vmem:[%s3457 + $0x2e0] sm:$0xff]
  %v3551 = vld [vmem:[%s3457 + $0x2e8] sm:$0xff]
  %v3552 = vld [vmem:[%s3457 + $0x2f0] sm:$0xff]
  %v3553 = vld [vmem:[%s3457 + $0x2f8] sm:$0xff]
  %v3554 = vld [vmem:[%s3457 + $0x300] sm:$0xff]
  %v3555 = vld [vmem:[%s3457 + $0x308] sm:$0xff]
  %v3556 = vld [vmem:[%s3457 + $0x310] sm:$0xff]
  %v3557 = vld [vmem:[%s3457 + $0x318] sm:$0xff]
  %v3558 = vld [vmem:[%s3457 + $0x320] sm:$0xff]
  %v3559 = vld [vmem:[%s3457 + $0x328] sm:$0xff]
  %v3560 = vld [vmem:[%s3457 + $0x330] sm:$0xff]
  %v3561 = vld [vmem:[%s3457 + $0x338] sm:$0xff]
  %v3562 = vld [vmem:[%s3457 + $0x340] sm:$0xff]
  %v3563 = vld [vmem:[%s3457 + $0x348] sm:$0xff]
  %v3564 = vld [vmem:[%s3457 + $0x350] sm:$0xff]
  %v3565 = vld [vmem:[%s3457 + $0x358] sm:$0xff]
  %v3566 = vld [vmem:[%s3457 + $0x360] sm:$0xff]
  %v3567 = vld [vmem:[%s3457 + $0x368] sm:$0xff]
  %v3568 = vld [vmem:[%s3457 + $0x370] sm:$0xff]
  %v3569 = vld [vmem:[%s3457 + $0x378] sm:$0xff]
  %v3570 = vld [vmem:[%s3457 + $0x380] sm:$0xff]
  %v3571 = vld [vmem:[%s3457 + $0x388] sm:$0xff]
  %v3572 = vld [vmem:[%s3457 + $0x390] sm:$0xff]
  %v3573 = vld [vmem:[%s3457 + $0x398] sm:$0xff]
  %v3574 = vld [vmem:[%s3457 + $0x3a0] sm:$0xff]
  %v3575 = vld [vmem:[%s3457 + $0x3a8] sm:$0xff]
  %v3576 = vld [vmem:[%s3457 + $0x3b0] sm:$0xff]
  %v3577 = vld [vmem:[%s3457 + $0x3b8] sm:$0xff]
  %v3578 = vld [vmem:[%s3457 + $0x3c0] sm:$0xff]
  %v3579 = vld [vmem:[%s3457 + $0x3c8] sm:$0xff]
  %v3580 = vld [vmem:[%s3457 + $0x3d0] sm:$0xff]
  %v3581 = vld [vmem:[%s3457 + $0x3d8] sm:$0xff]
  %v3582 = vld [vmem:[%s3457 + $0x3e0] sm:$0xff]
  %v3583 = vld [vmem:[%s3457 + $0x3e8] sm:$0xff]
  %v3584 = vld [vmem:[%s3457 + $0x3f0] sm:$0xff]
  %v3585 = vld [vmem:[%s3457 + $0x3f8] sm:$0xff]
  %v3586 = vld [vmem:[%s3457 + $0x400] sm:$0xff]
  %v3587 = vld [vmem:[%s3457 + $0x408] sm:$0xff]
  %v3588 = vld [vmem:[%s3457 + $0x410] sm:$0xff]
  %v3589 = vld [vmem:[%s3457 + $0x418] sm:$0xff]
  %v3590 = vld [vmem:[%s3457 + $0x420] sm:$0xff]
  %v3591 = vld [vmem:[%s3457 + $0x428] sm:$0xff]
  %v3592 = vld [vmem:[%s3457 + $0x430] sm:$0xff]
  %v3593 = vld [vmem:[%s3457 + $0x438] sm:$0xff]
  %v3594 = vld [vmem:[%s3457 + $0x440] sm:$0xff]
  %v3595 = vld [vmem:[%s3457 + $0x448] sm:$0xff]
  %v3596 = vld [vmem:[%s3457 + $0x450] sm:$0xff]
  %v3597 = vld [vmem:[%s3457 + $0x458] sm:$0xff]
  %v3598 = vld [vmem:[%s3457 + $0x460] sm:$0xff]
  %v3599 = vld [vmem:[%s3457 + $0x468] sm:$0xff]
  %v3600 = vld [vmem:[%s3457 + $0x470] sm:$0xff]
  %v3601 = vld [vmem:[%s3457 + $0x478] sm:$0xff]
  %v3602 = vld [vmem:[%s3457 + $0x480] sm:$0xff]
  %v3603 = vld [vmem:[%s3457 + $0x488] sm:$0xff]
  %v3604 = vld [vmem:[%s3457 + $0x490] sm:$0xff]
  %v3605 = vld [vmem:[%s3457 + $0x498] sm:$0xff]
  %v3606 = vld [vmem:[%s3457 + $0x4a0] sm:$0xff]
  %v3607 = vld [vmem:[%s3457 + $0x4a8] sm:$0xff]
  %v3608 = vld [vmem:[%s3457 + $0x4b0] sm:$0xff]
  %v3609 = vld [vmem:[%s3457 + $0x4b8] sm:$0xff]
  %v3610 = vld [vmem:[%s3457 + $0x4c0] sm:$0xff]
  %v3611 = vld [vmem:[%s3457 + $0x4c8] sm:$0xff]
  %v3612 = vld [vmem:[%s3457 + $0x4d0] sm:$0xff]
  %v3613 = vld [vmem:[%s3457 + $0x4d8] sm:$0xff]
  %v3614 = vld [vmem:[%s3457 + $0x4e0] sm:$0xff]
  %v3615 = vld [vmem:[%s3457 + $0x4e8] sm:$0xff]
  %v3616 = vld [vmem:[%s3457 + $0x4f0] sm:$0xff]
  %v3617 = vld [vmem:[%s3457 + $0x4f8] sm:$0xff]
  %v3618 = vld [vmem:[%s3457 + $0x500] sm:$0xff]
  %v3619 = vld [vmem:[%s3457 + $0x508] sm:$0xff]
  %v3620 = vld [vmem:[%s3457 + $0x510] sm:$0xff]
  %v3621 = vld [vmem:[%s3457 + $0x518] sm:$0xff]
  %v3622 = vld [vmem:[%s3457 + $0x520] sm:$0xff]
  %v3623 = vld [vmem:[%s3457 + $0x528] sm:$0xff]
  %v3624 = vld [vmem:[%s3457 + $0x530] sm:$0xff]
  %v3625 = vld [vmem:[%s3457 + $0x538] sm:$0xff]
  %v3626 = vld [vmem:[%s3457 + $0x540] sm:$0xff]
  %v3627 = vld [vmem:[%s3457 + $0x548] sm:$0xff]
  %v3628 = vld [vmem:[%s3457 + $0x550] sm:$0xff]
  %v3629 = vld [vmem:[%s3457 + $0x558] sm:$0xff]
  %v3630 = vld [vmem:[%s3457 + $0x560] sm:$0xff]
  %v3631 = vld [vmem:[%s3457 + $0x568] sm:$0xff]
  %v3632 = vld [vmem:[%s3457 + $0x570] sm:$0xff]
  %v3633 = vld [vmem:[%s3457 + $0x578] sm:$0xff]
  %v3634 = vld [vmem:[%s3457 + $0x580] sm:$0xff]
  %v3635 = vld [vmem:[%s3457 + $0x588] sm:$0xff]
  %v3636 = vld [vmem:[%s3457 + $0x590] sm:$0xff]
  %v3637 = vld [vmem:[%s3457 + $0x598] sm:$0xff]
  %v3638 = vld [vmem:[%s3457 + $0x5a0] sm:$0xff]
  %v3639 = vld [vmem:[%s3457 + $0x5a8] sm:$0xff]
  %v3640 = vld [vmem:[%s3457 + $0x5b0] sm:$0xff]
  %v3641 = vld [vmem:[%s3457 + $0x5b8] sm:$0xff]
  %v3642 = vld [vmem:[%s3457 + $0x5c0] sm:$0xff]
  %v3643 = vld [vmem:[%s3457 + $0x5c8] sm:$0xff]
  %v3644 = vld [vmem:[%s3457 + $0x5d0] sm:$0xff]
  %v3645 = vld [vmem:[%s3457 + $0x5d8] sm:$0xff]
  %v3646 = vld [vmem:[%s3457 + $0x5e0] sm:$0xff]
  %v3647 = vld [vmem:[%s3457 + $0x5e8] sm:$0xff]
  %v3648 = vld [vmem:[%s3457 + $0x5f0] sm:$0xff]
  %v3649 = vld [vmem:[%s3457 + $0x5f8] sm:$0xff]
  %v3650 = vld [vmem:[%s3457 + $0x600] sm:$0xff]
  %v3651 = vld [vmem:[%s3457 + $0x608] sm:$0xff]
  %v3652 = vld [vmem:[%s3457 + $0x610] sm:$0xff]
  %v3653 = vld [vmem:[%s3457 + $0x618] sm:$0xff]
  %v3654 = vld [vmem:[%s3457 + $0x620] sm:$0xff]
  %v3655 = vld [vmem:[%s3457 + $0x628] sm:$0xff]
  %v3656 = vld [vmem:[%s3457 + $0x630] sm:$0xff]
  %v3657 = vld [vmem:[%s3457 + $0x638] sm:$0xff]
  %v3658 = vld [vmem:[%s3457 + $0x640] sm:$0xff]
  %v3659 = vld [vmem:[%s3457 + $0x648] sm:$0xff]
  %v3660 = vld [vmem:[%s3457 + $0x650] sm:$0xff]
  %v3661 = vld [vmem:[%s3457 + $0x658] sm:$0xff]
  %v3662 = vld [vmem:[%s3457 + $0x660] sm:$0xff]
  %v3663 = vld [vmem:[%s3457 + $0x668] sm:$0xff]
  %v3664 = vld [vmem:[%s3457 + $0x670] sm:$0xff]
  %v3665 = vld [vmem:[%s3457 + $0x678] sm:$0xff]
  %v3666 = vld [vmem:[%s3457 + $0x680] sm:$0xff]
  %v3667 = vld [vmem:[%s3457 + $0x688] sm:$0xff]
  %v3668 = vld [vmem:[%s3457 + $0x690] sm:$0xff]
  %v3669 = vld [vmem:[%s3457 + $0x698] sm:$0xff]
  %v3670 = vld [vmem:[%s3457 + $0x6a0] sm:$0xff]
  %v3671 = vld [vmem:[%s3457 + $0x6a8] sm:$0xff]
  %v3672 = vld [vmem:[%s3457 + $0x6b0] sm:$0xff]
  %v3673 = vld [vmem:[%s3457 + $0x6b8] sm:$0xff]
  %v3674 = vld [vmem:[%s3457 + $0x6c0] sm:$0xff]
  %v3675 = vld [vmem:[%s3457 + $0x6c8] sm:$0xff]
  %v3676 = vld [vmem:[%s3457 + $0x6d0] sm:$0xff]
  %v3677 = vld [vmem:[%s3457 + $0x6d8] sm:$0xff]
  %v3678 = vld [vmem:[%s3457 + $0x6e0] sm:$0xff]
  %v3679 = vld [vmem:[%s3457 + $0x6e8] sm:$0xff]
  %v3680 = vld [vmem:[%s3457 + $0x6f0] sm:$0xff]
  %v3681 = vld [vmem:[%s3457 + $0x6f8] sm:$0xff]
  %v3682 = vld [vmem:[%s3457 + $0x700] sm:$0xff]
  %v3683 = vld [vmem:[%s3457 + $0x708] sm:$0xff]
  %v3684 = vld [vmem:[%s3457 + $0x710] sm:$0xff]
  %v3685 = vld [vmem:[%s3457 + $0x718] sm:$0xff]
  %v3686 = vld [vmem:[%s3457 + $0x720] sm:$0xff]
  %v3687 = vld [vmem:[%s3457 + $0x728] sm:$0xff]
  %v3688 = vld [vmem:[%s3457 + $0x730] sm:$0xff]
  %v3689 = vld [vmem:[%s3457 + $0x738] sm:$0xff]
  %v3690 = vld [vmem:[%s3457 + $0x740] sm:$0xff]
  %v3691 = vld [vmem:[%s3457 + $0x748] sm:$0xff]
  %v3692 = vld [vmem:[%s3457 + $0x750] sm:$0xff]
  %v3693 = vld [vmem:[%s3457 + $0x758] sm:$0xff]
  %v3694 = vld [vmem:[%s3457 + $0x760] sm:$0xff]
  %v3695 = vld [vmem:[%s3457 + $0x768] sm:$0xff]
  %v3696 = vld [vmem:[%s3457 + $0x770] sm:$0xff]
  %v3697 = vld [vmem:[%s3457 + $0x778] sm:$0xff]
  %v3698 = vld [vmem:[%s3457 + $0x780] sm:$0xff]
  %v3699 = vld [vmem:[%s3457 + $0x788] sm:$0xff]
  %v3700 = vld [vmem:[%s3457 + $0x790] sm:$0xff]
  %v3701 = vld [vmem:[%s3457 + $0x798] sm:$0xff]
  %v3702 = vld [vmem:[%s3457 + $0x7a0] sm:$0xff]
  %v3703 = vld [vmem:[%s3457 + $0x7a8] sm:$0xff]
  %v3704 = vld [vmem:[%s3457 + $0x7b0] sm:$0xff]
  %v3705 = vld [vmem:[%s3457 + $0x7b8] sm:$0xff]
  %v3706 = vld [vmem:[%s3457 + $0x7c0] sm:$0xff]
  %v3707 = vld [vmem:[%s3457 + $0x7c8] sm:$0xff]
  %v3708 = vld [vmem:[%s3457 + $0x7d0] sm:$0xff]
  %v3709 = vld [vmem:[%s3457 + $0x7d8] sm:$0xff]
  %v3710 = vld [vmem:[%s3457 + $0x7e0] sm:$0xff]
  %v3711 = vld [vmem:[%s3457 + $0x7e8] sm:$0xff]
  %v3712 = vld [vmem:[%s3457 + $0x7f0] sm:$0xff]
  %v3713 = vld [vmem:[%s3457 + $0x7f8] sm:$0xff]
  %3714 = vmatprep.subr.mxu0 %v3459
  %3715 = vmatpush1.msra.mxu0 %v3458
  %3716 = vmatprep.subr.mxu0 %v3463
  %3717 = vmatpush1.msra.mxu0 %v3462
  %3718 = vmatprep.subr.mxu0 %v3467
  %3719 = vmatpush1.msra.mxu0 %v3466
  %3720 = vmatprep.subr.mxu0 %v3471
  %3721 = vmatpush1.msra.mxu0 %v3470
  %3722 = vmatprep.subr.mxu0 %v3475
  %3723 = vmatpush1.msra.mxu0 %v3474
  %3724 = vmatprep.subr.mxu0 %v3479
  %3725 = vmatpush1.msra.mxu0 %v3478
  %3726 = vmatprep.subr.mxu0 %v3483
  %3727 = vmatpush1.msra.mxu0 %v3482
  %3728 = vmatprep.subr.mxu0 %v3487
  %3729 = vmatpush1.msra.mxu0 %v3486
  %3730 = vmatprep.subr.mxu0 %v3491
  %3731 = vmatpush1.msra.mxu0 %v3490
  %3732 = vmatprep.subr.mxu0 %v3495
  %3733 = vmatpush1.msra.mxu0 %v3494
  %3734 = vmatprep.subr.mxu0 %v3499
  %3735 = vmatpush1.msra.mxu0 %v3498
  %3736 = vmatprep.subr.mxu0 %v3503
  %3737 = vmatpush1.msra.mxu0 %v3502
  %3738 = vmatprep.subr.mxu0 %v3507
  %3739 = vmatpush1.msra.mxu0 %v3506
  %3740 = vmatprep.subr.mxu0 %v3511
  %3741 = vmatpush1.msra.mxu0 %v3510
  %3742 = vmatprep.subr.mxu0 %v3515
  %3743 = vmatpush1.msra.mxu0 %v3514
  %3744 = vmatprep.subr.mxu0 %v3519
  %3745 = vmatpush1.msra.mxu0 %v3518
  %3746 = vmatprep.subr.mxu0 %v3523
  %3747 = vmatpush1.msra.mxu0 %v3522
  %3748 = vmatprep.subr.mxu0 %v3527
  %3749 = vmatpush1.msra.mxu0 %v3526
  %3750 = vmatprep.subr.mxu0 %v3531
  %3751 = vmatpush1.msra.mxu0 %v3530
  %3752 = vmatprep.subr.mxu0 %v3535
  %3753 = vmatpush1.msra.mxu0 %v3534
  %3754 = vmatprep.subr.mxu0 %v3539
  %3755 = vmatpush1.msra.mxu0 %v3538
  %3756 = vmatprep.subr.mxu0 %v3543
  %3757 = vmatpush1.msra.mxu0 %v3542
  %3758 = vmatprep.subr.mxu0 %v3547
  %3759 = vmatpush1.msra.mxu0 %v3546
  %3760 = vmatprep.subr.mxu0 %v3551
  %3761 = vmatpush1.msra.mxu0 %v3550
  %3762 = vmatprep.subr.mxu0 %v3555
  %3763 = vmatpush1.msra.mxu0 %v3554
  %3764 = vmatprep.subr.mxu0 %v3559
  %3765 = vmatpush1.msra.mxu0 %v3558
  %3766 = vmatprep.subr.mxu0 %v3563
  %3767 = vmatpush1.msra.mxu0 %v3562
  %3768 = vmatprep.subr.mxu0 %v3567
  %3769 = vmatpush1.msra.mxu0 %v3566
  %3770 = vmatprep.subr.mxu0 %v3571
  %3771 = vmatpush1.msra.mxu0 %v3570
  %3772 = vmatprep.subr.mxu0 %v3575
  %3773 = vmatpush1.msra.mxu0 %v3574
  %3774 = vmatprep.subr.mxu0 %v3579
  %3775 = vmatpush1.msra.mxu0 %v3578
  %3776 = vmatprep.subr.mxu0 %v3583
  %3777 = vmatpush1.msra.mxu0 %v3582
  %3778 = vmatprep.mubr.f32.mxu0 %v3454
  %3779 = vmatmul.mubr.f32.gmra.mrb[0].mxu0 %v3453
  %v3780 = vpop.f32.mrb[0].mxu0
  %v3781 = vadd.f32 0.0, %v3780
  %v3782 = vpop.f32.mrb[0].mxu0
  %v3783 = vadd.f32 0.0, %v3782
  %3784 = vdwg.mxu0
  %3785 = vmatprep.subr.mxu0 %v3587
  %3786 = vmatpush1.msra.mxu0 %v3586
  %3787 = vmatprep.subr.mxu0 %v3591
  %3788 = vmatpush1.msra.mxu0 %v3590
  %3789 = vmatprep.subr.mxu0 %v3595
  %3790 = vmatpush1.msra.mxu0 %v3594
  %3791 = vmatprep.subr.mxu0 %v3599
  %3792 = vmatpush1.msra.mxu0 %v3598
  %3793 = vmatprep.subr.mxu0 %v3603
  %3794 = vmatpush1.msra.mxu0 %v3602
  %3795 = vmatprep.subr.mxu0 %v3607
  %3796 = vmatpush1.msra.mxu0 %v3606
  %3797 = vmatprep.subr.mxu0 %v3611
  %3798 = vmatpush1.msra.mxu0 %v3610
  %3799 = vmatprep.subr.mxu0 %v3615
  %3800 = vmatpush1.msra.mxu0 %v3614
  %3801 = vmatprep.subr.mxu0 %v3619
  %3802 = vmatpush1.msra.mxu0 %v3618
  %3803 = vmatprep.subr.mxu0 %v3623
  %3804 = vmatpush1.msra.mxu0 %v3622
  %3805 = vmatprep.subr.mxu0 %v3627
  %3806 = vmatpush1.msra.mxu0 %v3626
  %3807 = vmatprep.subr.mxu0 %v3631
  %3808 = vmatpush1.msra.mxu0 %v3630
  %3809 = vmatprep.subr.mxu0 %v3635
  %3810 = vmatpush1.msra.mxu0 %v3634
  %3811 = vmatprep.subr.mxu0 %v3639
  %3812 = vmatpush1.msra.mxu0 %v3638
  %3813 = vmatprep.subr.mxu0 %v3643
  %3814 = vmatpush1.msra.mxu0 %v3642
  %3815 = vmatprep.subr.mxu0 %v3647
  %3816 = vmatpush1.msra.mxu0 %v3646
  %3817 = vmatprep.subr.mxu0 %v3651
  %3818 = vmatpush1.msra.mxu0 %v3650
  %3819 = vmatprep.subr.mxu0 %v3655
  %3820 = vmatpush1.msra.mxu0 %v3654
  %3821 = vmatprep.subr.mxu0 %v3659
  %3822 = vmatpush1.msra.mxu0 %v3658
  %3823 = vmatprep.subr.mxu0 %v3663
  %3824 = vmatpush1.msra.mxu0 %v3662
  %3825 = vmatprep.subr.mxu0 %v3667
  %3826 = vmatpush1.msra.mxu0 %v3666
  %3827 = vmatprep.subr.mxu0 %v3671
  %3828 = vmatpush1.msra.mxu0 %v3670
  %3829 = vmatprep.subr.mxu0 %v3675
  %3830 = vmatpush1.msra.mxu0 %v3674
  %3831 = vmatprep.subr.mxu0 %v3679
  %3832 = vmatpush1.msra.mxu0 %v3678
  %3833 = vmatprep.subr.mxu0 %v3683
  %3834 = vmatpush1.msra.mxu0 %v3682
  %3835 = vmatprep.subr.mxu0 %v3687
  %3836 = vmatpush1.msra.mxu0 %v3686
  %3837 = vmatprep.subr.mxu0 %v3691
  %3838 = vmatpush1.msra.mxu0 %v3690
  %3839 = vmatprep.subr.mxu0 %v3695
  %3840 = vmatpush1.msra.mxu0 %v3694
  %3841 = vmatprep.subr.mxu0 %v3699
  %3842 = vmatpush1.msra.mxu0 %v3698
  %3843 = vmatprep.subr.mxu0 %v3703
  %3844 = vmatpush1.msra.mxu0 %v3702
  %3845 = vmatprep.subr.mxu0 %v3707
  %3846 = vmatpush1.msra.mxu0 %v3706
  %3847 = vmatprep.subr.mxu0 %v3711
  %3848 = vmatpush1.msra.mxu0 %v3710
  %3849 = vmatprep.mubr.f32.mxu0 %v3456
  %3850 = vmatmul.mubr.f32.gmra.mrb[0].mxu0 %v3455
  %v3851 = vpop.f32.mrb[0].mxu0
  %v3852 = vadd.f32 %v3781, %v3851
  %v3853 = vpop.f32.mrb[0].mxu0
  %v3854 = vadd.f32 %v3783, %v3853
  %3855 = vdwg.mxu0
  %3856 = vmatprep.subr.mxu0 %v3461
  %3857 = vmatpush1.msra.mxu0 %v3460
  %3858 = vmatprep.subr.mxu0 %v3465
  %3859 = vmatpush1.msra.mxu0 %v3464
  %3860 = vmatprep.subr.mxu0 %v3469
  %3861 = vmatpush1.msra.mxu0 %v3468
  %3862 = vmatprep.subr.mxu0 %v3473
  %3863 = vmatpush1.msra.mxu0 %v3472
  %3864 = vmatprep.subr.mxu0 %v3477
  %3865 = vmatpush1.msra.mxu0 %v3476
  %3866 = vmatprep.subr.mxu0 %v3481
  %3867 = vmatpush1.msra.mxu0 %v3480
  %3868 = vmatprep.subr.mxu0 %v3485
  %3869 = vmatpush1.msra.mxu0 %v3484
  %3870 = vmatprep.subr.mxu0 %v3489
  %3871 = vmatpush1.msra.mxu0 %v3488
  %3872 = vmatprep.subr.mxu0 %v3493
  %3873 = vmatpush1.msra.mxu0 %v3492
  %3874 = vmatprep.subr.mxu0 %v3497
  %3875 = vmatpush1.msra.mxu0 %v3496
  %3876 = vmatprep.subr.mxu0 %v3501
  %3877 = vmatpush1.msra.mxu0 %v3500
  %3878 = vmatprep.subr.mxu0 %v3505
  %3879 = vmatpush1.msra.mxu0 %v3504
  %3880 = vmatprep.subr.mxu0 %v3509
  %3881 = vmatpush1.msra.mxu0 %v3508
  %3882 = vmatprep.subr.mxu0 %v3513
  %3883 = vmatpush1.msra.mxu0 %v3512
  %3884 = vmatprep.subr.mxu0 %v3517
  %3885 = vmatpush1.msra.mxu0 %v3516
  %3886 = vmatprep.subr.mxu0 %v3521
  %3887 = vmatpush1.msra.mxu0 %v3520
  %3888 = vmatprep.subr.mxu0 %v3525
  %3889 = vmatpush1.msra.mxu0 %v3524
  %3890 = vmatprep.subr.mxu0 %v3529
  %3891 = vmatpush1.msra.mxu0 %v3528
  %3892 = vmatprep.subr.mxu0 %v3533
  %3893 = vmatpush1.msra.mxu0 %v3532
  %3894 = vmatprep.subr.mxu0 %v3537
  %3895 = vmatpush1.msra.mxu0 %v3536
  %3896 = vmatprep.subr.mxu0 %v3541
  %3897 = vmatpush1.msra.mxu0 %v3540
  %3898 = vmatprep.subr.mxu0 %v3545
  %3899 = vmatpush1.msra.mxu0 %v3544
  %3900 = vmatprep.subr.mxu0 %v3549
  %3901 = vmatpush1.msra.mxu0 %v3548
  %3902 = vmatprep.subr.mxu0 %v3553
  %3903 = vmatpush1.msra.mxu0 %v3552
  %3904 = vmatprep.subr.mxu0 %v3557
  %3905 = vmatpush1.msra.mxu0 %v3556
  %3906 = vmatprep.subr.mxu0 %v3561
  %3907 = vmatpush1.msra.mxu0 %v3560
  %3908 = vmatprep.subr.mxu0 %v3565
  %3909 = vmatpush1.msra.mxu0 %v3564
  %3910 = vmatprep.subr.mxu0 %v3569
  %3911 = vmatpush1.msra.mxu0 %v3568
  %3912 = vmatprep.subr.mxu0 %v3573
  %3913 = vmatpush1.msra.mxu0 %v3572
  %3914 = vmatprep.subr.mxu0 %v3577
  %3915 = vmatpush1.msra.mxu0 %v3576
  %3916 = vmatprep.subr.mxu0 %v3581
  %3917 = vmatpush1.msra.mxu0 %v3580
  %3918 = vmatprep.subr.mxu0 %v3585
  %3919 = vmatpush1.msra.mxu0 %v3584
  %3920 = vmatprep.mubr.f32.mxu0 %v3454
  %3921 = vmatmul.mubr.f32.gmra.mrb[0].mxu0 %v3453
  %v3922 = vpop.f32.mrb[0].mxu0
  %v3923 = vadd.f32 0.0, %v3922
  %v3924 = vpop.f32.mrb[0].mxu0
  %v3925 = vadd.f32 0.0, %v3924
  %3926 = vdwg.mxu0
  %3927 = vmatprep.subr.mxu0 %v3589
  %3928 = vmatpush1.msra.mxu0 %v3588
  %3929 = vmatprep.subr.mxu0 %v3593
  %3930 = vmatpush1.msra.mxu0 %v3592
  %3931 = vmatprep.subr.mxu0 %v3597
  %3932 = vmatpush1.msra.mxu0 %v3596
  %3933 = vmatprep.subr.mxu0 %v3601
  %3934 = vmatpush1.msra.mxu0 %v3600
  %3935 = vmatprep.subr.mxu0 %v3605
  %3936 = vmatpush1.msra.mxu0 %v3604
  %3937 = vmatprep.subr.mxu0 %v3609
  %3938 = vmatpush1.msra.mxu0 %v3608
  %3939 = vmatprep.subr.mxu0 %v3613
  %3940 = vmatpush1.msra.mxu0 %v3612
  %3941 = vmatprep.subr.mxu0 %v3617
  %3942 = vmatpush1.msra.mxu0 %v3616
  %3943 = vmatprep.subr.mxu0 %v3621
  %3944 = vmatpush1.msra.mxu0 %v3620
  %3945 = vmatprep.subr.mxu0 %v3625
  %3946 = vmatpush1.msra.mxu0 %v3624
  %3947 = vmatprep.subr.mxu0 %v3629
  %3948 = vmatpush1.msra.mxu0 %v3628
  %3949 = vmatprep.subr.mxu0 %v3633
  %3950 = vmatpush1.msra.mxu0 %v3632
  %3951 = vmatprep.subr.mxu0 %v3637
  %3952 = vmatpush1.msra.mxu0 %v3636
  %3953 = vmatprep.subr.mxu0 %v3641
  %3954 = vmatpush1.msra.mxu0 %v3640
  %3955 = vmatprep.subr.mxu0 %v3645
  %3956 = vmatpush1.msra.mxu0 %v3644
  %3957 = vmatprep.subr.mxu0 %v3649
  %3958 = vmatpush1.msra.mxu0 %v3648
  %3959 = vmatprep.subr.mxu0 %v3653
  %3960 = vmatpush1.msra.mxu0 %v3652
  %3961 = vmatprep.subr.mxu0 %v3657
  %3962 = vmatpush1.msra.mxu0 %v3656
  %3963 = vmatprep.subr.mxu0 %v3661
  %3964 = vmatpush1.msra.mxu0 %v3660
  %3965 = vmatprep.subr.mxu0 %v3665
  %3966 = vmatpush1.msra.mxu0 %v3664
  %3967 = vmatprep.subr.mxu0 %v3669
  %3968 = vmatpush1.msra.mxu0 %v3668
  %3969 = vmatprep.subr.mxu0 %v3673
  %3970 = vmatpush1.msra.mxu0 %v3672
  %3971 = vmatprep.subr.mxu0 %v3677
  %3972 = vmatpush1.msra.mxu0 %v3676
  %3973 = vmatprep.subr.mxu0 %v3681
  %3974 = vmatpush1.msra.mxu0 %v3680
  %3975 = vmatprep.subr.mxu0 %v3685
  %3976 = vmatpush1.msra.mxu0 %v3684
  %3977 = vmatprep.subr.mxu0 %v3689
  %3978 = vmatpush1.msra.mxu0 %v3688
  %3979 = vmatprep.subr.mxu0 %v3693
  %3980 = vmatpush1.msra.mxu0 %v3692
  %3981 = vmatprep.subr.mxu0 %v3697
  %3982 = vmatpush1.msra.mxu0 %v3696
  %3983 = vmatprep.subr.mxu0 %v3701
  %3984 = vmatpush1.msra.mxu0 %v3700
  %3985 = vmatprep.subr.mxu0 %v3705
  %3986 = vmatpush1.msra.mxu0 %v3704
  %3987 = vmatprep.subr.mxu0 %v3709
  %3988 = vmatpush1.msra.mxu0 %v3708
  %3989 = vmatprep.subr.mxu0 %v3713
  %3990 = vmatpush1.msra.mxu0 %v3712
  %3991 = vmatprep.mubr.f32.mxu0 %v3456
  %3992 = vmatmul.mubr.f32.gmra.mrb[0].mxu0 %v3455
  %v3993 = vpop.f32.mrb[0].mxu0
  %v3994 = vadd.f32 %v3923, %v3993
  %v3995 = vpop.f32.mrb[0].mxu0
  %v3996 = vadd.f32 %v3925, %v3995
  %3997 = vdwg.mxu0
  %s3998 = scalar_lea.vmem %s3, 3
  %v3999 = vld [vmem:[%s3998] sm:$0x1]
  %s4000 = scalar_lea.vmem %s4, 3
  %v4001 = vld [vmem:[%s4000] sm:$0x1]
  %v4002 = vsel %vm313, %v3852, 0.0
  %v4003 = vrot.slane %v4002, 4
  %v4004 = vadd.f32 %v4002, %v4003
  %v4005 = vrot.slane %v4004, 2
  %v4006 = vadd.f32 %v4004, %v4005
  %v4007 = vrot.slane %v4006, 1
  %v4008 = vadd.f32 %v4006, %v4007
  %v4009 = vsel %vm313, %v3854, 0.0
  %v4010 = vrot.slane %v4009, 4
  %v4011 = vadd.f32 %v4009, %v4010
  %v4012 = vrot.slane %v4011, 2
  %v4013 = vadd.f32 %v4011, %v4012
  %v4014 = vrot.slane %v4013, 1
  %v4015 = vadd.f32 %v4013, %v4014
  %v4016 = vsel %vm313, %v3994, 0.0
  %v4017 = vrot.slane %v4016, 4
  %v4018 = vadd.f32 %v4016, %v4017
  %v4019 = vrot.slane %v4018, 2
  %v4020 = vadd.f32 %v4018, %v4019
  %v4021 = vrot.slane %v4020, 1
  %v4022 = vadd.f32 %v4020, %v4021
  %v4023 = vsel %vm313, %v3996, 0.0
  %v4024 = vrot.slane %v4023, 4
  %v4025 = vadd.f32 %v4023, %v4024
  %v4026 = vrot.slane %v4025, 2
  %v4027 = vadd.f32 %v4025, %v4026
  %v4028 = vrot.slane %v4027, 1
  %v4029 = vadd.f32 %v4027, %v4028
  %v4030 = vmul.f32 %v3852, %v3852
  %v4031 = vmul.f32 %v3854, %v3854
  %v4032 = vmul.f32 %v3994, %v3994
  %v4033 = vmul.f32 %v3996, %v3996
  %v4034 = vsel %vm313, %v4030, 0.0
  %v4035 = vrot.slane %v4034, 4
  %v4036 = vadd.f32 %v4034, %v4035
  %v4037 = vrot.slane %v4036, 2
  %v4038 = vadd.f32 %v4036, %v4037
  %v4039 = vrot.slane %v4038, 1
  %v4040 = vadd.f32 %v4038, %v4039
  %v4041 = vsel %vm313, %v4031, 0.0
  %v4042 = vrot.slane %v4041, 4
  %v4043 = vadd.f32 %v4041, %v4042
  %v4044 = vrot.slane %v4043, 2
  %v4045 = vadd.f32 %v4043, %v4044
  %v4046 = vrot.slane %v4045, 1
  %v4047 = vadd.f32 %v4045, %v4046
  %v4048 = vsel %vm313, %v4032, 0.0
  %v4049 = vrot.slane %v4048, 4
  %v4050 = vadd.f32 %v4048, %v4049
  %v4051 = vrot.slane %v4050, 2
  %v4052 = vadd.f32 %v4050, %v4051
  %v4053 = vrot.slane %v4052, 1
  %v4054 = vadd.f32 %v4052, %v4053
  %v4055 = vsel %vm313, %v4033, 0.0
  %v4056 = vrot.slane %v4055, 4
  %v4057 = vadd.f32 %v4055, %v4056
  %v4058 = vrot.slane %v4057, 2
  %v4059 = vadd.f32 %v4057, %v4058
  %v4060 = vrot.slane %v4059, 1
  %v4061 = vadd.f32 %v4059, %v4060
  %4062 = vmatprep.subr.mxu0 0.0
  %4063 = vmatpush1.msra.mxu0 %v40
  %4064 = vmatprep.subr.mxu0 0.0
  %4065 = vmatpush1.msra.mxu0 %v41
  %4066 = vmatprep.subr.mxu0 0.0
  %4067 = vmatpush1.msra.mxu0 %v42
  %4068 = vmatprep.subr.mxu0 0.0
  %4069 = vmatpush1.msra.mxu0 %v43
  %4070 = vmatprep.subr.mxu0 0.0
  %4071 = vmatpush1.msra.mxu0 %v44
  %4072 = vmatprep.subr.mxu0 0.0
  %4073 = vmatpush1.msra.mxu0 %v45
  %4074 = vmatprep.subr.mxu0 0.0
  %4075 = vmatpush1.msra.mxu0 %v46
  %4076 = vmatprep.subr.mxu0 0.0
  %4077 = vmatpush1.msra.mxu0 %v47
  %4078 = vmatprep.subr.mxu0 0.0
  %4079 = vmatpush1.msra.mxu0 %v48
  %4080 = vmatprep.subr.mxu0 0.0
  %4081 = vmatpush1.msra.mxu0 %v49
  %4082 = vmatprep.subr.mxu0 0.0
  %4083 = vmatpush1.msra.mxu0 %v50
  %4084 = vmatprep.subr.mxu0 0.0
  %4085 = vmatpush1.msra.mxu0 %v51
  %4086 = vmatprep.subr.mxu0 0.0
  %4087 = vmatpush1.msra.mxu0 %v52
  %4088 = vmatprep.subr.mxu0 0.0
  %4089 = vmatpush1.msra.mxu0 %v53
  %4090 = vmatprep.subr.mxu0 0.0
  %4091 = vmatpush1.msra.mxu0 %v54
  %4092 = vmatprep.subr.mxu0 0.0
  %4093 = vmatpush1.msra.mxu0 %v55
  %4094 = vmatprep.subr.mxu0 0.0
  %4095 = vmatpush1.msra.mxu0 %v56
  %4096 = vmatprep.subr.mxu0 0.0
  %4097 = vmatpush1.msra.mxu0 %v57
  %4098 = vmatprep.subr.mxu0 0.0
  %4099 = vmatpush1.msra.mxu0 %v58
  %4100 = vmatprep.subr.mxu0 0.0
  %4101 = vmatpush1.msra.mxu0 %v59
  %4102 = vmatprep.subr.mxu0 0.0
  %4103 = vmatpush1.msra.mxu0 %v60
  %4104 = vmatprep.subr.mxu0 0.0
  %4105 = vmatpush1.msra.mxu0 %v61
  %4106 = vmatprep.subr.mxu0 0.0
  %4107 = vmatpush1.msra.mxu0 %v62
  %4108 = vmatprep.subr.mxu0 0.0
  %4109 = vmatpush1.msra.mxu0 %v63
  %4110 = vmatprep.subr.mxu0 0.0
  %4111 = vmatpush1.msra.mxu0 %v64
  %4112 = vmatprep.subr.mxu0 0.0
  %4113 = vmatpush1.msra.mxu0 %v65
  %4114 = vmatprep.subr.mxu0 0.0
  %4115 = vmatpush1.msra.mxu0 %v66
  %4116 = vmatprep.subr.mxu0 0.0
  %4117 = vmatpush1.msra.mxu0 %v67
  %4118 = vmatprep.subr.mxu0 0.0
  %4119 = vmatpush1.msra.mxu0 %v68
  %4120 = vmatprep.subr.mxu0 0.0
  %4121 = vmatpush1.msra.mxu0 %v69
  %4122 = vmatprep.subr.mxu0 0.0
  %4123 = vmatpush1.msra.mxu0 %v70
  %4124 = vmatprep.subr.mxu0 0.0
  %4125 = vmatpush1.msra.mxu0 %v71
  %4126 = vmatprep.mubr.f32.mxu0 %v4015
  %4127 = vmatmul.mubr.f32.gmra.mrb[0].mxu0 %v4008
  %v4128 = vpop.f32.mrb[0].mxu0
  %v4129 = vadd.f32 0.0, %v4128
  %v4130 = vpop.f32.mrb[0].mxu0
  %4131 = vdwg.mxu0
  %4132 = vmatprep.subr.mxu0 0.0
  %4133 = vmatpush1.msra.mxu0 %v72
  %4134 = vmatprep.subr.mxu0 0.0
  %4135 = vmatpush1.msra.mxu0 %v73
  %4136 = vmatprep.subr.mxu0 0.0
  %4137 = vmatpush1.msra.mxu0 %v74
  %4138 = vmatprep.subr.mxu0 0.0
  %4139 = vmatpush1.msra.mxu0 %v75
  %4140 = vmatprep.subr.mxu0 0.0
  %4141 = vmatpush1.msra.mxu0 %v76
  %4142 = vmatprep.subr.mxu0 0.0
  %4143 = vmatpush1.msra.mxu0 %v77
  %4144 = vmatprep.subr.mxu0 0.0
  %4145 = vmatpush1.msra.mxu0 %v78
  %4146 = vmatprep.subr.mxu0 0.0
  %4147 = vmatpush1.msra.mxu0 %v79
  %4148 = vmatprep.subr.mxu0 0.0
  %4149 = vmatpush1.msra.mxu0 %v80
  %4150 = vmatprep.subr.mxu0 0.0
  %4151 = vmatpush1.msra.mxu0 %v81
  %4152 = vmatprep.subr.mxu0 0.0
  %4153 = vmatpush1.msra.mxu0 %v82
  %4154 = vmatprep.subr.mxu0 0.0
  %4155 = vmatpush1.msra.mxu0 %v83
  %4156 = vmatprep.subr.mxu0 0.0
  %4157 = vmatpush1.msra.mxu0 %v84
  %4158 = vmatprep.subr.mxu0 0.0
  %4159 = vmatpush1.msra.mxu0 %v85
  %4160 = vmatprep.subr.mxu0 0.0
  %4161 = vmatpush1.msra.mxu0 %v86
  %4162 = vmatprep.subr.mxu0 0.0
  %4163 = vmatpush1.msra.mxu0 %v87
  %4164 = vmatprep.subr.mxu0 0.0
  %4165 = vmatpush1.msra.mxu0 %v88
  %4166 = vmatprep.subr.mxu0 0.0
  %4167 = vmatpush1.msra.mxu0 %v89
  %4168 = vmatprep.subr.mxu0 0.0
  %4169 = vmatpush1.msra.mxu0 %v90
  %4170 = vmatprep.subr.mxu0 0.0
  %4171 = vmatpush1.msra.mxu0 %v91
  %4172 = vmatprep.subr.mxu0 0.0
  %4173 = vmatpush1.msra.mxu0 %v92
  %4174 = vmatprep.subr.mxu0 0.0
  %4175 = vmatpush1.msra.mxu0 %v93
  %4176 = vmatprep.subr.mxu0 0.0
  %4177 = vmatpush1.msra.mxu0 %v94
  %4178 = vmatprep.subr.mxu0 0.0
  %4179 = vmatpush1.msra.mxu0 %v95
  %4180 = vmatprep.subr.mxu0 0.0
  %4181 = vmatpush1.msra.mxu0 %v96
  %4182 = vmatprep.subr.mxu0 0.0
  %4183 = vmatpush1.msra.mxu0 %v97
  %4184 = vmatprep.subr.mxu0 0.0
  %4185 = vmatpush1.msra.mxu0 %v98
  %4186 = vmatprep.subr.mxu0 0.0
  %4187 = vmatpush1.msra.mxu0 %v99
  %4188 = vmatprep.subr.mxu0 0.0
  %4189 = vmatpush1.msra.mxu0 %v100
  %4190 = vmatprep.subr.mxu0 0.0
  %4191 = vmatpush1.msra.mxu0 %v101
  %4192 = vmatprep.subr.mxu0 0.0
  %4193 = vmatpush1.msra.mxu0 %v102
  %4194 = vmatprep.subr.mxu0 0.0
  %4195 = vmatpush1.msra.mxu0 %v103
  %4196 = vmatprep.mubr.f32.mxu0 %v4029
  %4197 = vmatmul.mubr.f32.gmra.mrb[0].mxu0 %v4022
  %v4198 = vpop.f32.mrb[0].mxu0
  %v4199 = vadd.f32 %v4129, %v4198
  %v4200 = vpop.f32.mrb[0].mxu0
  %4201 = vdwg.mxu0
  %v4202 = vmul.f32 %v4199, 0.015625
  %4203 = vmatprep.subr.mxu0 0.0
  %4204 = vmatpush1.msra.mxu0 %v40
  %4205 = vmatprep.subr.mxu0 0.0
  %4206 = vmatpush1.msra.mxu0 %v41
  %4207 = vmatprep.subr.mxu0 0.0
  %4208 = vmatpush1.msra.mxu0 %v42
  %4209 = vmatprep.subr.mxu0 0.0
  %4210 = vmatpush1.msra.mxu0 %v43
  %4211 = vmatprep.subr.mxu0 0.0
  %4212 = vmatpush1.msra.mxu0 %v44
  %4213 = vmatprep.subr.mxu0 0.0
  %4214 = vmatpush1.msra.mxu0 %v45
  %4215 = vmatprep.subr.mxu0 0.0
  %4216 = vmatpush1.msra.mxu0 %v46
  %4217 = vmatprep.subr.mxu0 0.0
  %4218 = vmatpush1.msra.mxu0 %v47
  %4219 = vmatprep.subr.mxu0 0.0
  %4220 = vmatpush1.msra.mxu0 %v48
  %4221 = vmatprep.subr.mxu0 0.0
  %4222 = vmatpush1.msra.mxu0 %v49
  %4223 = vmatprep.subr.mxu0 0.0
  %4224 = vmatpush1.msra.mxu0 %v50
  %4225 = vmatprep.subr.mxu0 0.0
  %4226 = vmatpush1.msra.mxu0 %v51
  %4227 = vmatprep.subr.mxu0 0.0
  %4228 = vmatpush1.msra.mxu0 %v52
  %4229 = vmatprep.subr.mxu0 0.0
  %4230 = vmatpush1.msra.mxu0 %v53
  %4231 = vmatprep.subr.mxu0 0.0
  %4232 = vmatpush1.msra.mxu0 %v54
  %4233 = vmatprep.subr.mxu0 0.0
  %4234 = vmatpush1.msra.mxu0 %v55
  %4235 = vmatprep.subr.mxu0 0.0
  %4236 = vmatpush1.msra.mxu0 %v56
  %4237 = vmatprep.subr.mxu0 0.0
  %4238 = vmatpush1.msra.mxu0 %v57
  %4239 = vmatprep.subr.mxu0 0.0
  %4240 = vmatpush1.msra.mxu0 %v58
  %4241 = vmatprep.subr.mxu0 0.0
  %4242 = vmatpush1.msra.mxu0 %v59
  %4243 = vmatprep.subr.mxu0 0.0
  %4244 = vmatpush1.msra.mxu0 %v60
  %4245 = vmatprep.subr.mxu0 0.0
  %4246 = vmatpush1.msra.mxu0 %v61
  %4247 = vmatprep.subr.mxu0 0.0
  %4248 = vmatpush1.msra.mxu0 %v62
  %4249 = vmatprep.subr.mxu0 0.0
  %4250 = vmatpush1.msra.mxu0 %v63
  %4251 = vmatprep.subr.mxu0 0.0
  %4252 = vmatpush1.msra.mxu0 %v64
  %4253 = vmatprep.subr.mxu0 0.0
  %4254 = vmatpush1.msra.mxu0 %v65
  %4255 = vmatprep.subr.mxu0 0.0
  %4256 = vmatpush1.msra.mxu0 %v66
  %4257 = vmatprep.subr.mxu0 0.0
  %4258 = vmatpush1.msra.mxu0 %v67
  %4259 = vmatprep.subr.mxu0 0.0
  %4260 = vmatpush1.msra.mxu0 %v68
  %4261 = vmatprep.subr.mxu0 0.0
  %4262 = vmatpush1.msra.mxu0 %v69
  %4263 = vmatprep.subr.mxu0 0.0
  %4264 = vmatpush1.msra.mxu0 %v70
  %4265 = vmatprep.subr.mxu0 0.0
  %4266 = vmatpush1.msra.mxu0 %v71
  %4267 = vmatprep.mubr.f32.mxu0 %v4047
  %4268 = vmatmul.mubr.f32.gmra.mrb[0].mxu0 %v4040
  %v4269 = vpop.f32.mrb[0].mxu0
  %v4270 = vadd.f32 0.0, %v4269
  %v4271 = vpop.f32.mrb[0].mxu0
  %4272 = vdwg.mxu0
  %4273 = vmatprep.subr.mxu0 0.0
  %4274 = vmatpush1.msra.mxu0 %v72
  %4275 = vmatprep.subr.mxu0 0.0
  %4276 = vmatpush1.msra.mxu0 %v73
  %4277 = vmatprep.subr.mxu0 0.0
  %4278 = vmatpush1.msra.mxu0 %v74
  %4279 = vmatprep.subr.mxu0 0.0
  %4280 = vmatpush1.msra.mxu0 %v75
  %4281 = vmatprep.subr.mxu0 0.0
  %4282 = vmatpush1.msra.mxu0 %v76
  %4283 = vmatprep.subr.mxu0 0.0
  %4284 = vmatpush1.msra.mxu0 %v77
  %4285 = vmatprep.subr.mxu0 0.0
  %4286 = vmatpush1.msra.mxu0 %v78
  %4287 = vmatprep.subr.mxu0 0.0
  %4288 = vmatpush1.msra.mxu0 %v79
  %4289 = vmatprep.subr.mxu0 0.0
  %4290 = vmatpush1.msra.mxu0 %v80
  %4291 = vmatprep.subr.mxu0 0.0
  %4292 = vmatpush1.msra.mxu0 %v81
  %4293 = vmatprep.subr.mxu0 0.0
  %4294 = vmatpush1.msra.mxu0 %v82
  %4295 = vmatprep.subr.mxu0 0.0
  %4296 = vmatpush1.msra.mxu0 %v83
  %4297 = vmatprep.subr.mxu0 0.0
  %4298 = vmatpush1.msra.mxu0 %v84
  %4299 = vmatprep.subr.mxu0 0.0
  %4300 = vmatpush1.msra.mxu0 %v85
  %4301 = vmatprep.subr.mxu0 0.0
  %4302 = vmatpush1.msra.mxu0 %v86
  %4303 = vmatprep.subr.mxu0 0.0
  %4304 = vmatpush1.msra.mxu0 %v87
  %4305 = vmatprep.subr.mxu0 0.0
  %4306 = vmatpush1.msra.mxu0 %v88
  %4307 = vmatprep.subr.mxu0 0.0
  %4308 = vmatpush1.msra.mxu0 %v89
  %4309 = vmatprep.subr.mxu0 0.0
  %4310 = vmatpush1.msra.mxu0 %v90
  %4311 = vmatprep.subr.mxu0 0.0
  %4312 = vmatpush1.msra.mxu0 %v91
  %4313 = vmatprep.subr.mxu0 0.0
  %4314 = vmatpush1.msra.mxu0 %v92
  %4315 = vmatprep.subr.mxu0 0.0
  %4316 = vmatpush1.msra.mxu0 %v93
  %4317 = vmatprep.subr.mxu0 0.0
  %4318 = vmatpush1.msra.mxu0 %v94
  %4319 = vmatprep.subr.mxu0 0.0
  %4320 = vmatpush1.msra.mxu0 %v95
  %4321 = vmatprep.subr.mxu0 0.0
  %4322 = vmatpush1.msra.mxu0 %v96
  %4323 = vmatprep.subr.mxu0 0.0
  %4324 = vmatpush1.msra.mxu0 %v97
  %4325 = vmatprep.subr.mxu0 0.0
  %4326 = vmatpush1.msra.mxu0 %v98
  %4327 = vmatprep.subr.mxu0 0.0
  %4328 = vmatpush1.msra.mxu0 %v99
  %4329 = vmatprep.subr.mxu0 0.0
  %4330 = vmatpush1.msra.mxu0 %v100
  %4331 = vmatprep.subr.mxu0 0.0
  %4332 = vmatpush1.msra.mxu0 %v101
  %4333 = vmatprep.subr.mxu0 0.0
  %4334 = vmatpush1.msra.mxu0 %v102
  %4335 = vmatprep.subr.mxu0 0.0
  %4336 = vmatpush1.msra.mxu0 %v103
  %4337 = vmatprep.mubr.f32.mxu0 %v4061
  %4338 = vmatmul.mubr.f32.gmra.mrb[0].mxu0 %v4054
  %v4339 = vpop.f32.mrb[0].mxu0
  %v4340 = vadd.f32 %v4270, %v4339
  %v4341 = vpop.f32.mrb[0].mxu0
  %4342 = vdwg.mxu0
  %v4343 = vmul.f32 %v4340, 0.015625
  %v4344 = vmul.f32 %v4202, %v4202
  %v4345 = vsub.f32 %v4343, %v4344
  %v4346 = vadd.f32 %v4345, 1e-05
  %v4347 = vrsqrt.pop %v4346
  %v4348 = vmul.f32 %v3999, %v4347
  %v4349 = vmul.f32 %v4202, %v4348
  %v4350 = vsub.f32 %v4001, %v4349
  %v4352 = vsel %vm663, %v4348, 0
  %4354 = vmatprep.subr.mxu0 %v33
  %4355 = vmatpush1.msra.mxu0 %v32
  %4356 = vmatprep.subr.mxu0 %v37
  %4357 = vmatpush1.msra.mxu0 %v36
  %4358 = vmatprep.subr.mxu0 0.0
  %4359 = vmatpush1.msra.mxu0 0.0
  %4360 = vmatprep.subr.mxu0 0.0
  %4361 = vmatpush1.msra.mxu0 0.0
  %4362 = vmatprep.subr.mxu0 0.0
  %4363 = vmatpush1.msra.mxu0 0.0
  %4364 = vmatprep.subr.mxu0 0.0
  %4365 = vmatpush1.msra.mxu0 0.0
  %4366 = vmatprep.subr.mxu0 0.0
  %4367 = vmatpush1.msra.mxu0 0.0
  %4368 = vmatprep.subr.mxu0 0.0
  %4369 = vmatpush1.msra.mxu0 0.0
  %4370 = vmatprep.subr.mxu0 0.0
  %4371 = vmatpush1.msra.mxu0 0.0
  %4372 = vmatprep.subr.mxu0 0.0
  %4373 = vmatpush1.msra.mxu0 0.0
  %4374 = vmatprep.subr.mxu0 0.0
  %4375 = vmatpush1.msra.mxu0 0.0
  %4376 = vmatprep.subr.mxu0 0.0
  %4377 = vmatpush1.msra.mxu0 0.0
  %4378 = vmatprep.subr.mxu0 0.0
  %4379 = vmatpush1.msra.mxu0 0.0
  %4380 = vmatprep.subr.mxu0 0.0
  %4381 = vmatpush1.msra.mxu0 0.0
  %4382 = vmatprep.subr.mxu0 0.0
  %4383 = vmatpush1.msra.mxu0 0.0
  %4384 = vmatprep.subr.mxu0 0.0
  %4385 = vmatpush1.msra.mxu0 0.0
  %4386 = vmatprep.subr.mxu0 0.0
  %4387 = vmatpush1.msra.mxu0 0.0
  %4388 = vmatprep.subr.mxu0 0.0
  %4389 = vmatpush1.msra.mxu0 0.0
  %4390 = vmatprep.subr.mxu0 0.0
  %4391 = vmatpush1.msra.mxu0 0.0
  %4392 = vmatprep.subr.mxu0 0.0
  %4393 = vmatpush1.msra.mxu0 0.0
  %4394 = vmatprep.subr.mxu0 0.0
  %4395 = vmatpush1.msra.mxu0 0.0
  %4396 = vmatprep.subr.mxu0 0.0
  %4397 = vmatpush1.msra.mxu0 0.0
  %4398 = vmatprep.subr.mxu0 0.0
  %4399 = vmatpush1.msra.mxu0 0.0
  %4400 = vmatprep.subr.mxu0 0.0
  %4401 = vmatpush1.msra.mxu0 0.0
  %4402 = vmatprep.subr.mxu0 0.0
  %4403 = vmatpush1.msra.mxu0 0.0
  %4404 = vmatprep.subr.mxu0 0.0
  %4405 = vmatpush1.msra.mxu0 0.0
  %4406 = vmatprep.subr.mxu0 0.0
  %4407 = vmatpush1.msra.mxu0 0.0
  %4408 = vmatprep.subr.mxu0 0.0
  %4409 = vmatpush1.msra.mxu0 0.0
  %4410 = vmatprep.subr.mxu0 0.0
  %4411 = vmatpush1.msra.mxu0 0.0
  %4412 = vmatprep.subr.mxu0 0.0
  %4413 = vmatpush1.msra.mxu0 0.0
  %4414 = vmatprep.subr.mxu0 0.0
  %4415 = vmatpush1.msra.mxu0 0.0
  %4416 = vmatprep.subr.mxu0 0.0
  %4417 = vmatpush1.msra.mxu0 0.0
  %4418 = vmatprep.mubr.f32.mxu0 0.0
  %4419 = vmatmul.mubr.f32.gmra.mrb[0].mxu0 %v4352
  %v4420 = vpop.f32.mrb[0].mxu0
  %v4421 = vadd.f32 0.0, %v4420
  %v4422 = vpop.f32.mrb[0].mxu0
  %v4423 = vadd.f32 0.0, %v4422
  %4424 = vdwg.mxu0
  %4425 = vmatprep.subr.mxu0 %v35
  %4426 = vmatpush1.msra.mxu0 %v34
  %4427 = vmatprep.subr.mxu0 %v39
  %4428 = vmatpush1.msra.mxu0 %v38
  %4429 = vmatprep.subr.mxu0 0.0
  %4430 = vmatpush1.msra.mxu0 0.0
  %4431 = vmatprep.subr.mxu0 0.0
  %4432 = vmatpush1.msra.mxu0 0.0
  %4433 = vmatprep.subr.mxu0 0.0
  %4434 = vmatpush1.msra.mxu0 0.0
  %4435 = vmatprep.subr.mxu0 0.0
  %4436 = vmatpush1.msra.mxu0 0.0
  %4437 = vmatprep.subr.mxu0 0.0
  %4438 = vmatpush1.msra.mxu0 0.0
  %4439 = vmatprep.subr.mxu0 0.0
  %4440 = vmatpush1.msra.mxu0 0.0
  %4441 = vmatprep.subr.mxu0 0.0
  %4442 = vmatpush1.msra.mxu0 0.0
  %4443 = vmatprep.subr.mxu0 0.0
  %4444 = vmatpush1.msra.mxu0 0.0
  %4445 = vmatprep.subr.mxu0 0.0
  %4446 = vmatpush1.msra.mxu0 0.0
  %4447 = vmatprep.subr.mxu0 0.0
  %4448 = vmatpush1.msra.mxu0 0.0
  %4449 = vmatprep.subr.mxu0 0.0
  %4450 = vmatpush1.msra.mxu0 0.0
  %4451 = vmatprep.subr.mxu0 0.0
  %4452 = vmatpush1.msra.mxu0 0.0
  %4453 = vmatprep.subr.mxu0 0.0
  %4454 = vmatpush1.msra.mxu0 0.0
  %4455 = vmatprep.subr.mxu0 0.0
  %4456 = vmatpush1.msra.mxu0 0.0
  %4457 = vmatprep.subr.mxu0 0.0
  %4458 = vmatpush1.msra.mxu0 0.0
  %4459 = vmatprep.subr.mxu0 0.0
  %4460 = vmatpush1.msra.mxu0 0.0
  %4461 = vmatprep.subr.mxu0 0.0
  %4462 = vmatpush1.msra.mxu0 0.0
  %4463 = vmatprep.subr.mxu0 0.0
  %4464 = vmatpush1.msra.mxu0 0.0
  %4465 = vmatprep.subr.mxu0 0.0
  %4466 = vmatpush1.msra.mxu0 0.0
  %4467 = vmatprep.subr.mxu0 0.0
  %4468 = vmatpush1.msra.mxu0 0.0
  %4469 = vmatprep.subr.mxu0 0.0
  %4470 = vmatpush1.msra.mxu0 0.0
  %4471 = vmatprep.subr.mxu0 0.0
  %4472 = vmatpush1.msra.mxu0 0.0
  %4473 = vmatprep.subr.mxu0 0.0
  %4474 = vmatpush1.msra.mxu0 0.0
  %4475 = vmatprep.subr.mxu0 0.0
  %4476 = vmatpush1.msra.mxu0 0.0
  %4477 = vmatprep.subr.mxu0 0.0
  %4478 = vmatpush1.msra.mxu0 0.0
  %4479 = vmatprep.subr.mxu0 0.0
  %4480 = vmatpush1.msra.mxu0 0.0
  %4481 = vmatprep.subr.mxu0 0.0
  %4482 = vmatpush1.msra.mxu0 0.0
  %4483 = vmatprep.subr.mxu0 0.0
  %4484 = vmatpush1.msra.mxu0 0.0
  %4485 = vmatprep.subr.mxu0 0.0
  %4486 = vmatpush1.msra.mxu0 0.0
  %4487 = vmatprep.subr.mxu0 0.0
  %4488 = vmatpush1.msra.mxu0 0.0
  %4489 = vmatprep.mubr.f32.mxu0 0.0
  %4490 = vmatmul.mubr.f32.gmra.mrb[0].mxu0 %v4352
  %v4491 = vpop.f32.mrb[0].mxu0
  %v4492 = vadd.f32 0.0, %v4491
  %v4493 = vpop.f32.mrb[0].mxu0
  %v4494 = vadd.f32 0.0, %v4493
  %4495 = vdwg.mxu0
  %v4496 = vlaneseq
  %v4497 = vshrl.u32 %v4496, 7
  %v4498 = vsub.s32 0, %v4497
  %v4499 = vrot.slane %v4421, %v4498
  %v4500 = vlaneseq
  %v4501 = vshrl.u32 %v4500, 7
  %v4502 = vsub.s32 0, %v4501
  %v4503 = vrot.slane %v4423, %v4502
  %v4504 = vlaneseq
  %v4505 = vshrl.u32 %v4504, 7
  %v4506 = vsub.s32 0, %v4505
  %v4507 = vrot.slane %v4492, %v4506
  %v4508 = vlaneseq
  %v4509 = vshrl.u32 %v4508, 7
  %v4510 = vsub.s32 0, %v4509
  %v4511 = vrot.slane %v4494, %v4510
  %v4512 = vmul.f32 %v3852, %v4499
  %v4513 = vmul.f32 %v3854, %v4503
  %v4514 = vmul.f32 %v3994, %v4507
  %v4515 = vmul.f32 %v3996, %v4511
  %v4517 = vsel %vm663, %v4350, 0
  %4519 = vmatprep.subr.mxu0 %v33
  %4520 = vmatpush1.msra.mxu0 %v32
  %4521 = vmatprep.subr.mxu0 %v37
  %4522 = vmatpush1.msra.mxu0 %v36
  %4523 = vmatprep.subr.mxu0 0.0
  %4524 = vmatpush1.msra.mxu0 0.0
  %4525 = vmatprep.subr.mxu0 0.0
  %4526 = vmatpush1.msra.mxu0 0.0
  %4527 = vmatprep.subr.mxu0 0.0
  %4528 = vmatpush1.msra.mxu0 0.0
  %4529 = vmatprep.subr.mxu0 0.0
  %4530 = vmatpush1.msra.mxu0 0.0
  %4531 = vmatprep.subr.mxu0 0.0
  %4532 = vmatpush1.msra.mxu0 0.0
  %4533 = vmatprep.subr.mxu0 0.0
  %4534 = vmatpush1.msra.mxu0 0.0
  %4535 = vmatprep.subr.mxu0 0.0
  %4536 = vmatpush1.msra.mxu0 0.0
  %4537 = vmatprep.subr.mxu0 0.0
  %4538 = vmatpush1.msra.mxu0 0.0
  %4539 = vmatprep.subr.mxu0 0.0
  %4540 = vmatpush1.msra.mxu0 0.0
  %4541 = vmatprep.subr.mxu0 0.0
  %4542 = vmatpush1.msra.mxu0 0.0
  %4543 = vmatprep.subr.mxu0 0.0
  %4544 = vmatpush1.msra.mxu0 0.0
  %4545 = vmatprep.subr.mxu0 0.0
  %4546 = vmatpush1.msra.mxu0 0.0
  %4547 = vmatprep.subr.mxu0 0.0
  %4548 = vmatpush1.msra.mxu0 0.0
  %4549 = vmatprep.subr.mxu0 0.0
  %4550 = vmatpush1.msra.mxu0 0.0
  %4551 = vmatprep.subr.mxu0 0.0
  %4552 = vmatpush1.msra.mxu0 0.0
  %4553 = vmatprep.subr.mxu0 0.0
  %4554 = vmatpush1.msra.mxu0 0.0
  %4555 = vmatprep.subr.mxu0 0.0
  %4556 = vmatpush1.msra.mxu0 0.0
  %4557 = vmatprep.subr.mxu0 0.0
  %4558 = vmatpush1.msra.mxu0 0.0
  %4559 = vmatprep.subr.mxu0 0.0
  %4560 = vmatpush1.msra.mxu0 0.0
  %4561 = vmatprep.subr.mxu0 0.0
  %4562 = vmatpush1.msra.mxu0 0.0
  %4563 = vmatprep.subr.mxu0 0.0
  %4564 = vmatpush1.msra.mxu0 0.0
  %4565 = vmatprep.subr.mxu0 0.0
  %4566 = vmatpush1.msra.mxu0 0.0
  %4567 = vmatprep.subr.mxu0 0.0
  %4568 = vmatpush1.msra.mxu0 0.0
  %4569 = vmatprep.subr.mxu0 0.0
  %4570 = vmatpush1.msra.mxu0 0.0
  %4571 = vmatprep.subr.mxu0 0.0
  %4572 = vmatpush1.msra.mxu0 0.0
  %4573 = vmatprep.subr.mxu0 0.0
  %4574 = vmatpush1.msra.mxu0 0.0
  %4575 = vmatprep.subr.mxu0 0.0
  %4576 = vmatpush1.msra.mxu0 0.0
  %4577 = vmatprep.subr.mxu0 0.0
  %4578 = vmatpush1.msra.mxu0 0.0
  %4579 = vmatprep.subr.mxu0 0.0
  %4580 = vmatpush1.msra.mxu0 0.0
  %4581 = vmatprep.subr.mxu0 0.0
  %4582 = vmatpush1.msra.mxu0 0.0
  %4583 = vmatprep.mubr.f32.mxu0 0.0
  %4584 = vmatmul.mubr.f32.gmra.mrb[0].mxu0 %v4517
  %v4585 = vpop.f32.mrb[0].mxu0
  %v4586 = vadd.f32 0.0, %v4585
  %v4587 = vpop.f32.mrb[0].mxu0
  %v4588 = vadd.f32 0.0, %v4587
  %4589 = vdwg.mxu0
  %4590 = vmatprep.subr.mxu0 %v35
  %4591 = vmatpush1.msra.mxu0 %v34
  %4592 = vmatprep.subr.mxu0 %v39
  %4593 = vmatpush1.msra.mxu0 %v38
  %4594 = vmatprep.subr.mxu0 0.0
  %4595 = vmatpush1.msra.mxu0 0.0
  %4596 = vmatprep.subr.mxu0 0.0
  %4597 = vmatpush1.msra.mxu0 0.0
  %4598 = vmatprep.subr.mxu0 0.0
  %4599 = vmatpush1.msra.mxu0 0.0
  %4600 = vmatprep.subr.mxu0 0.0
  %4601 = vmatpush1.msra.mxu0 0.0
  %4602 = vmatprep.subr.mxu0 0.0
  %4603 = vmatpush1.msra.mxu0 0.0
  %4604 = vmatprep.subr.mxu0 0.0
  %4605 = vmatpush1.msra.mxu0 0.0
  %4606 = vmatprep.subr.mxu0 0.0
  %4607 = vmatpush1.msra.mxu0 0.0
  %4608 = vmatprep.subr.mxu0 0.0
  %4609 = vmatpush1.msra.mxu0 0.0
  %4610 = vmatprep.subr.mxu0 0.0
  %4611 = vmatpush1.msra.mxu0 0.0
  %4612 = vmatprep.subr.mxu0 0.0
  %4613 = vmatpush1.msra.mxu0 0.0
  %4614 = vmatprep.subr.mxu0 0.0
  %4615 = vmatpush1.msra.mxu0 0.0
  %4616 = vmatprep.subr.mxu0 0.0
  %4617 = vmatpush1.msra.mxu0 0.0
  %4618 = vmatprep.subr.mxu0 0.0
  %4619 = vmatpush1.msra.mxu0 0.0
  %4620 = vmatprep.subr.mxu0 0.0
  %4621 = vmatpush1.msra.mxu0 0.0
  %4622 = vmatprep.subr.mxu0 0.0
  %4623 = vmatpush1.msra.mxu0 0.0
  %4624 = vmatprep.subr.mxu0 0.0
  %4625 = vmatpush1.msra.mxu0 0.0
  %4626 = vmatprep.subr.mxu0 0.0
  %4627 = vmatpush1.msra.mxu0 0.0
  %4628 = vmatprep.subr.mxu0 0.0
  %4629 = vmatpush1.msra.mxu0 0.0
  %4630 = vmatprep.subr.mxu0 0.0
  %4631 = vmatpush1.msra.mxu0 0.0
  %4632 = vmatprep.subr.mxu0 0.0
  %4633 = vmatpush1.msra.mxu0 0.0
  %4634 = vmatprep.subr.mxu0 0.0
  %4635 = vmatpush1.msra.mxu0 0.0
  %4636 = vmatprep.subr.mxu0 0.0
  %4637 = vmatpush1.msra.mxu0 0.0
  %4638 = vmatprep.subr.mxu0 0.0
  %4639 = vmatpush1.msra.mxu0 0.0
  %4640 = vmatprep.subr.mxu0 0.0
  %4641 = vmatpush1.msra.mxu0 0.0
  %4642 = vmatprep.subr.mxu0 0.0
  %4643 = vmatpush1.msra.mxu0 0.0
  %4644 = vmatprep.subr.mxu0 0.0
  %4645 = vmatpush1.msra.mxu0 0.0
  %4646 = vmatprep.subr.mxu0 0.0
  %4647 = vmatpush1.msra.mxu0 0.0
  %4648 = vmatprep.subr.mxu0 0.0
  %4649 = vmatpush1.msra.mxu0 0.0
  %4650 = vmatprep.subr.mxu0 0.0
  %4651 = vmatpush1.msra.mxu0 0.0
  %4652 = vmatprep.subr.mxu0 0.0
  %4653 = vmatpush1.msra.mxu0 0.0
  %4654 = vmatprep.mubr.f32.mxu0 0.0
  %4655 = vmatmul.mubr.f32.gmra.mrb[0].mxu0 %v4517
  %v4656 = vpop.f32.mrb[0].mxu0
  %v4657 = vadd.f32 0.0, %v4656
  %v4658 = vpop.f32.mrb[0].mxu0
  %v4659 = vadd.f32 0.0, %v4658
  %4660 = vdwg.mxu0
  %v4661 = vlaneseq
  %v4662 = vshrl.u32 %v4661, 7
  %v4663 = vsub.s32 0, %v4662
  %v4664 = vrot.slane %v4586, %v4663
  %v4665 = vlaneseq
  %v4666 = vshrl.u32 %v4665, 7
  %v4667 = vsub.s32 0, %v4666
  %v4668 = vrot.slane %v4588, %v4667
  %v4669 = vlaneseq
  %v4670 = vshrl.u32 %v4669, 7
  %v4671 = vsub.s32 0, %v4670
  %v4672 = vrot.slane %v4657, %v4671
  %v4673 = vlaneseq
  %v4674 = vshrl.u32 %v4673, 7
  %v4675 = vsub.s32 0, %v4674
  %v4676 = vrot.slane %v4659, %v4675
  %v4677 = vadd.f32 %v4512, %v4664
  %v4678 = vadd.f32 %v4513, %v4668
  %v4679 = vadd.f32 %v4514, %v4672
  %v4680 = vadd.f32 %v4515, %v4676
  %v4681 = vmax.f32 %v4677, 0.0
  %v4682 = vmax.f32 %v4678, 0.0
  %v4683 = vmax.f32 %v4679, 0.0
  %v4684 = vmax.f32 %v4680, 0.0
  %s4685 = scalar_lea.vmem %s2, 6144
  %v4686 = vld [vmem:[%s4685] sm:$0xff]
  %v4687 = vld [vmem:[%s4685 + $0x8] sm:$0xff]
  %v4688 = vld [vmem:[%s4685 + $0x10] sm:$0xff]
  %v4689 = vld [vmem:[%s4685 + $0x18] sm:$0xff]
  %v4690 = vld [vmem:[%s4685 + $0x20] sm:$0xff]
  %v4691 = vld [vmem:[%s4685 + $0x28] sm:$0xff]
  %v4692 = vld [vmem:[%s4685 + $0x30] sm:$0xff]
  %v4693 = vld [vmem:[%s4685 + $0x38] sm:$0xff]
  %v4694 = vld [vmem:[%s4685 + $0x40] sm:$0xff]
  %v4695 = vld [vmem:[%s4685 + $0x48] sm:$0xff]
  %v4696 = vld [vmem:[%s4685 + $0x50] sm:$0xff]
  %v4697 = vld [vmem:[%s4685 + $0x58] sm:$0xff]
  %v4698 = vld [vmem:[%s4685 + $0x60] sm:$0xff]
  %v4699 = vld [vmem:[%s4685 + $0x68] sm:$0xff]
  %v4700 = vld [vmem:[%s4685 + $0x70] sm:$0xff]
  %v4701 = vld [vmem:[%s4685 + $0x78] sm:$0xff]
  %v4702 = vld [vmem:[%s4685 + $0x80] sm:$0xff]
  %v4703 = vld [vmem:[%s4685 + $0x88] sm:$0xff]
  %v4704 = vld [vmem:[%s4685 + $0x90] sm:$0xff]
  %v4705 = vld [vmem:[%s4685 + $0x98] sm:$0xff]
  %v4706 = vld [vmem:[%s4685 + $0xa0] sm:$0xff]
  %v4707 = vld [vmem:[%s4685 + $0xa8] sm:$0xff]
  %v4708 = vld [vmem:[%s4685 + $0xb0] sm:$0xff]
  %v4709 = vld [vmem:[%s4685 + $0xb8] sm:$0xff]
  %v4710 = vld [vmem:[%s4685 + $0xc0] sm:$0xff]
  %v4711 = vld [vmem:[%s4685 + $0xc8] sm:$0xff]
  %v4712 = vld [vmem:[%s4685 + $0xd0] sm:$0xff]
  %v4713 = vld [vmem:[%s4685 + $0xd8] sm:$0xff]
  %v4714 = vld [vmem:[%s4685 + $0xe0] sm:$0xff]
  %v4715 = vld [vmem:[%s4685 + $0xe8] sm:$0xff]
  %v4716 = vld [vmem:[%s4685 + $0xf0] sm:$0xff]
  %v4717 = vld [vmem:[%s4685 + $0xf8] sm:$0xff]
  %v4718 = vld [vmem:[%s4685 + $0x100] sm:$0xff]
  %v4719 = vld [vmem:[%s4685 + $0x108] sm:$0xff]
  %v4720 = vld [vmem:[%s4685 + $0x110] sm:$0xff]
  %v4721 = vld [vmem:[%s4685 + $0x118] sm:$0xff]
  %v4722 = vld [vmem:[%s4685 + $0x120] sm:$0xff]
  %v4723 = vld [vmem:[%s4685 + $0x128] sm:$0xff]
  %v4724 = vld [vmem:[%s4685 + $0x130] sm:$0xff]
  %v4725 = vld [vmem:[%s4685 + $0x138] sm:$0xff]
  %v4726 = vld [vmem:[%s4685 + $0x140] sm:$0xff]
  %v4727 = vld [vmem:[%s4685 + $0x148] sm:$0xff]
  %v4728 = vld [vmem:[%s4685 + $0x150] sm:$0xff]
  %v4729 = vld [vmem:[%s4685 + $0x158] sm:$0xff]
  %v4730 = vld [vmem:[%s4685 + $0x160] sm:$0xff]
  %v4731 = vld [vmem:[%s4685 + $0x168] sm:$0xff]
  %v4732 = vld [vmem:[%s4685 + $0x170] sm:$0xff]
  %v4733 = vld [vmem:[%s4685 + $0x178] sm:$0xff]
  %v4734 = vld [vmem:[%s4685 + $0x180] sm:$0xff]
  %v4735 = vld [vmem:[%s4685 + $0x188] sm:$0xff]
  %v4736 = vld [vmem:[%s4685 + $0x190] sm:$0xff]
  %v4737 = vld [vmem:[%s4685 + $0x198] sm:$0xff]
  %v4738 = vld [vmem:[%s4685 + $0x1a0] sm:$0xff]
  %v4739 = vld [vmem:[%s4685 + $0x1a8] sm:$0xff]
  %v4740 = vld [vmem:[%s4685 + $0x1b0] sm:$0xff]
  %v4741 = vld [vmem:[%s4685 + $0x1b8] sm:$0xff]
  %v4742 = vld [vmem:[%s4685 + $0x1c0] sm:$0xff]
  %v4743 = vld [vmem:[%s4685 + $0x1c8] sm:$0xff]
  %v4744 = vld [vmem:[%s4685 + $0x1d0] sm:$0xff]
  %v4745 = vld [vmem:[%s4685 + $0x1d8] sm:$0xff]
  %v4746 = vld [vmem:[%s4685 + $0x1e0] sm:$0xff]
  %v4747 = vld [vmem:[%s4685 + $0x1e8] sm:$0xff]
  %v4748 = vld [vmem:[%s4685 + $0x1f0] sm:$0xff]
  %v4749 = vld [vmem:[%s4685 + $0x1f8] sm:$0xff]
  %v4750 = vld [vmem:[%s4685 + $0x200] sm:$0xff]
  %v4751 = vld [vmem:[%s4685 + $0x208] sm:$0xff]
  %v4752 = vld [vmem:[%s4685 + $0x210] sm:$0xff]
  %v4753 = vld [vmem:[%s4685 + $0x218] sm:$0xff]
  %v4754 = vld [vmem:[%s4685 + $0x220] sm:$0xff]
  %v4755 = vld [vmem:[%s4685 + $0x228] sm:$0xff]
  %v4756 = vld [vmem:[%s4685 + $0x230] sm:$0xff]
  %v4757 = vld [vmem:[%s4685 + $0x238] sm:$0xff]
  %v4758 = vld [vmem:[%s4685 + $0x240] sm:$0xff]
  %v4759 = vld [vmem:[%s4685 + $0x248] sm:$0xff]
  %v4760 = vld [vmem:[%s4685 + $0x250] sm:$0xff]
  %v4761 = vld [vmem:[%s4685 + $0x258] sm:$0xff]
  %v4762 = vld [vmem:[%s4685 + $0x260] sm:$0xff]
  %v4763 = vld [vmem:[%s4685 + $0x268] sm:$0xff]
  %v4764 = vld [vmem:[%s4685 + $0x270] sm:$0xff]
  %v4765 = vld [vmem:[%s4685 + $0x278] sm:$0xff]
  %v4766 = vld [vmem:[%s4685 + $0x280] sm:$0xff]
  %v4767 = vld [vmem:[%s4685 + $0x288] sm:$0xff]
  %v4768 = vld [vmem:[%s4685 + $0x290] sm:$0xff]
  %v4769 = vld [vmem:[%s4685 + $0x298] sm:$0xff]
  %v4770 = vld [vmem:[%s4685 + $0x2a0] sm:$0xff]
  %v4771 = vld [vmem:[%s4685 + $0x2a8] sm:$0xff]
  %v4772 = vld [vmem:[%s4685 + $0x2b0] sm:$0xff]
  %v4773 = vld [vmem:[%s4685 + $0x2b8] sm:$0xff]
  %v4774 = vld [vmem:[%s4685 + $0x2c0] sm:$0xff]
  %v4775 = vld [vmem:[%s4685 + $0x2c8] sm:$0xff]
  %v4776 = vld [vmem:[%s4685 + $0x2d0] sm:$0xff]
  %v4777 = vld [vmem:[%s4685 + $0x2d8] sm:$0xff]
  %v4778 = vld [vmem:[%s4685 + $0x2e0] sm:$0xff]
  %v4779 = vld [vmem:[%s4685 + $0x2e8] sm:$0xff]
  %v4780 = vld [vmem:[%s4685 + $0x2f0] sm:$0xff]
  %v4781 = vld [vmem:[%s4685 + $0x2f8] sm:$0xff]
  %v4782 = vld [vmem:[%s4685 + $0x300] sm:$0xff]
  %v4783 = vld [vmem:[%s4685 + $0x308] sm:$0xff]
  %v4784 = vld [vmem:[%s4685 + $0x310] sm:$0xff]
  %v4785 = vld [vmem:[%s4685 + $0x318] sm:$0xff]
  %v4786 = vld [vmem:[%s4685 + $0x320] sm:$0xff]
  %v4787 = vld [vmem:[%s4685 + $0x328] sm:$0xff]
  %v4788 = vld [vmem:[%s4685 + $0x330] sm:$0xff]
  %v4789 = vld [vmem:[%s4685 + $0x338] sm:$0xff]
  %v4790 = vld [vmem:[%s4685 + $0x340] sm:$0xff]
  %v4791 = vld [vmem:[%s4685 + $0x348] sm:$0xff]
  %v4792 = vld [vmem:[%s4685 + $0x350] sm:$0xff]
  %v4793 = vld [vmem:[%s4685 + $0x358] sm:$0xff]
  %v4794 = vld [vmem:[%s4685 + $0x360] sm:$0xff]
  %v4795 = vld [vmem:[%s4685 + $0x368] sm:$0xff]
  %v4796 = vld [vmem:[%s4685 + $0x370] sm:$0xff]
  %v4797 = vld [vmem:[%s4685 + $0x378] sm:$0xff]
  %v4798 = vld [vmem:[%s4685 + $0x380] sm:$0xff]
  %v4799 = vld [vmem:[%s4685 + $0x388] sm:$0xff]
  %v4800 = vld [vmem:[%s4685 + $0x390] sm:$0xff]
  %v4801 = vld [vmem:[%s4685 + $0x398] sm:$0xff]
  %v4802 = vld [vmem:[%s4685 + $0x3a0] sm:$0xff]
  %v4803 = vld [vmem:[%s4685 + $0x3a8] sm:$0xff]
  %v4804 = vld [vmem:[%s4685 + $0x3b0] sm:$0xff]
  %v4805 = vld [vmem:[%s4685 + $0x3b8] sm:$0xff]
  %v4806 = vld [vmem:[%s4685 + $0x3c0] sm:$0xff]
  %v4807 = vld [vmem:[%s4685 + $0x3c8] sm:$0xff]
  %v4808 = vld [vmem:[%s4685 + $0x3d0] sm:$0xff]
  %v4809 = vld [vmem:[%s4685 + $0x3d8] sm:$0xff]
  %v4810 = vld [vmem:[%s4685 + $0x3e0] sm:$0xff]
  %v4811 = vld [vmem:[%s4685 + $0x3e8] sm:$0xff]
  %v4812 = vld [vmem:[%s4685 + $0x3f0] sm:$0xff]
  %v4813 = vld [vmem:[%s4685 + $0x3f8] sm:$0xff]
  %v4814 = vld [vmem:[%s4685 + $0x400] sm:$0xff]
  %v4815 = vld [vmem:[%s4685 + $0x408] sm:$0xff]
  %v4816 = vld [vmem:[%s4685 + $0x410] sm:$0xff]
  %v4817 = vld [vmem:[%s4685 + $0x418] sm:$0xff]
  %v4818 = vld [vmem:[%s4685 + $0x420] sm:$0xff]
  %v4819 = vld [vmem:[%s4685 + $0x428] sm:$0xff]
  %v4820 = vld [vmem:[%s4685 + $0x430] sm:$0xff]
  %v4821 = vld [vmem:[%s4685 + $0x438] sm:$0xff]
  %v4822 = vld [vmem:[%s4685 + $0x440] sm:$0xff]
  %v4823 = vld [vmem:[%s4685 + $0x448] sm:$0xff]
  %v4824 = vld [vmem:[%s4685 + $0x450] sm:$0xff]
  %v4825 = vld [vmem:[%s4685 + $0x458] sm:$0xff]
  %v4826 = vld [vmem:[%s4685 + $0x460] sm:$0xff]
  %v4827 = vld [vmem:[%s4685 + $0x468] sm:$0xff]
  %v4828 = vld [vmem:[%s4685 + $0x470] sm:$0xff]
  %v4829 = vld [vmem:[%s4685 + $0x478] sm:$0xff]
  %v4830 = vld [vmem:[%s4685 + $0x480] sm:$0xff]
  %v4831 = vld [vmem:[%s4685 + $0x488] sm:$0xff]
  %v4832 = vld [vmem:[%s4685 + $0x490] sm:$0xff]
  %v4833 = vld [vmem:[%s4685 + $0x498] sm:$0xff]
  %v4834 = vld [vmem:[%s4685 + $0x4a0] sm:$0xff]
  %v4835 = vld [vmem:[%s4685 + $0x4a8] sm:$0xff]
  %v4836 = vld [vmem:[%s4685 + $0x4b0] sm:$0xff]
  %v4837 = vld [vmem:[%s4685 + $0x4b8] sm:$0xff]
  %v4838 = vld [vmem:[%s4685 + $0x4c0] sm:$0xff]
  %v4839 = vld [vmem:[%s4685 + $0x4c8] sm:$0xff]
  %v4840 = vld [vmem:[%s4685 + $0x4d0] sm:$0xff]
  %v4841 = vld [vmem:[%s4685 + $0x4d8] sm:$0xff]
  %v4842 = vld [vmem:[%s4685 + $0x4e0] sm:$0xff]
  %v4843 = vld [vmem:[%s4685 + $0x4e8] sm:$0xff]
  %v4844 = vld [vmem:[%s4685 + $0x4f0] sm:$0xff]
  %v4845 = vld [vmem:[%s4685 + $0x4f8] sm:$0xff]
  %v4846 = vld [vmem:[%s4685 + $0x500] sm:$0xff]
  %v4847 = vld [vmem:[%s4685 + $0x508] sm:$0xff]
  %v4848 = vld [vmem:[%s4685 + $0x510] sm:$0xff]
  %v4849 = vld [vmem:[%s4685 + $0x518] sm:$0xff]
  %v4850 = vld [vmem:[%s4685 + $0x520] sm:$0xff]
  %v4851 = vld [vmem:[%s4685 + $0x528] sm:$0xff]
  %v4852 = vld [vmem:[%s4685 + $0x530] sm:$0xff]
  %v4853 = vld [vmem:[%s4685 + $0x538] sm:$0xff]
  %v4854 = vld [vmem:[%s4685 + $0x540] sm:$0xff]
  %v4855 = vld [vmem:[%s4685 + $0x548] sm:$0xff]
  %v4856 = vld [vmem:[%s4685 + $0x550] sm:$0xff]
  %v4857 = vld [vmem:[%s4685 + $0x558] sm:$0xff]
  %v4858 = vld [vmem:[%s4685 + $0x560] sm:$0xff]
  %v4859 = vld [vmem:[%s4685 + $0x568] sm:$0xff]
  %v4860 = vld [vmem:[%s4685 + $0x570] sm:$0xff]
  %v4861 = vld [vmem:[%s4685 + $0x578] sm:$0xff]
  %v4862 = vld [vmem:[%s4685 + $0x580] sm:$0xff]
  %v4863 = vld [vmem:[%s4685 + $0x588] sm:$0xff]
  %v4864 = vld [vmem:[%s4685 + $0x590] sm:$0xff]
  %v4865 = vld [vmem:[%s4685 + $0x598] sm:$0xff]
  %v4866 = vld [vmem:[%s4685 + $0x5a0] sm:$0xff]
  %v4867 = vld [vmem:[%s4685 + $0x5a8] sm:$0xff]
  %v4868 = vld [vmem:[%s4685 + $0x5b0] sm:$0xff]
  %v4869 = vld [vmem:[%s4685 + $0x5b8] sm:$0xff]
  %v4870 = vld [vmem:[%s4685 + $0x5c0] sm:$0xff]
  %v4871 = vld [vmem:[%s4685 + $0x5c8] sm:$0xff]
  %v4872 = vld [vmem:[%s4685 + $0x5d0] sm:$0xff]
  %v4873 = vld [vmem:[%s4685 + $0x5d8] sm:$0xff]
  %v4874 = vld [vmem:[%s4685 + $0x5e0] sm:$0xff]
  %v4875 = vld [vmem:[%s4685 + $0x5e8] sm:$0xff]
  %v4876 = vld [vmem:[%s4685 + $0x5f0] sm:$0xff]
  %v4877 = vld [vmem:[%s4685 + $0x5f8] sm:$0xff]
  %v4878 = vld [vmem:[%s4685 + $0x600] sm:$0xff]
  %v4879 = vld [vmem:[%s4685 + $0x608] sm:$0xff]
  %v4880 = vld [vmem:[%s4685 + $0x610] sm:$0xff]
  %v4881 = vld [vmem:[%s4685 + $0x618] sm:$0xff]
  %v4882 = vld [vmem:[%s4685 + $0x620] sm:$0xff]
  %v4883 = vld [vmem:[%s4685 + $0x628] sm:$0xff]
  %v4884 = vld [vmem:[%s4685 + $0x630] sm:$0xff]
  %v4885 = vld [vmem:[%s4685 + $0x638] sm:$0xff]
  %v4886 = vld [vmem:[%s4685 + $0x640] sm:$0xff]
  %v4887 = vld [vmem:[%s4685 + $0x648] sm:$0xff]
  %v4888 = vld [vmem:[%s4685 + $0x650] sm:$0xff]
  %v4889 = vld [vmem:[%s4685 + $0x658] sm:$0xff]
  %v4890 = vld [vmem:[%s4685 + $0x660] sm:$0xff]
  %v4891 = vld [vmem:[%s4685 + $0x668] sm:$0xff]
  %v4892 = vld [vmem:[%s4685 + $0x670] sm:$0xff]
  %v4893 = vld [vmem:[%s4685 + $0x678] sm:$0xff]
  %v4894 = vld [vmem:[%s4685 + $0x680] sm:$0xff]
  %v4895 = vld [vmem:[%s4685 + $0x688] sm:$0xff]
  %v4896 = vld [vmem:[%s4685 + $0x690] sm:$0xff]
  %v4897 = vld [vmem:[%s4685 + $0x698] sm:$0xff]
  %v4898 = vld [vmem:[%s4685 + $0x6a0] sm:$0xff]
  %v4899 = vld [vmem:[%s4685 + $0x6a8] sm:$0xff]
  %v4900 = vld [vmem:[%s4685 + $0x6b0] sm:$0xff]
  %v4901 = vld [vmem:[%s4685 + $0x6b8] sm:$0xff]
  %v4902 = vld [vmem:[%s4685 + $0x6c0] sm:$0xff]
  %v4903 = vld [vmem:[%s4685 + $0x6c8] sm:$0xff]
  %v4904 = vld [vmem:[%s4685 + $0x6d0] sm:$0xff]
  %v4905 = vld [vmem:[%s4685 + $0x6d8] sm:$0xff]
  %v4906 = vld [vmem:[%s4685 + $0x6e0] sm:$0xff]
  %v4907 = vld [vmem:[%s4685 + $0x6e8] sm:$0xff]
  %v4908 = vld [vmem:[%s4685 + $0x6f0] sm:$0xff]
  %v4909 = vld [vmem:[%s4685 + $0x6f8] sm:$0xff]
  %v4910 = vld [vmem:[%s4685 + $0x700] sm:$0xff]
  %v4911 = vld [vmem:[%s4685 + $0x708] sm:$0xff]
  %v4912 = vld [vmem:[%s4685 + $0x710] sm:$0xff]
  %v4913 = vld [vmem:[%s4685 + $0x718] sm:$0xff]
  %v4914 = vld [vmem:[%s4685 + $0x720] sm:$0xff]
  %v4915 = vld [vmem:[%s4685 + $0x728] sm:$0xff]
  %v4916 = vld [vmem:[%s4685 + $0x730] sm:$0xff]
  %v4917 = vld [vmem:[%s4685 + $0x738] sm:$0xff]
  %v4918 = vld [vmem:[%s4685 + $0x740] sm:$0xff]
  %v4919 = vld [vmem:[%s4685 + $0x748] sm:$0xff]
  %v4920 = vld [vmem:[%s4685 + $0x750] sm:$0xff]
  %v4921 = vld [vmem:[%s4685 + $0x758] sm:$0xff]
  %v4922 = vld [vmem:[%s4685 + $0x760] sm:$0xff]
  %v4923 = vld [vmem:[%s4685 + $0x768] sm:$0xff]
  %v4924 = vld [vmem:[%s4685 + $0x770] sm:$0xff]
  %v4925 = vld [vmem:[%s4685 + $0x778] sm:$0xff]
  %v4926 = vld [vmem:[%s4685 + $0x780] sm:$0xff]
  %v4927 = vld [vmem:[%s4685 + $0x788] sm:$0xff]
  %v4928 = vld [vmem:[%s4685 + $0x790] sm:$0xff]
  %v4929 = vld [vmem:[%s4685 + $0x798] sm:$0xff]
  %v4930 = vld [vmem:[%s4685 + $0x7a0] sm:$0xff]
  %v4931 = vld [vmem:[%s4685 + $0x7a8] sm:$0xff]
  %v4932 = vld [vmem:[%s4685 + $0x7b0] sm:$0xff]
  %v4933 = vld [vmem:[%s4685 + $0x7b8] sm:$0xff]
  %v4934 = vld [vmem:[%s4685 + $0x7c0] sm:$0xff]
  %v4935 = vld [vmem:[%s4685 + $0x7c8] sm:$0xff]
  %v4936 = vld [vmem:[%s4685 + $0x7d0] sm:$0xff]
  %v4937 = vld [vmem:[%s4685 + $0x7d8] sm:$0xff]
  %v4938 = vld [vmem:[%s4685 + $0x7e0] sm:$0xff]
  %v4939 = vld [vmem:[%s4685 + $0x7e8] sm:$0xff]
  %v4940 = vld [vmem:[%s4685 + $0x7f0] sm:$0xff]
  %v4941 = vld [vmem:[%s4685 + $0x7f8] sm:$0xff]
  %4942 = vmatprep.subr.mxu0 %v4687
  %4943 = vmatpush1.msra.mxu0 %v4686
  %4944 = vmatprep.subr.mxu0 %v4691
  %4945 = vmatpush1.msra.mxu0 %v4690
  %4946 = vmatprep.subr.mxu0 %v4695
  %4947 = vmatpush1.msra.mxu0 %v4694
  %4948 = vmatprep.subr.mxu0 %v4699
  %4949 = vmatpush1.msra.mxu0 %v4698
  %4950 = vmatprep.subr.mxu0 %v4703
  %4951 = vmatpush1.msra.mxu0 %v4702
  %4952 = vmatprep.subr.mxu0 %v4707
  %4953 = vmatpush1.msra.mxu0 %v4706
  %4954 = vmatprep.subr.mxu0 %v4711
  %4955 = vmatpush1.msra.mxu0 %v4710
  %4956 = vmatprep.subr.mxu0 %v4715
  %4957 = vmatpush1.msra.mxu0 %v4714
  %4958 = vmatprep.subr.mxu0 %v4719
  %4959 = vmatpush1.msra.mxu0 %v4718
  %4960 = vmatprep.subr.mxu0 %v4723
  %4961 = vmatpush1.msra.mxu0 %v4722
  %4962 = vmatprep.subr.mxu0 %v4727
  %4963 = vmatpush1.msra.mxu0 %v4726
  %4964 = vmatprep.subr.mxu0 %v4731
  %4965 = vmatpush1.msra.mxu0 %v4730
  %4966 = vmatprep.subr.mxu0 %v4735
  %4967 = vmatpush1.msra.mxu0 %v4734
  %4968 = vmatprep.subr.mxu0 %v4739
  %4969 = vmatpush1.msra.mxu0 %v4738
  %4970 = vmatprep.subr.mxu0 %v4743
  %4971 = vmatpush1.msra.mxu0 %v4742
  %4972 = vmatprep.subr.mxu0 %v4747
  %4973 = vmatpush1.msra.mxu0 %v4746
  %4974 = vmatprep.subr.mxu0 %v4751
  %4975 = vmatpush1.msra.mxu0 %v4750
  %4976 = vmatprep.subr.mxu0 %v4755
  %4977 = vmatpush1.msra.mxu0 %v4754
  %4978 = vmatprep.subr.mxu0 %v4759
  %4979 = vmatpush1.msra.mxu0 %v4758
  %4980 = vmatprep.subr.mxu0 %v4763
  %4981 = vmatpush1.msra.mxu0 %v4762
  %4982 = vmatprep.subr.mxu0 %v4767
  %4983 = vmatpush1.msra.mxu0 %v4766
  %4984 = vmatprep.subr.mxu0 %v4771
  %4985 = vmatpush1.msra.mxu0 %v4770
  %4986 = vmatprep.subr.mxu0 %v4775
  %4987 = vmatpush1.msra.mxu0 %v4774
  %4988 = vmatprep.subr.mxu0 %v4779
  %4989 = vmatpush1.msra.mxu0 %v4778
  %4990 = vmatprep.subr.mxu0 %v4783
  %4991 = vmatpush1.msra.mxu0 %v4782
  %4992 = vmatprep.subr.mxu0 %v4787
  %4993 = vmatpush1.msra.mxu0 %v4786
  %4994 = vmatprep.subr.mxu0 %v4791
  %4995 = vmatpush1.msra.mxu0 %v4790
  %4996 = vmatprep.subr.mxu0 %v4795
  %4997 = vmatpush1.msra.mxu0 %v4794
  %4998 = vmatprep.subr.mxu0 %v4799
  %4999 = vmatpush1.msra.mxu0 %v4798
  %5000 = vmatprep.subr.mxu0 %v4803
  %5001 = vmatpush1.msra.mxu0 %v4802
  %5002 = vmatprep.subr.mxu0 %v4807
  %5003 = vmatpush1.msra.mxu0 %v4806
  %5004 = vmatprep.subr.mxu0 %v4811
  %5005 = vmatpush1.msra.mxu0 %v4810
  %5006 = vmatprep.mubr.f32.mxu0 %v4682
  %5007 = vmatmul.mubr.f32.gmra.mrb[0].mxu0 %v4681
  %v5008 = vpop.f32.mrb[0].mxu0
  %v5009 = vadd.f32 0.0, %v5008
  %v5010 = vpop.f32.mrb[0].mxu0
  %v5011 = vadd.f32 0.0, %v5010
  %5012 = vdwg.mxu0
  %5013 = vmatprep.subr.mxu0 %v4815
  %5014 = vmatpush1.msra.mxu0 %v4814
  %5015 = vmatprep.subr.mxu0 %v4819
  %5016 = vmatpush1.msra.mxu0 %v4818
  %5017 = vmatprep.subr.mxu0 %v4823
  %5018 = vmatpush1.msra.mxu0 %v4822
  %5019 = vmatprep.subr.mxu0 %v4827
  %5020 = vmatpush1.msra.mxu0 %v4826
  %5021 = vmatprep.subr.mxu0 %v4831
  %5022 = vmatpush1.msra.mxu0 %v4830
  %5023 = vmatprep.subr.mxu0 %v4835
  %5024 = vmatpush1.msra.mxu0 %v4834
  %5025 = vmatprep.subr.mxu0 %v4839
  %5026 = vmatpush1.msra.mxu0 %v4838
  %5027 = vmatprep.subr.mxu0 %v4843
  %5028 = vmatpush1.msra.mxu0 %v4842
  %5029 = vmatprep.subr.mxu0 %v4847
  %5030 = vmatpush1.msra.mxu0 %v4846
  %5031 = vmatprep.subr.mxu0 %v4851
  %5032 = vmatpush1.msra.mxu0 %v4850
  %5033 = vmatprep.subr.mxu0 %v4855
  %5034 = vmatpush1.msra.mxu0 %v4854
  %5035 = vmatprep.subr.mxu0 %v4859
  %5036 = vmatpush1.msra.mxu0 %v4858
  %5037 = vmatprep.subr.mxu0 %v4863
  %5038 = vmatpush1.msra.mxu0 %v4862
  %5039 = vmatprep.subr.mxu0 %v4867
  %5040 = vmatpush1.msra.mxu0 %v4866
  %5041 = vmatprep.subr.mxu0 %v4871
  %5042 = vmatpush1.msra.mxu0 %v4870
  %5043 = vmatprep.subr.mxu0 %v4875
  %5044 = vmatpush1.msra.mxu0 %v4874
  %5045 = vmatprep.subr.mxu0 %v4879
  %5046 = vmatpush1.msra.mxu0 %v4878
  %5047 = vmatprep.subr.mxu0 %v4883
  %5048 = vmatpush1.msra.mxu0 %v4882
  %5049 = vmatprep.subr.mxu0 %v4887
  %5050 = vmatpush1.msra.mxu0 %v4886
  %5051 = vmatprep.subr.mxu0 %v4891
  %5052 = vmatpush1.msra.mxu0 %v4890
  %5053 = vmatprep.subr.mxu0 %v4895
  %5054 = vmatpush1.msra.mxu0 %v4894
  %5055 = vmatprep.subr.mxu0 %v4899
  %5056 = vmatpush1.msra.mxu0 %v4898
  %5057 = vmatprep.subr.mxu0 %v4903
  %5058 = vmatpush1.msra.mxu0 %v4902
  %5059 = vmatprep.subr.mxu0 %v4907
  %5060 = vmatpush1.msra.mxu0 %v4906
  %5061 = vmatprep.subr.mxu0 %v4911
  %5062 = vmatpush1.msra.mxu0 %v4910
  %5063 = vmatprep.subr.mxu0 %v4915
  %5064 = vmatpush1.msra.mxu0 %v4914
  %5065 = vmatprep.subr.mxu0 %v4919
  %5066 = vmatpush1.msra.mxu0 %v4918
  %5067 = vmatprep.subr.mxu0 %v4923
  %5068 = vmatpush1.msra.mxu0 %v4922
  %5069 = vmatprep.subr.mxu0 %v4927
  %5070 = vmatpush1.msra.mxu0 %v4926
  %5071 = vmatprep.subr.mxu0 %v4931
  %5072 = vmatpush1.msra.mxu0 %v4930
  %5073 = vmatprep.subr.mxu0 %v4935
  %5074 = vmatpush1.msra.mxu0 %v4934
  %5075 = vmatprep.subr.mxu0 %v4939
  %5076 = vmatpush1.msra.mxu0 %v4938
  %5077 = vmatprep.mubr.f32.mxu0 %v4684
  %5078 = vmatmul.mubr.f32.gmra.mrb[0].mxu0 %v4683
  %v5079 = vpop.f32.mrb[0].mxu0
  %v5080 = vadd.f32 %v5009, %v5079
  %v5081 = vpop.f32.mrb[0].mxu0
  %v5082 = vadd.f32 %v5011, %v5081
  %5083 = vdwg.mxu0
  %5084 = vmatprep.subr.mxu0 %v4689
  %5085 = vmatpush1.msra.mxu0 %v4688
  %5086 = vmatprep.subr.mxu0 %v4693
  %5087 = vmatpush1.msra.mxu0 %v4692
  %5088 = vmatprep.subr.mxu0 %v4697
  %5089 = vmatpush1.msra.mxu0 %v4696
  %5090 = vmatprep.subr.mxu0 %v4701
  %5091 = vmatpush1.msra.mxu0 %v4700
  %5092 = vmatprep.subr.mxu0 %v4705
  %5093 = vmatpush1.msra.mxu0 %v4704
  %5094 = vmatprep.subr.mxu0 %v4709
  %5095 = vmatpush1.msra.mxu0 %v4708
  %5096 = vmatprep.subr.mxu0 %v4713
  %5097 = vmatpush1.msra.mxu0 %v4712
  %5098 = vmatprep.subr.mxu0 %v4717
  %5099 = vmatpush1.msra.mxu0 %v4716
  %5100 = vmatprep.subr.mxu0 %v4721
  %5101 = vmatpush1.msra.mxu0 %v4720
  %5102 = vmatprep.subr.mxu0 %v4725
  %5103 = vmatpush1.msra.mxu0 %v4724
  %5104 = vmatprep.subr.mxu0 %v4729
  %5105 = vmatpush1.msra.mxu0 %v4728
  %5106 = vmatprep.subr.mxu0 %v4733
  %5107 = vmatpush1.msra.mxu0 %v4732
  %5108 = vmatprep.subr.mxu0 %v4737
  %5109 = vmatpush1.msra.mxu0 %v4736
  %5110 = vmatprep.subr.mxu0 %v4741
  %5111 = vmatpush1.msra.mxu0 %v4740
  %5112 = vmatprep.subr.mxu0 %v4745
  %5113 = vmatpush1.msra.mxu0 %v4744
  %5114 = vmatprep.subr.mxu0 %v4749
  %5115 = vmatpush1.msra.mxu0 %v4748
  %5116 = vmatprep.subr.mxu0 %v4753
  %5117 = vmatpush1.msra.mxu0 %v4752
  %5118 = vmatprep.subr.mxu0 %v4757
  %5119 = vmatpush1.msra.mxu0 %v4756
  %5120 = vmatprep.subr.mxu0 %v4761
  %5121 = vmatpush1.msra.mxu0 %v4760
  %5122 = vmatprep.subr.mxu0 %v4765
  %5123 = vmatpush1.msra.mxu0 %v4764
  %5124 = vmatprep.subr.mxu0 %v4769
  %5125 = vmatpush1.msra.mxu0 %v4768
  %5126 = vmatprep.subr.mxu0 %v4773
  %5127 = vmatpush1.msra.mxu0 %v4772
  %5128 = vmatprep.subr.mxu0 %v4777
  %5129 = vmatpush1.msra.mxu0 %v4776
  %5130 = vmatprep.subr.mxu0 %v4781
  %5131 = vmatpush1.msra.mxu0 %v4780
  %5132 = vmatprep.subr.mxu0 %v4785
  %5133 = vmatpush1.msra.mxu0 %v4784
  %5134 = vmatprep.subr.mxu0 %v4789
  %5135 = vmatpush1.msra.mxu0 %v4788
  %5136 = vmatprep.subr.mxu0 %v4793
  %5137 = vmatpush1.msra.mxu0 %v4792
  %5138 = vmatprep.subr.mxu0 %v4797
  %5139 = vmatpush1.msra.mxu0 %v4796
  %5140 = vmatprep.subr.mxu0 %v4801
  %5141 = vmatpush1.msra.mxu0 %v4800
  %5142 = vmatprep.subr.mxu0 %v4805
  %5143 = vmatpush1.msra.mxu0 %v4804
  %5144 = vmatprep.subr.mxu0 %v4809
  %5145 = vmatpush1.msra.mxu0 %v4808
  %5146 = vmatprep.subr.mxu0 %v4813
  %5147 = vmatpush1.msra.mxu0 %v4812
  %5148 = vmatprep.mubr.f32.mxu0 %v4682
  %5149 = vmatmul.mubr.f32.gmra.mrb[0].mxu0 %v4681
  %v5150 = vpop.f32.mrb[0].mxu0
  %v5151 = vadd.f32 0.0, %v5150
  %v5152 = vpop.f32.mrb[0].mxu0
  %v5153 = vadd.f32 0.0, %v5152
  %5154 = vdwg.mxu0
  %5155 = vmatprep.subr.mxu0 %v4817
  %5156 = vmatpush1.msra.mxu0 %v4816
  %5157 = vmatprep.subr.mxu0 %v4821
  %5158 = vmatpush1.msra.mxu0 %v4820
  %5159 = vmatprep.subr.mxu0 %v4825
  %5160 = vmatpush1.msra.mxu0 %v4824
  %5161 = vmatprep.subr.mxu0 %v4829
  %5162 = vmatpush1.msra.mxu0 %v4828
  %5163 = vmatprep.subr.mxu0 %v4833
  %5164 = vmatpush1.msra.mxu0 %v4832
  %5165 = vmatprep.subr.mxu0 %v4837
  %5166 = vmatpush1.msra.mxu0 %v4836
  %5167 = vmatprep.subr.mxu0 %v4841
  %5168 = vmatpush1.msra.mxu0 %v4840
  %5169 = vmatprep.subr.mxu0 %v4845
  %5170 = vmatpush1.msra.mxu0 %v4844
  %5171 = vmatprep.subr.mxu0 %v4849
  %5172 = vmatpush1.msra.mxu0 %v4848
  %5173 = vmatprep.subr.mxu0 %v4853
  %5174 = vmatpush1.msra.mxu0 %v4852
  %5175 = vmatprep.subr.mxu0 %v4857
  %5176 = vmatpush1.msra.mxu0 %v4856
  %5177 = vmatprep.subr.mxu0 %v4861
  %5178 = vmatpush1.msra.mxu0 %v4860
  %5179 = vmatprep.subr.mxu0 %v4865
  %5180 = vmatpush1.msra.mxu0 %v4864
  %5181 = vmatprep.subr.mxu0 %v4869
  %5182 = vmatpush1.msra.mxu0 %v4868
  %5183 = vmatprep.subr.mxu0 %v4873
  %5184 = vmatpush1.msra.mxu0 %v4872
  %5185 = vmatprep.subr.mxu0 %v4877
  %5186 = vmatpush1.msra.mxu0 %v4876
  %5187 = vmatprep.subr.mxu0 %v4881
  %5188 = vmatpush1.msra.mxu0 %v4880
  %5189 = vmatprep.subr.mxu0 %v4885
  %5190 = vmatpush1.msra.mxu0 %v4884
  %5191 = vmatprep.subr.mxu0 %v4889
  %5192 = vmatpush1.msra.mxu0 %v4888
  %5193 = vmatprep.subr.mxu0 %v4893
  %5194 = vmatpush1.msra.mxu0 %v4892
  %5195 = vmatprep.subr.mxu0 %v4897
  %5196 = vmatpush1.msra.mxu0 %v4896
  %5197 = vmatprep.subr.mxu0 %v4901
  %5198 = vmatpush1.msra.mxu0 %v4900
  %5199 = vmatprep.subr.mxu0 %v4905
  %5200 = vmatpush1.msra.mxu0 %v4904
  %5201 = vmatprep.subr.mxu0 %v4909
  %5202 = vmatpush1.msra.mxu0 %v4908
  %5203 = vmatprep.subr.mxu0 %v4913
  %5204 = vmatpush1.msra.mxu0 %v4912
  %5205 = vmatprep.subr.mxu0 %v4917
  %5206 = vmatpush1.msra.mxu0 %v4916
  %5207 = vmatprep.subr.mxu0 %v4921
  %5208 = vmatpush1.msra.mxu0 %v4920
  %5209 = vmatprep.subr.mxu0 %v4925
  %5210 = vmatpush1.msra.mxu0 %v4924
  %5211 = vmatprep.subr.mxu0 %v4929
  %5212 = vmatpush1.msra.mxu0 %v4928
  %5213 = vmatprep.subr.mxu0 %v4933
  %5214 = vmatpush1.msra.mxu0 %v4932
  %5215 = vmatprep.subr.mxu0 %v4937
  %5216 = vmatpush1.msra.mxu0 %v4936
  %5217 = vmatprep.subr.mxu0 %v4941
  %5218 = vmatpush1.msra.mxu0 %v4940
  %5219 = vmatprep.mubr.f32.mxu0 %v4684
  %5220 = vmatmul.mubr.f32.gmra.mrb[0].mxu0 %v4683
  %v5221 = vpop.f32.mrb[0].mxu0
  %v5222 = vadd.f32 %v5151, %v5221
  %v5223 = vpop.f32.mrb[0].mxu0
  %v5224 = vadd.f32 %v5153, %v5223
  %5225 = vdwg.mxu0
  %s5226 = scalar_lea.vmem %s3, 4
  %v5227 = vld [vmem:[%s5226] sm:$0x1]
  %s5228 = scalar_lea.vmem %s4, 4
  %v5229 = vld [vmem:[%s5228] sm:$0x1]
  %v5230 = vsel %vm313, %v5080, 0.0
  %v5231 = vrot.slane %v5230, 4
  %v5232 = vadd.f32 %v5230, %v5231
  %v5233 = vrot.slane %v5232, 2
  %v5234 = vadd.f32 %v5232, %v5233
  %v5235 = vrot.slane %v5234, 1
  %v5236 = vadd.f32 %v5234, %v5235
  %v5237 = vsel %vm313, %v5082, 0.0
  %v5238 = vrot.slane %v5237, 4
  %v5239 = vadd.f32 %v5237, %v5238
  %v5240 = vrot.slane %v5239, 2
  %v5241 = vadd.f32 %v5239, %v5240
  %v5242 = vrot.slane %v5241, 1
  %v5243 = vadd.f32 %v5241, %v5242
  %v5244 = vsel %vm313, %v5222, 0.0
  %v5245 = vrot.slane %v5244, 4
  %v5246 = vadd.f32 %v5244, %v5245
  %v5247 = vrot.slane %v5246, 2
  %v5248 = vadd.f32 %v5246, %v5247
  %v5249 = vrot.slane %v5248, 1
  %v5250 = vadd.f32 %v5248, %v5249
  %v5251 = vsel %vm313, %v5224, 0.0
  %v5252 = vrot.slane %v5251, 4
  %v5253 = vadd.f32 %v5251, %v5252
  %v5254 = vrot.slane %v5253, 2
  %v5255 = vadd.f32 %v5253, %v5254
  %v5256 = vrot.slane %v5255, 1
  %v5257 = vadd.f32 %v5255, %v5256
  %v5258 = vmul.f32 %v5080, %v5080
  %v5259 = vmul.f32 %v5082, %v5082
  %v5260 = vmul.f32 %v5222, %v5222
  %v5261 = vmul.f32 %v5224, %v5224
  %v5262 = vsel %vm313, %v5258, 0.0
  %v5263 = vrot.slane %v5262, 4
  %v5264 = vadd.f32 %v5262, %v5263
  %v5265 = vrot.slane %v5264, 2
  %v5266 = vadd.f32 %v5264, %v5265
  %v5267 = vrot.slane %v5266, 1
  %v5268 = vadd.f32 %v5266, %v5267
  %v5269 = vsel %vm313, %v5259, 0.0
  %v5270 = vrot.slane %v5269, 4
  %v5271 = vadd.f32 %v5269, %v5270
  %v5272 = vrot.slane %v5271, 2
  %v5273 = vadd.f32 %v5271, %v5272
  %v5274 = vrot.slane %v5273, 1
  %v5275 = vadd.f32 %v5273, %v5274
  %v5276 = vsel %vm313, %v5260, 0.0
  %v5277 = vrot.slane %v5276, 4
  %v5278 = vadd.f32 %v5276, %v5277
  %v5279 = vrot.slane %v5278, 2
  %v5280 = vadd.f32 %v5278, %v5279
  %v5281 = vrot.slane %v5280, 1
  %v5282 = vadd.f32 %v5280, %v5281
  %v5283 = vsel %vm313, %v5261, 0.0
  %v5284 = vrot.slane %v5283, 4
  %v5285 = vadd.f32 %v5283, %v5284
  %v5286 = vrot.slane %v5285, 2
  %v5287 = vadd.f32 %v5285, %v5286
  %v5288 = vrot.slane %v5287, 1
  %v5289 = vadd.f32 %v5287, %v5288
  %5290 = vmatprep.subr.mxu0 0.0
  %5291 = vmatpush1.msra.mxu0 %v40
  %5292 = vmatprep.subr.mxu0 0.0
  %5293 = vmatpush1.msra.mxu0 %v41
  %5294 = vmatprep.subr.mxu0 0.0
  %5295 = vmatpush1.msra.mxu0 %v42
  %5296 = vmatprep.subr.mxu0 0.0
  %5297 = vmatpush1.msra.mxu0 %v43
  %5298 = vmatprep.subr.mxu0 0.0
  %5299 = vmatpush1.msra.mxu0 %v44
  %5300 = vmatprep.subr.mxu0 0.0
  %5301 = vmatpush1.msra.mxu0 %v45
  %5302 = vmatprep.subr.mxu0 0.0
  %5303 = vmatpush1.msra.mxu0 %v46
  %5304 = vmatprep.subr.mxu0 0.0
  %5305 = vmatpush1.msra.mxu0 %v47
  %5306 = vmatprep.subr.mxu0 0.0
  %5307 = vmatpush1.msra.mxu0 %v48
  %5308 = vmatprep.subr.mxu0 0.0
  %5309 = vmatpush1.msra.mxu0 %v49
  %5310 = vmatprep.subr.mxu0 0.0
  %5311 = vmatpush1.msra.mxu0 %v50
  %5312 = vmatprep.subr.mxu0 0.0
  %5313 = vmatpush1.msra.mxu0 %v51
  %5314 = vmatprep.subr.mxu0 0.0
  %5315 = vmatpush1.msra.mxu0 %v52
  %5316 = vmatprep.subr.mxu0 0.0
  %5317 = vmatpush1.msra.mxu0 %v53
  %5318 = vmatprep.subr.mxu0 0.0
  %5319 = vmatpush1.msra.mxu0 %v54
  %5320 = vmatprep.subr.mxu0 0.0
  %5321 = vmatpush1.msra.mxu0 %v55
  %5322 = vmatprep.subr.mxu0 0.0
  %5323 = vmatpush1.msra.mxu0 %v56
  %5324 = vmatprep.subr.mxu0 0.0
  %5325 = vmatpush1.msra.mxu0 %v57
  %5326 = vmatprep.subr.mxu0 0.0
  %5327 = vmatpush1.msra.mxu0 %v58
  %5328 = vmatprep.subr.mxu0 0.0
  %5329 = vmatpush1.msra.mxu0 %v59
  %5330 = vmatprep.subr.mxu0 0.0
  %5331 = vmatpush1.msra.mxu0 %v60
  %5332 = vmatprep.subr.mxu0 0.0
  %5333 = vmatpush1.msra.mxu0 %v61
  %5334 = vmatprep.subr.mxu0 0.0
  %5335 = vmatpush1.msra.mxu0 %v62
  %5336 = vmatprep.subr.mxu0 0.0
  %5337 = vmatpush1.msra.mxu0 %v63
  %5338 = vmatprep.subr.mxu0 0.0
  %5339 = vmatpush1.msra.mxu0 %v64
  %5340 = vmatprep.subr.mxu0 0.0
  %5341 = vmatpush1.msra.mxu0 %v65
  %5342 = vmatprep.subr.mxu0 0.0
  %5343 = vmatpush1.msra.mxu0 %v66
  %5344 = vmatprep.subr.mxu0 0.0
  %5345 = vmatpush1.msra.mxu0 %v67
  %5346 = vmatprep.subr.mxu0 0.0
  %5347 = vmatpush1.msra.mxu0 %v68
  %5348 = vmatprep.subr.mxu0 0.0
  %5349 = vmatpush1.msra.mxu0 %v69
  %5350 = vmatprep.subr.mxu0 0.0
  %5351 = vmatpush1.msra.mxu0 %v70
  %5352 = vmatprep.subr.mxu0 0.0
  %5353 = vmatpush1.msra.mxu0 %v71
  %5354 = vmatprep.mubr.f32.mxu0 %v5243
  %5355 = vmatmul.mubr.f32.gmra.mrb[0].mxu0 %v5236
  %v5356 = vpop.f32.mrb[0].mxu0
  %v5357 = vadd.f32 0.0, %v5356
  %v5358 = vpop.f32.mrb[0].mxu0
  %5359 = vdwg.mxu0
  %5360 = vmatprep.subr.mxu0 0.0
  %5361 = vmatpush1.msra.mxu0 %v72
  %5362 = vmatprep.subr.mxu0 0.0
  %5363 = vmatpush1.msra.mxu0 %v73
  %5364 = vmatprep.subr.mxu0 0.0
  %5365 = vmatpush1.msra.mxu0 %v74
  %5366 = vmatprep.subr.mxu0 0.0
  %5367 = vmatpush1.msra.mxu0 %v75
  %5368 = vmatprep.subr.mxu0 0.0
  %5369 = vmatpush1.msra.mxu0 %v76
  %5370 = vmatprep.subr.mxu0 0.0
  %5371 = vmatpush1.msra.mxu0 %v77
  %5372 = vmatprep.subr.mxu0 0.0
  %5373 = vmatpush1.msra.mxu0 %v78
  %5374 = vmatprep.subr.mxu0 0.0
  %5375 = vmatpush1.msra.mxu0 %v79
  %5376 = vmatprep.subr.mxu0 0.0
  %5377 = vmatpush1.msra.mxu0 %v80
  %5378 = vmatprep.subr.mxu0 0.0
  %5379 = vmatpush1.msra.mxu0 %v81
  %5380 = vmatprep.subr.mxu0 0.0
  %5381 = vmatpush1.msra.mxu0 %v82
  %5382 = vmatprep.subr.mxu0 0.0
  %5383 = vmatpush1.msra.mxu0 %v83
  %5384 = vmatprep.subr.mxu0 0.0
  %5385 = vmatpush1.msra.mxu0 %v84
  %5386 = vmatprep.subr.mxu0 0.0
  %5387 = vmatpush1.msra.mxu0 %v85
  %5388 = vmatprep.subr.mxu0 0.0
  %5389 = vmatpush1.msra.mxu0 %v86
  %5390 = vmatprep.subr.mxu0 0.0
  %5391 = vmatpush1.msra.mxu0 %v87
  %5392 = vmatprep.subr.mxu0 0.0
  %5393 = vmatpush1.msra.mxu0 %v88
  %5394 = vmatprep.subr.mxu0 0.0
  %5395 = vmatpush1.msra.mxu0 %v89
  %5396 = vmatprep.subr.mxu0 0.0
  %5397 = vmatpush1.msra.mxu0 %v90
  %5398 = vmatprep.subr.mxu0 0.0
  %5399 = vmatpush1.msra.mxu0 %v91
  %5400 = vmatprep.subr.mxu0 0.0
  %5401 = vmatpush1.msra.mxu0 %v92
  %5402 = vmatprep.subr.mxu0 0.0
  %5403 = vmatpush1.msra.mxu0 %v93
  %5404 = vmatprep.subr.mxu0 0.0
  %5405 = vmatpush1.msra.mxu0 %v94
  %5406 = vmatprep.subr.mxu0 0.0
  %5407 = vmatpush1.msra.mxu0 %v95
  %5408 = vmatprep.subr.mxu0 0.0
  %5409 = vmatpush1.msra.mxu0 %v96
  %5410 = vmatprep.subr.mxu0 0.0
  %5411 = vmatpush1.msra.mxu0 %v97
  %5412 = vmatprep.subr.mxu0 0.0
  %5413 = vmatpush1.msra.mxu0 %v98
  %5414 = vmatprep.subr.mxu0 0.0
  %5415 = vmatpush1.msra.mxu0 %v99
  %5416 = vmatprep.subr.mxu0 0.0
  %5417 = vmatpush1.msra.mxu0 %v100
  %5418 = vmatprep.subr.mxu0 0.0
  %5419 = vmatpush1.msra.mxu0 %v101
  %5420 = vmatprep.subr.mxu0 0.0
  %5421 = vmatpush1.msra.mxu0 %v102
  %5422 = vmatprep.subr.mxu0 0.0
  %5423 = vmatpush1.msra.mxu0 %v103
  %5424 = vmatprep.mubr.f32.mxu0 %v5257
  %5425 = vmatmul.mubr.f32.gmra.mrb[0].mxu0 %v5250
  %v5426 = vpop.f32.mrb[0].mxu0
  %v5427 = vadd.f32 %v5357, %v5426
  %v5428 = vpop.f32.mrb[0].mxu0
  %5429 = vdwg.mxu0
  %v5430 = vmul.f32 %v5427, 0.015625
  %5431 = vmatprep.subr.mxu0 0.0
  %5432 = vmatpush1.msra.mxu0 %v40
  %5433 = vmatprep.subr.mxu0 0.0
  %5434 = vmatpush1.msra.mxu0 %v41
  %5435 = vmatprep.subr.mxu0 0.0
  %5436 = vmatpush1.msra.mxu0 %v42
  %5437 = vmatprep.subr.mxu0 0.0
  %5438 = vmatpush1.msra.mxu0 %v43
  %5439 = vmatprep.subr.mxu0 0.0
  %5440 = vmatpush1.msra.mxu0 %v44
  %5441 = vmatprep.subr.mxu0 0.0
  %5442 = vmatpush1.msra.mxu0 %v45
  %5443 = vmatprep.subr.mxu0 0.0
  %5444 = vmatpush1.msra.mxu0 %v46
  %5445 = vmatprep.subr.mxu0 0.0
  %5446 = vmatpush1.msra.mxu0 %v47
  %5447 = vmatprep.subr.mxu0 0.0
  %5448 = vmatpush1.msra.mxu0 %v48
  %5449 = vmatprep.subr.mxu0 0.0
  %5450 = vmatpush1.msra.mxu0 %v49
  %5451 = vmatprep.subr.mxu0 0.0
  %5452 = vmatpush1.msra.mxu0 %v50
  %5453 = vmatprep.subr.mxu0 0.0
  %5454 = vmatpush1.msra.mxu0 %v51
  %5455 = vmatprep.subr.mxu0 0.0
  %5456 = vmatpush1.msra.mxu0 %v52
  %5457 = vmatprep.subr.mxu0 0.0
  %5458 = vmatpush1.msra.mxu0 %v53
  %5459 = vmatprep.subr.mxu0 0.0
  %5460 = vmatpush1.msra.mxu0 %v54
  %5461 = vmatprep.subr.mxu0 0.0
  %5462 = vmatpush1.msra.mxu0 %v55
  %5463 = vmatprep.subr.mxu0 0.0
  %5464 = vmatpush1.msra.mxu0 %v56
  %5465 = vmatprep.subr.mxu0 0.0
  %5466 = vmatpush1.msra.mxu0 %v57
  %5467 = vmatprep.subr.mxu0 0.0
  %5468 = vmatpush1.msra.mxu0 %v58
  %5469 = vmatprep.subr.mxu0 0.0
  %5470 = vmatpush1.msra.mxu0 %v59
  %5471 = vmatprep.subr.mxu0 0.0
  %5472 = vmatpush1.msra.mxu0 %v60
  %5473 = vmatprep.subr.mxu0 0.0
  %5474 = vmatpush1.msra.mxu0 %v61
  %5475 = vmatprep.subr.mxu0 0.0
  %5476 = vmatpush1.msra.mxu0 %v62
  %5477 = vmatprep.subr.mxu0 0.0
  %5478 = vmatpush1.msra.mxu0 %v63
  %5479 = vmatprep.subr.mxu0 0.0
  %5480 = vmatpush1.msra.mxu0 %v64
  %5481 = vmatprep.subr.mxu0 0.0
  %5482 = vmatpush1.msra.mxu0 %v65
  %5483 = vmatprep.subr.mxu0 0.0
  %5484 = vmatpush1.msra.mxu0 %v66
  %5485 = vmatprep.subr.mxu0 0.0
  %5486 = vmatpush1.msra.mxu0 %v67
  %5487 = vmatprep.subr.mxu0 0.0
  %5488 = vmatpush1.msra.mxu0 %v68
  %5489 = vmatprep.subr.mxu0 0.0
  %5490 = vmatpush1.msra.mxu0 %v69
  %5491 = vmatprep.subr.mxu0 0.0
  %5492 = vmatpush1.msra.mxu0 %v70
  %5493 = vmatprep.subr.mxu0 0.0
  %5494 = vmatpush1.msra.mxu0 %v71
  %5495 = vmatprep.mubr.f32.mxu0 %v5275
  %5496 = vmatmul.mubr.f32.gmra.mrb[0].mxu0 %v5268
  %v5497 = vpop.f32.mrb[0].mxu0
  %v5498 = vadd.f32 0.0, %v5497
  %v5499 = vpop.f32.mrb[0].mxu0
  %5500 = vdwg.mxu0
  %5501 = vmatprep.subr.mxu0 0.0
  %5502 = vmatpush1.msra.mxu0 %v72
  %5503 = vmatprep.subr.mxu0 0.0
  %5504 = vmatpush1.msra.mxu0 %v73
  %5505 = vmatprep.subr.mxu0 0.0
  %5506 = vmatpush1.msra.mxu0 %v74
  %5507 = vmatprep.subr.mxu0 0.0
  %5508 = vmatpush1.msra.mxu0 %v75
  %5509 = vmatprep.subr.mxu0 0.0
  %5510 = vmatpush1.msra.mxu0 %v76
  %5511 = vmatprep.subr.mxu0 0.0
  %5512 = vmatpush1.msra.mxu0 %v77
  %5513 = vmatprep.subr.mxu0 0.0
  %5514 = vmatpush1.msra.mxu0 %v78
  %5515 = vmatprep.subr.mxu0 0.0
  %5516 = vmatpush1.msra.mxu0 %v79
  %5517 = vmatprep.subr.mxu0 0.0
  %5518 = vmatpush1.msra.mxu0 %v80
  %5519 = vmatprep.subr.mxu0 0.0
  %5520 = vmatpush1.msra.mxu0 %v81
  %5521 = vmatprep.subr.mxu0 0.0
  %5522 = vmatpush1.msra.mxu0 %v82
  %5523 = vmatprep.subr.mxu0 0.0
  %5524 = vmatpush1.msra.mxu0 %v83
  %5525 = vmatprep.subr.mxu0 0.0
  %5526 = vmatpush1.msra.mxu0 %v84
  %5527 = vmatprep.subr.mxu0 0.0
  %5528 = vmatpush1.msra.mxu0 %v85
  %5529 = vmatprep.subr.mxu0 0.0
  %5530 = vmatpush1.msra.mxu0 %v86
  %5531 = vmatprep.subr.mxu0 0.0
  %5532 = vmatpush1.msra.mxu0 %v87
  %5533 = vmatprep.subr.mxu0 0.0
  %5534 = vmatpush1.msra.mxu0 %v88
  %5535 = vmatprep.subr.mxu0 0.0
  %5536 = vmatpush1.msra.mxu0 %v89
  %5537 = vmatprep.subr.mxu0 0.0
  %5538 = vmatpush1.msra.mxu0 %v90
  %5539 = vmatprep.subr.mxu0 0.0
  %5540 = vmatpush1.msra.mxu0 %v91
  %5541 = vmatprep.subr.mxu0 0.0
  %5542 = vmatpush1.msra.mxu0 %v92
  %5543 = vmatprep.subr.mxu0 0.0
  %5544 = vmatpush1.msra.mxu0 %v93
  %5545 = vmatprep.subr.mxu0 0.0
  %5546 = vmatpush1.msra.mxu0 %v94
  %5547 = vmatprep.subr.mxu0 0.0
  %5548 = vmatpush1.msra.mxu0 %v95
  %5549 = vmatprep.subr.mxu0 0.0
  %5550 = vmatpush1.msra.mxu0 %v96
  %5551 = vmatprep.subr.mxu0 0.0
  %5552 = vmatpush1.msra.mxu0 %v97
  %5553 = vmatprep.subr.mxu0 0.0
  %5554 = vmatpush1.msra.mxu0 %v98
  %5555 = vmatprep.subr.mxu0 0.0
  %5556 = vmatpush1.msra.mxu0 %v99
  %5557 = vmatprep.subr.mxu0 0.0
  %5558 = vmatpush1.msra.mxu0 %v100
  %5559 = vmatprep.subr.mxu0 0.0
  %5560 = vmatpush1.msra.mxu0 %v101
  %5561 = vmatprep.subr.mxu0 0.0
  %5562 = vmatpush1.msra.mxu0 %v102
  %5563 = vmatprep.subr.mxu0 0.0
  %5564 = vmatpush1.msra.mxu0 %v103
  %5565 = vmatprep.mubr.f32.mxu0 %v5289
  %5566 = vmatmul.mubr.f32.gmra.mrb[0].mxu0 %v5282
  %v5567 = vpop.f32.mrb[0].mxu0
  %v5568 = vadd.f32 %v5498, %v5567
  %v5569 = vpop.f32.mrb[0].mxu0
  %5570 = vdwg.mxu0
  %v5571 = vmul.f32 %v5568, 0.015625
  %v5572 = vmul.f32 %v5430, %v5430
  %v5573 = vsub.f32 %v5571, %v5572
  %v5574 = vadd.f32 %v5573, 1e-05
  %v5575 = vrsqrt.pop %v5574
  %v5576 = vmul.f32 %v5227, %v5575
  %v5577 = vmul.f32 %v5430, %v5576
  %v5578 = vsub.f32 %v5229, %v5577
  %v5580 = vsel %vm663, %v5576, 0
  %5582 = vmatprep.subr.mxu0 %v33
  %5583 = vmatpush1.msra.mxu0 %v32
  %5584 = vmatprep.subr.mxu0 %v37
  %5585 = vmatpush1.msra.mxu0 %v36
  %5586 = vmatprep.subr.mxu0 0.0
  %5587 = vmatpush1.msra.mxu0 0.0
  %5588 = vmatprep.subr.mxu0 0.0
  %5589 = vmatpush1.msra.mxu0 0.0
  %5590 = vmatprep.subr.mxu0 0.0
  %5591 = vmatpush1.msra.mxu0 0.0
  %5592 = vmatprep.subr.mxu0 0.0
  %5593 = vmatpush1.msra.mxu0 0.0
  %5594 = vmatprep.subr.mxu0 0.0
  %5595 = vmatpush1.msra.mxu0 0.0
  %5596 = vmatprep.subr.mxu0 0.0
  %5597 = vmatpush1.msra.mxu0 0.0
  %5598 = vmatprep.subr.mxu0 0.0
  %5599 = vmatpush1.msra.mxu0 0.0
  %5600 = vmatprep.subr.mxu0 0.0
  %5601 = vmatpush1.msra.mxu0 0.0
  %5602 = vmatprep.subr.mxu0 0.0
  %5603 = vmatpush1.msra.mxu0 0.0
  %5604 = vmatprep.subr.mxu0 0.0
  %5605 = vmatpush1.msra.mxu0 0.0
  %5606 = vmatprep.subr.mxu0 0.0
  %5607 = vmatpush1.msra.mxu0 0.0
  %5608 = vmatprep.subr.mxu0 0.0
  %5609 = vmatpush1.msra.mxu0 0.0
  %5610 = vmatprep.subr.mxu0 0.0
  %5611 = vmatpush1.msra.mxu0 0.0
  %5612 = vmatprep.subr.mxu0 0.0
  %5613 = vmatpush1.msra.mxu0 0.0
  %5614 = vmatprep.subr.mxu0 0.0
  %5615 = vmatpush1.msra.mxu0 0.0
  %5616 = vmatprep.subr.mxu0 0.0
  %5617 = vmatpush1.msra.mxu0 0.0
  %5618 = vmatprep.subr.mxu0 0.0
  %5619 = vmatpush1.msra.mxu0 0.0
  %5620 = vmatprep.subr.mxu0 0.0
  %5621 = vmatpush1.msra.mxu0 0.0
  %5622 = vmatprep.subr.mxu0 0.0
  %5623 = vmatpush1.msra.mxu0 0.0
  %5624 = vmatprep.subr.mxu0 0.0
  %5625 = vmatpush1.msra.mxu0 0.0
  %5626 = vmatprep.subr.mxu0 0.0
  %5627 = vmatpush1.msra.mxu0 0.0
  %5628 = vmatprep.subr.mxu0 0.0
  %5629 = vmatpush1.msra.mxu0 0.0
  %5630 = vmatprep.subr.mxu0 0.0
  %5631 = vmatpush1.msra.mxu0 0.0
  %5632 = vmatprep.subr.mxu0 0.0
  %5633 = vmatpush1.msra.mxu0 0.0
  %5634 = vmatprep.subr.mxu0 0.0
  %5635 = vmatpush1.msra.mxu0 0.0
  %5636 = vmatprep.subr.mxu0 0.0
  %5637 = vmatpush1.msra.mxu0 0.0
  %5638 = vmatprep.subr.mxu0 0.0
  %5639 = vmatpush1.msra.mxu0 0.0
  %5640 = vmatprep.subr.mxu0 0.0
  %5641 = vmatpush1.msra.mxu0 0.0
  %5642 = vmatprep.subr.mxu0 0.0
  %5643 = vmatpush1.msra.mxu0 0.0
  %5644 = vmatprep.subr.mxu0 0.0
  %5645 = vmatpush1.msra.mxu0 0.0
  %5646 = vmatprep.mubr.f32.mxu0 0.0
  %5647 = vmatmul.mubr.f32.gmra.mrb[0].mxu0 %v5580
  %v5648 = vpop.f32.mrb[0].mxu0
  %v5649 = vadd.f32 0.0, %v5648
  %v5650 = vpop.f32.mrb[0].mxu0
  %v5651 = vadd.f32 0.0, %v5650
  %5652 = vdwg.mxu0
  %5653 = vmatprep.subr.mxu0 %v35
  %5654 = vmatpush1.msra.mxu0 %v34
  %5655 = vmatprep.subr.mxu0 %v39
  %5656 = vmatpush1.msra.mxu0 %v38
  %5657 = vmatprep.subr.mxu0 0.0
  %5658 = vmatpush1.msra.mxu0 0.0
  %5659 = vmatprep.subr.mxu0 0.0
  %5660 = vmatpush1.msra.mxu0 0.0
  %5661 = vmatprep.subr.mxu0 0.0
  %5662 = vmatpush1.msra.mxu0 0.0
  %5663 = vmatprep.subr.mxu0 0.0
  %5664 = vmatpush1.msra.mxu0 0.0
  %5665 = vmatprep.subr.mxu0 0.0
  %5666 = vmatpush1.msra.mxu0 0.0
  %5667 = vmatprep.subr.mxu0 0.0
  %5668 = vmatpush1.msra.mxu0 0.0
  %5669 = vmatprep.subr.mxu0 0.0
  %5670 = vmatpush1.msra.mxu0 0.0
  %5671 = vmatprep.subr.mxu0 0.0
  %5672 = vmatpush1.msra.mxu0 0.0
  %5673 = vmatprep.subr.mxu0 0.0
  %5674 = vmatpush1.msra.mxu0 0.0
  %5675 = vmatprep.subr.mxu0 0.0
  %5676 = vmatpush1.msra.mxu0 0.0
  %5677 = vmatprep.subr.mxu0 0.0
  %5678 = vmatpush1.msra.mxu0 0.0
  %5679 = vmatprep.subr.mxu0 0.0
  %5680 = vmatpush1.msra.mxu0 0.0
  %5681 = vmatprep.subr.mxu0 0.0
  %5682 = vmatpush1.msra.mxu0 0.0
  %5683 = vmatprep.subr.mxu0 0.0
  %5684 = vmatpush1.msra.mxu0 0.0
  %5685 = vmatprep.subr.mxu0 0.0
  %5686 = vmatpush1.msra.mxu0 0.0
  %5687 = vmatprep.subr.mxu0 0.0
  %5688 = vmatpush1.msra.mxu0 0.0
  %5689 = vmatprep.subr.mxu0 0.0
  %5690 = vmatpush1.msra.mxu0 0.0
  %5691 = vmatprep.subr.mxu0 0.0
  %5692 = vmatpush1.msra.mxu0 0.0
  %5693 = vmatprep.subr.mxu0 0.0
  %5694 = vmatpush1.msra.mxu0 0.0
  %5695 = vmatprep.subr.mxu0 0.0
  %5696 = vmatpush1.msra.mxu0 0.0
  %5697 = vmatprep.subr.mxu0 0.0
  %5698 = vmatpush1.msra.mxu0 0.0
  %5699 = vmatprep.subr.mxu0 0.0
  %5700 = vmatpush1.msra.mxu0 0.0
  %5701 = vmatprep.subr.mxu0 0.0
  %5702 = vmatpush1.msra.mxu0 0.0
  %5703 = vmatprep.subr.mxu0 0.0
  %5704 = vmatpush1.msra.mxu0 0.0
  %5705 = vmatprep.subr.mxu0 0.0
  %5706 = vmatpush1.msra.mxu0 0.0
  %5707 = vmatprep.subr.mxu0 0.0
  %5708 = vmatpush1.msra.mxu0 0.0
  %5709 = vmatprep.subr.mxu0 0.0
  %5710 = vmatpush1.msra.mxu0 0.0
  %5711 = vmatprep.subr.mxu0 0.0
  %5712 = vmatpush1.msra.mxu0 0.0
  %5713 = vmatprep.subr.mxu0 0.0
  %5714 = vmatpush1.msra.mxu0 0.0
  %5715 = vmatprep.subr.mxu0 0.0
  %5716 = vmatpush1.msra.mxu0 0.0
  %5717 = vmatprep.mubr.f32.mxu0 0.0
  %5718 = vmatmul.mubr.f32.gmra.mrb[0].mxu0 %v5580
  %v5719 = vpop.f32.mrb[0].mxu0
  %v5720 = vadd.f32 0.0, %v5719
  %v5721 = vpop.f32.mrb[0].mxu0
  %v5722 = vadd.f32 0.0, %v5721
  %5723 = vdwg.mxu0
  %v5724 = vlaneseq
  %v5725 = vshrl.u32 %v5724, 7
  %v5726 = vsub.s32 0, %v5725
  %v5727 = vrot.slane %v5649, %v5726
  %v5728 = vlaneseq
  %v5729 = vshrl.u32 %v5728, 7
  %v5730 = vsub.s32 0, %v5729
  %v5731 = vrot.slane %v5651, %v5730
  %v5732 = vlaneseq
  %v5733 = vshrl.u32 %v5732, 7
  %v5734 = vsub.s32 0, %v5733
  %v5735 = vrot.slane %v5720, %v5734
  %v5736 = vlaneseq
  %v5737 = vshrl.u32 %v5736, 7
  %v5738 = vsub.s32 0, %v5737
  %v5739 = vrot.slane %v5722, %v5738
  %v5740 = vmul.f32 %v5080, %v5727
  %v5741 = vmul.f32 %v5082, %v5731
  %v5742 = vmul.f32 %v5222, %v5735
  %v5743 = vmul.f32 %v5224, %v5739
  %v5745 = vsel %vm663, %v5578, 0
  %5747 = vmatprep.subr.mxu0 %v33
  %5748 = vmatpush1.msra.mxu0 %v32
  %5749 = vmatprep.subr.mxu0 %v37
  %5750 = vmatpush1.msra.mxu0 %v36
  %5751 = vmatprep.subr.mxu0 0.0
  %5752 = vmatpush1.msra.mxu0 0.0
  %5753 = vmatprep.subr.mxu0 0.0
  %5754 = vmatpush1.msra.mxu0 0.0
  %5755 = vmatprep.subr.mxu0 0.0
  %5756 = vmatpush1.msra.mxu0 0.0
  %5757 = vmatprep.subr.mxu0 0.0
  %5758 = vmatpush1.msra.mxu0 0.0
  %5759 = vmatprep.subr.mxu0 0.0
  %5760 = vmatpush1.msra.mxu0 0.0
  %5761 = vmatprep.subr.mxu0 0.0
  %5762 = vmatpush1.msra.mxu0 0.0
  %5763 = vmatprep.subr.mxu0 0.0
  %5764 = vmatpush1.msra.mxu0 0.0
  %5765 = vmatprep.subr.mxu0 0.0
  %5766 = vmatpush1.msra.mxu0 0.0
  %5767 = vmatprep.subr.mxu0 0.0
  %5768 = vmatpush1.msra.mxu0 0.0
  %5769 = vmatprep.subr.mxu0 0.0
  %5770 = vmatpush1.msra.mxu0 0.0
  %5771 = vmatprep.subr.mxu0 0.0
  %5772 = vmatpush1.msra.mxu0 0.0
  %5773 = vmatprep.subr.mxu0 0.0
  %5774 = vmatpush1.msra.mxu0 0.0
  %5775 = vmatprep.subr.mxu0 0.0
  %5776 = vmatpush1.msra.mxu0 0.0
  %5777 = vmatprep.subr.mxu0 0.0
  %5778 = vmatpush1.msra.mxu0 0.0
  %5779 = vmatprep.subr.mxu0 0.0
  %5780 = vmatpush1.msra.mxu0 0.0
  %5781 = vmatprep.subr.mxu0 0.0
  %5782 = vmatpush1.msra.mxu0 0.0
  %5783 = vmatprep.subr.mxu0 0.0
  %5784 = vmatpush1.msra.mxu0 0.0
  %5785 = vmatprep.subr.mxu0 0.0
  %5786 = vmatpush1.msra.mxu0 0.0
  %5787 = vmatprep.subr.mxu0 0.0
  %5788 = vmatpush1.msra.mxu0 0.0
  %5789 = vmatprep.subr.mxu0 0.0
  %5790 = vmatpush1.msra.mxu0 0.0
  %5791 = vmatprep.subr.mxu0 0.0
  %5792 = vmatpush1.msra.mxu0 0.0
  %5793 = vmatprep.subr.mxu0 0.0
  %5794 = vmatpush1.msra.mxu0 0.0
  %5795 = vmatprep.subr.mxu0 0.0
  %5796 = vmatpush1.msra.mxu0 0.0
  %5797 = vmatprep.subr.mxu0 0.0
  %5798 = vmatpush1.msra.mxu0 0.0
  %5799 = vmatprep.subr.mxu0 0.0
  %5800 = vmatpush1.msra.mxu0 0.0
  %5801 = vmatprep.subr.mxu0 0.0
  %5802 = vmatpush1.msra.mxu0 0.0
  %5803 = vmatprep.subr.mxu0 0.0
  %5804 = vmatpush1.msra.mxu0 0.0
  %5805 = vmatprep.subr.mxu0 0.0
  %5806 = vmatpush1.msra.mxu0 0.0
  %5807 = vmatprep.subr.mxu0 0.0
  %5808 = vmatpush1.msra.mxu0 0.0
  %5809 = vmatprep.subr.mxu0 0.0
  %5810 = vmatpush1.msra.mxu0 0.0
  %5811 = vmatprep.mubr.f32.mxu0 0.0
  %5812 = vmatmul.mubr.f32.gmra.mrb[0].mxu0 %v5745
  %v5813 = vpop.f32.mrb[0].mxu0
  %v5814 = vadd.f32 0.0, %v5813
  %v5815 = vpop.f32.mrb[0].mxu0
  %v5816 = vadd.f32 0.0, %v5815
  %5817 = vdwg.mxu0
  %5818 = vmatprep.subr.mxu0 %v35
  %5819 = vmatpush1.msra.mxu0 %v34
  %5820 = vmatprep.subr.mxu0 %v39
  %5821 = vmatpush1.msra.mxu0 %v38
  %5822 = vmatprep.subr.mxu0 0.0
  %5823 = vmatpush1.msra.mxu0 0.0
  %5824 = vmatprep.subr.mxu0 0.0
  %5825 = vmatpush1.msra.mxu0 0.0
  %5826 = vmatprep.subr.mxu0 0.0
  %5827 = vmatpush1.msra.mxu0 0.0
  %5828 = vmatprep.subr.mxu0 0.0
  %5829 = vmatpush1.msra.mxu0 0.0
  %5830 = vmatprep.subr.mxu0 0.0
  %5831 = vmatpush1.msra.mxu0 0.0
  %5832 = vmatprep.subr.mxu0 0.0
  %5833 = vmatpush1.msra.mxu0 0.0
  %5834 = vmatprep.subr.mxu0 0.0
  %5835 = vmatpush1.msra.mxu0 0.0
  %5836 = vmatprep.subr.mxu0 0.0
  %5837 = vmatpush1.msra.mxu0 0.0
  %5838 = vmatprep.subr.mxu0 0.0
  %5839 = vmatpush1.msra.mxu0 0.0
  %5840 = vmatprep.subr.mxu0 0.0
  %5841 = vmatpush1.msra.mxu0 0.0
  %5842 = vmatprep.subr.mxu0 0.0
  %5843 = vmatpush1.msra.mxu0 0.0
  %5844 = vmatprep.subr.mxu0 0.0
  %5845 = vmatpush1.msra.mxu0 0.0
  %5846 = vmatprep.subr.mxu0 0.0
  %5847 = vmatpush1.msra.mxu0 0.0
  %5848 = vmatprep.subr.mxu0 0.0
  %5849 = vmatpush1.msra.mxu0 0.0
  %5850 = vmatprep.subr.mxu0 0.0
  %5851 = vmatpush1.msra.mxu0 0.0
  %5852 = vmatprep.subr.mxu0 0.0
  %5853 = vmatpush1.msra.mxu0 0.0
  %5854 = vmatprep.subr.mxu0 0.0
  %5855 = vmatpush1.msra.mxu0 0.0
  %5856 = vmatprep.subr.mxu0 0.0
  %5857 = vmatpush1.msra.mxu0 0.0
  %5858 = vmatprep.subr.mxu0 0.0
  %5859 = vmatpush1.msra.mxu0 0.0
  %5860 = vmatprep.subr.mxu0 0.0
  %5861 = vmatpush1.msra.mxu0 0.0
  %5862 = vmatprep.subr.mxu0 0.0
  %5863 = vmatpush1.msra.mxu0 0.0
  %5864 = vmatprep.subr.mxu0 0.0
  %5865 = vmatpush1.msra.mxu0 0.0
  %5866 = vmatprep.subr.mxu0 0.0
  %5867 = vmatpush1.msra.mxu0 0.0
  %5868 = vmatprep.subr.mxu0 0.0
  %5869 = vmatpush1.msra.mxu0 0.0
  %5870 = vmatprep.subr.mxu0 0.0
  %5871 = vmatpush1.msra.mxu0 0.0
  %5872 = vmatprep.subr.mxu0 0.0
  %5873 = vmatpush1.msra.mxu0 0.0
  %5874 = vmatprep.subr.mxu0 0.0
  %5875 = vmatpush1.msra.mxu0 0.0
  %5876 = vmatprep.subr.mxu0 0.0
  %5877 = vmatpush1.msra.mxu0 0.0
  %5878 = vmatprep.subr.mxu0 0.0
  %5879 = vmatpush1.msra.mxu0 0.0
  %5880 = vmatprep.subr.mxu0 0.0
  %5881 = vmatpush1.msra.mxu0 0.0
  %5882 = vmatprep.mubr.f32.mxu0 0.0
  %5883 = vmatmul.mubr.f32.gmra.mrb[0].mxu0 %v5745
  %v5884 = vpop.f32.mrb[0].mxu0
  %v5885 = vadd.f32 0.0, %v5884
  %v5886 = vpop.f32.mrb[0].mxu0
  %v5887 = vadd.f32 0.0, %v5886
  %5888 = vdwg.mxu0
  %v5889 = vlaneseq
  %v5890 = vshrl.u32 %v5889, 7
  %v5891 = vsub.s32 0, %v5890
  %v5892 = vrot.slane %v5814, %v5891
  %v5893 = vlaneseq
  %v5894 = vshrl.u32 %v5893, 7
  %v5895 = vsub.s32 0, %v5894
  %v5896 = vrot.slane %v5816, %v5895
  %v5897 = vlaneseq
  %v5898 = vshrl.u32 %v5897, 7
  %v5899 = vsub.s32 0, %v5898
  %v5900 = vrot.slane %v5885, %v5899
  %v5901 = vlaneseq
  %v5902 = vshrl.u32 %v5901, 7
  %v5903 = vsub.s32 0, %v5902
  %v5904 = vrot.slane %v5887, %v5903
  %v5905 = vadd.f32 %v5740, %v5892
  %v5906 = vadd.f32 %v5741, %v5896
  %v5907 = vadd.f32 %v5742, %v5900
  %v5908 = vadd.f32 %v5743, %v5904
  %v5909 = vadd.f32 %v5905, %v3453
  %v5910 = vadd.f32 %v5906, %v3454
  %v5911 = vadd.f32 %v5907, %v3455
  %v5912 = vadd.f32 %v5908, %v3456
  %v5913 = vmax.f32 %v5909, 0.0
  %v5914 = vmax.f32 %v5910, 0.0
  %v5915 = vmax.f32 %v5911, 0.0
  %v5916 = vmax.f32 %v5912, 0.0
  %v5917 = vld [vmem:[%s7] sm:$0xff]
  %v5918 = vld [vmem:[%s7 + $0x8] sm:$0xff]
  %v5919 = vld [vmem:[%s7 + $0x10] sm:$0xff]
  %v5920 = vld [vmem:[%s7 + $0x18] sm:$0xff]
  %v5921 = vld [vmem:[%s7 + $0x20] sm:$0xff]
  %v5922 = vld [vmem:[%s7 + $0x28] sm:$0xff]
  %v5923 = vld [vmem:[%s7 + $0x30] sm:$0xff]
  %v5924 = vld [vmem:[%s7 + $0x38] sm:$0xff]
  %v5925 = vld [vmem:[%s7 + $0x40] sm:$0xff]
  %v5926 = vld [vmem:[%s7 + $0x48] sm:$0xff]
  %v5927 = vld [vmem:[%s7 + $0x50] sm:$0xff]
  %v5928 = vld [vmem:[%s7 + $0x58] sm:$0xff]
  %v5929 = vld [vmem:[%s7 + $0x60] sm:$0xff]
  %v5930 = vld [vmem:[%s7 + $0x68] sm:$0xff]
  %v5931 = vld [vmem:[%s7 + $0x70] sm:$0xff]
  %v5932 = vld [vmem:[%s7 + $0x78] sm:$0xff]
  %v5933 = vld [vmem:[%s7 + $0x80] sm:$0xff]
  %v5934 = vld [vmem:[%s7 + $0x88] sm:$0xff]
  %v5935 = vld [vmem:[%s7 + $0x90] sm:$0xff]
  %v5936 = vld [vmem:[%s7 + $0x98] sm:$0xff]
  %v5937 = vld [vmem:[%s7 + $0xa0] sm:$0xff]
  %v5938 = vld [vmem:[%s7 + $0xa8] sm:$0xff]
  %v5939 = vld [vmem:[%s7 + $0xb0] sm:$0xff]
  %v5940 = vld [vmem:[%s7 + $0xb8] sm:$0xff]
  %v5941 = vld [vmem:[%s7 + $0xc0] sm:$0xff]
  %v5942 = vld [vmem:[%s7 + $0xc8] sm:$0xff]
  %v5943 = vld [vmem:[%s7 + $0xd0] sm:$0xff]
  %v5944 = vld [vmem:[%s7 + $0xd8] sm:$0xff]
  %v5945 = vld [vmem:[%s7 + $0xe0] sm:$0xff]
  %v5946 = vld [vmem:[%s7 + $0xe8] sm:$0xff]
  %v5947 = vld [vmem:[%s7 + $0xf0] sm:$0xff]
  %v5948 = vld [vmem:[%s7 + $0xf8] sm:$0xff]
  %v5949 = vld [vmem:[%s7 + $0x100] sm:$0xff]
  %v5950 = vld [vmem:[%s7 + $0x108] sm:$0xff]
  %v5951 = vld [vmem:[%s7 + $0x110] sm:$0xff]
  %v5952 = vld [vmem:[%s7 + $0x118] sm:$0xff]
  %v5953 = vld [vmem:[%s7 + $0x120] sm:$0xff]
  %v5954 = vld [vmem:[%s7 + $0x128] sm:$0xff]
  %v5955 = vld [vmem:[%s7 + $0x130] sm:$0xff]
  %v5956 = vld [vmem:[%s7 + $0x138] sm:$0xff]
  %v5957 = vld [vmem:[%s7 + $0x140] sm:$0xff]
  %v5958 = vld [vmem:[%s7 + $0x148] sm:$0xff]
  %v5959 = vld [vmem:[%s7 + $0x150] sm:$0xff]
  %v5960 = vld [vmem:[%s7 + $0x158] sm:$0xff]
  %v5961 = vld [vmem:[%s7 + $0x160] sm:$0xff]
  %v5962 = vld [vmem:[%s7 + $0x168] sm:$0xff]
  %v5963 = vld [vmem:[%s7 + $0x170] sm:$0xff]
  %v5964 = vld [vmem:[%s7 + $0x178] sm:$0xff]
  %v5965 = vld [vmem:[%s7 + $0x180] sm:$0xff]
  %v5966 = vld [vmem:[%s7 + $0x188] sm:$0xff]
  %v5967 = vld [vmem:[%s7 + $0x190] sm:$0xff]
  %v5968 = vld [vmem:[%s7 + $0x198] sm:$0xff]
  %v5969 = vld [vmem:[%s7 + $0x1a0] sm:$0xff]
  %v5970 = vld [vmem:[%s7 + $0x1a8] sm:$0xff]
  %v5971 = vld [vmem:[%s7 + $0x1b0] sm:$0xff]
  %v5972 = vld [vmem:[%s7 + $0x1b8] sm:$0xff]
  %v5973 = vld [vmem:[%s7 + $0x1c0] sm:$0xff]
  %v5974 = vld [vmem:[%s7 + $0x1c8] sm:$0xff]
  %v5975 = vld [vmem:[%s7 + $0x1d0] sm:$0xff]
  %v5976 = vld [vmem:[%s7 + $0x1d8] sm:$0xff]
  %v5977 = vld [vmem:[%s7 + $0x1e0] sm:$0xff]
  %v5978 = vld [vmem:[%s7 + $0x1e8] sm:$0xff]
  %v5979 = vld [vmem:[%s7 + $0x1f0] sm:$0xff]
  %v5980 = vld [vmem:[%s7 + $0x1f8] sm:$0xff]
  %v5981 = vld [vmem:[%s7 + $0x200] sm:$0xff]
  %v5982 = vld [vmem:[%s7 + $0x208] sm:$0xff]
  %v5983 = vld [vmem:[%s7 + $0x210] sm:$0xff]
  %v5984 = vld [vmem:[%s7 + $0x218] sm:$0xff]
  %v5985 = vld [vmem:[%s7 + $0x220] sm:$0xff]
  %v5986 = vld [vmem:[%s7 + $0x228] sm:$0xff]
  %v5987 = vld [vmem:[%s7 + $0x230] sm:$0xff]
  %v5988 = vld [vmem:[%s7 + $0x238] sm:$0xff]
  %v5989 = vld [vmem:[%s7 + $0x240] sm:$0xff]
  %v5990 = vld [vmem:[%s7 + $0x248] sm:$0xff]
  %v5991 = vld [vmem:[%s7 + $0x250] sm:$0xff]
  %v5992 = vld [vmem:[%s7 + $0x258] sm:$0xff]
  %v5993 = vld [vmem:[%s7 + $0x260] sm:$0xff]
  %v5994 = vld [vmem:[%s7 + $0x268] sm:$0xff]
  %v5995 = vld [vmem:[%s7 + $0x270] sm:$0xff]
  %v5996 = vld [vmem:[%s7 + $0x278] sm:$0xff]
  %v5997 = vld [vmem:[%s7 + $0x280] sm:$0xff]
  %v5998 = vld [vmem:[%s7 + $0x288] sm:$0xff]
  %v5999 = vld [vmem:[%s7 + $0x290] sm:$0xff]
  %v6000 = vld [vmem:[%s7 + $0x298] sm:$0xff]
  %v6001 = vld [vmem:[%s7 + $0x2a0] sm:$0xff]
  %v6002 = vld [vmem:[%s7 + $0x2a8] sm:$0xff]
  %v6003 = vld [vmem:[%s7 + $0x2b0] sm:$0xff]
  %v6004 = vld [vmem:[%s7 + $0x2b8] sm:$0xff]
  %v6005 = vld [vmem:[%s7 + $0x2c0] sm:$0xff]
  %v6006 = vld [vmem:[%s7 + $0x2c8] sm:$0xff]
  %v6007 = vld [vmem:[%s7 + $0x2d0] sm:$0xff]
  %v6008 = vld [vmem:[%s7 + $0x2d8] sm:$0xff]
  %v6009 = vld [vmem:[%s7 + $0x2e0] sm:$0xff]
  %v6010 = vld [vmem:[%s7 + $0x2e8] sm:$0xff]
  %v6011 = vld [vmem:[%s7 + $0x2f0] sm:$0xff]
  %v6012 = vld [vmem:[%s7 + $0x2f8] sm:$0xff]
  %v6013 = vld [vmem:[%s7 + $0x300] sm:$0xff]
  %v6014 = vld [vmem:[%s7 + $0x308] sm:$0xff]
  %v6015 = vld [vmem:[%s7 + $0x310] sm:$0xff]
  %v6016 = vld [vmem:[%s7 + $0x318] sm:$0xff]
  %v6017 = vld [vmem:[%s7 + $0x320] sm:$0xff]
  %v6018 = vld [vmem:[%s7 + $0x328] sm:$0xff]
  %v6019 = vld [vmem:[%s7 + $0x330] sm:$0xff]
  %v6020 = vld [vmem:[%s7 + $0x338] sm:$0xff]
  %v6021 = vld [vmem:[%s7 + $0x340] sm:$0xff]
  %v6022 = vld [vmem:[%s7 + $0x348] sm:$0xff]
  %v6023 = vld [vmem:[%s7 + $0x350] sm:$0xff]
  %v6024 = vld [vmem:[%s7 + $0x358] sm:$0xff]
  %v6025 = vld [vmem:[%s7 + $0x360] sm:$0xff]
  %v6026 = vld [vmem:[%s7 + $0x368] sm:$0xff]
  %v6027 = vld [vmem:[%s7 + $0x370] sm:$0xff]
  %v6028 = vld [vmem:[%s7 + $0x378] sm:$0xff]
  %v6029 = vld [vmem:[%s7 + $0x380] sm:$0xff]
  %v6030 = vld [vmem:[%s7 + $0x388] sm:$0xff]
  %v6031 = vld [vmem:[%s7 + $0x390] sm:$0xff]
  %v6032 = vld [vmem:[%s7 + $0x398] sm:$0xff]
  %v6033 = vld [vmem:[%s7 + $0x3a0] sm:$0xff]
  %v6034 = vld [vmem:[%s7 + $0x3a8] sm:$0xff]
  %v6035 = vld [vmem:[%s7 + $0x3b0] sm:$0xff]
  %v6036 = vld [vmem:[%s7 + $0x3b8] sm:$0xff]
  %v6037 = vld [vmem:[%s7 + $0x3c0] sm:$0xff]
  %v6038 = vld [vmem:[%s7 + $0x3c8] sm:$0xff]
  %v6039 = vld [vmem:[%s7 + $0x3d0] sm:$0xff]
  %v6040 = vld [vmem:[%s7 + $0x3d8] sm:$0xff]
  %v6041 = vld [vmem:[%s7 + $0x3e0] sm:$0xff]
  %v6042 = vld [vmem:[%s7 + $0x3e8] sm:$0xff]
  %v6043 = vld [vmem:[%s7 + $0x3f0] sm:$0xff]
  %v6044 = vld [vmem:[%s7 + $0x3f8] sm:$0xff]
  %v6045 = vld [vmem:[%s7 + $0x400] sm:$0xff]
  %v6046 = vld [vmem:[%s7 + $0x408] sm:$0xff]
  %v6047 = vld [vmem:[%s7 + $0x410] sm:$0xff]
  %v6048 = vld [vmem:[%s7 + $0x418] sm:$0xff]
  %v6049 = vld [vmem:[%s7 + $0x420] sm:$0xff]
  %v6050 = vld [vmem:[%s7 + $0x428] sm:$0xff]
  %v6051 = vld [vmem:[%s7 + $0x430] sm:$0xff]
  %v6052 = vld [vmem:[%s7 + $0x438] sm:$0xff]
  %v6053 = vld [vmem:[%s7 + $0x440] sm:$0xff]
  %v6054 = vld [vmem:[%s7 + $0x448] sm:$0xff]
  %v6055 = vld [vmem:[%s7 + $0x450] sm:$0xff]
  %v6056 = vld [vmem:[%s7 + $0x458] sm:$0xff]
  %v6057 = vld [vmem:[%s7 + $0x460] sm:$0xff]
  %v6058 = vld [vmem:[%s7 + $0x468] sm:$0xff]
  %v6059 = vld [vmem:[%s7 + $0x470] sm:$0xff]
  %v6060 = vld [vmem:[%s7 + $0x478] sm:$0xff]
  %v6061 = vld [vmem:[%s7 + $0x480] sm:$0xff]
  %v6062 = vld [vmem:[%s7 + $0x488] sm:$0xff]
  %v6063 = vld [vmem:[%s7 + $0x490] sm:$0xff]
  %v6064 = vld [vmem:[%s7 + $0x498] sm:$0xff]
  %v6065 = vld [vmem:[%s7 + $0x4a0] sm:$0xff]
  %v6066 = vld [vmem:[%s7 + $0x4a8] sm:$0xff]
  %v6067 = vld [vmem:[%s7 + $0x4b0] sm:$0xff]
  %v6068 = vld [vmem:[%s7 + $0x4b8] sm:$0xff]
  %v6069 = vld [vmem:[%s7 + $0x4c0] sm:$0xff]
  %v6070 = vld [vmem:[%s7 + $0x4c8] sm:$0xff]
  %v6071 = vld [vmem:[%s7 + $0x4d0] sm:$0xff]
  %v6072 = vld [vmem:[%s7 + $0x4d8] sm:$0xff]
  %v6073 = vld [vmem:[%s7 + $0x4e0] sm:$0xff]
  %v6074 = vld [vmem:[%s7 + $0x4e8] sm:$0xff]
  %v6075 = vld [vmem:[%s7 + $0x4f0] sm:$0xff]
  %v6076 = vld [vmem:[%s7 + $0x4f8] sm:$0xff]
  %v6077 = vld [vmem:[%s7 + $0x500] sm:$0xff]
  %v6078 = vld [vmem:[%s7 + $0x508] sm:$0xff]
  %v6079 = vld [vmem:[%s7 + $0x510] sm:$0xff]
  %v6080 = vld [vmem:[%s7 + $0x518] sm:$0xff]
  %v6081 = vld [vmem:[%s7 + $0x520] sm:$0xff]
  %v6082 = vld [vmem:[%s7 + $0x528] sm:$0xff]
  %v6083 = vld [vmem:[%s7 + $0x530] sm:$0xff]
  %v6084 = vld [vmem:[%s7 + $0x538] sm:$0xff]
  %v6085 = vld [vmem:[%s7 + $0x540] sm:$0xff]
  %v6086 = vld [vmem:[%s7 + $0x548] sm:$0xff]
  %v6087 = vld [vmem:[%s7 + $0x550] sm:$0xff]
  %v6088 = vld [vmem:[%s7 + $0x558] sm:$0xff]
  %v6089 = vld [vmem:[%s7 + $0x560] sm:$0xff]
  %v6090 = vld [vmem:[%s7 + $0x568] sm:$0xff]
  %v6091 = vld [vmem:[%s7 + $0x570] sm:$0xff]
  %v6092 = vld [vmem:[%s7 + $0x578] sm:$0xff]
  %v6093 = vld [vmem:[%s7 + $0x580] sm:$0xff]
  %v6094 = vld [vmem:[%s7 + $0x588] sm:$0xff]
  %v6095 = vld [vmem:[%s7 + $0x590] sm:$0xff]
  %v6096 = vld [vmem:[%s7 + $0x598] sm:$0xff]
  %v6097 = vld [vmem:[%s7 + $0x5a0] sm:$0xff]
  %v6098 = vld [vmem:[%s7 + $0x5a8] sm:$0xff]
  %v6099 = vld [vmem:[%s7 + $0x5b0] sm:$0xff]
  %v6100 = vld [vmem:[%s7 + $0x5b8] sm:$0xff]
  %v6101 = vld [vmem:[%s7 + $0x5c0] sm:$0xff]
  %v6102 = vld [vmem:[%s7 + $0x5c8] sm:$0xff]
  %v6103 = vld [vmem:[%s7 + $0x5d0] sm:$0xff]
  %v6104 = vld [vmem:[%s7 + $0x5d8] sm:$0xff]
  %v6105 = vld [vmem:[%s7 + $0x5e0] sm:$0xff]
  %v6106 = vld [vmem:[%s7 + $0x5e8] sm:$0xff]
  %v6107 = vld [vmem:[%s7 + $0x5f0] sm:$0xff]
  %v6108 = vld [vmem:[%s7 + $0x5f8] sm:$0xff]
  %v6109 = vld [vmem:[%s8] sm:$0x7]
  %v6111 = vlaneseq
  %v6112 = vshrl.u32 %v6111, 7
  %v6113 = vsub.s32 0, %v6112
  %v6114 = vrot.slane %v6109, %v6113
  %v6115 = vlaneseq
  %v6116 = vshrl.u32 %v6115, 7
  %v6117 = vsub.s32 1, %v6116
  %v6118 = vrot.slane %v6109, %v6117
  %v6119 = vlaneseq
  %v6120 = vshrl.u32 %v6119, 7
  %v6121 = vsub.s32 2, %v6120
  %v6122 = vrot.slane %v6109, %v6121
  %6126 = vmatprep.subr.mxu0 %v5918
  %6127 = vmatpush1.msra.mxu0 %v5917
  %6128 = vmatprep.subr.mxu0 %v5921
  %6129 = vmatpush1.msra.mxu0 %v5920
  %6130 = vmatprep.subr.mxu0 %v5924
  %6131 = vmatpush1.msra.mxu0 %v5923
  %6132 = vmatprep.subr.mxu0 %v5927
  %6133 = vmatpush1.msra.mxu0 %v5926
  %6134 = vmatprep.subr.mxu0 %v5930
  %6135 = vmatpush1.msra.mxu0 %v5929
  %6136 = vmatprep.subr.mxu0 %v5933
  %6137 = vmatpush1.msra.mxu0 %v5932
  %6138 = vmatprep.subr.mxu0 %v5936
  %6139 = vmatpush1.msra.mxu0 %v5935
  %6140 = vmatprep.subr.mxu0 %v5939
  %6141 = vmatpush1.msra.mxu0 %v5938
  %6142 = vmatprep.subr.mxu0 %v5942
  %6143 = vmatpush1.msra.mxu0 %v5941
  %6144 = vmatprep.subr.mxu0 %v5945
  %6145 = vmatpush1.msra.mxu0 %v5944
  %6146 = vmatprep.subr.mxu0 %v5948
  %6147 = vmatpush1.msra.mxu0 %v5947
  %6148 = vmatprep.subr.mxu0 %v5951
  %6149 = vmatpush1.msra.mxu0 %v5950
  %6150 = vmatprep.subr.mxu0 %v5954
  %6151 = vmatpush1.msra.mxu0 %v5953
  %6152 = vmatprep.subr.mxu0 %v5957
  %6153 = vmatpush1.msra.mxu0 %v5956
  %6154 = vmatprep.subr.mxu0 %v5960
  %6155 = vmatpush1.msra.mxu0 %v5959
  %6156 = vmatprep.subr.mxu0 %v5963
  %6157 = vmatpush1.msra.mxu0 %v5962
  %6158 = vmatprep.subr.mxu0 %v5966
  %6159 = vmatpush1.msra.mxu0 %v5965
  %6160 = vmatprep.subr.mxu0 %v5969
  %6161 = vmatpush1.msra.mxu0 %v5968
  %6162 = vmatprep.subr.mxu0 %v5972
  %6163 = vmatpush1.msra.mxu0 %v5971
  %6164 = vmatprep.subr.mxu0 %v5975
  %6165 = vmatpush1.msra.mxu0 %v5974
  %6166 = vmatprep.subr.mxu0 %v5978
  %6167 = vmatpush1.msra.mxu0 %v5977
  %6168 = vmatprep.subr.mxu0 %v5981
  %6169 = vmatpush1.msra.mxu0 %v5980
  %6170 = vmatprep.subr.mxu0 %v5984
  %6171 = vmatpush1.msra.mxu0 %v5983
  %6172 = vmatprep.subr.mxu0 %v5987
  %6173 = vmatpush1.msra.mxu0 %v5986
  %6174 = vmatprep.subr.mxu0 %v5990
  %6175 = vmatpush1.msra.mxu0 %v5989
  %6176 = vmatprep.subr.mxu0 %v5993
  %6177 = vmatpush1.msra.mxu0 %v5992
  %6178 = vmatprep.subr.mxu0 %v5996
  %6179 = vmatpush1.msra.mxu0 %v5995
  %6180 = vmatprep.subr.mxu0 %v5999
  %6181 = vmatpush1.msra.mxu0 %v5998
  %6182 = vmatprep.subr.mxu0 %v6002
  %6183 = vmatpush1.msra.mxu0 %v6001
  %6184 = vmatprep.subr.mxu0 %v6005
  %6185 = vmatpush1.msra.mxu0 %v6004
  %6186 = vmatprep.subr.mxu0 %v6008
  %6187 = vmatpush1.msra.mxu0 %v6007
  %6188 = vmatprep.subr.mxu0 %v6011
  %6189 = vmatpush1.msra.mxu0 %v6010
  %6190 = vmatprep.mubr.f32.mxu0 %v5914
  %6191 = vmatmul.mubr.f32.gmra.mrb[0].mxu0 %v5913
  %v6192 = vpop.f32.mrb[0].mxu0
  %v6193 = vadd.f32 %v6114, %v6192
  %v6194 = vpop.f32.mrb[0].mxu0
  %v6195 = vadd.f32 %v6118, %v6194
  %6196 = vdwg.mxu0
  %6197 = vmatprep.subr.mxu0 %v6014
  %6198 = vmatpush1.msra.mxu0 %v6013
  %6199 = vmatprep.subr.mxu0 %v6017
  %6200 = vmatpush1.msra.mxu0 %v6016
  %6201 = vmatprep.subr.mxu0 %v6020
  %6202 = vmatpush1.msra.mxu0 %v6019
  %6203 = vmatprep.subr.mxu0 %v6023
  %6204 = vmatpush1.msra.mxu0 %v6022
  %6205 = vmatprep.subr.mxu0 %v6026
  %6206 = vmatpush1.msra.mxu0 %v6025
  %6207 = vmatprep.subr.mxu0 %v6029
  %6208 = vmatpush1.msra.mxu0 %v6028
  %6209 = vmatprep.subr.mxu0 %v6032
  %6210 = vmatpush1.msra.mxu0 %v6031
  %6211 = vmatprep.subr.mxu0 %v6035
  %6212 = vmatpush1.msra.mxu0 %v6034
  %6213 = vmatprep.subr.mxu0 %v6038
  %6214 = vmatpush1.msra.mxu0 %v6037
  %6215 = vmatprep.subr.mxu0 %v6041
  %6216 = vmatpush1.msra.mxu0 %v6040
  %6217 = vmatprep.subr.mxu0 %v6044
  %6218 = vmatpush1.msra.mxu0 %v6043
  %6219 = vmatprep.subr.mxu0 %v6047
  %6220 = vmatpush1.msra.mxu0 %v6046
  %6221 = vmatprep.subr.mxu0 %v6050
  %6222 = vmatpush1.msra.mxu0 %v6049
  %6223 = vmatprep.subr.mxu0 %v6053
  %6224 = vmatpush1.msra.mxu0 %v6052
  %6225 = vmatprep.subr.mxu0 %v6056
  %6226 = vmatpush1.msra.mxu0 %v6055
  %6227 = vmatprep.subr.mxu0 %v6059
  %6228 = vmatpush1.msra.mxu0 %v6058
  %6229 = vmatprep.subr.mxu0 %v6062
  %6230 = vmatpush1.msra.mxu0 %v6061
  %6231 = vmatprep.subr.mxu0 %v6065
  %6232 = vmatpush1.msra.mxu0 %v6064
  %6233 = vmatprep.subr.mxu0 %v6068
  %6234 = vmatpush1.msra.mxu0 %v6067
  %6235 = vmatprep.subr.mxu0 %v6071
  %6236 = vmatpush1.msra.mxu0 %v6070
  %6237 = vmatprep.subr.mxu0 %v6074
  %6238 = vmatpush1.msra.mxu0 %v6073
  %6239 = vmatprep.subr.mxu0 %v6077
  %6240 = vmatpush1.msra.mxu0 %v6076
  %6241 = vmatprep.subr.mxu0 %v6080
  %6242 = vmatpush1.msra.mxu0 %v6079
  %6243 = vmatprep.subr.mxu0 %v6083
  %6244 = vmatpush1.msra.mxu0 %v6082
  %6245 = vmatprep.subr.mxu0 %v6086
  %6246 = vmatpush1.msra.mxu0 %v6085
  %6247 = vmatprep.subr.mxu0 %v6089
  %6248 = vmatpush1.msra.mxu0 %v6088
  %6249 = vmatprep.subr.mxu0 %v6092
  %6250 = vmatpush1.msra.mxu0 %v6091
  %6251 = vmatprep.subr.mxu0 %v6095
  %6252 = vmatpush1.msra.mxu0 %v6094
  %6253 = vmatprep.subr.mxu0 %v6098
  %6254 = vmatpush1.msra.mxu0 %v6097
  %6255 = vmatprep.subr.mxu0 %v6101
  %6256 = vmatpush1.msra.mxu0 %v6100
  %6257 = vmatprep.subr.mxu0 %v6104
  %6258 = vmatpush1.msra.mxu0 %v6103
  %6259 = vmatprep.subr.mxu0 %v6107
  %6260 = vmatpush1.msra.mxu0 %v6106
  %6261 = vmatprep.mubr.f32.mxu0 %v5916
  %6262 = vmatmul.mubr.f32.gmra.mrb[0].mxu0 %v5915
  %v6263 = vpop.f32.mrb[0].mxu0
  %v6264 = vadd.f32 %v6193, %v6263
  %v6265 = vpop.f32.mrb[0].mxu0
  %v6266 = vadd.f32 %v6195, %v6265
  %6267 = vdwg.mxu0
  %6268 = vmatprep.subr.mxu0 0.0
  %6269 = vmatpush1.msra.mxu0 %v5919
  %6270 = vmatprep.subr.mxu0 0.0
  %6271 = vmatpush1.msra.mxu0 %v5922
  %6272 = vmatprep.subr.mxu0 0.0
  %6273 = vmatpush1.msra.mxu0 %v5925
  %6274 = vmatprep.subr.mxu0 0.0
  %6275 = vmatpush1.msra.mxu0 %v5928
  %6276 = vmatprep.subr.mxu0 0.0
  %6277 = vmatpush1.msra.mxu0 %v5931
  %6278 = vmatprep.subr.mxu0 0.0
  %6279 = vmatpush1.msra.mxu0 %v5934
  %6280 = vmatprep.subr.mxu0 0.0
  %6281 = vmatpush1.msra.mxu0 %v5937
  %6282 = vmatprep.subr.mxu0 0.0
  %6283 = vmatpush1.msra.mxu0 %v5940
  %6284 = vmatprep.subr.mxu0 0.0
  %6285 = vmatpush1.msra.mxu0 %v5943
  %6286 = vmatprep.subr.mxu0 0.0
  %6287 = vmatpush1.msra.mxu0 %v5946
  %6288 = vmatprep.subr.mxu0 0.0
  %6289 = vmatpush1.msra.mxu0 %v5949
  %6290 = vmatprep.subr.mxu0 0.0
  %6291 = vmatpush1.msra.mxu0 %v5952
  %6292 = vmatprep.subr.mxu0 0.0
  %6293 = vmatpush1.msra.mxu0 %v5955
  %6294 = vmatprep.subr.mxu0 0.0
  %6295 = vmatpush1.msra.mxu0 %v5958
  %6296 = vmatprep.subr.mxu0 0.0
  %6297 = vmatpush1.msra.mxu0 %v5961
  %6298 = vmatprep.subr.mxu0 0.0
  %6299 = vmatpush1.msra.mxu0 %v5964
  %6300 = vmatprep.subr.mxu0 0.0
  %6301 = vmatpush1.msra.mxu0 %v5967
  %6302 = vmatprep.subr.mxu0 0.0
  %6303 = vmatpush1.msra.mxu0 %v5970
  %6304 = vmatprep.subr.mxu0 0.0
  %6305 = vmatpush1.msra.mxu0 %v5973
  %6306 = vmatprep.subr.mxu0 0.0
  %6307 = vmatpush1.msra.mxu0 %v5976
  %6308 = vmatprep.subr.mxu0 0.0
  %6309 = vmatpush1.msra.mxu0 %v5979
  %6310 = vmatprep.subr.mxu0 0.0
  %6311 = vmatpush1.msra.mxu0 %v5982
  %6312 = vmatprep.subr.mxu0 0.0
  %6313 = vmatpush1.msra.mxu0 %v5985
  %6314 = vmatprep.subr.mxu0 0.0
  %6315 = vmatpush1.msra.mxu0 %v5988
  %6316 = vmatprep.subr.mxu0 0.0
  %6317 = vmatpush1.msra.mxu0 %v5991
  %6318 = vmatprep.subr.mxu0 0.0
  %6319 = vmatpush1.msra.mxu0 %v5994
  %6320 = vmatprep.subr.mxu0 0.0
  %6321 = vmatpush1.msra.mxu0 %v5997
  %6322 = vmatprep.subr.mxu0 0.0
  %6323 = vmatpush1.msra.mxu0 %v6000
  %6324 = vmatprep.subr.mxu0 0.0
  %6325 = vmatpush1.msra.mxu0 %v6003
  %6326 = vmatprep.subr.mxu0 0.0
  %6327 = vmatpush1.msra.mxu0 %v6006
  %6328 = vmatprep.subr.mxu0 0.0
  %6329 = vmatpush1.msra.mxu0 %v6009
  %6330 = vmatprep.subr.mxu0 0.0
  %6331 = vmatpush1.msra.mxu0 %v6012
  %6332 = vmatprep.mubr.f32.mxu0 %v5914
  %6333 = vmatmul.mubr.f32.gmra.mrb[0].mxu0 %v5913
  %v6334 = vpop.f32.mrb[0].mxu0
  %v6335 = vadd.f32 %v6122, %v6334
  %v6336 = vpop.f32.mrb[0].mxu0
  %6337 = vdwg.mxu0
  %6338 = vmatprep.subr.mxu0 0.0
  %6339 = vmatpush1.msra.mxu0 %v6015
  %6340 = vmatprep.subr.mxu0 0.0
  %6341 = vmatpush1.msra.mxu0 %v6018
  %6342 = vmatprep.subr.mxu0 0.0
  %6343 = vmatpush1.msra.mxu0 %v6021
  %6344 = vmatprep.subr.mxu0 0.0
  %6345 = vmatpush1.msra.mxu0 %v6024
  %6346 = vmatprep.subr.mxu0 0.0
  %6347 = vmatpush1.msra.mxu0 %v6027
  %6348 = vmatprep.subr.mxu0 0.0
  %6349 = vmatpush1.msra.mxu0 %v6030
  %6350 = vmatprep.subr.mxu0 0.0
  %6351 = vmatpush1.msra.mxu0 %v6033
  %6352 = vmatprep.subr.mxu0 0.0
  %6353 = vmatpush1.msra.mxu0 %v6036
  %6354 = vmatprep.subr.mxu0 0.0
  %6355 = vmatpush1.msra.mxu0 %v6039
  %6356 = vmatprep.subr.mxu0 0.0
  %6357 = vmatpush1.msra.mxu0 %v6042
  %6358 = vmatprep.subr.mxu0 0.0
  %6359 = vmatpush1.msra.mxu0 %v6045
  %6360 = vmatprep.subr.mxu0 0.0
  %6361 = vmatpush1.msra.mxu0 %v6048
  %6362 = vmatprep.subr.mxu0 0.0
  %6363 = vmatpush1.msra.mxu0 %v6051
  %6364 = vmatprep.subr.mxu0 0.0
  %6365 = vmatpush1.msra.mxu0 %v6054
  %6366 = vmatprep.subr.mxu0 0.0
  %6367 = vmatpush1.msra.mxu0 %v6057
  %6368 = vmatprep.subr.mxu0 0.0
  %6369 = vmatpush1.msra.mxu0 %v6060
  %6370 = vmatprep.subr.mxu0 0.0
  %6371 = vmatpush1.msra.mxu0 %v6063
  %6372 = vmatprep.subr.mxu0 0.0
  %6373 = vmatpush1.msra.mxu0 %v6066
  %6374 = vmatprep.subr.mxu0 0.0
  %6375 = vmatpush1.msra.mxu0 %v6069
  %6376 = vmatprep.subr.mxu0 0.0
  %6377 = vmatpush1.msra.mxu0 %v6072
  %6378 = vmatprep.subr.mxu0 0.0
  %6379 = vmatpush1.msra.mxu0 %v6075
  %6380 = vmatprep.subr.mxu0 0.0
  %6381 = vmatpush1.msra.mxu0 %v6078
  %6382 = vmatprep.subr.mxu0 0.0
  %6383 = vmatpush1.msra.mxu0 %v6081
  %6384 = vmatprep.subr.mxu0 0.0
  %6385 = vmatpush1.msra.mxu0 %v6084
  %6386 = vmatprep.subr.mxu0 0.0
  %6387 = vmatpush1.msra.mxu0 %v6087
  %6388 = vmatprep.subr.mxu0 0.0
  %6389 = vmatpush1.msra.mxu0 %v6090
  %6390 = vmatprep.subr.mxu0 0.0
  %6391 = vmatpush1.msra.mxu0 %v6093
  %6392 = vmatprep.subr.mxu0 0.0
  %6393 = vmatpush1.msra.mxu0 %v6096
  %6394 = vmatprep.subr.mxu0 0.0
  %6395 = vmatpush1.msra.mxu0 %v6099
  %6396 = vmatprep.subr.mxu0 0.0
  %6397 = vmatpush1.msra.mxu0 %v6102
  %6398 = vmatprep.subr.mxu0 0.0
  %6399 = vmatpush1.msra.mxu0 %v6105
  %6400 = vmatprep.subr.mxu0 0.0
  %6401 = vmatpush1.msra.mxu0 %v6108
  %6402 = vmatprep.mubr.f32.mxu0 %v5916
  %6403 = vmatmul.mubr.f32.gmra.mrb[0].mxu0 %v5915
  %v6404 = vpop.f32.mrb[0].mxu0
  %v6405 = vadd.f32 %v6335, %v6404
  %v6406 = vpop.f32.mrb[0].mxu0
  %6407 = vdwg.mxu0
  %v6411 = vcombine.low %v6264, %v6266
  %v6413 = vunpack.c.l.s4 1983009808
  %v6414 = vunpack.c.0.s8 %v6413
  %v6415 = vlaneseq
  %v6416 = vshrl.u32 %v6415, 7
  %v6417 = vsub.s32 %v6414, %v6416
  %v6418 = vrot.slane %v6411, %v6417
  %v6420 = vunpack.c.l.s4 1983009808
  %v6421 = vunpack.c.0.s8 %v6420
  %v6422 = vlaneseq
  %v6423 = vshrl.u32 %v6422, 7
  %v6424 = vsub.s32 %v6421, %v6423
  %v6425 = vrot.slane %v6405, %v6424
  %v6426 = vcombine.low %v6418, %v6425
  %vm6428 = vcmask 1043458
  %vm6429 = vmor %vm6428, %vm313
  %vm6430 = vcmask 521220
  %vm6431 = vmor %vm6430, %vm6429
  %6432 = vst.msk [vmem:[%s9] sm:$0x3f] %vm6431, %v6426
  // Predicated region
  $region38: #{resnet_base_forward.1} parent=0 // pred_check
    _
  $region39: #{resnet_base_forward.1} parent=0 // pred_check_branch
    %6434 = sbr.rel (0) target = $region41
  $region40: #{resnet_base_forward.1} parent=0 // pred_region
    _
  $region41: #{resnet_base_forward.1} parent=0 // pred_fallthru
    _
  // Predicated region
  $region42: #{resnet_base_forward.1} parent=0 // pred_check
    _
  $region43: #{resnet_base_forward.1} parent=0 // pred_check_branch
    %6436 = sbr.rel (0) target = $region45
  $region44: #{resnet_base_forward.1} parent=0 // pred_region
    _
  $region45: #{resnet_base_forward.1} parent=0 // pred_fallthru
    _

</llo_original>
